<compile_context>
chip_gen: v6e
topology: v6e:2x2x1
jax: 0.10.0
libtpu: 0.0.40
codegen_flags: <defaults>
</compile_context>

<pallas_src>
import functools
import math

import jax
import jax.numpy as jnp
from jax.experimental import pallas as pl
from jax.experimental.pallas import tpu as pltpu


# TODO(synk): PyTorch nn.GELU() is exact erf-GELU; the tanh approximation is
# used here (and in the reference) to avoid relying on an erf lowering.
def _gelu(x):
    c = math.sqrt(2.0 / math.pi)
    return 0.5 * x * (1.0 + jnp.tanh(c * (x + 0.044715 * x * x * x)))


# ---------------------------------------------------------------------------
# Kernel A: fused [BN-folded qk|v 1x1 conv + GELU] + per-window attention.
# Block = G windows of the already window-partitioned input (BW, T, C).
# ---------------------------------------------------------------------------
def _qkv_attn_kernel(xw_ref, wq_ref, wk_ref, wv_ref, bq_ref, bk_ref, bv_ref,
                     o_ref, *, G, T, num_head, scale):
    C = wq_ref.shape[0]
    dh = wq_ref.shape[1] // num_head
    dv = wv_ref.shape[1] // num_head

    # One lane-dense matmul per projection over all G*T rows (better MXU
    # utilization than per-window matmuls); GELU + folded-BN bias fused.
    xf = xw_ref[...].reshape(G * T, C)
    q_all = _gelu(jnp.dot(xf, wq_ref[...], preferred_element_type=jnp.float32)
                  + bq_ref[...])
    k_all = _gelu(jnp.dot(xf, wk_ref[...], preferred_element_type=jnp.float32)
                  + bk_ref[...])
    v_all = _gelu(jnp.dot(xf, wv_ref[...], preferred_element_type=jnp.float32)
                  + bv_ref[...])

    for g in range(G):                      # static unroll over windows
        r0, r1 = g * T, (g + 1) * T
        outs = []
        for h in range(num_head):           # static unroll over heads
            if num_head == 1:
                q, k, v = q_all[r0:r1], k_all[r0:r1], v_all[r0:r1]
            else:
                q = q_all[r0:r1, h * dh:(h + 1) * dh]
                k = k_all[r0:r1, h * dh:(h + 1) * dh]
                v = v_all[r0:r1, h * dv:(h + 1) * dv]
            s = jax.lax.dot_general(q, k, (((1,), (1,)), ((), ())),
                                    preferred_element_type=jnp.float32) * scale
            s = s - jnp.max(s, axis=-1, keepdims=True)
            p = jnp.exp(s)
            p = p / jnp.sum(p, axis=-1, keepdims=True)
            outs.append(jnp.dot(p, v, preferred_element_type=jnp.float32))
        o = outs[0] if num_head == 1 else jnp.concatenate(outs, axis=-1)
        o_ref[g] = o.astype(o_ref.dtype)


def _windows_qkv_attention(x_win, wq, wk, wv, bq, bk, bv, *, dim_mid,
                           num_head, scale):
    BW, T, C = x_win.shape
    # Windows per grid step: amortize per-step overhead, keep >=2 steps when
    # possible so megacore / pipelining engage.
    G = 8 if BW > 8 else max(1, (BW + 1) // 2)
    n_blk = pl.cdiv(BW, G)
    BWp = n_blk * G
    if BWp != BW:
        x_win = jnp.pad(x_win, ((0, BWp - BW), (0, 0), (0, 0)))

    out = pl.pallas_call(
        functools.partial(_qkv_attn_kernel, G=G, T=T, num_head=num_head,
                          scale=scale),
        out_shape=jax.ShapeDtypeStruct((BWp, T, dim_mid), x_win.dtype),
        grid_spec=pltpu.PrefetchScalarGridSpec(
            num_scalar_prefetch=0,
            grid=(n_blk,),
            in_specs=[
                pl.BlockSpec((G, T, C), lambda i: (i, 0, 0)),
                pl.BlockSpec(wq.shape, lambda i: (0, 0)),   # weights resident
                pl.BlockSpec(wk.shape, lambda i: (0, 0)),
                pl.BlockSpec(wv.shape, lambda i: (0, 0)),
                pl.BlockSpec(bq.shape, lambda i: (0, 0)),   # folded-BN biases
                pl.BlockSpec(bk.shape, lambda i: (0, 0)),
                pl.BlockSpec(bv.shape, lambda i: (0, 0)),
            ],
            out_specs=pl.BlockSpec((G, T, dim_mid), lambda i: (i, 0, 0)),
        ),
        compiler_params=pltpu.CompilerParams(
            dimension_semantics=("parallel",)),
    )(x_win, wq, wk, wv, bq, bk, bv)
    return out[:BW] if BWp != BW else out


# ---------------------------------------------------------------------------
# Kernel B: fused depthwise-3x3 + BN(eval) + GELU + SELayerV2 gate + inner
# residual + 1x1 proj + GELU + outer shortcut.  One batch element per step.
# ---------------------------------------------------------------------------
def _local_se_proj_kernel(xp_ref, sc_ref, wdw_ref, bdw_ref, sew_ref, sefc_ref,
                          wproj_ref, o_ref, *, H, W, inv_hw):
    Cm = xp_ref.shape[-1]
    Co = wproj_ref.shape[1]

    # depthwise 3x3 (BN scale folded into weights) + BN shift + GELU
    acc = jnp.zeros((H, W, Cm), jnp.float32)
    for i in range(3):
        for j in range(3):
            patch = xp_ref[0, i:i + H, j:j + W, :]          # static-offset load
            acc = acc + patch.astype(jnp.float32) * wdw_ref[i * 3 + j, :]
    u = _gelu(acc + bdw_ref[...])

    # SELayerV2: global avg-pool -> 4x[Linear+ReLU] -> Linear -> sigmoid
    y = jnp.sum(jnp.sum(u, axis=0), axis=0, keepdims=True) * inv_hw   # (1, Cm)
    g = None
    for i in range(4):
        yi = jnp.maximum(
            jnp.dot(y, sew_ref[i], preferred_element_type=jnp.float32), 0.0)
        gi = jnp.dot(yi, sefc_ref[i], preferred_element_type=jnp.float32)
        g = gi if g is None else g + gi       # == concat(y1..y4) @ W_fc
    gate = jax.nn.sigmoid(g)                  # (1, Cm)

    # inner residual: x_attn + u * gate   (x_attn = center crop of padded in)
    x_attn = xp_ref[0, 1:1 + H, 1:1 + W, :].astype(jnp.float32)
    x_mid = x_attn + u * gate

    # proj (1x1, no bias) + GELU + outer shortcut
    proj = jnp.dot(x_mid.reshape(H * W, Cm), wproj_ref[...],
                   preferred_element_type=jnp.float32)
    out = _gelu(proj).reshape(H, W, Co) + sc_ref[0].astype(jnp.float32)
    o_ref[0] = out.astype(o_ref.dtype)


def _local_se_proj(x_attn, shortcut, w_dw, b_dw, se_w, se_fc, w_proj):
    B, H, W, Cm = x_attn.shape
    Co = w_proj.shape[1]
    x_pad = jnp.pad(x_attn, ((0, 0), (1, 1), (1, 1), (0, 0)))
    return pl.pallas_call(
        functools.partial(_local_se_proj_kernel, H=H, W=W,
                          inv_hw=1.0 / (H * W)),
        out_shape=jax.ShapeDtypeStruct((B, H, W, Co), x_attn.dtype),
        grid_spec=pltpu.PrefetchScalarGridSpec(
            num_scalar_prefetch=0,
            grid=(B,),
            in_specs=[
                pl.BlockSpec((1, H + 2, W + 2, Cm), lambda b: (b, 0, 0, 0)),
                pl.BlockSpec((1, H, W, shortcut.shape[-1]),
                             lambda b: (b, 0, 0, 0)),
                pl.BlockSpec((9, Cm), lambda b: (0, 0)),
                pl.BlockSpec((1, Cm), lambda b: (0, 0)),
                pl.BlockSpec((4, Cm, Cm), lambda b: (0, 0, 0)),
                pl.BlockSpec((4, Cm, Cm), lambda b: (0, 0, 0)),
                pl.BlockSpec((Cm, Co), lambda b: (0, 0)),
            ],
            out_specs=pl.BlockSpec((1, H, W, Co), lambda b: (b, 0, 0, 0)),
        ),
        compiler_params=pltpu.CompilerParams(
            dimension_semantics=("parallel",)),
    )(x_pad, shortcut, w_dw, b_dw, se_w, se_fc, w_proj)


# ---------------------------------------------------------------------------
# iRMB forward (Pallas kernels + wrapper-side layout plumbing / BN folding)
# ---------------------------------------------------------------------------
def irmb_forward(x_nchw, p, *, dim_head=64, window_size=8):
    eps = 1e-6
    hi = jax.lax.Precision.HIGHEST
    B, C, H, W = x_nchw.shape
    assert C % dim_head == 0
    num_head = C // dim_head
    dim_mid = p["w_v"].shape[1]
    assert dim_mid % num_head == 0
    scale = dim_head ** -0.5
    ws = window_size
    # TODO(synk): spatial F.pad path for H/W not divisible by window_size is
    # not implemented; test shapes are chosen so no padding is required.
    assert H % ws == 0 and W % ws == 0
    n1, n2 = H // ws, W // ws

    # Fold BatchNorm2d(eval) of `norm` into the qk / v pointwise convs.
    s1 = p["bn1_g"] / jnp.sqrt(p["bn1_v"] + eps)
    t1 = p["bn1_b"] - p["bn1_m"] * s1
    w_q, w_k = p["w_qk"][:, :C], p["w_qk"][:, C:]
    wq_eff = s1[:, None] * w_q
    wk_eff = s1[:, None] * w_k
    wv_eff = s1[:, None] * p["w_v"]
    bq_eff = jnp.matmul(t1[None, :], w_q, precision=hi)          # (1, C)
    bk_eff = jnp.matmul(t1[None, :], w_k, precision=hi)          # (1, C)
    bv_eff = jnp.matmul(t1[None, :], p["w_v"], precision=hi)     # (1, Cmid)

    x_nhwc = jnp.transpose(x_nchw, (0, 2, 3, 1))                 # (B,H,W,C)

    # EMO (strided) window partition, channels-last:
    #   'b c (h1 n1) (w1 n2) -> (b n1 n2) c h1 w1'  ->  (BW, T, C)
    x_win = x_nhwc.reshape(B, ws, n1, ws, n2, C)
    x_win = jnp.transpose(x_win, (0, 2, 4, 1, 3, 5)).reshape(
        B * n1 * n2, ws * ws, C)

    o_win = _windows_qkv_attention(
        x_win, wq_eff, wk_eff, wv_eff, bq_eff, bk_eff, bv_eff,
        dim_mid=dim_mid, num_head=num_head, scale=scale)

    # window de-partition back to (B, H, W, Cmid)
    x_attn = o_win.reshape(B, n1, n2, ws, ws, dim_mid)
    x_attn = jnp.transpose(x_attn, (0, 3, 1, 4, 2, 5)).reshape(B, H, W, dim_mid)

    # Fold BN(eval) of conv_local into the depthwise weights / bias.
    s2 = p["bn2_g"] / jnp.sqrt(p["bn2_v"] + eps)
    t2 = p["bn2_b"] - p["bn2_m"] * s2
    w_dw_eff = (p["w_dw"] * s2[None, None, :]).reshape(9, dim_mid)

    out_nhwc = _local_se_proj(x_attn, x_nhwc, w_dw_eff, t2[None, :],
                              p["se_w"], p["se_wfc"], p["w_proj"])
    return jnp.transpose(out_nhwc, (0, 3, 1, 2))


# ---------------------------------------------------------------------------
# Pure-JAX reference (unfolded parameters, independent ops) for validation
# ---------------------------------------------------------------------------
def irmb_reference(x_nchw, p, *, dim_head=64, window_size=8):
    eps = 1e-6
    hi = jax.lax.Precision.HIGHEST
    B, C, H, W = x_nchw.shape
    num_head = C // dim_head
    dim_mid = p["w_v"].shape[1]
    ws = window_size
    n1, n2 = H // ws, W // ws
    scale = dim_head ** -0.5

    x_nhwc = jnp.transpose(x_nchw, (0, 2, 3, 1))
    shortcut = x_nhwc
    xn = (x_nhwc - p["bn1_m"]) / jnp.sqrt(p["bn1_v"] + eps) * p["bn1_g"] + p["bn1_b"]

    qk = _gelu(jnp.einsum("bhwc,cd->bhwd", xn, p["w_qk"], precision=hi))
    vv = _gelu(jnp.einsum("bhwc,cd->bhwd", xn, p["w_v"], precision=hi))

    def win_part(t):
        Cc = t.shape[-1]
        t = t.reshape(B, ws, n1, ws, n2, Cc)
        return jnp.transpose(t, (0, 2, 4, 1, 3, 5)).reshape(B * n1 * n2, ws * ws, Cc)

    def win_unpart(t, Cc):
        t = t.reshape(B, n1, n2, ws, ws, Cc)
        return jnp.transpose(t, (0, 3, 1, 4, 2, 5)).reshape(B, H, W, Cc)

    qk_w, v_w = win_part(qk), win_part(vv)
    BW, T = qk_w.shape[0], ws * ws

    def heads(t):
        dh = t.shape[-1] // num_head
        return jnp.transpose(t.reshape(BW, T, num_head, dh), (0, 2, 1, 3))

    q, k, v = heads(qk_w[..., :C]), heads(qk_w[..., C:]), heads(v_w)
    attn = jax.nn.softmax(
        jnp.einsum("bhtd,bhsd->bhts", q, k, precision=hi) * scale, axis=-1)
    o = jnp.einsum("bhts,bhsd->bhtd", attn, v, precision=hi)
    o = jnp.transpose(o, (0, 2, 1, 3)).reshape(BW, T, dim_mid)
    x_attn = win_unpart(o, dim_mid)

    dw = p["w_dw"].reshape(3, 3, 1, dim_mid)
    u = jax.lax.conv_general_dilated(
        x_attn, dw, window_strides=(1, 1), padding=((1, 1), (1, 1)),
        dimension_numbers=("NHWC", "HWIO", "NHWC"),
        feature_group_count=dim_mid, precision=hi)
    u = (u - p["bn2_m"]) / jnp.sqrt(p["bn2_v"] + eps) * p["bn2_g"] + p["bn2_b"]
    u = _gelu(u)

    y = jnp.mean(u, axis=(1, 2))                                  # (B, Cmid)
    ys = [jnp.maximum(jnp.dot(y, p["se_w"][i], precision=hi), 0.0) for i in range(4)]
    cat = jnp.concatenate(ys, axis=-1)                            # (B, 4*Cmid)
    gate = jax.nn.sigmoid(
        jnp.dot(cat, p["se_wfc"].reshape(4 * dim_mid, dim_mid), precision=hi))
    x_mid = x_attn + u * gate[:, None, None, :]

    out = _gelu(jnp.einsum("bhwc,cd->bhwd", x_mid, p["w_proj"], precision=hi)) + shortcut
    return jnp.transpose(out, (0, 3, 1, 2))


if __name__ == "__main__":
    dim = 64           # dim_in == dim_out (must be divisible by dim_head)
    dim_mid = 64       # exp_ratio = 1.0
    dim_head = 64
    window_size = 8
    B, H, W = 2, 16, 16

    f32 = jnp.float32
    ks = jax.random.split(jax.random.PRNGKey(0), 15)
    params = {
        "bn1_g": 1.0 + 0.1 * jax.random.normal(ks[0], (dim,), f32),
        "bn1_b": 0.1 * jax.random.normal(ks[1], (dim,), f32),
        "bn1_m": 0.1 * jax.random.normal(ks[2], (dim,), f32),
        "bn1_v": 1.0 + 0.3 * jnp.abs(jax.random.normal(ks[3], (dim,), f32)),
        "w_qk": 0.1 * jax.random.normal(ks[4], (dim, 2 * dim), f32),
        "w_v": 0.1 * jax.random.normal(ks[5], (dim, dim_mid), f32),
        "w_dw": 0.3 * jax.random.normal(ks[6], (3, 3, dim_mid), f32),
        "bn2_g": 1.0 + 0.1 * jax.random.normal(ks[7], (dim_mid,), f32),
        "bn2_b": 0.1 * jax.random.normal(ks[8], (dim_mid,), f32),
        "bn2_m": 0.1 * jax.random.normal(ks[9], (dim_mid,), f32),
        "bn2_v": 1.0 + 0.3 * jnp.abs(jax.random.normal(ks[10], (dim_mid,), f32)),
        "se_w": 0.2 * jax.random.normal(ks[11], (4, dim_mid, dim_mid), f32),
        "se_wfc": 0.1 * jax.random.normal(ks[12], (4, dim_mid, dim_mid), f32),
        "w_proj": 0.1 * jax.random.normal(ks[13], (dim_mid, dim), f32),
    }
    x = jax.random.normal(ks[14], (B, dim, H, W), f32)

    fwd = jax.jit(functools.partial(irmb_forward, dim_head=dim_head,
                                    window_size=window_size))
    out = jax.block_until_ready(fwd(x, params))

    ref = jax.jit(functools.partial(irmb_reference, dim_head=dim_head,
                                    window_size=window_size))(x, params)
    assert out.shape == x.shape and out.dtype == x.dtype
    assert bool(jnp.allclose(out, ref, rtol=1e-2, atol=1e-2)), (
        float(jnp.max(jnp.abs(out - ref))))
    print("KERNEL_OK")
</pallas_src>

<mosaic_0001>
module attributes {stable_mosaic.version = 11 : i64} {
  func.func @_qkv_attn_kernel(%arg0: i32, %arg1: memref<4x64x64xf32, #tpu.memory_space<vmem>>, %arg2: memref<64x64xf32, #tpu.memory_space<vmem>>, %arg3: memref<64x64xf32, #tpu.memory_space<vmem>>, %arg4: memref<64x64xf32, #tpu.memory_space<vmem>>, %arg5: memref<1x64xf32, #tpu.memory_space<vmem>>, %arg6: memref<1x64xf32, #tpu.memory_space<vmem>>, %arg7: memref<1x64xf32, #tpu.memory_space<vmem>>, %arg8: memref<4x64x64xf32, #tpu.memory_space<vmem>>) attributes {dimension_semantics = [#tpu.dimension_semantics<parallel>], iteration_bounds = array<i64: 2>, scalar_prefetch = 0 : i64, scratch_operands = 0 : i64, tpu.core_type = #tpu.core_type<tc>, window_params = [{transform_indices = @transform_0, window_bounds = array<i64: 4, 64, 64>}, {pipeline_mode = #tpu.pipeline_mode<synchronous>, transform_indices = @transform_1, window_bounds = array<i64: 64, 64>}, {pipeline_mode = #tpu.pipeline_mode<synchronous>, transform_indices = @transform_2, window_bounds = array<i64: 64, 64>}, {pipeline_mode = #tpu.pipeline_mode<synchronous>, transform_indices = @transform_3, window_bounds = array<i64: 64, 64>}, {pipeline_mode = #tpu.pipeline_mode<synchronous>, transform_indices = @transform_4, window_bounds = array<i64: 1, 64>}, {pipeline_mode = #tpu.pipeline_mode<synchronous>, transform_indices = @transform_5, window_bounds = array<i64: 1, 64>}, {pipeline_mode = #tpu.pipeline_mode<synchronous>, transform_indices = @transform_6, window_bounds = array<i64: 1, 64>}, {transform_indices = @transform_7, window_bounds = array<i64: 4, 64, 64>}]} {
    %c0 = arith.constant 0 : index
    %c0_0 = arith.constant 0 : index
    %c0_1 = arith.constant 0 : index
    %0 = vector.load %arg1[%c0, %c0_0, %c0_1] : memref<4x64x64xf32, #tpu.memory_space<vmem>>, vector<4x64x64xf32>
    %1 = vector.shape_cast %0 : vector<4x64x64xf32> to vector<256x64xf32>
    %c0_2 = arith.constant 0 : index
    %c0_3 = arith.constant 0 : index
    %2 = vector.load %arg2[%c0_2, %c0_3] : memref<64x64xf32, #tpu.memory_space<vmem>>, vector<64x64xf32>
    %cst = arith.constant dense<0.000000e+00> : vector<256x64xf32>
    %3 = tpu.matmul %1, %2, %cst {dimension_numbers = #tpu.dot_dimension_numbers<[1], [0], [0], [1], [0, 0, 1, 1], [], []>} : vector<256x64xf32>, vector<64x64xf32>, vector<256x64xf32> -> vector<256x64xf32>
    %c0_4 = arith.constant 0 : index
    %c0_5 = arith.constant 0 : index
    %4 = vector.load %arg5[%c0_4, %c0_5] : memref<1x64xf32, #tpu.memory_space<vmem>>, vector<1x64xf32>
    %5 = vector.broadcast %4 : vector<1x64xf32> to vector<256x64xf32>
    %6 = arith.addf %3, %5 : vector<256x64xf32>
    %cst_6 = arith.constant 5.000000e-01 : f32
    %7 = vector.broadcast %cst_6 : f32 to vector<256x64xf32>
    %8 = arith.mulf %7, %6 : vector<256x64xf32>
    %cst_7 = arith.constant 4.471500e-02 : f32
    %9 = vector.broadcast %cst_7 : f32 to vector<256x64xf32>
    %10 = arith.mulf %9, %6 : vector<256x64xf32>
    %11 = arith.mulf %10, %6 : vector<256x64xf32>
    %12 = arith.mulf %11, %6 : vector<256x64xf32>
    %13 = arith.addf %6, %12 : vector<256x64xf32>
    %cst_8 = arith.constant 0.797884583 : f32
    %14 = vector.broadcast %cst_8 : f32 to vector<256x64xf32>
    %15 = arith.mulf %14, %13 : vector<256x64xf32>
    %16 = math.tanh %15 : vector<256x64xf32>
    %cst_9 = arith.constant 1.000000e+00 : f32
    %17 = vector.broadcast %cst_9 : f32 to vector<256x64xf32>
    %18 = arith.addf %17, %16 : vector<256x64xf32>
    %19 = arith.mulf %8, %18 : vector<256x64xf32>
    %c0_10 = arith.constant 0 : index
    %c0_11 = arith.constant 0 : index
    %20 = vector.load %arg3[%c0_10, %c0_11] : memref<64x64xf32, #tpu.memory_space<vmem>>, vector<64x64xf32>
    %cst_12 = arith.constant dense<0.000000e+00> : vector<256x64xf32>
    %21 = tpu.matmul %1, %20, %cst_12 {dimension_numbers = #tpu.dot_dimension_numbers<[1], [0], [0], [1], [0, 0, 1, 1], [], []>} : vector<256x64xf32>, vector<64x64xf32>, vector<256x64xf32> -> vector<256x64xf32>
    %c0_13 = arith.constant 0 : index
    %c0_14 = arith.constant 0 : index
    %22 = vector.load %arg6[%c0_13, %c0_14] : memref<1x64xf32, #tpu.memory_space<vmem>>, vector<1x64xf32>
    %23 = vector.broadcast %22 : vector<1x64xf32> to vector<256x64xf32>
    %24 = arith.addf %21, %23 : vector<256x64xf32>
    %cst_15 = arith.constant 5.000000e-01 : f32
    %25 = vector.broadcast %cst_15 : f32 to vector<256x64xf32>
    %26 = arith.mulf %25, %24 : vector<256x64xf32>
    %cst_16 = arith.constant 4.471500e-02 : f32
    %27 = vector.broadcast %cst_16 : f32 to vector<256x64xf32>
    %28 = arith.mulf %27, %24 : vector<256x64xf32>
    %29 = arith.mulf %28, %24 : vector<256x64xf32>
    %30 = arith.mulf %29, %24 : vector<256x64xf32>
    %31 = arith.addf %24, %30 : vector<256x64xf32>
    %cst_17 = arith.constant 0.797884583 : f32
    %32 = vector.broadcast %cst_17 : f32 to vector<256x64xf32>
    %33 = arith.mulf %32, %31 : vector<256x64xf32>
    %34 = math.tanh %33 : vector<256x64xf32>
    %cst_18 = arith.constant 1.000000e+00 : f32
    %35 = vector.broadcast %cst_18 : f32 to vector<256x64xf32>
    %36 = arith.addf %35, %34 : vector<256x64xf32>
    %37 = arith.mulf %26, %36 : vector<256x64xf32>
    %c0_19 = arith.constant 0 : index
    %c0_20 = arith.constant 0 : index
    %38 = vector.load %arg4[%c0_19, %c0_20] : memref<64x64xf32, #tpu.memory_space<vmem>>, vector<64x64xf32>
    %cst_21 = arith.constant dense<0.000000e+00> : vector<256x64xf32>
    %39 = tpu.matmul %1, %38, %cst_21 {dimension_numbers = #tpu.dot_dimension_numbers<[1], [0], [0], [1], [0, 0, 1, 1], [], []>} : vector<256x64xf32>, vector<64x64xf32>, vector<256x64xf32> -> vector<256x64xf32>
    %c0_22 = arith.constant 0 : index
    %c0_23 = arith.constant 0 : index
    %40 = vector.load %arg7[%c0_22, %c0_23] : memref<1x64xf32, #tpu.memory_space<vmem>>, vector<1x64xf32>
    %41 = vector.broadcast %40 : vector<1x64xf32> to vector<256x64xf32>
    %42 = arith.addf %39, %41 : vector<256x64xf32>
    %cst_24 = arith.constant 5.000000e-01 : f32
    %43 = vector.broadcast %cst_24 : f32 to vector<256x64xf32>
    %44 = arith.mulf %43, %42 : vector<256x64xf32>
    %cst_25 = arith.constant 4.471500e-02 : f32
    %45 = vector.broadcast %cst_25 : f32 to vector<256x64xf32>
    %46 = arith.mulf %45, %42 : vector<256x64xf32>
    %47 = arith.mulf %46, %42 : vector<256x64xf32>
    %48 = arith.mulf %47, %42 : vector<256x64xf32>
    %49 = arith.addf %42, %48 : vector<256x64xf32>
    %cst_26 = arith.constant 0.797884583 : f32
    %50 = vector.broadcast %cst_26 : f32 to vector<256x64xf32>
    %51 = arith.mulf %50, %49 : vector<256x64xf32>
    %52 = math.tanh %51 : vector<256x64xf32>
    %cst_27 = arith.constant 1.000000e+00 : f32
    %53 = vector.broadcast %cst_27 : f32 to vector<256x64xf32>
    %54 = arith.addf %53, %52 : vector<256x64xf32>
    %55 = arith.mulf %44, %54 : vector<256x64xf32>
    %56 = vector.extract_strided_slice %19 {offsets = [0, 0], sizes = [64, 64], strides = [1, 1]} : vector<256x64xf32> to vector<64x64xf32>
    %57 = vector.extract_strided_slice %37 {offsets = [0, 0], sizes = [64, 64], strides = [1, 1]} : vector<256x64xf32> to vector<64x64xf32>
    %58 = vector.extract_strided_slice %55 {offsets = [0, 0], sizes = [64, 64], strides = [1, 1]} : vector<256x64xf32> to vector<64x64xf32>
    %cst_28 = arith.constant dense<0.000000e+00> : vector<64x64xf32>
    %59 = tpu.matmul %56, %57, %cst_28 {dimension_numbers = #tpu.dot_dimension_numbers<[1], [1], [0], [0], [0, 0, 1, 0], [], []>} : vector<64x64xf32>, vector<64x64xf32>, vector<64x64xf32> -> vector<64x64xf32>
    %cst_29 = arith.constant 1.250000e-01 : f32
    %60 = vector.broadcast %cst_29 : f32 to vector<64x64xf32>
    %61 = arith.mulf %59, %60 : vector<64x64xf32>
    %cst_30 = arith.constant dense<0xFF800000> : vector<64xf32>
    %62 = vector.multi_reduction <maximumf>, %61, %cst_30 [1] : vector<64x64xf32> to vector<64xf32>
    %63 = vector.shape_cast %62 : vector<64xf32> to vector<64x1xf32>
    %64 = vector.broadcast %63 : vector<64x1xf32> to vector<64x64xf32>
    %65 = arith.subf %61, %64 : vector<64x64xf32>
    %66 = math.exp %65 : vector<64x64xf32>
    %cst_31 = arith.constant dense<0.000000e+00> : vector<64xf32>
    %67 = vector.multi_reduction <add>, %66, %cst_31 [1] : vector<64x64xf32> to vector<64xf32>
    %68 = vector.shape_cast %67 : vector<64xf32> to vector<64x1xf32>
    %69 = vector.broadcast %68 : vector<64x1xf32> to vector<64x64xf32>
    %70 = arith.divf %66, %69 : vector<64x64xf32>
    %cst_32 = arith.constant dense<0.000000e+00> : vector<64x64xf32>
    %71 = tpu.matmul %70, %58, %cst_32 {dimension_numbers = #tpu.dot_dimension_numbers<[1], [0], [0], [1], [0, 0, 1, 1], [], []>} : vector<64x64xf32>, vector<64x64xf32>, vector<64x64xf32> -> vector<64x64xf32>
    %c0_33 = arith.constant 0 : index
    %c0_34 = arith.constant 0 : index
    %c0_35 = arith.constant 0 : index
    %72 = vector.load %arg8[%c0_33, %c0_34, %c0_35] : memref<4x64x64xf32, #tpu.memory_space<vmem>>, vector<1x64x64xf32>
    %73 = vector.shape_cast %72 : vector<1x64x64xf32> to vector<64x64xf32>
    %74 = vector.shape_cast %71 : vector<64x64xf32> to vector<1x64x64xf32>
    tpu.vector_store %arg8[%c0_33, %c0_34, %c0_35], %74 {strides = array<i32>} : memref<4x64x64xf32, #tpu.memory_space<vmem>>, vector<1x64x64xf32>,
    %75 = vector.extract_strided_slice %19 {offsets = [64, 0], sizes = [64, 64], strides = [1, 1]} : vector<256x64xf32> to vector<64x64xf32>
    %76 = vector.extract_strided_slice %37 {offsets = [64, 0], sizes = [64, 64], strides = [1, 1]} : vector<256x64xf32> to vector<64x64xf32>
    %77 = vector.extract_strided_slice %55 {offsets = [64, 0], sizes = [64, 64], strides = [1, 1]} : vector<256x64xf32> to vector<64x64xf32>
    %cst_36 = arith.constant dense<0.000000e+00> : vector<64x64xf32>
    %78 = tpu.matmul %75, %76, %cst_36 {dimension_numbers = #tpu.dot_dimension_numbers<[1], [1], [0], [0], [0, 0, 1, 0], [], []>} : vector<64x64xf32>, vector<64x64xf32>, vector<64x64xf32> -> vector<64x64xf32>
    %cst_37 = arith.constant 1.250000e-01 : f32
    %79 = vector.broadcast %cst_37 : f32 to vector<64x64xf32>
    %80 = arith.mulf %78, %79 : vector<64x64xf32>
    %cst_38 = arith.constant dense<0xFF800000> : vector<64xf32>
    %81 = vector.multi_reduction <maximumf>, %80, %cst_38 [1] : vector<64x64xf32> to vector<64xf32>
    %82 = vector.shape_cast %81 : vector<64xf32> to vector<64x1xf32>
    %83 = vector.broadcast %82 : vector<64x1xf32> to vector<64x64xf32>
    %84 = arith.subf %80, %83 : vector<64x64xf32>
    %85 = math.exp %84 : vector<64x64xf32>
    %cst_39 = arith.constant dense<0.000000e+00> : vector<64xf32>
    %86 = vector.multi_reduction <add>, %85, %cst_39 [1] : vector<64x64xf32> to vector<64xf32>
    %87 = vector.shape_cast %86 : vector<64xf32> to vector<64x1xf32>
    %88 = vector.broadcast %87 : vector<64x1xf32> to vector<64x64xf32>
    %89 = arith.divf %85, %88 : vector<64x64xf32>
    %cst_40 = arith.constant dense<0.000000e+00> : vector<64x64xf32>
    %90 = tpu.matmul %89, %77, %cst_40 {dimension_numbers = #tpu.dot_dimension_numbers<[1], [0], [0], [1], [0, 0, 1, 1], [], []>} : vector<64x64xf32>, vector<64x64xf32>, vector<64x64xf32> -> vector<64x64xf32>
    %c1 = arith.constant 1 : index
    %c0_41 = arith.constant 0 : index
    %c0_42 = arith.constant 0 : index
    %91 = vector.load %arg8[%c1, %c0_41, %c0_42] : memref<4x64x64xf32, #tpu.memory_space<vmem>>, vector<1x64x64xf32>
    %92 = vector.shape_cast %91 : vector<1x64x64xf32> to vector<64x64xf32>
    %93 = vector.shape_cast %90 : vector<64x64xf32> to vector<1x64x64xf32>
    tpu.vector_store %arg8[%c1, %c0_41, %c0_42], %93 {strides = array<i32>} : memref<4x64x64xf32, #tpu.memory_space<vmem>>, vector<1x64x64xf32>,
    %94 = vector.extract_strided_slice %19 {offsets = [128, 0], sizes = [64, 64], strides = [1, 1]} : vector<256x64xf32> to vector<64x64xf32>
    %95 = vector.extract_strided_slice %37 {offsets = [128, 0], sizes = [64, 64], strides = [1, 1]} : vector<256x64xf32> to vector<64x64xf32>
    %96 = vector.extract_strided_slice %55 {offsets = [128, 0], sizes = [64, 64], strides = [1, 1]} : vector<256x64xf32> to vector<64x64xf32>
    %cst_43 = arith.constant dense<0.000000e+00> : vector<64x64xf32>
    %97 = tpu.matmul %94, %95, %cst_43 {dimension_numbers = #tpu.dot_dimension_numbers<[1], [1], [0], [0], [0, 0, 1, 0], [], []>} : vector<64x64xf32>, vector<64x64xf32>, vector<64x64xf32> -> vector<64x64xf32>
    %cst_44 = arith.constant 1.250000e-01 : f32
    %98 = vector.broadcast %cst_44 : f32 to vector<64x64xf32>
    %99 = arith.mulf %97, %98 : vector<64x64xf32>
    %cst_45 = arith.constant dense<0xFF800000> : vector<64xf32>
    %100 = vector.multi_reduction <maximumf>, %99, %cst_45 [1] : vector<64x64xf32> to vector<64xf32>
    %101 = vector.shape_cast %100 : vector<64xf32> to vector<64x1xf32>
    %102 = vector.broadcast %101 : vector<64x1xf32> to vector<64x64xf32>
    %103 = arith.subf %99, %102 : vector<64x64xf32>
    %104 = math.exp %103 : vector<64x64xf32>
    %cst_46 = arith.constant dense<0.000000e+00> : vector<64xf32>
    %105 = vector.multi_reduction <add>, %104, %cst_46 [1] : vector<64x64xf32> to vector<64xf32>
    %106 = vector.shape_cast %105 : vector<64xf32> to vector<64x1xf32>
    %107 = vector.broadcast %106 : vector<64x1xf32> to vector<64x64xf32>
    %108 = arith.divf %104, %107 : vector<64x64xf32>
    %cst_47 = arith.constant dense<0.000000e+00> : vector<64x64xf32>
    %109 = tpu.matmul %108, %96, %cst_47 {dimension_numbers = #tpu.dot_dimension_numbers<[1], [0], [0], [1], [0, 0, 1, 1], [], []>} : vector<64x64xf32>, vector<64x64xf32>, vector<64x64xf32> -> vector<64x64xf32>
    %c2 = arith.constant 2 : index
    %c0_48 = arith.constant 0 : index
    %c0_49 = arith.constant 0 : index
    %110 = vector.load %arg8[%c2, %c0_48, %c0_49] : memref<4x64x64xf32, #tpu.memory_space<vmem>>, vector<1x64x64xf32>
    %111 = vector.shape_cast %110 : vector<1x64x64xf32> to vector<64x64xf32>
    %112 = vector.shape_cast %109 : vector<64x64xf32> to vector<1x64x64xf32>
    tpu.vector_store %arg8[%c2, %c0_48, %c0_49], %112 {strides = array<i32>} : memref<4x64x64xf32, #tpu.memory_space<vmem>>, vector<1x64x64xf32>,
    %113 = vector.extract_strided_slice %19 {offsets = [192, 0], sizes = [64, 64], strides = [1, 1]} : vector<256x64xf32> to vector<64x64xf32>
    %114 = vector.extract_strided_slice %37 {offsets = [192, 0], sizes = [64, 64], strides = [1, 1]} : vector<256x64xf32> to vector<64x64xf32>
    %115 = vector.extract_strided_slice %55 {offsets = [192, 0], sizes = [64, 64], strides = [1, 1]} : vector<256x64xf32> to vector<64x64xf32>
    %cst_50 = arith.constant dense<0.000000e+00> : vector<64x64xf32>
    %116 = tpu.matmul %113, %114, %cst_50 {dimension_numbers = #tpu.dot_dimension_numbers<[1], [1], [0], [0], [0, 0, 1, 0], [], []>} : vector<64x64xf32>, vector<64x64xf32>, vector<64x64xf32> -> vector<64x64xf32>
    %cst_51 = arith.constant 1.250000e-01 : f32
    %117 = vector.broadcast %cst_51 : f32 to vector<64x64xf32>
    %118 = arith.mulf %116, %117 : vector<64x64xf32>
    %cst_52 = arith.constant dense<0xFF800000> : vector<64xf32>
    %119 = vector.multi_reduction <maximumf>, %118, %cst_52 [1] : vector<64x64xf32> to vector<64xf32>
    %120 = vector.shape_cast %119 : vector<64xf32> to vector<64x1xf32>
    %121 = vector.broadcast %120 : vector<64x1xf32> to vector<64x64xf32>
    %122 = arith.subf %118, %121 : vector<64x64xf32>
    %123 = math.exp %122 : vector<64x64xf32>
    %cst_53 = arith.constant dense<0.000000e+00> : vector<64xf32>
    %124 = vector.multi_reduction <add>, %123, %cst_53 [1] : vector<64x64xf32> to vector<64xf32>
    %125 = vector.shape_cast %124 : vector<64xf32> to vector<64x1xf32>
    %126 = vector.broadcast %125 : vector<64x1xf32> to vector<64x64xf32>
    %127 = arith.divf %123, %126 : vector<64x64xf32>
    %cst_54 = arith.constant dense<0.000000e+00> : vector<64x64xf32>
    %128 = tpu.matmul %127, %115, %cst_54 {dimension_numbers = #tpu.dot_dimension_numbers<[1], [0], [0], [1], [0, 0, 1, 1], [], []>} : vector<64x64xf32>, vector<64x64xf32>, vector<64x64xf32> -> vector<64x64xf32>
    %c3 = arith.constant 3 : index
    %c0_55 = arith.constant 0 : index
    %c0_56 = arith.constant 0 : index
    %129 = vector.load %arg8[%c3, %c0_55, %c0_56] : memref<4x64x64xf32, #tpu.memory_space<vmem>>, vector<1x64x64xf32>
    %130 = vector.shape_cast %129 : vector<1x64x64xf32> to vector<64x64xf32>
    %131 = vector.shape_cast %128 : vector<64x64xf32> to vector<1x64x64xf32>
    tpu.vector_store %arg8[%c3, %c0_55, %c0_56], %131 {strides = array<i32>} : memref<4x64x64xf32, #tpu.memory_space<vmem>>, vector<1x64x64xf32>,
    return
  }
  func.func @transform_0(%arg0: i32) -> (i32, i32, i32) {
    %c0_i32 = arith.constant 0 : i32
    %c0_i32_0 = arith.constant 0 : i32
    %c0_i32_1 = arith.constant 0 : i32
    return %arg0, %c0_i32, %c0_i32_0 : i32, i32, i32
  }
  func.func @transform_1(%arg0: i32) -> (i32, i32) {
    %c0_i32 = arith.constant 0 : i32
    %c0_i32_0 = arith.constant 0 : i32
    %c0_i32_1 = arith.constant 0 : i32
    return %c0_i32, %c0_i32_0 : i32, i32
  }
  func.func @transform_2(%arg0: i32) -> (i32, i32) {
    %c0_i32 = arith.constant 0 : i32
    %c0_i32_0 = arith.constant 0 : i32
    %c0_i32_1 = arith.constant 0 : i32
    return %c0_i32, %c0_i32_0 : i32, i32
  }
  func.func @transform_3(%arg0: i32) -> (i32, i32) {
    %c0_i32 = arith.constant 0 : i32
    %c0_i32_0 = arith.constant 0 : i32
    %c0_i32_1 = arith.constant 0 : i32
    return %c0_i32, %c0_i32_0 : i32, i32
  }
  func.func @transform_4(%arg0: i32) -> (i32, i32) {
    %c0_i32 = arith.constant 0 : i32
    %c0_i32_0 = arith.constant 0 : i32
    %c0_i32_1 = arith.constant 0 : i32
    return %c0_i32, %c0_i32_0 : i32, i32
  }
  func.func @transform_5(%arg0: i32) -> (i32, i32) {
    %c0_i32 = arith.constant 0 : i32
    %c0_i32_0 = arith.constant 0 : i32
    %c0_i32_1 = arith.constant 0 : i32
    return %c0_i32, %c0_i32_0 : i32, i32
  }
  func.func @transform_6(%arg0: i32) -> (i32, i32) {
    %c0_i32 = arith.constant 0 : i32
    %c0_i32_0 = arith.constant 0 : i32
    %c0_i32_1 = arith.constant 0 : i32
    return %c0_i32, %c0_i32_0 : i32, i32
  }
  func.func @transform_7(%arg0: i32) -> (i32, i32, i32) {
    %c0_i32 = arith.constant 0 : i32
    %c0_i32_0 = arith.constant 0 : i32
    %c0_i32_1 = arith.constant 0 : i32
    return %arg0, %c0_i32, %c0_i32_0 : i32, i32, i32
  }
}

module attributes {stable_mosaic.version = 11 : i64} {
  func.func @_local_se_proj_kernel(%arg0: i32, %arg1: memref<1x18x18x64xf32, #tpu.memory_space<vmem>>, %arg2: memref<1x16x16x64xf32, #tpu.memory_space<vmem>>, %arg3: memref<9x64xf32, #tpu.memory_space<vmem>>, %arg4: memref<1x64xf32, #tpu.memory_space<vmem>>, %arg5: memref<4x64x64xf32, #tpu.memory_space<vmem>>, %arg6: memref<4x64x64xf32, #tpu.memory_space<vmem>>, %arg7: memref<64x64xf32, #tpu.memory_space<vmem>>, %arg8: memref<1x16x16x64xf32, #tpu.memory_space<vmem>>) attributes {dimension_semantics = [#tpu.dimension_semantics<parallel>], iteration_bounds = array<i64: 2>, scalar_prefetch = 0 : i64, scratch_operands = 0 : i64, tpu.core_type = #tpu.core_type<tc>, window_params = [{transform_indices = @transform_0, window_bounds = array<i64: 1, 18, 18, 64>}, {transform_indices = @transform_1, window_bounds = array<i64: 1, 16, 16, 64>}, {pipeline_mode = #tpu.pipeline_mode<synchronous>, transform_indices = @transform_2, window_bounds = array<i64: 9, 64>}, {pipeline_mode = #tpu.pipeline_mode<synchronous>, transform_indices = @transform_3, window_bounds = array<i64: 1, 64>}, {pipeline_mode = #tpu.pipeline_mode<synchronous>, transform_indices = @transform_4, window_bounds = array<i64: 4, 64, 64>}, {pipeline_mode = #tpu.pipeline_mode<synchronous>, transform_indices = @transform_5, window_bounds = array<i64: 4, 64, 64>}, {pipeline_mode = #tpu.pipeline_mode<synchronous>, transform_indices = @transform_6, window_bounds = array<i64: 64, 64>}, {transform_indices = @transform_7, window_bounds = array<i64: 1, 16, 16, 64>}]} {
    %cst = arith.constant 0.000000e+00 : f32
    %0 = vector.broadcast %cst : f32 to vector<16x16x64xf32>
    %c0 = arith.constant 0 : index
    %c0_0 = arith.constant 0 : index
    %c0_1 = arith.constant 0 : index
    %c0_2 = arith.constant 0 : index
    %1 = vector.load %arg1[%c0, %c0_0, %c0_1, %c0_2] : memref<1x18x18x64xf32, #tpu.memory_space<vmem>>, vector<1x16x16x64xf32>
    %2 = vector.shape_cast %1 : vector<1x16x16x64xf32> to vector<16x16x64xf32>
    %c0_3 = arith.constant 0 : index
    %c0_4 = arith.constant 0 : index
    %3 = vector.load %arg3[%c0_3, %c0_4] : memref<9x64xf32, #tpu.memory_space<vmem>>, vector<1x64xf32>
    %4 = vector.shape_cast %3 : vector<1x64xf32> to vector<64xf32>
    %5 = vector.shape_cast %4 : vector<64xf32> to vector<1x1x64xf32>
    %6 = vector.broadcast %5 : vector<1x1x64xf32> to vector<16x16x64xf32>
    %7 = arith.mulf %2, %6 : vector<16x16x64xf32>
    %8 = arith.addf %0, %7 : vector<16x16x64xf32>
    %c0_5 = arith.constant 0 : index
    %c0_6 = arith.constant 0 : index
    %c1 = arith.constant 1 : index
    %c0_7 = arith.constant 0 : index
    %9 = vector.load %arg1[%c0_5, %c0_6, %c1, %c0_7] : memref<1x18x18x64xf32, #tpu.memory_space<vmem>>, vector<1x16x16x64xf32>
    %10 = vector.shape_cast %9 : vector<1x16x16x64xf32> to vector<16x16x64xf32>
    %c1_8 = arith.constant 1 : index
    %c0_9 = arith.constant 0 : index
    %11 = vector.load %arg3[%c1_8, %c0_9] : memref<9x64xf32, #tpu.memory_space<vmem>>, vector<1x64xf32>
    %12 = vector.shape_cast %11 : vector<1x64xf32> to vector<64xf32>
    %13 = vector.shape_cast %12 : vector<64xf32> to vector<1x1x64xf32>
    %14 = vector.broadcast %13 : vector<1x1x64xf32> to vector<16x16x64xf32>
    %15 = arith.mulf %10, %14 : vector<16x16x64xf32>
    %16 = arith.addf %8, %15 : vector<16x16x64xf32>
    %c0_10 = arith.constant 0 : index
    %c0_11 = arith.constant 0 : index
    %c2 = arith.constant 2 : index
    %c0_12 = arith.constant 0 : index
    %17 = vector.load %arg1[%c0_10, %c0_11, %c2, %c0_12] : memref<1x18x18x64xf32, #tpu.memory_space<vmem>>, vector<1x16x16x64xf32>
    %18 = vector.shape_cast %17 : vector<1x16x16x64xf32> to vector<16x16x64xf32>
    %c2_13 = arith.constant 2 : index
    %c0_14 = arith.constant 0 : index
    %19 = vector.load %arg3[%c2_13, %c0_14] : memref<9x64xf32, #tpu.memory_space<vmem>>, vector<1x64xf32>
    %20 = vector.shape_cast %19 : vector<1x64xf32> to vector<64xf32>
    %21 = vector.shape_cast %20 : vector<64xf32> to vector<1x1x64xf32>
    %22 = vector.broadcast %21 : vector<1x1x64xf32> to vector<16x16x64xf32>
    %23 = arith.mulf %18, %22 : vector<16x16x64xf32>
    %24 = arith.addf %16, %23 : vector<16x16x64xf32>
    %c0_15 = arith.constant 0 : index
    %c1_16 = arith.constant 1 : index
    %c0_17 = arith.constant 0 : index
    %c0_18 = arith.constant 0 : index
    %25 = vector.load %arg1[%c0_15, %c1_16, %c0_17, %c0_18] : memref<1x18x18x64xf32, #tpu.memory_space<vmem>>, vector<1x16x16x64xf32>
    %26 = vector.shape_cast %25 : vector<1x16x16x64xf32> to vector<16x16x64xf32>
    %c3 = arith.constant 3 : index
    %c0_19 = arith.constant 0 : index
    %27 = vector.load %arg3[%c3, %c0_19] : memref<9x64xf32, #tpu.memory_space<vmem>>, vector<1x64xf32>
    %28 = vector.shape_cast %27 : vector<1x64xf32> to vector<64xf32>
    %29 = vector.shape_cast %28 : vector<64xf32> to vector<1x1x64xf32>
    %30 = vector.broadcast %29 : vector<1x1x64xf32> to vector<16x16x64xf32>
    %31 = arith.mulf %26, %30 : vector<16x16x64xf32>
    %32 = arith.addf %24, %31 : vector<16x16x64xf32>
    %c0_20 = arith.constant 0 : index
    %c1_21 = arith.constant 1 : index
    %c1_22 = arith.constant 1 : index
    %c0_23 = arith.constant 0 : index
    %33 = vector.load %arg1[%c0_20, %c1_21, %c1_22, %c0_23] : memref<1x18x18x64xf32, #tpu.memory_space<vmem>>, vector<1x16x16x64xf32>
    %34 = vector.shape_cast %33 : vector<1x16x16x64xf32> to vector<16x16x64xf32>
    %c4 = arith.constant 4 : index
    %c0_24 = arith.constant 0 : index
    %35 = vector.load %arg3[%c4, %c0_24] : memref<9x64xf32, #tpu.memory_space<vmem>>, vector<1x64xf32>
    %36 = vector.shape_cast %35 : vector<1x64xf32> to vector<64xf32>
    %37 = vector.shape_cast %36 : vector<64xf32> to vector<1x1x64xf32>
    %38 = vector.broadcast %37 : vector<1x1x64xf32> to vector<16x16x64xf32>
    %39 = arith.mulf %34, %38 : vector<16x16x64xf32>
    %40 = arith.addf %32, %39 : vector<16x16x64xf32>
    %c0_25 = arith.constant 0 : index
    %c1_26 = arith.constant 1 : index
    %c2_27 = arith.constant 2 : index
    %c0_28 = arith.constant 0 : index
    %41 = vector.load %arg1[%c0_25, %c1_26, %c2_27, %c0_28] : memref<1x18x18x64xf32, #tpu.memory_space<vmem>>, vector<1x16x16x64xf32>
    %42 = vector.shape_cast %41 : vector<1x16x16x64xf32> to vector<16x16x64xf32>
    %c5 = arith.constant 5 : index
    %c0_29 = arith.constant 0 : index
    %43 = vector.load %arg3[%c5, %c0_29] : memref<9x64xf32, #tpu.memory_space<vmem>>, vector<1x64xf32>
    %44 = vector.shape_cast %43 : vector<1x64xf32> to vector<64xf32>
    %45 = vector.shape_cast %44 : vector<64xf32> to vector<1x1x64xf32>
    %46 = vector.broadcast %45 : vector<1x1x64xf32> to vector<16x16x64xf32>
    %47 = arith.mulf %42, %46 : vector<16x16x64xf32>
    %48 = arith.addf %40, %47 : vector<16x16x64xf32>
    %c0_30 = arith.constant 0 : index
    %c2_31 = arith.constant 2 : index
    %c0_32 = arith.constant 0 : index
    %c0_33 = arith.constant 0 : index
    %49 = vector.load %arg1[%c0_30, %c2_31, %c0_32, %c0_33] : memref<1x18x18x64xf32, #tpu.memory_space<vmem>>, vector<1x16x16x64xf32>
    %50 = vector.shape_cast %49 : vector<1x16x16x64xf32> to vector<16x16x64xf32>
    %c6 = arith.constant 6 : index
    %c0_34 = arith.constant 0 : index
    %51 = vector.load %arg3[%c6, %c0_34] : memref<9x64xf32, #tpu.memory_space<vmem>>, vector<1x64xf32>
    %52 = vector.shape_cast %51 : vector<1x64xf32> to vector<64xf32>
    %53 = vector.shape_cast %52 : vector<64xf32> to vector<1x1x64xf32>
    %54 = vector.broadcast %53 : vector<1x1x64xf32> to vector<16x16x64xf32>
    %55 = arith.mulf %50, %54 : vector<16x16x64xf32>
    %56 = arith.addf %48, %55 : vector<16x16x64xf32>
    %c0_35 = arith.constant 0 : index
    %c2_36 = arith.constant 2 : index
    %c1_37 = arith.constant 1 : index
    %c0_38 = arith.constant 0 : index
    %57 = vector.load %arg1[%c0_35, %c2_36, %c1_37, %c0_38] : memref<1x18x18x64xf32, #tpu.memory_space<vmem>>, vector<1x16x16x64xf32>
    %58 = vector.shape_cast %57 : vector<1x16x16x64xf32> to vector<16x16x64xf32>
    %c7 = arith.constant 7 : index
    %c0_39 = arith.constant 0 : index
    %59 = vector.load %arg3[%c7, %c0_39] : memref<9x64xf32, #tpu.memory_space<vmem>>, vector<1x64xf32>
    %60 = vector.shape_cast %59 : vector<1x64xf32> to vector<64xf32>
    %61 = vector.shape_cast %60 : vector<64xf32> to vector<1x1x64xf32>
    %62 = vector.broadcast %61 : vector<1x1x64xf32> to vector<16x16x64xf32>
    %63 = arith.mulf %58, %62 : vector<16x16x64xf32>
    %64 = arith.addf %56, %63 : vector<16x16x64xf32>
    %c0_40 = arith.constant 0 : index
    %c2_41 = arith.constant 2 : index
    %c2_42 = arith.constant 2 : index
    %c0_43 = arith.constant 0 : index
    %65 = vector.load %arg1[%c0_40, %c2_41, %c2_42, %c0_43] : memref<1x18x18x64xf32, #tpu.memory_space<vmem>>, vector<1x16x16x64xf32>
    %66 = vector.shape_cast %65 : vector<1x16x16x64xf32> to vector<16x16x64xf32>
    %c8 = arith.constant 8 : index
    %c0_44 = arith.constant 0 : index
    %67 = vector.load %arg3[%c8, %c0_44] : memref<9x64xf32, #tpu.memory_space<vmem>>, vector<1x64xf32>
    %68 = vector.shape_cast %67 : vector<1x64xf32> to vector<64xf32>
    %69 = vector.shape_cast %68 : vector<64xf32> to vector<1x1x64xf32>
    %70 = vector.broadcast %69 : vector<1x1x64xf32> to vector<16x16x64xf32>
    %71 = arith.mulf %66, %70 : vector<16x16x64xf32>
    %72 = arith.addf %64, %71 : vector<16x16x64xf32>
    %c0_45 = arith.constant 0 : index
    %c0_46 = arith.constant 0 : index
    %73 = vector.load %arg4[%c0_45, %c0_46] : memref<1x64xf32, #tpu.memory_space<vmem>>, vector<1x64xf32>
    %74 = vector.shape_cast %73 : vector<1x64xf32> to vector<1x1x64xf32>
    %75 = vector.broadcast %74 : vector<1x1x64xf32> to vector<16x16x64xf32>
    %76 = arith.addf %72, %75 : vector<16x16x64xf32>
    %cst_47 = arith.constant 5.000000e-01 : f32
    %77 = vector.broadcast %cst_47 : f32 to vector<16x16x64xf32>
    %78 = arith.mulf %77, %76 : vector<16x16x64xf32>
    %cst_48 = arith.constant 4.471500e-02 : f32
    %79 = vector.broadcast %cst_48 : f32 to vector<16x16x64xf32>
    %80 = arith.mulf %79, %76 : vector<16x16x64xf32>
    %81 = arith.mulf %80, %76 : vector<16x16x64xf32>
    %82 = arith.mulf %81, %76 : vector<16x16x64xf32>
    %83 = arith.addf %76, %82 : vector<16x16x64xf32>
    %cst_49 = arith.constant 0.797884583 : f32
    %84 = vector.broadcast %cst_49 : f32 to vector<16x16x64xf32>
    %85 = arith.mulf %84, %83 : vector<16x16x64xf32>
    %86 = math.tanh %85 : vector<16x16x64xf32>
    %cst_50 = arith.constant 1.000000e+00 : f32
    %87 = vector.broadcast %cst_50 : f32 to vector<16x16x64xf32>
    %88 = arith.addf %87, %86 : vector<16x16x64xf32>
    %89 = arith.mulf %78, %88 : vector<16x16x64xf32>
    %cst_51 = arith.constant dense<0.000000e+00> : vector<16x64xf32>
    %90 = vector.multi_reduction <add>, %89, %cst_51 [0] : vector<16x16x64xf32> to vector<16x64xf32>
    %cst_52 = arith.constant dense<0.000000e+00> : vector<64xf32>
    %91 = vector.multi_reduction <add>, %90, %cst_52 [0] : vector<16x64xf32> to vector<64xf32>
    %92 = vector.shape_cast %91 : vector<64xf32> to vector<1x64xf32>
    %cst_53 = arith.constant 3.906250e-03 : f32
    %93 = vector.broadcast %cst_53 : f32 to vector<1x64xf32>
    %94 = arith.mulf %92, %93 : vector<1x64xf32>
    %c0_54 = arith.constant 0 : index
    %c0_55 = arith.constant 0 : index
    %c0_56 = arith.constant 0 : index
    %95 = vector.load %arg5[%c0_54, %c0_55, %c0_56] : memref<4x64x64xf32, #tpu.memory_space<vmem>>, vector<1x64x64xf32>
    %96 = vector.shape_cast %95 : vector<1x64x64xf32> to vector<64x64xf32>
    %cst_57 = arith.constant dense<0.000000e+00> : vector<1x64xf32>
    %97 = tpu.matmul %94, %96, %cst_57 {dimension_numbers = #tpu.dot_dimension_numbers<[1], [0], [0], [1], [0, 0, 1, 1], [], []>} : vector<1x64xf32>, vector<64x64xf32>, vector<1x64xf32> -> vector<1x64xf32>
    %cst_58 = arith.constant 0.000000e+00 : f32
    %98 = vector.broadcast %cst_58 : f32 to vector<1x64xf32>
    %99 = arith.maximumf %97, %98 : vector<1x64xf32>
    %c0_59 = arith.constant 0 : index
    %c0_60 = arith.constant 0 : index
    %c0_61 = arith.constant 0 : index
    %100 = vector.load %arg6[%c0_59, %c0_60, %c0_61] : memref<4x64x64xf32, #tpu.memory_space<vmem>>, vector<1x64x64xf32>
    %101 = vector.shape_cast %100 : vector<1x64x64xf32> to vector<64x64xf32>
    %cst_62 = arith.constant dense<0.000000e+00> : vector<1x64xf32>
    %102 = tpu.matmul %99, %101, %cst_62 {dimension_numbers = #tpu.dot_dimension_numbers<[1], [0], [0], [1], [0, 0, 1, 1], [], []>} : vector<1x64xf32>, vector<64x64xf32>, vector<1x64xf32> -> vector<1x64xf32>
    %c1_63 = arith.constant 1 : index
    %c0_64 = arith.constant 0 : index
    %c0_65 = arith.constant 0 : index
    %103 = vector.load %arg5[%c1_63, %c0_64, %c0_65] : memref<4x64x64xf32, #tpu.memory_space<vmem>>, vector<1x64x64xf32>
    %104 = vector.shape_cast %103 : vector<1x64x64xf32> to vector<64x64xf32>
    %cst_66 = arith.constant dense<0.000000e+00> : vector<1x64xf32>
    %105 = tpu.matmul %94, %104, %cst_66 {dimension_numbers = #tpu.dot_dimension_numbers<[1], [0], [0], [1], [0, 0, 1, 1], [], []>} : vector<1x64xf32>, vector<64x64xf32>, vector<1x64xf32> -> vector<1x64xf32>
    %cst_67 = arith.constant 0.000000e+00 : f32
    %106 = vector.broadcast %cst_67 : f32 to vector<1x64xf32>
    %107 = arith.maximumf %105, %106 : vector<1x64xf32>
    %c1_68 = arith.constant 1 : index
    %c0_69 = arith.constant 0 : index
    %c0_70 = arith.constant 0 : index
    %108 = vector.load %arg6[%c1_68, %c0_69, %c0_70] : memref<4x64x64xf32, #tpu.memory_space<vmem>>, vector<1x64x64xf32>
    %109 = vector.shape_cast %108 : vector<1x64x64xf32> to vector<64x64xf32>
    %cst_71 = arith.constant dense<0.000000e+00> : vector<1x64xf32>
    %110 = tpu.matmul %107, %109, %cst_71 {dimension_numbers = #tpu.dot_dimension_numbers<[1], [0], [0], [1], [0, 0, 1, 1], [], []>} : vector<1x64xf32>, vector<64x64xf32>, vector<1x64xf32> -> vector<1x64xf32>
    %111 = arith.addf %102, %110 : vector<1x64xf32>
    %c2_72 = arith.constant 2 : index
    %c0_73 = arith.constant 0 : index
    %c0_74 = arith.constant 0 : index
    %112 = vector.load %arg5[%c2_72, %c0_73, %c0_74] : memref<4x64x64xf32, #tpu.memory_space<vmem>>, vector<1x64x64xf32>
    %113 = vector.shape_cast %112 : vector<1x64x64xf32> to vector<64x64xf32>
    %cst_75 = arith.constant dense<0.000000e+00> : vector<1x64xf32>
    %114 = tpu.matmul %94, %113, %cst_75 {dimension_numbers = #tpu.dot_dimension_numbers<[1], [0], [0], [1], [0, 0, 1, 1], [], []>} : vector<1x64xf32>, vector<64x64xf32>, vector<1x64xf32> -> vector<1x64xf32>
    %cst_76 = arith.constant 0.000000e+00 : f32
    %115 = vector.broadcast %cst_76 : f32 to vector<1x64xf32>
    %116 = arith.maximumf %114, %115 : vector<1x64xf32>
    %c2_77 = arith.constant 2 : index
    %c0_78 = arith.constant 0 : index
    %c0_79 = arith.constant 0 : index
    %117 = vector.load %arg6[%c2_77, %c0_78, %c0_79] : memref<4x64x64xf32, #tpu.memory_space<vmem>>, vector<1x64x64xf32>
    %118 = vector.shape_cast %117 : vector<1x64x64xf32> to vector<64x64xf32>
    %cst_80 = arith.constant dense<0.000000e+00> : vector<1x64xf32>
    %119 = tpu.matmul %116, %118, %cst_80 {dimension_numbers = #tpu.dot_dimension_numbers<[1], [0], [0], [1], [0, 0, 1, 1], [], []>} : vector<1x64xf32>, vector<64x64xf32>, vector<1x64xf32> -> vector<1x64xf32>
    %120 = arith.addf %111, %119 : vector<1x64xf32>
    %c3_81 = arith.constant 3 : index
    %c0_82 = arith.constant 0 : index
    %c0_83 = arith.constant 0 : index
    %121 = vector.load %arg5[%c3_81, %c0_82, %c0_83] : memref<4x64x64xf32, #tpu.memory_space<vmem>>, vector<1x64x64xf32>
    %122 = vector.shape_cast %121 : vector<1x64x64xf32> to vector<64x64xf32>
    %cst_84 = arith.constant dense<0.000000e+00> : vector<1x64xf32>
    %123 = tpu.matmul %94, %122, %cst_84 {dimension_numbers = #tpu.dot_dimension_numbers<[1], [0], [0], [1], [0, 0, 1, 1], [], []>} : vector<1x64xf32>, vector<64x64xf32>, vector<1x64xf32> -> vector<1x64xf32>
    %cst_85 = arith.constant 0.000000e+00 : f32
    %124 = vector.broadcast %cst_85 : f32 to vector<1x64xf32>
    %125 = arith.maximumf %123, %124 : vector<1x64xf32>
    %c3_86 = arith.constant 3 : index
    %c0_87 = arith.constant 0 : index
    %c0_88 = arith.constant 0 : index
    %126 = vector.load %arg6[%c3_86, %c0_87, %c0_88] : memref<4x64x64xf32, #tpu.memory_space<vmem>>, vector<1x64x64xf32>
    %127 = vector.shape_cast %126 : vector<1x64x64xf32> to vector<64x64xf32>
    %cst_89 = arith.constant dense<0.000000e+00> : vector<1x64xf32>
    %128 = tpu.matmul %125, %127, %cst_89 {dimension_numbers = #tpu.dot_dimension_numbers<[1], [0], [0], [1], [0, 0, 1, 1], [], []>} : vector<1x64xf32>, vector<64x64xf32>, vector<1x64xf32> -> vector<1x64xf32>
    %129 = arith.addf %120, %128 : vector<1x64xf32>
    %130 = arith.negf %129 : vector<1x64xf32>
    %131 = math.exp %130 : vector<1x64xf32>
    %cst_90 = arith.constant 1.000000e+00 : f32
    %132 = vector.broadcast %cst_90 : f32 to vector<1x64xf32>
    %133 = arith.addf %132, %131 : vector<1x64xf32>
    %134 = arith.divf %132, %133 : vector<1x64xf32>
    %c0_91 = arith.constant 0 : index
    %c1_92 = arith.constant 1 : index
    %c1_93 = arith.constant 1 : index
    %c0_94 = arith.constant 0 : index
    %135 = vector.load %arg1[%c0_91, %c1_92, %c1_93, %c0_94] : memref<1x18x18x64xf32, #tpu.memory_space<vmem>>, vector<1x16x16x64xf32>
    %136 = vector.shape_cast %135 : vector<1x16x16x64xf32> to vector<16x16x64xf32>
    %137 = vector.shape_cast %134 : vector<1x64xf32> to vector<1x1x64xf32>
    %138 = vector.broadcast %137 : vector<1x1x64xf32> to vector<16x16x64xf32>
    %139 = arith.mulf %89, %138 : vector<16x16x64xf32>
    %140 = arith.addf %136, %139 : vector<16x16x64xf32>
    %141 = vector.shape_cast %140 : vector<16x16x64xf32> to vector<256x64xf32>
    %c0_95 = arith.constant 0 : index
    %c0_96 = arith.constant 0 : index
    %142 = vector.load %arg7[%c0_95, %c0_96] : memref<64x64xf32, #tpu.memory_space<vmem>>, vector<64x64xf32>
    %cst_97 = arith.constant dense<0.000000e+00> : vector<256x64xf32>
    %143 = tpu.matmul %141, %142, %cst_97 {dimension_numbers = #tpu.dot_dimension_numbers<[1], [0], [0], [1], [0, 0, 1, 1], [], []>} : vector<256x64xf32>, vector<64x64xf32>, vector<256x64xf32> -> vector<256x64xf32>
    %cst_98 = arith.constant 5.000000e-01 : f32
    %144 = vector.broadcast %cst_98 : f32 to vector<256x64xf32>
    %145 = arith.mulf %144, %143 : vector<256x64xf32>
    %cst_99 = arith.constant 4.471500e-02 : f32
    %146 = vector.broadcast %cst_99 : f32 to vector<256x64xf32>
    %147 = arith.mulf %146, %143 : vector<256x64xf32>
    %148 = arith.mulf %147, %143 : vector<256x64xf32>
    %149 = arith.mulf %148, %143 : vector<256x64xf32>
    %150 = arith.addf %143, %149 : vector<256x64xf32>
    %cst_100 = arith.constant 0.797884583 : f32
    %151 = vector.broadcast %cst_100 : f32 to vector<256x64xf32>
    %152 = arith.mulf %151, %150 : vector<256x64xf32>
    %153 = math.tanh %152 : vector<256x64xf32>
    %cst_101 = arith.constant 1.000000e+00 : f32
    %154 = vector.broadcast %cst_101 : f32 to vector<256x64xf32>
    %155 = arith.addf %154, %153 : vector<256x64xf32>
    %156 = arith.mulf %145, %155 : vector<256x64xf32>
    %157 = vector.shape_cast %156 : vector<256x64xf32> to vector<16x16x64xf32>
    %c0_102 = arith.constant 0 : index
    %c0_103 = arith.constant 0 : index
    %c0_104 = arith.constant 0 : index
    %c0_105 = arith.constant 0 : index
    %158 = vector.load %arg2[%c0_102, %c0_103, %c0_104, %c0_105] : memref<1x16x16x64xf32, #tpu.memory_space<vmem>>, vector<1x16x16x64xf32>
    %159 = vector.shape_cast %158 : vector<1x16x16x64xf32> to vector<16x16x64xf32>
    %160 = arith.addf %157, %159 : vector<16x16x64xf32>
    %c0_106 = arith.constant 0 : index
    %c0_107 = arith.constant 0 : index
    %c0_108 = arith.constant 0 : index
    %c0_109 = arith.constant 0 : index
    %161 = vector.load %arg8[%c0_106, %c0_107, %c0_108, %c0_109] : memref<1x16x16x64xf32, #tpu.memory_space<vmem>>, vector<1x16x16x64xf32>
    %162 = vector.shape_cast %161 : vector<1x16x16x64xf32> to vector<16x16x64xf32>
    %163 = vector.shape_cast %160 : vector<16x16x64xf32> to vector<1x16x16x64xf32>
    tpu.vector_store %arg8[%c0_106, %c0_107, %c0_108, %c0_109], %163 {strides = array<i32>} : memref<1x16x16x64xf32, #tpu.memory_space<vmem>>, vector<1x16x16x64xf32>,
    return
  }
  func.func @transform_0(%arg0: i32) -> (i32, i32, i32, i32) {
    %c0_i32 = arith.constant 0 : i32
    %c0_i32_0 = arith.constant 0 : i32
    %c0_i32_1 = arith.constant 0 : i32
    %c0_i32_2 = arith.constant 0 : i32
    return %arg0, %c0_i32, %c0_i32_0, %c0_i32_1 : i32, i32, i32, i32
  }
  func.func @transform_1(%arg0: i32) -> (i32, i32, i32, i32) {
    %c0_i32 = arith.constant 0 : i32
    %c0_i32_0 = arith.constant 0 : i32
    %c0_i32_1 = arith.constant 0 : i32
    %c0_i32_2 = arith.constant 0 : i32
    return %arg0, %c0_i32, %c0_i32_0, %c0_i32_1 : i32, i32, i32, i32
  }
  func.func @transform_2(%arg0: i32) -> (i32, i32) {
    %c0_i32 = arith.constant 0 : i32
    %c0_i32_0 = arith.constant 0 : i32
    %c0_i32_1 = arith.constant 0 : i32
    return %c0_i32, %c0_i32_0 : i32, i32
  }
  func.func @transform_3(%arg0: i32) -> (i32, i32) {
    %c0_i32 = arith.constant 0 : i32
    %c0_i32_0 = arith.constant 0 : i32
    %c0_i32_1 = arith.constant 0 : i32
    return %c0_i32, %c0_i32_0 : i32, i32
  }
  func.func @transform_4(%arg0: i32) -> (i32, i32, i32) {
    %c0_i32 = arith.constant 0 : i32
    %c0_i32_0 = arith.constant 0 : i32
    %c0_i32_1 = arith.constant 0 : i32
    %c0_i32_2 = arith.constant 0 : i32
    return %c0_i32, %c0_i32_0, %c0_i32_1 : i32, i32, i32
  }
  func.func @transform_5(%arg0: i32) -> (i32, i32, i32) {
    %c0_i32 = arith.constant 0 : i32
    %c0_i32_0 = arith.constant 0 : i32
    %c0_i32_1 = arith.constant 0 : i32
    %c0_i32_2 = arith.constant 0 : i32
    return %c0_i32, %c0_i32_0, %c0_i32_1 : i32, i32, i32
  }
  func.func @transform_6(%arg0: i32) -> (i32, i32) {
    %c0_i32 = arith.constant 0 : i32
    %c0_i32_0 = arith.constant 0 : i32
    %c0_i32_1 = arith.constant 0 : i32
    return %c0_i32, %c0_i32_0 : i32, i32
  }
  func.func @transform_7(%arg0: i32) -> (i32, i32, i32, i32) {
    %c0_i32 = arith.constant 0 : i32
    %c0_i32_0 = arith.constant 0 : i32
    %c0_i32_1 = arith.constant 0 : i32
    %c0_i32_2 = arith.constant 0 : i32
    return %arg0, %c0_i32, %c0_i32_0, %c0_i32_1 : i32, i32, i32, i32
  }
}

</mosaic_0001>

<llo_original>
// kernel: irmb_forward.2
$region0: #{irmb_forward.2}
  #allocation0 [shape = 'u32[]', space=smem, size = 0x4, offset = 0x4, fixed_abs, tag = 'smem constant byte address 0x4 - core index']
  #allocation1 [shape = 'u32[144,128]{1,0:T(1,128)}', space=vmem, size = 0x12000, scoped, tag = 'internal scratch']
  %s0 = inlined_call_operand.vmem [shape: f32[8,64,64], index: 0, kind: input, shape index: {}]
  %s1 = inlined_call_operand.vmem [shape: f32[64,64], index: 1, kind: input, shape index: {}]
  %s2 = inlined_call_operand.vmem [shape: f32[64,64], index: 2, kind: input, shape index: {}]
  %s3 = inlined_call_operand.vmem [shape: f32[64,64], index: 3, kind: input, shape index: {}]
  %s4 = inlined_call_operand.vmem [shape: f32[1,64], index: 4, kind: input, shape index: {}]
  %s5 = inlined_call_operand.vmem [shape: f32[1,64], index: 5, kind: input, shape index: {}]
  %s6 = inlined_call_operand.vmem [shape: f32[1,64], index: 6, kind: input, shape index: {}]
  %s7 = inlined_call_operand.vmem [shape: f32[8,64,64], index: 7, kind: output, shape index: {}]
  %s8 = sld [smem:[#allocation0]]
  $region61: #{irmb_forward.2} parent=0
    _
  %s10 = ssub.s32 1, %s8
  %s11 = scalar_select 0, %s10, %s8
  loop: start=0, step=1, limit=4
  $region2: #{irmb_forward.2} parent=0 // loop_pre_header
    _
  $region3: #{irmb_forward.2} parent=0 // loop_header
    %s13 = sphi 0, %s17
    %p14 = scmp.ge.s32.totalorder %s13, 4
    %s23 = sphi 0, %s25
    %s26 = sphi 0, %s23
    %s27 = sphi 0, %s26
    %s43 = sphi 0, %s27
    %s47 = sphi 0, %s47
    %s49 = sphi 0, %s47
    %s50 = sphi 0, %s49
    %s64 = sphi 0, %s50
    %s68 = sphi 0, %s68
    %s70 = sphi 0, %s68
    %s71 = sphi 0, %s70
    %s85 = sphi 0, %s71
    %s89 = sphi 0, %s89
    %s91 = sphi 0, %s89
    %s92 = sphi 0, %s91
    %s106 = sphi 0, %s92
    %s110 = sphi 0, %s110
    %s112 = sphi 0, %s110
    %s113 = sphi 0, %s112
    %s127 = sphi 0, %s113
    %s131 = sphi 0, %s131
    %s133 = sphi 0, %s131
    %s134 = sphi 0, %s133
    %s148 = sphi 0, %s134
    %s152 = sphi 0, %s152
    %s154 = sphi 0, %s152
    %s155 = sphi 0, %s154
    %s169 = sphi 0, %s155
    %s175 = sphi 0, %s177
    %s178 = sphi 0, %s175
    %s179 = sphi 0, %s178
    %s195 = sphi 0, %s179
  $region4: #{irmb_forward.2} parent=0 // loop_header_branch
    %16 = sbr.rel (%p14) target = $region8
  $region5: #{irmb_forward.2} parent=0 // loop_body
    %s18 = ssub.s32 %s13, 1
    %s19 = ssub.s32 %s13, 2
    %s20 = sadd.s32 %s13, 1
    %s21 = ssub.s32 %s13, %s20
    %p22 = scmp.eq.s32.totalorder %s21, 0
    %s24 = sadd.s32 %s23, 1
    %s25 = scalar_select %p22, %s23, %s24
    %p28 = pneg %p22
    %p29 = scmp.eq.s32.totalorder %s13, 1
    %p30 = por %p28, %p29
    %p31 = scmp.ne.s32.totalorder %s23, %s26
    %p32 = scmp.eq.s32.totalorder %s13, 0
    %p33 = por %p31, %p32
    %p34 = scmp.ne.s32.totalorder %s23, %s26
    %p35 = scmp.eq.s32.totalorder %s18, 1
    %p36 = por %p34, %p35
    %p37 = scmp.ne.s32.totalorder %s26, %s27
    %p38 = scmp.eq.s32.totalorder %s18, 0
    %p39 = por %p37, %p38
    %p40 = scmp.ne.s32.totalorder %s26, %s27
    %p41 = scmp.eq.s32.totalorder %s19, 1
    %p42 = por %p40, %p41
    %p44 = scmp.ne.s32.totalorder %s27, %s43
    %p45 = scmp.eq.s32.totalorder %s19, 0
    %p46 = por %p44, %p45
    %s48 = sadd.s32 %s47, 1
    %p51 = scmp.eq.s32.totalorder %s13, 1
    %p52 = scmp.ne.s32.totalorder %s47, %s49
    %p53 = scmp.eq.s32.totalorder %s13, 0
    %p54 = por %p52, %p53
    %p55 = scmp.ne.s32.totalorder %s47, %s49
    %p56 = scmp.eq.s32.totalorder %s18, 1
    %p57 = por %p55, %p56
    %p58 = scmp.ne.s32.totalorder %s49, %s50
    %p59 = scmp.eq.s32.totalorder %s18, 0
    %p60 = por %p58, %p59
    %p61 = scmp.ne.s32.totalorder %s49, %s50
    %p62 = scmp.eq.s32.totalorder %s19, 1
    %p63 = por %p61, %p62
    %p65 = scmp.ne.s32.totalorder %s50, %s64
    %p66 = scmp.eq.s32.totalorder %s19, 0
    %p67 = por %p65, %p66
    %s69 = sadd.s32 %s68, 1
    %p72 = scmp.eq.s32.totalorder %s13, 1
    %p73 = scmp.ne.s32.totalorder %s68, %s70
    %p74 = scmp.eq.s32.totalorder %s13, 0
    %p75 = por %p73, %p74
    %p76 = scmp.ne.s32.totalorder %s68, %s70
    %p77 = scmp.eq.s32.totalorder %s18, 1
    %p78 = por %p76, %p77
    %p79 = scmp.ne.s32.totalorder %s70, %s71
    %p80 = scmp.eq.s32.totalorder %s18, 0
    %p81 = por %p79, %p80
    %p82 = scmp.ne.s32.totalorder %s70, %s71
    %p83 = scmp.eq.s32.totalorder %s19, 1
    %p84 = por %p82, %p83
    %p86 = scmp.ne.s32.totalorder %s71, %s85
    %p87 = scmp.eq.s32.totalorder %s19, 0
    %p88 = por %p86, %p87
    %s90 = sadd.s32 %s89, 1
    %p93 = scmp.eq.s32.totalorder %s13, 1
    %p94 = scmp.ne.s32.totalorder %s89, %s91
    %p95 = scmp.eq.s32.totalorder %s13, 0
    %p96 = por %p94, %p95
    %p97 = scmp.ne.s32.totalorder %s89, %s91
    %p98 = scmp.eq.s32.totalorder %s18, 1
    %p99 = por %p97, %p98
    %p100 = scmp.ne.s32.totalorder %s91, %s92
    %p101 = scmp.eq.s32.totalorder %s18, 0
    %p102 = por %p100, %p101
    %p103 = scmp.ne.s32.totalorder %s91, %s92
    %p104 = scmp.eq.s32.totalorder %s19, 1
    %p105 = por %p103, %p104
    %p107 = scmp.ne.s32.totalorder %s92, %s106
    %p108 = scmp.eq.s32.totalorder %s19, 0
    %p109 = por %p107, %p108
    %s111 = sadd.s32 %s110, 1
    %p114 = scmp.eq.s32.totalorder %s13, 1
    %p115 = scmp.ne.s32.totalorder %s110, %s112
    %p116 = scmp.eq.s32.totalorder %s13, 0
    %p117 = por %p115, %p116
    %p118 = scmp.ne.s32.totalorder %s110, %s112
    %p119 = scmp.eq.s32.totalorder %s18, 1
    %p120 = por %p118, %p119
    %p121 = scmp.ne.s32.totalorder %s112, %s113
    %p122 = scmp.eq.s32.totalorder %s18, 0
    %p123 = por %p121, %p122
    %p124 = scmp.ne.s32.totalorder %s112, %s113
    %p125 = scmp.eq.s32.totalorder %s19, 1
    %p126 = por %p124, %p125
    %p128 = scmp.ne.s32.totalorder %s113, %s127
    %p129 = scmp.eq.s32.totalorder %s19, 0
    %p130 = por %p128, %p129
    %s132 = sadd.s32 %s131, 1
    %p135 = scmp.eq.s32.totalorder %s13, 1
    %p136 = scmp.ne.s32.totalorder %s131, %s133
    %p137 = scmp.eq.s32.totalorder %s13, 0
    %p138 = por %p136, %p137
    %p139 = scmp.ne.s32.totalorder %s131, %s133
    %p140 = scmp.eq.s32.totalorder %s18, 1
    %p141 = por %p139, %p140
    %p142 = scmp.ne.s32.totalorder %s133, %s134
    %p143 = scmp.eq.s32.totalorder %s18, 0
    %p144 = por %p142, %p143
    %p145 = scmp.ne.s32.totalorder %s133, %s134
    %p146 = scmp.eq.s32.totalorder %s19, 1
    %p147 = por %p145, %p146
    %p149 = scmp.ne.s32.totalorder %s134, %s148
    %p150 = scmp.eq.s32.totalorder %s19, 0
    %p151 = por %p149, %p150
    %s153 = sadd.s32 %s152, 1
    %p156 = scmp.eq.s32.totalorder %s13, 1
    %p157 = scmp.ne.s32.totalorder %s152, %s154
    %p158 = scmp.eq.s32.totalorder %s13, 0
    %p159 = por %p157, %p158
    %p160 = scmp.ne.s32.totalorder %s152, %s154
    %p161 = scmp.eq.s32.totalorder %s18, 1
    %p162 = por %p160, %p161
    %p163 = scmp.ne.s32.totalorder %s154, %s155
    %p164 = scmp.eq.s32.totalorder %s18, 0
    %p165 = por %p163, %p164
    %p166 = scmp.ne.s32.totalorder %s154, %s155
    %p167 = scmp.eq.s32.totalorder %s19, 1
    %p168 = por %p166, %p167
    %p170 = scmp.ne.s32.totalorder %s155, %s169
    %p171 = scmp.eq.s32.totalorder %s19, 0
    %p172 = por %p170, %p171
    %s173 = ssub.s32 %s13, %s20
    %p174 = scmp.eq.s32.totalorder %s173, 0
    %s176 = sadd.s32 %s175, 1
    %s177 = scalar_select %p174, %s175, %s176
    %p180 = pneg %p174
    %p181 = scmp.eq.s32.totalorder %s13, 1
    %p182 = por %p180, %p181
    %p183 = scmp.ne.s32.totalorder %s175, %s178
    %p184 = scmp.eq.s32.totalorder %s13, 0
    %p185 = por %p183, %p184
    %p186 = scmp.ne.s32.totalorder %s175, %s178
    %p187 = scmp.eq.s32.totalorder %s18, 1
    %p188 = por %p186, %p187
    %p189 = scmp.ne.s32.totalorder %s178, %s179
    %p190 = scmp.eq.s32.totalorder %s18, 0
    %p191 = por %p189, %p190
    %p192 = scmp.ne.s32.totalorder %s178, %s179
    %p193 = scmp.eq.s32.totalorder %s19, 1
    %p194 = por %p192, %p193
    %p196 = scmp.ne.s32.totalorder %s179, %s195
    %p197 = scmp.eq.s32.totalorder %s19, 0
    %p198 = por %p196, %p197
    %p199 = scmp.le.s32.totalorder 1, %s13
    %p200 = scmp.lt.s32.totalorder %s13, 3
    %p201 = pnand %p199, %p200
    %p202 = pneg %p201
    // Predicated region
    $region9: #{irmb_forward.2} parent=5 // pred_check
      _
    $region10: #{irmb_forward.2} parent=5 // pred_check_branch
      %204 = sbr.rel (%p201) target = $region12
    $region11: #{irmb_forward.2} parent=5 // pred_region
      %s205 = ssub.s32 %s13, 1
      // Predicated region
      $region13: #{irmb_forward.2} parent=11 // pred_check
        %p206 = pneg %p60
      $region14: #{irmb_forward.2} parent=11 // pred_check_branch
        %208 = sbr.rel (%p206) target = $region16
      $region15: #{irmb_forward.2} parent=11 // pred_region
        _
      $region16: #{irmb_forward.2} parent=11 // pred_fallthru
        _
      // Predicated region
      $region17: #{irmb_forward.2} parent=11 // pred_check
        %p209 = pneg %p81
      $region18: #{irmb_forward.2} parent=11 // pred_check_branch
        %211 = sbr.rel (%p209) target = $region20
      $region19: #{irmb_forward.2} parent=11 // pred_region
        _
      $region20: #{irmb_forward.2} parent=11 // pred_fallthru
        _
      // Predicated region
      $region21: #{irmb_forward.2} parent=11 // pred_check
        %p212 = pneg %p102
      $region22: #{irmb_forward.2} parent=11 // pred_check_branch
        %214 = sbr.rel (%p212) target = $region24
      $region23: #{irmb_forward.2} parent=11 // pred_region
        _
      $region24: #{irmb_forward.2} parent=11 // pred_fallthru
        _
      // Predicated region
      $region25: #{irmb_forward.2} parent=11 // pred_check
        %p215 = pneg %p123
      $region26: #{irmb_forward.2} parent=11 // pred_check_branch
        %217 = sbr.rel (%p215) target = $region28
      $region27: #{irmb_forward.2} parent=11 // pred_region
        _
      $region28: #{irmb_forward.2} parent=11 // pred_fallthru
        _
      // Predicated region
      $region29: #{irmb_forward.2} parent=11 // pred_check
        %p218 = pneg %p144
      $region30: #{irmb_forward.2} parent=11 // pred_check_branch
        %220 = sbr.rel (%p218) target = $region32
      $region31: #{irmb_forward.2} parent=11 // pred_region
        _
      $region32: #{irmb_forward.2} parent=11 // pred_fallthru
        _
      // Predicated region
      $region33: #{irmb_forward.2} parent=11 // pred_check
        %p221 = pneg %p165
      $region34: #{irmb_forward.2} parent=11 // pred_check_branch
        %223 = sbr.rel (%p221) target = $region36
      $region35: #{irmb_forward.2} parent=11 // pred_region
        _
      $region36: #{irmb_forward.2} parent=11 // pred_fallthru
        _
    $region12: #{irmb_forward.2} parent=5 // pred_fallthru
      _
    %p224 = scmp.lt.s32.totalorder %s13, 2
    // Predicated region
    $region37: #{irmb_forward.2} parent=5 // pred_check
      %p225 = pneg %p224
    $region38: #{irmb_forward.2} parent=5 // pred_check_branch
      %227 = sbr.rel (%p225) target = $region40
    $region39: #{irmb_forward.2} parent=5 // pred_region
      // Predicated region
      $region41: #{irmb_forward.2} parent=39 // pred_check
        %p228 = pneg %p33
      $region42: #{irmb_forward.2} parent=39 // pred_check_branch
        %230 = sbr.rel (%p228) target = $region44
      $region43: #{irmb_forward.2} parent=39 // pred_region
        %s231 = smul.u32 4, %s13
        %p232 = scmp.lt.s32.totalorder %s231, 7
        %s233 = scalar_select %p232, %s231, 7
        %s234 = smul.addr %s233, 8
        %s235 = smul.addr %s234, 8
        %s236 = scalar_lea.vmem %s0, %s235
        %s237 = smul.u32 4, %s13
      $region44: #{irmb_forward.2} parent=39 // pred_fallthru
        _
    $region40: #{irmb_forward.2} parent=5 // pred_fallthru
      _
    %p238 = scmp.le.s32.totalorder 1, %s13
    %p239 = scmp.lt.s32.totalorder %s13, 3
    %p240 = pnand %p238, %p239
    %p241 = pneg %p240
    // Predicated region
    $region45: #{irmb_forward.2} parent=5 // pred_check
      _
    $region46: #{irmb_forward.2} parent=5 // pred_check_branch
      %243 = sbr.rel (%p240) target = $region48
    $region47: #{irmb_forward.2} parent=5 // pred_region
      %s244 = ssub.s32 %s13, 1
      %s245 = smul.u32 4, %s18
      %p246 = scmp.lt.s32.totalorder %s245, 7
      %s247 = scalar_select %p246, %s245, 7
      %s248 = smul.addr %s247, 8
      %s249 = smul.addr %s248, 8
      %s250 = scalar_lea.vmem %s0, %s249
      %p251 = pneg %p39
      %p252 = pneg %p36
      %p253 = pneg %p60
      %p254 = pneg %p57
      %p255 = pneg %p81
      %p256 = pneg %p78
      %p257 = pneg %p102
      %p258 = pneg %p99
      %p259 = pneg %p123
      %p260 = pneg %p120
      %p261 = pneg %p144
      %p262 = pneg %p141
      %p263 = pneg %p165
      %p264 = pneg %p162
      %p265 = pneg %p191
      %p266 = pneg %p188
      %s267 = smul.u32 4, %s18
      %p268 = scmp.lt.s32.totalorder %s267, 7
      %s269 = scalar_select %p268, %s267, 7
      %s270 = smul.addr %s269, 8
      %s271 = smul.addr %s270, 8
      %s272 = scalar_lea.vmem %s7, %s271
      %s273 = smul.u32 4, %s18
      %p274 = scmp.lt.s32.totalorder %s273, 7
      %s275 = scalar_select %p274, %s273, 7
      %s276 = smul.addr %s275, 8
      %s277 = smul.addr %s276, 8
      %s278 = scalar_lea.vmem %s0, %s277
      %s279 = smul.u32 4, %s18
      %s280 = smul.u32 4, %s18
      %p281 = scmp.lt.s32.totalorder %s280, 7
      %s282 = scalar_select %p281, %s280, 7
      %s283 = smul.addr %s282, 8
      %s284 = smul.addr %s283, 8
      %s285 = scalar_lea.vmem %s7, %s284
      %s286 = smul.u32 4, %s18
      %v287 = vld [vmem:[%s278] sm:$0xff]
      %v288 = vld [vmem:[%s278 + $0x8] sm:$0xff]
      %v289 = vld [vmem:[%s278 + $0x10] sm:$0xff]
      %v290 = vld [vmem:[%s278 + $0x18] sm:$0xff]
      %v291 = vld [vmem:[%s278 + $0x20] sm:$0xff]
      %v292 = vld [vmem:[%s278 + $0x28] sm:$0xff]
      %v293 = vld [vmem:[%s278 + $0x30] sm:$0xff]
      %v294 = vld [vmem:[%s278 + $0x38] sm:$0xff]
      %v295 = vld [vmem:[%s278 + $0x40] sm:$0xff]
      %v296 = vld [vmem:[%s278 + $0x48] sm:$0xff]
      %v297 = vld [vmem:[%s278 + $0x50] sm:$0xff]
      %v298 = vld [vmem:[%s278 + $0x58] sm:$0xff]
      %v299 = vld [vmem:[%s278 + $0x60] sm:$0xff]
      %v300 = vld [vmem:[%s278 + $0x68] sm:$0xff]
      %v301 = vld [vmem:[%s278 + $0x70] sm:$0xff]
      %v302 = vld [vmem:[%s278 + $0x78] sm:$0xff]
      %v303 = vld [vmem:[%s278 + $0x80] sm:$0xff]
      %v304 = vld [vmem:[%s278 + $0x88] sm:$0xff]
      %v305 = vld [vmem:[%s278 + $0x90] sm:$0xff]
      %v306 = vld [vmem:[%s278 + $0x98] sm:$0xff]
      %v307 = vld [vmem:[%s278 + $0xa0] sm:$0xff]
      %v308 = vld [vmem:[%s278 + $0xa8] sm:$0xff]
      %v309 = vld [vmem:[%s278 + $0xb0] sm:$0xff]
      %v310 = vld [vmem:[%s278 + $0xb8] sm:$0xff]
      %v311 = vld [vmem:[%s278 + $0xc0] sm:$0xff]
      %v312 = vld [vmem:[%s278 + $0xc8] sm:$0xff]
      %v313 = vld [vmem:[%s278 + $0xd0] sm:$0xff]
      %v314 = vld [vmem:[%s278 + $0xd8] sm:$0xff]
      %v315 = vld [vmem:[%s278 + $0xe0] sm:$0xff]
      %v316 = vld [vmem:[%s278 + $0xe8] sm:$0xff]
      %v317 = vld [vmem:[%s278 + $0xf0] sm:$0xff]
      %v318 = vld [vmem:[%s278 + $0xf8] sm:$0xff]
      %v319 = vld [vmem:[%s1] sm:$0xff]
      %v320 = vld [vmem:[%s1 + $0x8] sm:$0xff]
      %v321 = vld [vmem:[%s1 + $0x10] sm:$0xff]
      %v322 = vld [vmem:[%s1 + $0x18] sm:$0xff]
      %v323 = vld [vmem:[%s1 + $0x20] sm:$0xff]
      %v324 = vld [vmem:[%s1 + $0x28] sm:$0xff]
      %v325 = vld [vmem:[%s1 + $0x30] sm:$0xff]
      %v326 = vld [vmem:[%s1 + $0x38] sm:$0xff]
      %v327 = vld [vmem:[%s4] sm:$0x1]
      %v329 = vlaneseq
      %v330 = vshrl.u32 %v329, 7
      %v331 = vsub.s32 0, %v330
      %v332 = vrot.slane %v327, %v331
      %vm334 = vcmask 523264
      %v336 = vsel %vm334, %v287, 0
      %v339 = vsel %vm334, %v288, 0
      %v342 = vsel %vm334, %v289, 0
      %v345 = vsel %vm334, %v290, 0
      %v348 = vsel %vm334, %v291, 0
      %v351 = vsel %vm334, %v292, 0
      %v354 = vsel %vm334, %v293, 0
      %v357 = vsel %vm334, %v294, 0
      %v360 = vsel %vm334, %v295, 0
      %v363 = vsel %vm334, %v296, 0
      %v366 = vsel %vm334, %v297, 0
      %v369 = vsel %vm334, %v298, 0
      %v372 = vsel %vm334, %v299, 0
      %v375 = vsel %vm334, %v300, 0
      %v378 = vsel %vm334, %v301, 0
      %v381 = vsel %vm334, %v302, 0
      %v384 = vsel %vm334, %v303, 0
      %v387 = vsel %vm334, %v304, 0
      %v390 = vsel %vm334, %v305, 0
      %v393 = vsel %vm334, %v306, 0
      %v396 = vsel %vm334, %v307, 0
      %v399 = vsel %vm334, %v308, 0
      %v402 = vsel %vm334, %v309, 0
      %v405 = vsel %vm334, %v310, 0
      %v408 = vsel %vm334, %v311, 0
      %v411 = vsel %vm334, %v312, 0
      %v414 = vsel %vm334, %v313, 0
      %v417 = vsel %vm334, %v314, 0
      %v420 = vsel %vm334, %v315, 0
      %v423 = vsel %vm334, %v316, 0
      %v426 = vsel %vm334, %v317, 0
      %v429 = vsel %vm334, %v318, 0
      %431 = vmatprep.subr.mxu0 0.0
      %432 = vmatpush1.msra.mxu0 0.0
      %433 = vmatprep.subr.mxu0 0.0
      %434 = vmatpush1.msra.mxu0 0.0
      %435 = vmatprep.subr.mxu0 0.0
      %436 = vmatpush1.msra.mxu0 0.0
      %437 = vmatprep.subr.mxu0 0.0
      %438 = vmatpush1.msra.mxu0 0.0
      %439 = vmatprep.subr.mxu0 0.0
      %440 = vmatpush1.msra.mxu0 0.0
      %441 = vmatprep.subr.mxu0 0.0
      %442 = vmatpush1.msra.mxu0 0.0
      %443 = vmatprep.subr.mxu0 0.0
      %444 = vmatpush1.msra.mxu0 0.0
      %445 = vmatprep.subr.mxu0 0.0
      %446 = vmatpush1.msra.mxu0 0.0
      %447 = vmatprep.subr.mxu0 0.0
      %448 = vmatpush1.msra.mxu0 %v326
      %449 = vmatprep.subr.mxu0 0.0
      %450 = vmatpush1.msra.mxu0 %v325
      %451 = vmatprep.subr.mxu0 0.0
      %452 = vmatpush1.msra.mxu0 %v324
      %453 = vmatprep.subr.mxu0 0.0
      %454 = vmatpush1.msra.mxu0 %v323
      %455 = vmatprep.subr.mxu0 0.0
      %456 = vmatpush1.msra.mxu0 %v322
      %457 = vmatprep.subr.mxu0 0.0
      %458 = vmatpush1.msra.mxu0 %v321
      %459 = vmatprep.subr.mxu0 0.0
      %460 = vmatpush1.msra.mxu0 %v320
      %461 = vmatprep.subr.mxu0 0.0
      %462 = vmatpush1.msra.mxu0 %v319
      %463 = vmatprep.subr.mxu0 0.0
      %464 = vmatpush2.msra.mxu0 0.0
      %465 = vmatprep.subr.mxu0 0.0
      %466 = vmatpush2.msra.mxu0 0.0
      %467 = vmatprep.subr.mxu0 0.0
      %468 = vmatpush2.msra.mxu0 0.0
      %469 = vmatprep.subr.mxu0 0.0
      %470 = vmatpush2.msra.mxu0 0.0
      %471 = vmatprep.subr.mxu0 0.0
      %472 = vmatpush2.msra.mxu0 0.0
      %473 = vmatprep.subr.mxu0 0.0
      %474 = vmatpush2.msra.mxu0 0.0
      %475 = vmatprep.subr.mxu0 0.0
      %476 = vmatpush2.msra.mxu0 0.0
      %477 = vmatprep.subr.mxu0 0.0
      %478 = vmatpush2.msra.mxu0 0.0
      %479 = vmatprep.subr.mxu0 0.0
      %480 = vmatpush2.msra.mxu0 0.0
      %481 = vmatprep.subr.mxu0 0.0
      %482 = vmatpush2.msra.mxu0 0.0
      %483 = vmatprep.subr.mxu0 0.0
      %484 = vmatpush2.msra.mxu0 0.0
      %485 = vmatprep.subr.mxu0 0.0
      %486 = vmatpush2.msra.mxu0 0.0
      %487 = vmatprep.subr.mxu0 0.0
      %488 = vmatpush2.msra.mxu0 0.0
      %489 = vmatprep.subr.mxu0 0.0
      %490 = vmatpush2.msra.mxu0 0.0
      %491 = vmatprep.subr.mxu0 0.0
      %492 = vmatpush2.msra.mxu0 0.0
      %493 = vmatprep.subr.mxu0 0.0
      %494 = vmatpush2.msra.mxu0 0.0
      %495 = vmatprep.mubr.f32.mxu0 0.0
      %496 = vmatmul.mubr.f32.gmra.mxu0 %v336
      %v497 = vpop.f32.mrf.mxu0
      %v498 = vadd.f32 %v332, %v497
      %v499 = vpop.f32.mrf.mxu0
      %500 = vmatprep.mubr.f32.mxu0 0.0
      %501 = vmatmul.mubr.f32.gmra.mxu0 %v339
      %v502 = vpop.f32.mrf.mxu0
      %v503 = vadd.f32 %v332, %v502
      %v504 = vpop.f32.mrf.mxu0
      %505 = vmatprep.mubr.f32.mxu0 0.0
      %506 = vmatmul.mubr.f32.gmra.mxu0 %v342
      %v507 = vpop.f32.mrf.mxu0
      %v508 = vadd.f32 %v332, %v507
      %v509 = vpop.f32.mrf.mxu0
      %510 = vmatprep.mubr.f32.mxu0 0.0
      %511 = vmatmul.mubr.f32.gmra.mxu0 %v345
      %v512 = vpop.f32.mrf.mxu0
      %v513 = vadd.f32 %v332, %v512
      %v514 = vpop.f32.mrf.mxu0
      %515 = vmatprep.mubr.f32.mxu0 0.0
      %516 = vmatmul.mubr.f32.gmra.mxu0 %v348
      %v517 = vpop.f32.mrf.mxu0
      %v518 = vadd.f32 %v332, %v517
      %v519 = vpop.f32.mrf.mxu0
      %520 = vmatprep.mubr.f32.mxu0 0.0
      %521 = vmatmul.mubr.f32.gmra.mxu0 %v351
      %v522 = vpop.f32.mrf.mxu0
      %v523 = vadd.f32 %v332, %v522
      %v524 = vpop.f32.mrf.mxu0
      %525 = vmatprep.mubr.f32.mxu0 0.0
      %526 = vmatmul.mubr.f32.gmra.mxu0 %v354
      %v527 = vpop.f32.mrf.mxu0
      %v528 = vadd.f32 %v332, %v527
      %v529 = vpop.f32.mrf.mxu0
      %530 = vmatprep.mubr.f32.mxu0 0.0
      %531 = vmatmul.mubr.f32.gmra.mxu0 %v357
      %v532 = vpop.f32.mrf.mxu0
      %v533 = vadd.f32 %v332, %v532
      %v534 = vpop.f32.mrf.mxu0
      %535 = vmatprep.mubr.f32.mxu0 0.0
      %536 = vmatmul.mubr.f32.gmra.mxu0 %v360
      %v537 = vpop.f32.mrf.mxu0
      %v538 = vadd.f32 %v332, %v537
      %v539 = vpop.f32.mrf.mxu0
      %540 = vmatprep.mubr.f32.mxu0 0.0
      %541 = vmatmul.mubr.f32.gmra.mxu0 %v363
      %v542 = vpop.f32.mrf.mxu0
      %v543 = vadd.f32 %v332, %v542
      %v544 = vpop.f32.mrf.mxu0
      %545 = vmatprep.mubr.f32.mxu0 0.0
      %546 = vmatmul.mubr.f32.gmra.mxu0 %v366
      %v547 = vpop.f32.mrf.mxu0
      %v548 = vadd.f32 %v332, %v547
      %v549 = vpop.f32.mrf.mxu0
      %550 = vmatprep.mubr.f32.mxu0 0.0
      %551 = vmatmul.mubr.f32.gmra.mxu0 %v369
      %v552 = vpop.f32.mrf.mxu0
      %v553 = vadd.f32 %v332, %v552
      %v554 = vpop.f32.mrf.mxu0
      %555 = vmatprep.mubr.f32.mxu0 0.0
      %556 = vmatmul.mubr.f32.gmra.mxu0 %v372
      %v557 = vpop.f32.mrf.mxu0
      %v558 = vadd.f32 %v332, %v557
      %v559 = vpop.f32.mrf.mxu0
      %560 = vmatprep.mubr.f32.mxu0 0.0
      %561 = vmatmul.mubr.f32.gmra.mxu0 %v375
      %v562 = vpop.f32.mrf.mxu0
      %v563 = vadd.f32 %v332, %v562
      %v564 = vpop.f32.mrf.mxu0
      %565 = vmatprep.mubr.f32.mxu0 0.0
      %566 = vmatmul.mubr.f32.gmra.mxu0 %v378
      %v567 = vpop.f32.mrf.mxu0
      %v568 = vadd.f32 %v332, %v567
      %v569 = vpop.f32.mrf.mxu0
      %570 = vmatprep.mubr.f32.mxu0 0.0
      %571 = vmatmul.mubr.f32.gmra.mxu0 %v381
      %v572 = vpop.f32.mrf.mxu0
      %v573 = vadd.f32 %v332, %v572
      %v574 = vpop.f32.mrf.mxu0
      %575 = vmatprep.mubr.f32.mxu0 0.0
      %576 = vmatmul.mubr.f32.gmra.mxu0 %v384
      %v577 = vpop.f32.mrf.mxu0
      %v578 = vadd.f32 %v332, %v577
      %v579 = vpop.f32.mrf.mxu0
      %580 = vmatprep.mubr.f32.mxu0 0.0
      %581 = vmatmul.mubr.f32.gmra.mxu0 %v387
      %v582 = vpop.f32.mrf.mxu0
      %v583 = vadd.f32 %v332, %v582
      %v584 = vpop.f32.mrf.mxu0
      %585 = vmatprep.mubr.f32.mxu0 0.0
      %586 = vmatmul.mubr.f32.gmra.mxu0 %v390
      %v587 = vpop.f32.mrf.mxu0
      %v588 = vadd.f32 %v332, %v587
      %v589 = vpop.f32.mrf.mxu0
      %590 = vmatprep.mubr.f32.mxu0 0.0
      %591 = vmatmul.mubr.f32.gmra.mxu0 %v393
      %v592 = vpop.f32.mrf.mxu0
      %v593 = vadd.f32 %v332, %v592
      %v594 = vpop.f32.mrf.mxu0
      %595 = vmatprep.mubr.f32.mxu0 0.0
      %596 = vmatmul.mubr.f32.gmra.mxu0 %v396
      %v597 = vpop.f32.mrf.mxu0
      %v598 = vadd.f32 %v332, %v597
      %v599 = vpop.f32.mrf.mxu0
      %600 = vmatprep.mubr.f32.mxu0 0.0
      %601 = vmatmul.mubr.f32.gmra.mxu0 %v399
      %v602 = vpop.f32.mrf.mxu0
      %v603 = vadd.f32 %v332, %v602
      %v604 = vpop.f32.mrf.mxu0
      %605 = vmatprep.mubr.f32.mxu0 0.0
      %606 = vmatmul.mubr.f32.gmra.mxu0 %v402
      %v607 = vpop.f32.mrf.mxu0
      %v608 = vadd.f32 %v332, %v607
      %v609 = vpop.f32.mrf.mxu0
      %610 = vmatprep.mubr.f32.mxu0 0.0
      %611 = vmatmul.mubr.f32.gmra.mxu0 %v405
      %v612 = vpop.f32.mrf.mxu0
      %v613 = vadd.f32 %v332, %v612
      %v614 = vpop.f32.mrf.mxu0
      %615 = vmatprep.mubr.f32.mxu0 0.0
      %616 = vmatmul.mubr.f32.gmra.mxu0 %v408
      %v617 = vpop.f32.mrf.mxu0
      %v618 = vadd.f32 %v332, %v617
      %v619 = vpop.f32.mrf.mxu0
      %620 = vmatprep.mubr.f32.mxu0 0.0
      %621 = vmatmul.mubr.f32.gmra.mxu0 %v411
      %v622 = vpop.f32.mrf.mxu0
      %v623 = vadd.f32 %v332, %v622
      %v624 = vpop.f32.mrf.mxu0
      %625 = vmatprep.mubr.f32.mxu0 0.0
      %626 = vmatmul.mubr.f32.gmra.mxu0 %v414
      %v627 = vpop.f32.mrf.mxu0
      %v628 = vadd.f32 %v332, %v627
      %v629 = vpop.f32.mrf.mxu0
      %630 = vmatprep.mubr.f32.mxu0 0.0
      %631 = vmatmul.mubr.f32.gmra.mxu0 %v417
      %v632 = vpop.f32.mrf.mxu0
      %v633 = vadd.f32 %v332, %v632
      %v634 = vpop.f32.mrf.mxu0
      %635 = vmatprep.mubr.f32.mxu0 0.0
      %636 = vmatmul.mubr.f32.gmra.mxu0 %v420
      %v637 = vpop.f32.mrf.mxu0
      %v638 = vadd.f32 %v332, %v637
      %v639 = vpop.f32.mrf.mxu0
      %640 = vmatprep.mubr.f32.mxu0 0.0
      %641 = vmatmul.mubr.f32.gmra.mxu0 %v423
      %v642 = vpop.f32.mrf.mxu0
      %v643 = vadd.f32 %v332, %v642
      %v644 = vpop.f32.mrf.mxu0
      %645 = vmatprep.mubr.f32.mxu0 0.0
      %646 = vmatmul.mubr.f32.gmra.mxu0 %v426
      %v647 = vpop.f32.mrf.mxu0
      %v648 = vadd.f32 %v332, %v647
      %v649 = vpop.f32.mrf.mxu0
      %650 = vmatprep.mubr.f32.mxu0 0.0
      %651 = vmatmul.mubr.f32.gmra.mxu0 %v429
      %v652 = vpop.f32.mrf.mxu0
      %v653 = vadd.f32 %v332, %v652
      %v654 = vpop.f32.mrf.mxu0
      %655 = vdwg.mxu0
      %v656 = vmul.f32 %v498, 0.5
      %v657 = vmul.f32 %v503, 0.5
      %v658 = vmul.f32 %v508, 0.5
      %v659 = vmul.f32 %v513, 0.5
      %v660 = vmul.f32 %v518, 0.5
      %v661 = vmul.f32 %v523, 0.5
      %v662 = vmul.f32 %v528, 0.5
      %v663 = vmul.f32 %v533, 0.5
      %v664 = vmul.f32 %v538, 0.5
      %v665 = vmul.f32 %v543, 0.5
      %v666 = vmul.f32 %v548, 0.5
      %v667 = vmul.f32 %v553, 0.5
      %v668 = vmul.f32 %v558, 0.5
      %v669 = vmul.f32 %v563, 0.5
      %v670 = vmul.f32 %v568, 0.5
      %v671 = vmul.f32 %v573, 0.5
      %v672 = vmul.f32 %v578, 0.5
      %v673 = vmul.f32 %v583, 0.5
      %v674 = vmul.f32 %v588, 0.5
      %v675 = vmul.f32 %v593, 0.5
      %v676 = vmul.f32 %v598, 0.5
      %v677 = vmul.f32 %v603, 0.5
      %v678 = vmul.f32 %v608, 0.5
      %v679 = vmul.f32 %v613, 0.5
      %v680 = vmul.f32 %v618, 0.5
      %v681 = vmul.f32 %v623, 0.5
      %v682 = vmul.f32 %v628, 0.5
      %v683 = vmul.f32 %v633, 0.5
      %v684 = vmul.f32 %v638, 0.5
      %v685 = vmul.f32 %v643, 0.5
      %v686 = vmul.f32 %v648, 0.5
      %v687 = vmul.f32 %v653, 0.5
      %v688 = vmul.f32 %v498, 0.044715
      %v689 = vmul.f32 %v503, 0.044715
      %v690 = vmul.f32 %v508, 0.044715
      %v691 = vmul.f32 %v513, 0.044715
      %v692 = vmul.f32 %v518, 0.044715
      %v693 = vmul.f32 %v523, 0.044715
      %v694 = vmul.f32 %v528, 0.044715
      %v695 = vmul.f32 %v533, 0.044715
      %v696 = vmul.f32 %v538, 0.044715
      %v697 = vmul.f32 %v543, 0.044715
      %v698 = vmul.f32 %v548, 0.044715
      %v699 = vmul.f32 %v553, 0.044715
      %v700 = vmul.f32 %v558, 0.044715
      %v701 = vmul.f32 %v563, 0.044715
      %v702 = vmul.f32 %v568, 0.044715
      %v703 = vmul.f32 %v573, 0.044715
      %v704 = vmul.f32 %v578, 0.044715
      %v705 = vmul.f32 %v583, 0.044715
      %v706 = vmul.f32 %v588, 0.044715
      %v707 = vmul.f32 %v593, 0.044715
      %v708 = vmul.f32 %v598, 0.044715
      %v709 = vmul.f32 %v603, 0.044715
      %v710 = vmul.f32 %v608, 0.044715
      %v711 = vmul.f32 %v613, 0.044715
      %v712 = vmul.f32 %v618, 0.044715
      %v713 = vmul.f32 %v623, 0.044715
      %v714 = vmul.f32 %v628, 0.044715
      %v715 = vmul.f32 %v633, 0.044715
      %v716 = vmul.f32 %v638, 0.044715
      %v717 = vmul.f32 %v643, 0.044715
      %v718 = vmul.f32 %v648, 0.044715
      %v719 = vmul.f32 %v653, 0.044715
      %v720 = vmul.f32 %v688, %v498
      %v721 = vmul.f32 %v689, %v503
      %v722 = vmul.f32 %v690, %v508
      %v723 = vmul.f32 %v691, %v513
      %v724 = vmul.f32 %v692, %v518
      %v725 = vmul.f32 %v693, %v523
      %v726 = vmul.f32 %v694, %v528
      %v727 = vmul.f32 %v695, %v533
      %v728 = vmul.f32 %v696, %v538
      %v729 = vmul.f32 %v697, %v543
      %v730 = vmul.f32 %v698, %v548
      %v731 = vmul.f32 %v699, %v553
      %v732 = vmul.f32 %v700, %v558
      %v733 = vmul.f32 %v701, %v563
      %v734 = vmul.f32 %v702, %v568
      %v735 = vmul.f32 %v703, %v573
      %v736 = vmul.f32 %v704, %v578
      %v737 = vmul.f32 %v705, %v583
      %v738 = vmul.f32 %v706, %v588
      %v739 = vmul.f32 %v707, %v593
      %v740 = vmul.f32 %v708, %v598
      %v741 = vmul.f32 %v709, %v603
      %v742 = vmul.f32 %v710, %v608
      %v743 = vmul.f32 %v711, %v613
      %v744 = vmul.f32 %v712, %v618
      %v745 = vmul.f32 %v713, %v623
      %v746 = vmul.f32 %v714, %v628
      %v747 = vmul.f32 %v715, %v633
      %v748 = vmul.f32 %v716, %v638
      %v749 = vmul.f32 %v717, %v643
      %v750 = vmul.f32 %v718, %v648
      %v751 = vmul.f32 %v719, %v653
      %v752 = vmul.f32 %v720, %v498
      %v753 = vmul.f32 %v721, %v503
      %v754 = vmul.f32 %v722, %v508
      %v755 = vmul.f32 %v723, %v513
      %v756 = vmul.f32 %v724, %v518
      %v757 = vmul.f32 %v725, %v523
      %v758 = vmul.f32 %v726, %v528
      %v759 = vmul.f32 %v727, %v533
      %v760 = vmul.f32 %v728, %v538
      %v761 = vmul.f32 %v729, %v543
      %v762 = vmul.f32 %v730, %v548
      %v763 = vmul.f32 %v731, %v553
      %v764 = vmul.f32 %v732, %v558
      %v765 = vmul.f32 %v733, %v563
      %v766 = vmul.f32 %v734, %v568
      %v767 = vmul.f32 %v735, %v573
      %v768 = vmul.f32 %v736, %v578
      %v769 = vmul.f32 %v737, %v583
      %v770 = vmul.f32 %v738, %v588
      %v771 = vmul.f32 %v739, %v593
      %v772 = vmul.f32 %v740, %v598
      %v773 = vmul.f32 %v741, %v603
      %v774 = vmul.f32 %v742, %v608
      %v775 = vmul.f32 %v743, %v613
      %v776 = vmul.f32 %v744, %v618
      %v777 = vmul.f32 %v745, %v623
      %v778 = vmul.f32 %v746, %v628
      %v779 = vmul.f32 %v747, %v633
      %v780 = vmul.f32 %v748, %v638
      %v781 = vmul.f32 %v749, %v643
      %v782 = vmul.f32 %v750, %v648
      %v783 = vmul.f32 %v751, %v653
      %v784 = vadd.f32 %v498, %v752
      %v785 = vadd.f32 %v503, %v753
      %v786 = vadd.f32 %v508, %v754
      %v787 = vadd.f32 %v513, %v755
      %v788 = vadd.f32 %v518, %v756
      %v789 = vadd.f32 %v523, %v757
      %v790 = vadd.f32 %v528, %v758
      %v791 = vadd.f32 %v533, %v759
      %v792 = vadd.f32 %v538, %v760
      %v793 = vadd.f32 %v543, %v761
      %v794 = vadd.f32 %v548, %v762
      %v795 = vadd.f32 %v553, %v763
      %v796 = vadd.f32 %v558, %v764
      %v797 = vadd.f32 %v563, %v765
      %v798 = vadd.f32 %v568, %v766
      %v799 = vadd.f32 %v573, %v767
      %v800 = vadd.f32 %v578, %v768
      %v801 = vadd.f32 %v583, %v769
      %v802 = vadd.f32 %v588, %v770
      %v803 = vadd.f32 %v593, %v771
      %v804 = vadd.f32 %v598, %v772
      %v805 = vadd.f32 %v603, %v773
      %v806 = vadd.f32 %v608, %v774
      %v807 = vadd.f32 %v613, %v775
      %v808 = vadd.f32 %v618, %v776
      %v809 = vadd.f32 %v623, %v777
      %v810 = vadd.f32 %v628, %v778
      %v811 = vadd.f32 %v633, %v779
      %v812 = vadd.f32 %v638, %v780
      %v813 = vadd.f32 %v643, %v781
      %v814 = vadd.f32 %v648, %v782
      %v815 = vadd.f32 %v653, %v783
      %v816 = vmul.f32 %v784, 0.7978846
      %v817 = vmul.f32 %v785, 0.7978846
      %v818 = vmul.f32 %v786, 0.7978846
      %v819 = vmul.f32 %v787, 0.7978846
      %v820 = vmul.f32 %v788, 0.7978846
      %v821 = vmul.f32 %v789, 0.7978846
      %v822 = vmul.f32 %v790, 0.7978846
      %v823 = vmul.f32 %v791, 0.7978846
      %v824 = vmul.f32 %v792, 0.7978846
      %v825 = vmul.f32 %v793, 0.7978846
      %v826 = vmul.f32 %v794, 0.7978846
      %v827 = vmul.f32 %v795, 0.7978846
      %v828 = vmul.f32 %v796, 0.7978846
      %v829 = vmul.f32 %v797, 0.7978846
      %v830 = vmul.f32 %v798, 0.7978846
      %v831 = vmul.f32 %v799, 0.7978846
      %v832 = vmul.f32 %v800, 0.7978846
      %v833 = vmul.f32 %v801, 0.7978846
      %v834 = vmul.f32 %v802, 0.7978846
      %v835 = vmul.f32 %v803, 0.7978846
      %v836 = vmul.f32 %v804, 0.7978846
      %v837 = vmul.f32 %v805, 0.7978846
      %v838 = vmul.f32 %v806, 0.7978846
      %v839 = vmul.f32 %v807, 0.7978846
      %v840 = vmul.f32 %v808, 0.7978846
      %v841 = vmul.f32 %v809, 0.7978846
      %v842 = vmul.f32 %v810, 0.7978846
      %v843 = vmul.f32 %v811, 0.7978846
      %v844 = vmul.f32 %v812, 0.7978846
      %v845 = vmul.f32 %v813, 0.7978846
      %v846 = vmul.f32 %v814, 0.7978846
      %v847 = vmul.f32 %v815, 0.7978846
      %v848 = vtanh.pop %v816
      %v849 = vtanh.pop %v817
      %v850 = vtanh.pop %v818
      %v851 = vtanh.pop %v819
      %v852 = vtanh.pop %v820
      %v853 = vtanh.pop %v821
      %v854 = vtanh.pop %v822
      %v855 = vtanh.pop %v823
      %v856 = vtanh.pop %v824
      %v857 = vtanh.pop %v825
      %v858 = vtanh.pop %v826
      %v859 = vtanh.pop %v827
      %v860 = vtanh.pop %v828
      %v861 = vtanh.pop %v829
      %v862 = vtanh.pop %v830
      %v863 = vtanh.pop %v831
      %v864 = vtanh.pop %v832
      %v865 = vtanh.pop %v833
      %v866 = vtanh.pop %v834
      %v867 = vtanh.pop %v835
      %v868 = vtanh.pop %v836
      %v869 = vtanh.pop %v837
      %v870 = vtanh.pop %v838
      %v871 = vtanh.pop %v839
      %v872 = vtanh.pop %v840
      %v873 = vtanh.pop %v841
      %v874 = vtanh.pop %v842
      %v875 = vtanh.pop %v843
      %v876 = vtanh.pop %v844
      %v877 = vtanh.pop %v845
      %v878 = vtanh.pop %v846
      %v879 = vtanh.pop %v847
      %v880 = vadd.f32 %v848, 1.0
      %v881 = vadd.f32 %v849, 1.0
      %v882 = vadd.f32 %v850, 1.0
      %v883 = vadd.f32 %v851, 1.0
      %v884 = vadd.f32 %v852, 1.0
      %v885 = vadd.f32 %v853, 1.0
      %v886 = vadd.f32 %v854, 1.0
      %v887 = vadd.f32 %v855, 1.0
      %v888 = vadd.f32 %v856, 1.0
      %v889 = vadd.f32 %v857, 1.0
      %v890 = vadd.f32 %v858, 1.0
      %v891 = vadd.f32 %v859, 1.0
      %v892 = vadd.f32 %v860, 1.0
      %v893 = vadd.f32 %v861, 1.0
      %v894 = vadd.f32 %v862, 1.0
      %v895 = vadd.f32 %v863, 1.0
      %v896 = vadd.f32 %v864, 1.0
      %v897 = vadd.f32 %v865, 1.0
      %v898 = vadd.f32 %v866, 1.0
      %v899 = vadd.f32 %v867, 1.0
      %v900 = vadd.f32 %v868, 1.0
      %v901 = vadd.f32 %v869, 1.0
      %v902 = vadd.f32 %v870, 1.0
      %v903 = vadd.f32 %v871, 1.0
      %v904 = vadd.f32 %v872, 1.0
      %v905 = vadd.f32 %v873, 1.0
      %v906 = vadd.f32 %v874, 1.0
      %v907 = vadd.f32 %v875, 1.0
      %v908 = vadd.f32 %v876, 1.0
      %v909 = vadd.f32 %v877, 1.0
      %v910 = vadd.f32 %v878, 1.0
      %v911 = vadd.f32 %v879, 1.0
      %v912 = vmul.f32 %v656, %v880
      %v913 = vmul.f32 %v657, %v881
      %v914 = vmul.f32 %v658, %v882
      %v915 = vmul.f32 %v659, %v883
      %v916 = vmul.f32 %v660, %v884
      %v917 = vmul.f32 %v661, %v885
      %v918 = vmul.f32 %v662, %v886
      %v919 = vmul.f32 %v663, %v887
      %v920 = vmul.f32 %v664, %v888
      %v921 = vmul.f32 %v665, %v889
      %v922 = vmul.f32 %v666, %v890
      %v923 = vmul.f32 %v667, %v891
      %v924 = vmul.f32 %v668, %v892
      %v925 = vmul.f32 %v669, %v893
      %v926 = vmul.f32 %v670, %v894
      %v927 = vmul.f32 %v671, %v895
      %v928 = vmul.f32 %v672, %v896
      %v929 = vmul.f32 %v673, %v897
      %v930 = vmul.f32 %v674, %v898
      %v931 = vmul.f32 %v675, %v899
      %v932 = vmul.f32 %v676, %v900
      %v933 = vmul.f32 %v677, %v901
      %v934 = vmul.f32 %v678, %v902
      %v935 = vmul.f32 %v679, %v903
      %v936 = vmul.f32 %v680, %v904
      %v937 = vmul.f32 %v681, %v905
      %v938 = vmul.f32 %v682, %v906
      %v939 = vmul.f32 %v683, %v907
      %v940 = vmul.f32 %v684, %v908
      %v941 = vmul.f32 %v685, %v909
      %v942 = vmul.f32 %v686, %v910
      %v943 = vmul.f32 %v687, %v911
      %v944 = vld [vmem:[%s2] sm:$0xff]
      %v945 = vld [vmem:[%s2 + $0x8] sm:$0xff]
      %v946 = vld [vmem:[%s2 + $0x10] sm:$0xff]
      %v947 = vld [vmem:[%s2 + $0x18] sm:$0xff]
      %v948 = vld [vmem:[%s2 + $0x20] sm:$0xff]
      %v949 = vld [vmem:[%s2 + $0x28] sm:$0xff]
      %v950 = vld [vmem:[%s2 + $0x30] sm:$0xff]
      %v951 = vld [vmem:[%s2 + $0x38] sm:$0xff]
      %v952 = vld [vmem:[%s5] sm:$0x1]
      %v954 = vlaneseq
      %v955 = vshrl.u32 %v954, 7
      %v956 = vsub.s32 0, %v955
      %v957 = vrot.slane %v952, %v956
      %959 = vmatprep.subr.mxu0 0.0
      %960 = vmatpush1.msra.mxu0 0.0
      %961 = vmatprep.subr.mxu0 0.0
      %962 = vmatpush1.msra.mxu0 0.0
      %963 = vmatprep.subr.mxu0 0.0
      %964 = vmatpush1.msra.mxu0 0.0
      %965 = vmatprep.subr.mxu0 0.0
      %966 = vmatpush1.msra.mxu0 0.0
      %967 = vmatprep.subr.mxu0 0.0
      %968 = vmatpush1.msra.mxu0 0.0
      %969 = vmatprep.subr.mxu0 0.0
      %970 = vmatpush1.msra.mxu0 0.0
      %971 = vmatprep.subr.mxu0 0.0
      %972 = vmatpush1.msra.mxu0 0.0
      %973 = vmatprep.subr.mxu0 0.0
      %974 = vmatpush1.msra.mxu0 0.0
      %975 = vmatprep.subr.mxu0 0.0
      %976 = vmatpush1.msra.mxu0 %v951
      %977 = vmatprep.subr.mxu0 0.0
      %978 = vmatpush1.msra.mxu0 %v950
      %979 = vmatprep.subr.mxu0 0.0
      %980 = vmatpush1.msra.mxu0 %v949
      %981 = vmatprep.subr.mxu0 0.0
      %982 = vmatpush1.msra.mxu0 %v948
      %983 = vmatprep.subr.mxu0 0.0
      %984 = vmatpush1.msra.mxu0 %v947
      %985 = vmatprep.subr.mxu0 0.0
      %986 = vmatpush1.msra.mxu0 %v946
      %987 = vmatprep.subr.mxu0 0.0
      %988 = vmatpush1.msra.mxu0 %v945
      %989 = vmatprep.subr.mxu0 0.0
      %990 = vmatpush1.msra.mxu0 %v944
      %991 = vmatprep.subr.mxu0 0.0
      %992 = vmatpush2.msra.mxu0 0.0
      %993 = vmatprep.subr.mxu0 0.0
      %994 = vmatpush2.msra.mxu0 0.0
      %995 = vmatprep.subr.mxu0 0.0
      %996 = vmatpush2.msra.mxu0 0.0
      %997 = vmatprep.subr.mxu0 0.0
      %998 = vmatpush2.msra.mxu0 0.0
      %999 = vmatprep.subr.mxu0 0.0
      %1000 = vmatpush2.msra.mxu0 0.0
      %1001 = vmatprep.subr.mxu0 0.0
      %1002 = vmatpush2.msra.mxu0 0.0
      %1003 = vmatprep.subr.mxu0 0.0
      %1004 = vmatpush2.msra.mxu0 0.0
      %1005 = vmatprep.subr.mxu0 0.0
      %1006 = vmatpush2.msra.mxu0 0.0
      %1007 = vmatprep.subr.mxu0 0.0
      %1008 = vmatpush2.msra.mxu0 0.0
      %1009 = vmatprep.subr.mxu0 0.0
      %1010 = vmatpush2.msra.mxu0 0.0
      %1011 = vmatprep.subr.mxu0 0.0
      %1012 = vmatpush2.msra.mxu0 0.0
      %1013 = vmatprep.subr.mxu0 0.0
      %1014 = vmatpush2.msra.mxu0 0.0
      %1015 = vmatprep.subr.mxu0 0.0
      %1016 = vmatpush2.msra.mxu0 0.0
      %1017 = vmatprep.subr.mxu0 0.0
      %1018 = vmatpush2.msra.mxu0 0.0
      %1019 = vmatprep.subr.mxu0 0.0
      %1020 = vmatpush2.msra.mxu0 0.0
      %1021 = vmatprep.subr.mxu0 0.0
      %1022 = vmatpush2.msra.mxu0 0.0
      %1023 = vmatprep.mubr.f32.mxu0 0.0
      %1024 = vmatmul.mubr.f32.gmra.mxu0 %v336
      %v1025 = vpop.f32.mrf.mxu0
      %v1026 = vadd.f32 %v957, %v1025
      %v1027 = vpop.f32.mrf.mxu0
      %1028 = vmatprep.mubr.f32.mxu0 0.0
      %1029 = vmatmul.mubr.f32.gmra.mxu0 %v339
      %v1030 = vpop.f32.mrf.mxu0
      %v1031 = vadd.f32 %v957, %v1030
      %v1032 = vpop.f32.mrf.mxu0
      %1033 = vmatprep.mubr.f32.mxu0 0.0
      %1034 = vmatmul.mubr.f32.gmra.mxu0 %v342
      %v1035 = vpop.f32.mrf.mxu0
      %v1036 = vadd.f32 %v957, %v1035
      %v1037 = vpop.f32.mrf.mxu0
      %1038 = vmatprep.mubr.f32.mxu0 0.0
      %1039 = vmatmul.mubr.f32.gmra.mxu0 %v345
      %v1040 = vpop.f32.mrf.mxu0
      %v1041 = vadd.f32 %v957, %v1040
      %v1042 = vpop.f32.mrf.mxu0
      %1043 = vmatprep.mubr.f32.mxu0 0.0
      %1044 = vmatmul.mubr.f32.gmra.mxu0 %v348
      %v1045 = vpop.f32.mrf.mxu0
      %v1046 = vadd.f32 %v957, %v1045
      %v1047 = vpop.f32.mrf.mxu0
      %1048 = vmatprep.mubr.f32.mxu0 0.0
      %1049 = vmatmul.mubr.f32.gmra.mxu0 %v351
      %v1050 = vpop.f32.mrf.mxu0
      %v1051 = vadd.f32 %v957, %v1050
      %v1052 = vpop.f32.mrf.mxu0
      %1053 = vmatprep.mubr.f32.mxu0 0.0
      %1054 = vmatmul.mubr.f32.gmra.mxu0 %v354
      %v1055 = vpop.f32.mrf.mxu0
      %v1056 = vadd.f32 %v957, %v1055
      %v1057 = vpop.f32.mrf.mxu0
      %1058 = vmatprep.mubr.f32.mxu0 0.0
      %1059 = vmatmul.mubr.f32.gmra.mxu0 %v357
      %v1060 = vpop.f32.mrf.mxu0
      %v1061 = vadd.f32 %v957, %v1060
      %v1062 = vpop.f32.mrf.mxu0
      %1063 = vmatprep.mubr.f32.mxu0 0.0
      %1064 = vmatmul.mubr.f32.gmra.mxu0 %v360
      %v1065 = vpop.f32.mrf.mxu0
      %v1066 = vadd.f32 %v957, %v1065
      %v1067 = vpop.f32.mrf.mxu0
      %1068 = vmatprep.mubr.f32.mxu0 0.0
      %1069 = vmatmul.mubr.f32.gmra.mxu0 %v363
      %v1070 = vpop.f32.mrf.mxu0
      %v1071 = vadd.f32 %v957, %v1070
      %v1072 = vpop.f32.mrf.mxu0
      %1073 = vmatprep.mubr.f32.mxu0 0.0
      %1074 = vmatmul.mubr.f32.gmra.mxu0 %v366
      %v1075 = vpop.f32.mrf.mxu0
      %v1076 = vadd.f32 %v957, %v1075
      %v1077 = vpop.f32.mrf.mxu0
      %1078 = vmatprep.mubr.f32.mxu0 0.0
      %1079 = vmatmul.mubr.f32.gmra.mxu0 %v369
      %v1080 = vpop.f32.mrf.mxu0
      %v1081 = vadd.f32 %v957, %v1080
      %v1082 = vpop.f32.mrf.mxu0
      %1083 = vmatprep.mubr.f32.mxu0 0.0
      %1084 = vmatmul.mubr.f32.gmra.mxu0 %v372
      %v1085 = vpop.f32.mrf.mxu0
      %v1086 = vadd.f32 %v957, %v1085
      %v1087 = vpop.f32.mrf.mxu0
      %1088 = vmatprep.mubr.f32.mxu0 0.0
      %1089 = vmatmul.mubr.f32.gmra.mxu0 %v375
      %v1090 = vpop.f32.mrf.mxu0
      %v1091 = vadd.f32 %v957, %v1090
      %v1092 = vpop.f32.mrf.mxu0
      %1093 = vmatprep.mubr.f32.mxu0 0.0
      %1094 = vmatmul.mubr.f32.gmra.mxu0 %v378
      %v1095 = vpop.f32.mrf.mxu0
      %v1096 = vadd.f32 %v957, %v1095
      %v1097 = vpop.f32.mrf.mxu0
      %1098 = vmatprep.mubr.f32.mxu0 0.0
      %1099 = vmatmul.mubr.f32.gmra.mxu0 %v381
      %v1100 = vpop.f32.mrf.mxu0
      %v1101 = vadd.f32 %v957, %v1100
      %v1102 = vpop.f32.mrf.mxu0
      %1103 = vmatprep.mubr.f32.mxu0 0.0
      %1104 = vmatmul.mubr.f32.gmra.mxu0 %v384
      %v1105 = vpop.f32.mrf.mxu0
      %v1106 = vadd.f32 %v957, %v1105
      %v1107 = vpop.f32.mrf.mxu0
      %1108 = vmatprep.mubr.f32.mxu0 0.0
      %1109 = vmatmul.mubr.f32.gmra.mxu0 %v387
      %v1110 = vpop.f32.mrf.mxu0
      %v1111 = vadd.f32 %v957, %v1110
      %v1112 = vpop.f32.mrf.mxu0
      %1113 = vmatprep.mubr.f32.mxu0 0.0
      %1114 = vmatmul.mubr.f32.gmra.mxu0 %v390
      %v1115 = vpop.f32.mrf.mxu0
      %v1116 = vadd.f32 %v957, %v1115
      %v1117 = vpop.f32.mrf.mxu0
      %1118 = vmatprep.mubr.f32.mxu0 0.0
      %1119 = vmatmul.mubr.f32.gmra.mxu0 %v393
      %v1120 = vpop.f32.mrf.mxu0
      %v1121 = vadd.f32 %v957, %v1120
      %v1122 = vpop.f32.mrf.mxu0
      %1123 = vmatprep.mubr.f32.mxu0 0.0
      %1124 = vmatmul.mubr.f32.gmra.mxu0 %v396
      %v1125 = vpop.f32.mrf.mxu0
      %v1126 = vadd.f32 %v957, %v1125
      %v1127 = vpop.f32.mrf.mxu0
      %1128 = vmatprep.mubr.f32.mxu0 0.0
      %1129 = vmatmul.mubr.f32.gmra.mxu0 %v399
      %v1130 = vpop.f32.mrf.mxu0
      %v1131 = vadd.f32 %v957, %v1130
      %v1132 = vpop.f32.mrf.mxu0
      %1133 = vmatprep.mubr.f32.mxu0 0.0
      %1134 = vmatmul.mubr.f32.gmra.mxu0 %v402
      %v1135 = vpop.f32.mrf.mxu0
      %v1136 = vadd.f32 %v957, %v1135
      %v1137 = vpop.f32.mrf.mxu0
      %1138 = vmatprep.mubr.f32.mxu0 0.0
      %1139 = vmatmul.mubr.f32.gmra.mxu0 %v405
      %v1140 = vpop.f32.mrf.mxu0
      %v1141 = vadd.f32 %v957, %v1140
      %v1142 = vpop.f32.mrf.mxu0
      %1143 = vmatprep.mubr.f32.mxu0 0.0
      %1144 = vmatmul.mubr.f32.gmra.mxu0 %v408
      %v1145 = vpop.f32.mrf.mxu0
      %v1146 = vadd.f32 %v957, %v1145
      %v1147 = vpop.f32.mrf.mxu0
      %1148 = vmatprep.mubr.f32.mxu0 0.0
      %1149 = vmatmul.mubr.f32.gmra.mxu0 %v411
      %v1150 = vpop.f32.mrf.mxu0
      %v1151 = vadd.f32 %v957, %v1150
      %v1152 = vpop.f32.mrf.mxu0
      %1153 = vmatprep.mubr.f32.mxu0 0.0
      %1154 = vmatmul.mubr.f32.gmra.mxu0 %v414
      %v1155 = vpop.f32.mrf.mxu0
      %v1156 = vadd.f32 %v957, %v1155
      %v1157 = vpop.f32.mrf.mxu0
      %1158 = vmatprep.mubr.f32.mxu0 0.0
      %1159 = vmatmul.mubr.f32.gmra.mxu0 %v417
      %v1160 = vpop.f32.mrf.mxu0
      %v1161 = vadd.f32 %v957, %v1160
      %v1162 = vpop.f32.mrf.mxu0
      %1163 = vmatprep.mubr.f32.mxu0 0.0
      %1164 = vmatmul.mubr.f32.gmra.mxu0 %v420
      %v1165 = vpop.f32.mrf.mxu0
      %v1166 = vadd.f32 %v957, %v1165
      %v1167 = vpop.f32.mrf.mxu0
      %1168 = vmatprep.mubr.f32.mxu0 0.0
      %1169 = vmatmul.mubr.f32.gmra.mxu0 %v423
      %v1170 = vpop.f32.mrf.mxu0
      %v1171 = vadd.f32 %v957, %v1170
      %v1172 = vpop.f32.mrf.mxu0
      %1173 = vmatprep.mubr.f32.mxu0 0.0
      %1174 = vmatmul.mubr.f32.gmra.mxu0 %v426
      %v1175 = vpop.f32.mrf.mxu0
      %v1176 = vadd.f32 %v957, %v1175
      %v1177 = vpop.f32.mrf.mxu0
      %1178 = vmatprep.mubr.f32.mxu0 0.0
      %1179 = vmatmul.mubr.f32.gmra.mxu0 %v429
      %v1180 = vpop.f32.mrf.mxu0
      %v1181 = vadd.f32 %v957, %v1180
      %v1182 = vpop.f32.mrf.mxu0
      %1183 = vdwg.mxu0
      %v1184 = vmul.f32 %v1026, 0.5
      %v1185 = vmul.f32 %v1031, 0.5
      %v1186 = vmul.f32 %v1036, 0.5
      %v1187 = vmul.f32 %v1041, 0.5
      %v1188 = vmul.f32 %v1046, 0.5
      %v1189 = vmul.f32 %v1051, 0.5
      %v1190 = vmul.f32 %v1056, 0.5
      %v1191 = vmul.f32 %v1061, 0.5
      %v1192 = vmul.f32 %v1066, 0.5
      %v1193 = vmul.f32 %v1071, 0.5
      %v1194 = vmul.f32 %v1076, 0.5
      %v1195 = vmul.f32 %v1081, 0.5
      %v1196 = vmul.f32 %v1086, 0.5
      %v1197 = vmul.f32 %v1091, 0.5
      %v1198 = vmul.f32 %v1096, 0.5
      %v1199 = vmul.f32 %v1101, 0.5
      %v1200 = vmul.f32 %v1106, 0.5
      %v1201 = vmul.f32 %v1111, 0.5
      %v1202 = vmul.f32 %v1116, 0.5
      %v1203 = vmul.f32 %v1121, 0.5
      %v1204 = vmul.f32 %v1126, 0.5
      %v1205 = vmul.f32 %v1131, 0.5
      %v1206 = vmul.f32 %v1136, 0.5
      %v1207 = vmul.f32 %v1141, 0.5
      %v1208 = vmul.f32 %v1146, 0.5
      %v1209 = vmul.f32 %v1151, 0.5
      %v1210 = vmul.f32 %v1156, 0.5
      %v1211 = vmul.f32 %v1161, 0.5
      %v1212 = vmul.f32 %v1166, 0.5
      %v1213 = vmul.f32 %v1171, 0.5
      %v1214 = vmul.f32 %v1176, 0.5
      %v1215 = vmul.f32 %v1181, 0.5
      %v1216 = vmul.f32 %v1026, 0.044715
      %v1217 = vmul.f32 %v1031, 0.044715
      %v1218 = vmul.f32 %v1036, 0.044715
      %v1219 = vmul.f32 %v1041, 0.044715
      %v1220 = vmul.f32 %v1046, 0.044715
      %v1221 = vmul.f32 %v1051, 0.044715
      %v1222 = vmul.f32 %v1056, 0.044715
      %v1223 = vmul.f32 %v1061, 0.044715
      %v1224 = vmul.f32 %v1066, 0.044715
      %v1225 = vmul.f32 %v1071, 0.044715
      %v1226 = vmul.f32 %v1076, 0.044715
      %v1227 = vmul.f32 %v1081, 0.044715
      %v1228 = vmul.f32 %v1086, 0.044715
      %v1229 = vmul.f32 %v1091, 0.044715
      %v1230 = vmul.f32 %v1096, 0.044715
      %v1231 = vmul.f32 %v1101, 0.044715
      %v1232 = vmul.f32 %v1106, 0.044715
      %v1233 = vmul.f32 %v1111, 0.044715
      %v1234 = vmul.f32 %v1116, 0.044715
      %v1235 = vmul.f32 %v1121, 0.044715
      %v1236 = vmul.f32 %v1126, 0.044715
      %v1237 = vmul.f32 %v1131, 0.044715
      %v1238 = vmul.f32 %v1136, 0.044715
      %v1239 = vmul.f32 %v1141, 0.044715
      %v1240 = vmul.f32 %v1146, 0.044715
      %v1241 = vmul.f32 %v1151, 0.044715
      %v1242 = vmul.f32 %v1156, 0.044715
      %v1243 = vmul.f32 %v1161, 0.044715
      %v1244 = vmul.f32 %v1166, 0.044715
      %v1245 = vmul.f32 %v1171, 0.044715
      %v1246 = vmul.f32 %v1176, 0.044715
      %v1247 = vmul.f32 %v1181, 0.044715
      %v1248 = vmul.f32 %v1216, %v1026
      %v1249 = vmul.f32 %v1217, %v1031
      %v1250 = vmul.f32 %v1218, %v1036
      %v1251 = vmul.f32 %v1219, %v1041
      %v1252 = vmul.f32 %v1220, %v1046
      %v1253 = vmul.f32 %v1221, %v1051
      %v1254 = vmul.f32 %v1222, %v1056
      %v1255 = vmul.f32 %v1223, %v1061
      %v1256 = vmul.f32 %v1224, %v1066
      %v1257 = vmul.f32 %v1225, %v1071
      %v1258 = vmul.f32 %v1226, %v1076
      %v1259 = vmul.f32 %v1227, %v1081
      %v1260 = vmul.f32 %v1228, %v1086
      %v1261 = vmul.f32 %v1229, %v1091
      %v1262 = vmul.f32 %v1230, %v1096
      %v1263 = vmul.f32 %v1231, %v1101
      %v1264 = vmul.f32 %v1232, %v1106
      %v1265 = vmul.f32 %v1233, %v1111
      %v1266 = vmul.f32 %v1234, %v1116
      %v1267 = vmul.f32 %v1235, %v1121
      %v1268 = vmul.f32 %v1236, %v1126
      %v1269 = vmul.f32 %v1237, %v1131
      %v1270 = vmul.f32 %v1238, %v1136
      %v1271 = vmul.f32 %v1239, %v1141
      %v1272 = vmul.f32 %v1240, %v1146
      %v1273 = vmul.f32 %v1241, %v1151
      %v1274 = vmul.f32 %v1242, %v1156
      %v1275 = vmul.f32 %v1243, %v1161
      %v1276 = vmul.f32 %v1244, %v1166
      %v1277 = vmul.f32 %v1245, %v1171
      %v1278 = vmul.f32 %v1246, %v1176
      %v1279 = vmul.f32 %v1247, %v1181
      %v1280 = vmul.f32 %v1248, %v1026
      %v1281 = vmul.f32 %v1249, %v1031
      %v1282 = vmul.f32 %v1250, %v1036
      %v1283 = vmul.f32 %v1251, %v1041
      %v1284 = vmul.f32 %v1252, %v1046
      %v1285 = vmul.f32 %v1253, %v1051
      %v1286 = vmul.f32 %v1254, %v1056
      %v1287 = vmul.f32 %v1255, %v1061
      %v1288 = vmul.f32 %v1256, %v1066
      %v1289 = vmul.f32 %v1257, %v1071
      %v1290 = vmul.f32 %v1258, %v1076
      %v1291 = vmul.f32 %v1259, %v1081
      %v1292 = vmul.f32 %v1260, %v1086
      %v1293 = vmul.f32 %v1261, %v1091
      %v1294 = vmul.f32 %v1262, %v1096
      %v1295 = vmul.f32 %v1263, %v1101
      %v1296 = vmul.f32 %v1264, %v1106
      %v1297 = vmul.f32 %v1265, %v1111
      %v1298 = vmul.f32 %v1266, %v1116
      %v1299 = vmul.f32 %v1267, %v1121
      %v1300 = vmul.f32 %v1268, %v1126
      %v1301 = vmul.f32 %v1269, %v1131
      %v1302 = vmul.f32 %v1270, %v1136
      %v1303 = vmul.f32 %v1271, %v1141
      %v1304 = vmul.f32 %v1272, %v1146
      %v1305 = vmul.f32 %v1273, %v1151
      %v1306 = vmul.f32 %v1274, %v1156
      %v1307 = vmul.f32 %v1275, %v1161
      %v1308 = vmul.f32 %v1276, %v1166
      %v1309 = vmul.f32 %v1277, %v1171
      %v1310 = vmul.f32 %v1278, %v1176
      %v1311 = vmul.f32 %v1279, %v1181
      %v1312 = vadd.f32 %v1026, %v1280
      %v1313 = vadd.f32 %v1031, %v1281
      %v1314 = vadd.f32 %v1036, %v1282
      %v1315 = vadd.f32 %v1041, %v1283
      %v1316 = vadd.f32 %v1046, %v1284
      %v1317 = vadd.f32 %v1051, %v1285
      %v1318 = vadd.f32 %v1056, %v1286
      %v1319 = vadd.f32 %v1061, %v1287
      %v1320 = vadd.f32 %v1066, %v1288
      %v1321 = vadd.f32 %v1071, %v1289
      %v1322 = vadd.f32 %v1076, %v1290
      %v1323 = vadd.f32 %v1081, %v1291
      %v1324 = vadd.f32 %v1086, %v1292
      %v1325 = vadd.f32 %v1091, %v1293
      %v1326 = vadd.f32 %v1096, %v1294
      %v1327 = vadd.f32 %v1101, %v1295
      %v1328 = vadd.f32 %v1106, %v1296
      %v1329 = vadd.f32 %v1111, %v1297
      %v1330 = vadd.f32 %v1116, %v1298
      %v1331 = vadd.f32 %v1121, %v1299
      %v1332 = vadd.f32 %v1126, %v1300
      %v1333 = vadd.f32 %v1131, %v1301
      %v1334 = vadd.f32 %v1136, %v1302
      %v1335 = vadd.f32 %v1141, %v1303
      %v1336 = vadd.f32 %v1146, %v1304
      %v1337 = vadd.f32 %v1151, %v1305
      %v1338 = vadd.f32 %v1156, %v1306
      %v1339 = vadd.f32 %v1161, %v1307
      %v1340 = vadd.f32 %v1166, %v1308
      %v1341 = vadd.f32 %v1171, %v1309
      %v1342 = vadd.f32 %v1176, %v1310
      %v1343 = vadd.f32 %v1181, %v1311
      %v1344 = vmul.f32 %v1312, 0.7978846
      %v1345 = vmul.f32 %v1313, 0.7978846
      %v1346 = vmul.f32 %v1314, 0.7978846
      %v1347 = vmul.f32 %v1315, 0.7978846
      %v1348 = vmul.f32 %v1316, 0.7978846
      %v1349 = vmul.f32 %v1317, 0.7978846
      %v1350 = vmul.f32 %v1318, 0.7978846
      %v1351 = vmul.f32 %v1319, 0.7978846
      %v1352 = vmul.f32 %v1320, 0.7978846
      %v1353 = vmul.f32 %v1321, 0.7978846
      %v1354 = vmul.f32 %v1322, 0.7978846
      %v1355 = vmul.f32 %v1323, 0.7978846
      %v1356 = vmul.f32 %v1324, 0.7978846
      %v1357 = vmul.f32 %v1325, 0.7978846
      %v1358 = vmul.f32 %v1326, 0.7978846
      %v1359 = vmul.f32 %v1327, 0.7978846
      %v1360 = vmul.f32 %v1328, 0.7978846
      %v1361 = vmul.f32 %v1329, 0.7978846
      %v1362 = vmul.f32 %v1330, 0.7978846
      %v1363 = vmul.f32 %v1331, 0.7978846
      %v1364 = vmul.f32 %v1332, 0.7978846
      %v1365 = vmul.f32 %v1333, 0.7978846
      %v1366 = vmul.f32 %v1334, 0.7978846
      %v1367 = vmul.f32 %v1335, 0.7978846
      %v1368 = vmul.f32 %v1336, 0.7978846
      %v1369 = vmul.f32 %v1337, 0.7978846
      %v1370 = vmul.f32 %v1338, 0.7978846
      %v1371 = vmul.f32 %v1339, 0.7978846
      %v1372 = vmul.f32 %v1340, 0.7978846
      %v1373 = vmul.f32 %v1341, 0.7978846
      %v1374 = vmul.f32 %v1342, 0.7978846
      %v1375 = vmul.f32 %v1343, 0.7978846
      %v1376 = vtanh.pop %v1344
      %v1377 = vtanh.pop %v1345
      %v1378 = vtanh.pop %v1346
      %v1379 = vtanh.pop %v1347
      %v1380 = vtanh.pop %v1348
      %v1381 = vtanh.pop %v1349
      %v1382 = vtanh.pop %v1350
      %v1383 = vtanh.pop %v1351
      %v1384 = vtanh.pop %v1352
      %v1385 = vtanh.pop %v1353
      %v1386 = vtanh.pop %v1354
      %v1387 = vtanh.pop %v1355
      %v1388 = vtanh.pop %v1356
      %v1389 = vtanh.pop %v1357
      %v1390 = vtanh.pop %v1358
      %v1391 = vtanh.pop %v1359
      %v1392 = vtanh.pop %v1360
      %v1393 = vtanh.pop %v1361
      %v1394 = vtanh.pop %v1362
      %v1395 = vtanh.pop %v1363
      %v1396 = vtanh.pop %v1364
      %v1397 = vtanh.pop %v1365
      %v1398 = vtanh.pop %v1366
      %v1399 = vtanh.pop %v1367
      %v1400 = vtanh.pop %v1368
      %v1401 = vtanh.pop %v1369
      %v1402 = vtanh.pop %v1370
      %v1403 = vtanh.pop %v1371
      %v1404 = vtanh.pop %v1372
      %v1405 = vtanh.pop %v1373
      %v1406 = vtanh.pop %v1374
      %v1407 = vtanh.pop %v1375
      %v1408 = vadd.f32 %v1376, 1.0
      %v1409 = vadd.f32 %v1377, 1.0
      %v1410 = vadd.f32 %v1378, 1.0
      %v1411 = vadd.f32 %v1379, 1.0
      %v1412 = vadd.f32 %v1380, 1.0
      %v1413 = vadd.f32 %v1381, 1.0
      %v1414 = vadd.f32 %v1382, 1.0
      %v1415 = vadd.f32 %v1383, 1.0
      %v1416 = vadd.f32 %v1384, 1.0
      %v1417 = vadd.f32 %v1385, 1.0
      %v1418 = vadd.f32 %v1386, 1.0
      %v1419 = vadd.f32 %v1387, 1.0
      %v1420 = vadd.f32 %v1388, 1.0
      %v1421 = vadd.f32 %v1389, 1.0
      %v1422 = vadd.f32 %v1390, 1.0
      %v1423 = vadd.f32 %v1391, 1.0
      %v1424 = vadd.f32 %v1392, 1.0
      %v1425 = vadd.f32 %v1393, 1.0
      %v1426 = vadd.f32 %v1394, 1.0
      %v1427 = vadd.f32 %v1395, 1.0
      %v1428 = vadd.f32 %v1396, 1.0
      %v1429 = vadd.f32 %v1397, 1.0
      %v1430 = vadd.f32 %v1398, 1.0
      %v1431 = vadd.f32 %v1399, 1.0
      %v1432 = vadd.f32 %v1400, 1.0
      %v1433 = vadd.f32 %v1401, 1.0
      %v1434 = vadd.f32 %v1402, 1.0
      %v1435 = vadd.f32 %v1403, 1.0
      %v1436 = vadd.f32 %v1404, 1.0
      %v1437 = vadd.f32 %v1405, 1.0
      %v1438 = vadd.f32 %v1406, 1.0
      %v1439 = vadd.f32 %v1407, 1.0
      %v1440 = vmul.f32 %v1184, %v1408
      %v1441 = vmul.f32 %v1185, %v1409
      %v1442 = vmul.f32 %v1186, %v1410
      %v1443 = vmul.f32 %v1187, %v1411
      %v1444 = vmul.f32 %v1188, %v1412
      %v1445 = vmul.f32 %v1189, %v1413
      %v1446 = vmul.f32 %v1190, %v1414
      %v1447 = vmul.f32 %v1191, %v1415
      %v1448 = vmul.f32 %v1192, %v1416
      %v1449 = vmul.f32 %v1193, %v1417
      %v1450 = vmul.f32 %v1194, %v1418
      %v1451 = vmul.f32 %v1195, %v1419
      %v1452 = vmul.f32 %v1196, %v1420
      %v1453 = vmul.f32 %v1197, %v1421
      %v1454 = vmul.f32 %v1198, %v1422
      %v1455 = vmul.f32 %v1199, %v1423
      %v1456 = vmul.f32 %v1200, %v1424
      %v1457 = vmul.f32 %v1201, %v1425
      %v1458 = vmul.f32 %v1202, %v1426
      %v1459 = vmul.f32 %v1203, %v1427
      %v1460 = vmul.f32 %v1204, %v1428
      %v1461 = vmul.f32 %v1205, %v1429
      %v1462 = vmul.f32 %v1206, %v1430
      %v1463 = vmul.f32 %v1207, %v1431
      %v1464 = vmul.f32 %v1208, %v1432
      %v1465 = vmul.f32 %v1209, %v1433
      %v1466 = vmul.f32 %v1210, %v1434
      %v1467 = vmul.f32 %v1211, %v1435
      %v1468 = vmul.f32 %v1212, %v1436
      %v1469 = vmul.f32 %v1213, %v1437
      %v1470 = vmul.f32 %v1214, %v1438
      %v1471 = vmul.f32 %v1215, %v1439
      %v1472 = vld [vmem:[%s3] sm:$0xff]
      %v1473 = vld [vmem:[%s3 + $0x8] sm:$0xff]
      %v1474 = vld [vmem:[%s3 + $0x10] sm:$0xff]
      %v1475 = vld [vmem:[%s3 + $0x18] sm:$0xff]
      %v1476 = vld [vmem:[%s3 + $0x20] sm:$0xff]
      %v1477 = vld [vmem:[%s3 + $0x28] sm:$0xff]
      %v1478 = vld [vmem:[%s3 + $0x30] sm:$0xff]
      %v1479 = vld [vmem:[%s3 + $0x38] sm:$0xff]
      %v1480 = vld [vmem:[%s6] sm:$0x1]
      %v1482 = vlaneseq
      %v1483 = vshrl.u32 %v1482, 7
      %v1484 = vsub.s32 0, %v1483
      %v1485 = vrot.slane %v1480, %v1484
      %1487 = vmatprep.subr.mxu0 0.0
      %1488 = vmatpush1.msra.mxu0 0.0
      %1489 = vmatprep.subr.mxu0 0.0
      %1490 = vmatpush1.msra.mxu0 0.0
      %1491 = vmatprep.subr.mxu0 0.0
      %1492 = vmatpush1.msra.mxu0 0.0
      %1493 = vmatprep.subr.mxu0 0.0
      %1494 = vmatpush1.msra.mxu0 0.0
      %1495 = vmatprep.subr.mxu0 0.0
      %1496 = vmatpush1.msra.mxu0 0.0
      %1497 = vmatprep.subr.mxu0 0.0
      %1498 = vmatpush1.msra.mxu0 0.0
      %1499 = vmatprep.subr.mxu0 0.0
      %1500 = vmatpush1.msra.mxu0 0.0
      %1501 = vmatprep.subr.mxu0 0.0
      %1502 = vmatpush1.msra.mxu0 0.0
      %1503 = vmatprep.subr.mxu0 0.0
      %1504 = vmatpush1.msra.mxu0 %v1479
      %1505 = vmatprep.subr.mxu0 0.0
      %1506 = vmatpush1.msra.mxu0 %v1478
      %1507 = vmatprep.subr.mxu0 0.0
      %1508 = vmatpush1.msra.mxu0 %v1477
      %1509 = vmatprep.subr.mxu0 0.0
      %1510 = vmatpush1.msra.mxu0 %v1476
      %1511 = vmatprep.subr.mxu0 0.0
      %1512 = vmatpush1.msra.mxu0 %v1475
      %1513 = vmatprep.subr.mxu0 0.0
      %1514 = vmatpush1.msra.mxu0 %v1474
      %1515 = vmatprep.subr.mxu0 0.0
      %1516 = vmatpush1.msra.mxu0 %v1473
      %1517 = vmatprep.subr.mxu0 0.0
      %1518 = vmatpush1.msra.mxu0 %v1472
      %1519 = vmatprep.subr.mxu0 0.0
      %1520 = vmatpush2.msra.mxu0 0.0
      %1521 = vmatprep.subr.mxu0 0.0
      %1522 = vmatpush2.msra.mxu0 0.0
      %1523 = vmatprep.subr.mxu0 0.0
      %1524 = vmatpush2.msra.mxu0 0.0
      %1525 = vmatprep.subr.mxu0 0.0
      %1526 = vmatpush2.msra.mxu0 0.0
      %1527 = vmatprep.subr.mxu0 0.0
      %1528 = vmatpush2.msra.mxu0 0.0
      %1529 = vmatprep.subr.mxu0 0.0
      %1530 = vmatpush2.msra.mxu0 0.0
      %1531 = vmatprep.subr.mxu0 0.0
      %1532 = vmatpush2.msra.mxu0 0.0
      %1533 = vmatprep.subr.mxu0 0.0
      %1534 = vmatpush2.msra.mxu0 0.0
      %1535 = vmatprep.subr.mxu0 0.0
      %1536 = vmatpush2.msra.mxu0 0.0
      %1537 = vmatprep.subr.mxu0 0.0
      %1538 = vmatpush2.msra.mxu0 0.0
      %1539 = vmatprep.subr.mxu0 0.0
      %1540 = vmatpush2.msra.mxu0 0.0
      %1541 = vmatprep.subr.mxu0 0.0
      %1542 = vmatpush2.msra.mxu0 0.0
      %1543 = vmatprep.subr.mxu0 0.0
      %1544 = vmatpush2.msra.mxu0 0.0
      %1545 = vmatprep.subr.mxu0 0.0
      %1546 = vmatpush2.msra.mxu0 0.0
      %1547 = vmatprep.subr.mxu0 0.0
      %1548 = vmatpush2.msra.mxu0 0.0
      %1549 = vmatprep.subr.mxu0 0.0
      %1550 = vmatpush2.msra.mxu0 0.0
      %1551 = vmatprep.mubr.f32.mxu0 0.0
      %1552 = vmatmul.mubr.f32.gmra.mxu0 %v336
      %v1553 = vpop.f32.mrf.mxu0
      %v1554 = vadd.f32 %v1485, %v1553
      %v1555 = vpop.f32.mrf.mxu0
      %1556 = vmatprep.mubr.f32.mxu0 0.0
      %1557 = vmatmul.mubr.f32.gmra.mxu0 %v339
      %v1558 = vpop.f32.mrf.mxu0
      %v1559 = vadd.f32 %v1485, %v1558
      %v1560 = vpop.f32.mrf.mxu0
      %1561 = vmatprep.mubr.f32.mxu0 0.0
      %1562 = vmatmul.mubr.f32.gmra.mxu0 %v342
      %v1563 = vpop.f32.mrf.mxu0
      %v1564 = vadd.f32 %v1485, %v1563
      %v1565 = vpop.f32.mrf.mxu0
      %1566 = vmatprep.mubr.f32.mxu0 0.0
      %1567 = vmatmul.mubr.f32.gmra.mxu0 %v345
      %v1568 = vpop.f32.mrf.mxu0
      %v1569 = vadd.f32 %v1485, %v1568
      %v1570 = vpop.f32.mrf.mxu0
      %1571 = vmatprep.mubr.f32.mxu0 0.0
      %1572 = vmatmul.mubr.f32.gmra.mxu0 %v348
      %v1573 = vpop.f32.mrf.mxu0
      %v1574 = vadd.f32 %v1485, %v1573
      %v1575 = vpop.f32.mrf.mxu0
      %1576 = vmatprep.mubr.f32.mxu0 0.0
      %1577 = vmatmul.mubr.f32.gmra.mxu0 %v351
      %v1578 = vpop.f32.mrf.mxu0
      %v1579 = vadd.f32 %v1485, %v1578
      %v1580 = vpop.f32.mrf.mxu0
      %1581 = vmatprep.mubr.f32.mxu0 0.0
      %1582 = vmatmul.mubr.f32.gmra.mxu0 %v354
      %v1583 = vpop.f32.mrf.mxu0
      %v1584 = vadd.f32 %v1485, %v1583
      %v1585 = vpop.f32.mrf.mxu0
      %1586 = vmatprep.mubr.f32.mxu0 0.0
      %1587 = vmatmul.mubr.f32.gmra.mxu0 %v357
      %v1588 = vpop.f32.mrf.mxu0
      %v1589 = vadd.f32 %v1485, %v1588
      %v1590 = vpop.f32.mrf.mxu0
      %1591 = vmatprep.mubr.f32.mxu0 0.0
      %1592 = vmatmul.mubr.f32.gmra.mxu0 %v360
      %v1593 = vpop.f32.mrf.mxu0
      %v1594 = vadd.f32 %v1485, %v1593
      %v1595 = vpop.f32.mrf.mxu0
      %1596 = vmatprep.mubr.f32.mxu0 0.0
      %1597 = vmatmul.mubr.f32.gmra.mxu0 %v363
      %v1598 = vpop.f32.mrf.mxu0
      %v1599 = vadd.f32 %v1485, %v1598
      %v1600 = vpop.f32.mrf.mxu0
      %1601 = vmatprep.mubr.f32.mxu0 0.0
      %1602 = vmatmul.mubr.f32.gmra.mxu0 %v366
      %v1603 = vpop.f32.mrf.mxu0
      %v1604 = vadd.f32 %v1485, %v1603
      %v1605 = vpop.f32.mrf.mxu0
      %1606 = vmatprep.mubr.f32.mxu0 0.0
      %1607 = vmatmul.mubr.f32.gmra.mxu0 %v369
      %v1608 = vpop.f32.mrf.mxu0
      %v1609 = vadd.f32 %v1485, %v1608
      %v1610 = vpop.f32.mrf.mxu0
      %1611 = vmatprep.mubr.f32.mxu0 0.0
      %1612 = vmatmul.mubr.f32.gmra.mxu0 %v372
      %v1613 = vpop.f32.mrf.mxu0
      %v1614 = vadd.f32 %v1485, %v1613
      %v1615 = vpop.f32.mrf.mxu0
      %1616 = vmatprep.mubr.f32.mxu0 0.0
      %1617 = vmatmul.mubr.f32.gmra.mxu0 %v375
      %v1618 = vpop.f32.mrf.mxu0
      %v1619 = vadd.f32 %v1485, %v1618
      %v1620 = vpop.f32.mrf.mxu0
      %1621 = vmatprep.mubr.f32.mxu0 0.0
      %1622 = vmatmul.mubr.f32.gmra.mxu0 %v378
      %v1623 = vpop.f32.mrf.mxu0
      %v1624 = vadd.f32 %v1485, %v1623
      %v1625 = vpop.f32.mrf.mxu0
      %1626 = vmatprep.mubr.f32.mxu0 0.0
      %1627 = vmatmul.mubr.f32.gmra.mxu0 %v381
      %v1628 = vpop.f32.mrf.mxu0
      %v1629 = vadd.f32 %v1485, %v1628
      %v1630 = vpop.f32.mrf.mxu0
      %1631 = vmatprep.mubr.f32.mxu0 0.0
      %1632 = vmatmul.mubr.f32.gmra.mxu0 %v384
      %v1633 = vpop.f32.mrf.mxu0
      %v1634 = vadd.f32 %v1485, %v1633
      %v1635 = vpop.f32.mrf.mxu0
      %1636 = vmatprep.mubr.f32.mxu0 0.0
      %1637 = vmatmul.mubr.f32.gmra.mxu0 %v387
      %v1638 = vpop.f32.mrf.mxu0
      %v1639 = vadd.f32 %v1485, %v1638
      %v1640 = vpop.f32.mrf.mxu0
      %1641 = vmatprep.mubr.f32.mxu0 0.0
      %1642 = vmatmul.mubr.f32.gmra.mxu0 %v390
      %v1643 = vpop.f32.mrf.mxu0
      %v1644 = vadd.f32 %v1485, %v1643
      %v1645 = vpop.f32.mrf.mxu0
      %1646 = vmatprep.mubr.f32.mxu0 0.0
      %1647 = vmatmul.mubr.f32.gmra.mxu0 %v393
      %v1648 = vpop.f32.mrf.mxu0
      %v1649 = vadd.f32 %v1485, %v1648
      %v1650 = vpop.f32.mrf.mxu0
      %1651 = vmatprep.mubr.f32.mxu0 0.0
      %1652 = vmatmul.mubr.f32.gmra.mxu0 %v396
      %v1653 = vpop.f32.mrf.mxu0
      %v1654 = vadd.f32 %v1485, %v1653
      %v1655 = vpop.f32.mrf.mxu0
      %1656 = vmatprep.mubr.f32.mxu0 0.0
      %1657 = vmatmul.mubr.f32.gmra.mxu0 %v399
      %v1658 = vpop.f32.mrf.mxu0
      %v1659 = vadd.f32 %v1485, %v1658
      %v1660 = vpop.f32.mrf.mxu0
      %1661 = vmatprep.mubr.f32.mxu0 0.0
      %1662 = vmatmul.mubr.f32.gmra.mxu0 %v402
      %v1663 = vpop.f32.mrf.mxu0
      %v1664 = vadd.f32 %v1485, %v1663
      %v1665 = vpop.f32.mrf.mxu0
      %1666 = vmatprep.mubr.f32.mxu0 0.0
      %1667 = vmatmul.mubr.f32.gmra.mxu0 %v405
      %v1668 = vpop.f32.mrf.mxu0
      %v1669 = vadd.f32 %v1485, %v1668
      %v1670 = vpop.f32.mrf.mxu0
      %1671 = vmatprep.mubr.f32.mxu0 0.0
      %1672 = vmatmul.mubr.f32.gmra.mxu0 %v408
      %v1673 = vpop.f32.mrf.mxu0
      %v1674 = vadd.f32 %v1485, %v1673
      %v1675 = vpop.f32.mrf.mxu0
      %1676 = vmatprep.mubr.f32.mxu0 0.0
      %1677 = vmatmul.mubr.f32.gmra.mxu0 %v411
      %v1678 = vpop.f32.mrf.mxu0
      %v1679 = vadd.f32 %v1485, %v1678
      %v1680 = vpop.f32.mrf.mxu0
      %1681 = vmatprep.mubr.f32.mxu0 0.0
      %1682 = vmatmul.mubr.f32.gmra.mxu0 %v414
      %v1683 = vpop.f32.mrf.mxu0
      %v1684 = vadd.f32 %v1485, %v1683
      %v1685 = vpop.f32.mrf.mxu0
      %1686 = vmatprep.mubr.f32.mxu0 0.0
      %1687 = vmatmul.mubr.f32.gmra.mxu0 %v417
      %v1688 = vpop.f32.mrf.mxu0
      %v1689 = vadd.f32 %v1485, %v1688
      %v1690 = vpop.f32.mrf.mxu0
      %1691 = vmatprep.mubr.f32.mxu0 0.0
      %1692 = vmatmul.mubr.f32.gmra.mxu0 %v420
      %v1693 = vpop.f32.mrf.mxu0
      %v1694 = vadd.f32 %v1485, %v1693
      %v1695 = vpop.f32.mrf.mxu0
      %1696 = vmatprep.mubr.f32.mxu0 0.0
      %1697 = vmatmul.mubr.f32.gmra.mxu0 %v423
      %v1698 = vpop.f32.mrf.mxu0
      %v1699 = vadd.f32 %v1485, %v1698
      %v1700 = vpop.f32.mrf.mxu0
      %1701 = vmatprep.mubr.f32.mxu0 0.0
      %1702 = vmatmul.mubr.f32.gmra.mxu0 %v426
      %v1703 = vpop.f32.mrf.mxu0
      %v1704 = vadd.f32 %v1485, %v1703
      %v1705 = vpop.f32.mrf.mxu0
      %1706 = vmatprep.mubr.f32.mxu0 0.0
      %1707 = vmatmul.mubr.f32.gmra.mxu0 %v429
      %v1708 = vpop.f32.mrf.mxu0
      %v1709 = vadd.f32 %v1485, %v1708
      %v1710 = vpop.f32.mrf.mxu0
      %1711 = vdwg.mxu0
      %v1712 = vmul.f32 %v1554, 0.5
      %v1713 = vmul.f32 %v1559, 0.5
      %v1714 = vmul.f32 %v1564, 0.5
      %v1715 = vmul.f32 %v1569, 0.5
      %v1716 = vmul.f32 %v1574, 0.5
      %v1717 = vmul.f32 %v1579, 0.5
      %v1718 = vmul.f32 %v1584, 0.5
      %v1719 = vmul.f32 %v1589, 0.5
      %v1720 = vmul.f32 %v1594, 0.5
      %v1721 = vmul.f32 %v1599, 0.5
      %v1722 = vmul.f32 %v1604, 0.5
      %v1723 = vmul.f32 %v1609, 0.5
      %v1724 = vmul.f32 %v1614, 0.5
      %v1725 = vmul.f32 %v1619, 0.5
      %v1726 = vmul.f32 %v1624, 0.5
      %v1727 = vmul.f32 %v1629, 0.5
      %v1728 = vmul.f32 %v1634, 0.5
      %v1729 = vmul.f32 %v1639, 0.5
      %v1730 = vmul.f32 %v1644, 0.5
      %v1731 = vmul.f32 %v1649, 0.5
      %v1732 = vmul.f32 %v1654, 0.5
      %v1733 = vmul.f32 %v1659, 0.5
      %v1734 = vmul.f32 %v1664, 0.5
      %v1735 = vmul.f32 %v1669, 0.5
      %v1736 = vmul.f32 %v1674, 0.5
      %v1737 = vmul.f32 %v1679, 0.5
      %v1738 = vmul.f32 %v1684, 0.5
      %v1739 = vmul.f32 %v1689, 0.5
      %v1740 = vmul.f32 %v1694, 0.5
      %v1741 = vmul.f32 %v1699, 0.5
      %v1742 = vmul.f32 %v1704, 0.5
      %v1743 = vmul.f32 %v1709, 0.5
      %v1744 = vmul.f32 %v1554, 0.044715
      %v1745 = vmul.f32 %v1559, 0.044715
      %v1746 = vmul.f32 %v1564, 0.044715
      %v1747 = vmul.f32 %v1569, 0.044715
      %v1748 = vmul.f32 %v1574, 0.044715
      %v1749 = vmul.f32 %v1579, 0.044715
      %v1750 = vmul.f32 %v1584, 0.044715
      %v1751 = vmul.f32 %v1589, 0.044715
      %v1752 = vmul.f32 %v1594, 0.044715
      %v1753 = vmul.f32 %v1599, 0.044715
      %v1754 = vmul.f32 %v1604, 0.044715
      %v1755 = vmul.f32 %v1609, 0.044715
      %v1756 = vmul.f32 %v1614, 0.044715
      %v1757 = vmul.f32 %v1619, 0.044715
      %v1758 = vmul.f32 %v1624, 0.044715
      %v1759 = vmul.f32 %v1629, 0.044715
      %v1760 = vmul.f32 %v1634, 0.044715
      %v1761 = vmul.f32 %v1639, 0.044715
      %v1762 = vmul.f32 %v1644, 0.044715
      %v1763 = vmul.f32 %v1649, 0.044715
      %v1764 = vmul.f32 %v1654, 0.044715
      %v1765 = vmul.f32 %v1659, 0.044715
      %v1766 = vmul.f32 %v1664, 0.044715
      %v1767 = vmul.f32 %v1669, 0.044715
      %v1768 = vmul.f32 %v1674, 0.044715
      %v1769 = vmul.f32 %v1679, 0.044715
      %v1770 = vmul.f32 %v1684, 0.044715
      %v1771 = vmul.f32 %v1689, 0.044715
      %v1772 = vmul.f32 %v1694, 0.044715
      %v1773 = vmul.f32 %v1699, 0.044715
      %v1774 = vmul.f32 %v1704, 0.044715
      %v1775 = vmul.f32 %v1709, 0.044715
      %v1776 = vmul.f32 %v1744, %v1554
      %v1777 = vmul.f32 %v1745, %v1559
      %v1778 = vmul.f32 %v1746, %v1564
      %v1779 = vmul.f32 %v1747, %v1569
      %v1780 = vmul.f32 %v1748, %v1574
      %v1781 = vmul.f32 %v1749, %v1579
      %v1782 = vmul.f32 %v1750, %v1584
      %v1783 = vmul.f32 %v1751, %v1589
      %v1784 = vmul.f32 %v1752, %v1594
      %v1785 = vmul.f32 %v1753, %v1599
      %v1786 = vmul.f32 %v1754, %v1604
      %v1787 = vmul.f32 %v1755, %v1609
      %v1788 = vmul.f32 %v1756, %v1614
      %v1789 = vmul.f32 %v1757, %v1619
      %v1790 = vmul.f32 %v1758, %v1624
      %v1791 = vmul.f32 %v1759, %v1629
      %v1792 = vmul.f32 %v1760, %v1634
      %v1793 = vmul.f32 %v1761, %v1639
      %v1794 = vmul.f32 %v1762, %v1644
      %v1795 = vmul.f32 %v1763, %v1649
      %v1796 = vmul.f32 %v1764, %v1654
      %v1797 = vmul.f32 %v1765, %v1659
      %v1798 = vmul.f32 %v1766, %v1664
      %v1799 = vmul.f32 %v1767, %v1669
      %v1800 = vmul.f32 %v1768, %v1674
      %v1801 = vmul.f32 %v1769, %v1679
      %v1802 = vmul.f32 %v1770, %v1684
      %v1803 = vmul.f32 %v1771, %v1689
      %v1804 = vmul.f32 %v1772, %v1694
      %v1805 = vmul.f32 %v1773, %v1699
      %v1806 = vmul.f32 %v1774, %v1704
      %v1807 = vmul.f32 %v1775, %v1709
      %v1808 = vmul.f32 %v1776, %v1554
      %v1809 = vmul.f32 %v1777, %v1559
      %v1810 = vmul.f32 %v1778, %v1564
      %v1811 = vmul.f32 %v1779, %v1569
      %v1812 = vmul.f32 %v1780, %v1574
      %v1813 = vmul.f32 %v1781, %v1579
      %v1814 = vmul.f32 %v1782, %v1584
      %v1815 = vmul.f32 %v1783, %v1589
      %v1816 = vmul.f32 %v1784, %v1594
      %v1817 = vmul.f32 %v1785, %v1599
      %v1818 = vmul.f32 %v1786, %v1604
      %v1819 = vmul.f32 %v1787, %v1609
      %v1820 = vmul.f32 %v1788, %v1614
      %v1821 = vmul.f32 %v1789, %v1619
      %v1822 = vmul.f32 %v1790, %v1624
      %v1823 = vmul.f32 %v1791, %v1629
      %v1824 = vmul.f32 %v1792, %v1634
      %v1825 = vmul.f32 %v1793, %v1639
      %v1826 = vmul.f32 %v1794, %v1644
      %v1827 = vmul.f32 %v1795, %v1649
      %v1828 = vmul.f32 %v1796, %v1654
      %v1829 = vmul.f32 %v1797, %v1659
      %v1830 = vmul.f32 %v1798, %v1664
      %v1831 = vmul.f32 %v1799, %v1669
      %v1832 = vmul.f32 %v1800, %v1674
      %v1833 = vmul.f32 %v1801, %v1679
      %v1834 = vmul.f32 %v1802, %v1684
      %v1835 = vmul.f32 %v1803, %v1689
      %v1836 = vmul.f32 %v1804, %v1694
      %v1837 = vmul.f32 %v1805, %v1699
      %v1838 = vmul.f32 %v1806, %v1704
      %v1839 = vmul.f32 %v1807, %v1709
      %v1840 = vadd.f32 %v1554, %v1808
      %v1841 = vadd.f32 %v1559, %v1809
      %v1842 = vadd.f32 %v1564, %v1810
      %v1843 = vadd.f32 %v1569, %v1811
      %v1844 = vadd.f32 %v1574, %v1812
      %v1845 = vadd.f32 %v1579, %v1813
      %v1846 = vadd.f32 %v1584, %v1814
      %v1847 = vadd.f32 %v1589, %v1815
      %v1848 = vadd.f32 %v1594, %v1816
      %v1849 = vadd.f32 %v1599, %v1817
      %v1850 = vadd.f32 %v1604, %v1818
      %v1851 = vadd.f32 %v1609, %v1819
      %v1852 = vadd.f32 %v1614, %v1820
      %v1853 = vadd.f32 %v1619, %v1821
      %v1854 = vadd.f32 %v1624, %v1822
      %v1855 = vadd.f32 %v1629, %v1823
      %v1856 = vadd.f32 %v1634, %v1824
      %v1857 = vadd.f32 %v1639, %v1825
      %v1858 = vadd.f32 %v1644, %v1826
      %v1859 = vadd.f32 %v1649, %v1827
      %v1860 = vadd.f32 %v1654, %v1828
      %v1861 = vadd.f32 %v1659, %v1829
      %v1862 = vadd.f32 %v1664, %v1830
      %v1863 = vadd.f32 %v1669, %v1831
      %v1864 = vadd.f32 %v1674, %v1832
      %v1865 = vadd.f32 %v1679, %v1833
      %v1866 = vadd.f32 %v1684, %v1834
      %v1867 = vadd.f32 %v1689, %v1835
      %v1868 = vadd.f32 %v1694, %v1836
      %v1869 = vadd.f32 %v1699, %v1837
      %v1870 = vadd.f32 %v1704, %v1838
      %v1871 = vadd.f32 %v1709, %v1839
      %v1872 = vmul.f32 %v1840, 0.7978846
      %v1873 = vmul.f32 %v1841, 0.7978846
      %v1874 = vmul.f32 %v1842, 0.7978846
      %v1875 = vmul.f32 %v1843, 0.7978846
      %v1876 = vmul.f32 %v1844, 0.7978846
      %v1877 = vmul.f32 %v1845, 0.7978846
      %v1878 = vmul.f32 %v1846, 0.7978846
      %v1879 = vmul.f32 %v1847, 0.7978846
      %v1880 = vmul.f32 %v1848, 0.7978846
      %v1881 = vmul.f32 %v1849, 0.7978846
      %v1882 = vmul.f32 %v1850, 0.7978846
      %v1883 = vmul.f32 %v1851, 0.7978846
      %v1884 = vmul.f32 %v1852, 0.7978846
      %v1885 = vmul.f32 %v1853, 0.7978846
      %v1886 = vmul.f32 %v1854, 0.7978846
      %v1887 = vmul.f32 %v1855, 0.7978846
      %v1888 = vmul.f32 %v1856, 0.7978846
      %v1889 = vmul.f32 %v1857, 0.7978846
      %v1890 = vmul.f32 %v1858, 0.7978846
      %v1891 = vmul.f32 %v1859, 0.7978846
      %v1892 = vmul.f32 %v1860, 0.7978846
      %v1893 = vmul.f32 %v1861, 0.7978846
      %v1894 = vmul.f32 %v1862, 0.7978846
      %v1895 = vmul.f32 %v1863, 0.7978846
      %v1896 = vmul.f32 %v1864, 0.7978846
      %v1897 = vmul.f32 %v1865, 0.7978846
      %v1898 = vmul.f32 %v1866, 0.7978846
      %v1899 = vmul.f32 %v1867, 0.7978846
      %v1900 = vmul.f32 %v1868, 0.7978846
      %v1901 = vmul.f32 %v1869, 0.7978846
      %v1902 = vmul.f32 %v1870, 0.7978846
      %v1903 = vmul.f32 %v1871, 0.7978846
      %v1904 = vtanh.pop %v1872
      %v1905 = vtanh.pop %v1873
      %v1906 = vtanh.pop %v1874
      %v1907 = vtanh.pop %v1875
      %v1908 = vtanh.pop %v1876
      %v1909 = vtanh.pop %v1877
      %v1910 = vtanh.pop %v1878
      %v1911 = vtanh.pop %v1879
      %v1912 = vtanh.pop %v1880
      %v1913 = vtanh.pop %v1881
      %v1914 = vtanh.pop %v1882
      %v1915 = vtanh.pop %v1883
      %v1916 = vtanh.pop %v1884
      %v1917 = vtanh.pop %v1885
      %v1918 = vtanh.pop %v1886
      %v1919 = vtanh.pop %v1887
      %v1920 = vtanh.pop %v1888
      %v1921 = vtanh.pop %v1889
      %v1922 = vtanh.pop %v1890
      %v1923 = vtanh.pop %v1891
      %v1924 = vtanh.pop %v1892
      %v1925 = vtanh.pop %v1893
      %v1926 = vtanh.pop %v1894
      %v1927 = vtanh.pop %v1895
      %v1928 = vtanh.pop %v1896
      %v1929 = vtanh.pop %v1897
      %v1930 = vtanh.pop %v1898
      %v1931 = vtanh.pop %v1899
      %v1932 = vtanh.pop %v1900
      %v1933 = vtanh.pop %v1901
      %v1934 = vtanh.pop %v1902
      %v1935 = vtanh.pop %v1903
      %v1936 = vadd.f32 %v1904, 1.0
      %v1937 = vadd.f32 %v1905, 1.0
      %v1938 = vadd.f32 %v1906, 1.0
      %v1939 = vadd.f32 %v1907, 1.0
      %v1940 = vadd.f32 %v1908, 1.0
      %v1941 = vadd.f32 %v1909, 1.0
      %v1942 = vadd.f32 %v1910, 1.0
      %v1943 = vadd.f32 %v1911, 1.0
      %v1944 = vadd.f32 %v1912, 1.0
      %v1945 = vadd.f32 %v1913, 1.0
      %v1946 = vadd.f32 %v1914, 1.0
      %v1947 = vadd.f32 %v1915, 1.0
      %v1948 = vadd.f32 %v1916, 1.0
      %v1949 = vadd.f32 %v1917, 1.0
      %v1950 = vadd.f32 %v1918, 1.0
      %v1951 = vadd.f32 %v1919, 1.0
      %v1952 = vadd.f32 %v1920, 1.0
      %v1953 = vadd.f32 %v1921, 1.0
      %v1954 = vadd.f32 %v1922, 1.0
      %v1955 = vadd.f32 %v1923, 1.0
      %v1956 = vadd.f32 %v1924, 1.0
      %v1957 = vadd.f32 %v1925, 1.0
      %v1958 = vadd.f32 %v1926, 1.0
      %v1959 = vadd.f32 %v1927, 1.0
      %v1960 = vadd.f32 %v1928, 1.0
      %v1961 = vadd.f32 %v1929, 1.0
      %v1962 = vadd.f32 %v1930, 1.0
      %v1963 = vadd.f32 %v1931, 1.0
      %v1964 = vadd.f32 %v1932, 1.0
      %v1965 = vadd.f32 %v1933, 1.0
      %v1966 = vadd.f32 %v1934, 1.0
      %v1967 = vadd.f32 %v1935, 1.0
      %v1968 = vmul.f32 %v1712, %v1936
      %v1969 = vmul.f32 %v1713, %v1937
      %v1970 = vmul.f32 %v1714, %v1938
      %v1971 = vmul.f32 %v1715, %v1939
      %v1972 = vmul.f32 %v1716, %v1940
      %v1973 = vmul.f32 %v1717, %v1941
      %v1974 = vmul.f32 %v1718, %v1942
      %v1975 = vmul.f32 %v1719, %v1943
      %v1976 = vmul.f32 %v1720, %v1944
      %v1977 = vmul.f32 %v1721, %v1945
      %v1978 = vmul.f32 %v1722, %v1946
      %v1979 = vmul.f32 %v1723, %v1947
      %v1980 = vmul.f32 %v1724, %v1948
      %v1981 = vmul.f32 %v1725, %v1949
      %v1982 = vmul.f32 %v1726, %v1950
      %v1983 = vmul.f32 %v1727, %v1951
      %v1984 = vmul.f32 %v1728, %v1952
      %v1985 = vmul.f32 %v1729, %v1953
      %v1986 = vmul.f32 %v1730, %v1954
      %v1987 = vmul.f32 %v1731, %v1955
      %v1988 = vmul.f32 %v1732, %v1956
      %v1989 = vmul.f32 %v1733, %v1957
      %v1990 = vmul.f32 %v1734, %v1958
      %v1991 = vmul.f32 %v1735, %v1959
      %v1992 = vmul.f32 %v1736, %v1960
      %v1993 = vmul.f32 %v1737, %v1961
      %v1994 = vmul.f32 %v1738, %v1962
      %v1995 = vmul.f32 %v1739, %v1963
      %v1996 = vmul.f32 %v1740, %v1964
      %v1997 = vmul.f32 %v1741, %v1965
      %v1998 = vmul.f32 %v1742, %v1966
      %v1999 = vmul.f32 %v1743, %v1967
      %v2001 = vsel %vm334, %v912, 0
      %v2004 = vsel %vm334, %v913, 0
      %v2007 = vsel %vm334, %v914, 0
      %v2010 = vsel %vm334, %v915, 0
      %v2013 = vsel %vm334, %v916, 0
      %v2016 = vsel %vm334, %v917, 0
      %v2019 = vsel %vm334, %v918, 0
      %v2022 = vsel %vm334, %v919, 0
      %v2025 = vsel %vm334, %v1440, 0
      %v2028 = vsel %vm334, %v1441, 0
      %v2031 = vsel %vm334, %v1442, 0
      %v2034 = vsel %vm334, %v1443, 0
      %v2037 = vsel %vm334, %v1444, 0
      %v2040 = vsel %vm334, %v1445, 0
      %v2043 = vsel %vm334, %v1446, 0
      %v2046 = vsel %vm334, %v1447, 0
      %2048 = vmatprep.subr.mxu0 0.0
      %2049 = vmatpush1.xpose.msra.mxu0 0.0
      %2050 = vmatprep.subr.mxu0 0.0
      %2051 = vmatpush1.xpose.msra.mxu0 0.0
      %2052 = vmatprep.subr.mxu0 0.0
      %2053 = vmatpush1.xpose.msra.mxu0 0.0
      %2054 = vmatprep.subr.mxu0 0.0
      %2055 = vmatpush1.xpose.msra.mxu0 0.0
      %2056 = vmatprep.subr.mxu0 0.0
      %2057 = vmatpush1.xpose.msra.mxu0 0.0
      %2058 = vmatprep.subr.mxu0 0.0
      %2059 = vmatpush1.xpose.msra.mxu0 0.0
      %2060 = vmatprep.subr.mxu0 0.0
      %2061 = vmatpush1.xpose.msra.mxu0 0.0
      %2062 = vmatprep.subr.mxu0 0.0
      %2063 = vmatpush1.xpose.msra.mxu0 0.0
      %2064 = vmatprep.subr.mxu0 0.0
      %2065 = vmatpush1.xpose.msra.mxu0 %v2046
      %2066 = vmatprep.subr.mxu0 0.0
      %2067 = vmatpush1.xpose.msra.mxu0 %v2043
      %2068 = vmatprep.subr.mxu0 0.0
      %2069 = vmatpush1.xpose.msra.mxu0 %v2040
      %2070 = vmatprep.subr.mxu0 0.0
      %2071 = vmatpush1.xpose.msra.mxu0 %v2037
      %2072 = vmatprep.subr.mxu0 0.0
      %2073 = vmatpush1.xpose.msra.mxu0 %v2034
      %2074 = vmatprep.subr.mxu0 0.0
      %2075 = vmatpush1.xpose.msra.mxu0 %v2031
      %2076 = vmatprep.subr.mxu0 0.0
      %2077 = vmatpush1.xpose.msra.mxu0 %v2028
      %2078 = vmatprep.subr.mxu0 0.0
      %2079 = vmatpush1.xpose.msra.mxu0 %v2025
      %2080 = vmatprep.subr.mxu0 0.0
      %2081 = vmatpush2.xpose.msra.mxu0 0.0
      %2082 = vmatprep.subr.mxu0 0.0
      %2083 = vmatpush2.xpose.msra.mxu0 0.0
      %2084 = vmatprep.subr.mxu0 0.0
      %2085 = vmatpush2.xpose.msra.mxu0 0.0
      %2086 = vmatprep.subr.mxu0 0.0
      %2087 = vmatpush2.xpose.msra.mxu0 0.0
      %2088 = vmatprep.subr.mxu0 0.0
      %2089 = vmatpush2.xpose.msra.mxu0 0.0
      %2090 = vmatprep.subr.mxu0 0.0
      %2091 = vmatpush2.xpose.msra.mxu0 0.0
      %2092 = vmatprep.subr.mxu0 0.0
      %2093 = vmatpush2.xpose.msra.mxu0 0.0
      %2094 = vmatprep.subr.mxu0 0.0
      %2095 = vmatpush2.xpose.msra.mxu0 0.0
      %2096 = vmatprep.subr.mxu0 0.0
      %2097 = vmatpush2.xpose.msra.mxu0 0.0
      %2098 = vmatprep.subr.mxu0 0.0
      %2099 = vmatpush2.xpose.msra.mxu0 0.0
      %2100 = vmatprep.subr.mxu0 0.0
      %2101 = vmatpush2.xpose.msra.mxu0 0.0
      %2102 = vmatprep.subr.mxu0 0.0
      %2103 = vmatpush2.xpose.msra.mxu0 0.0
      %2104 = vmatprep.subr.mxu0 0.0
      %2105 = vmatpush2.xpose.msra.mxu0 0.0
      %2106 = vmatprep.subr.mxu0 0.0
      %2107 = vmatpush2.xpose.msra.mxu0 0.0
      %2108 = vmatprep.subr.mxu0 0.0
      %2109 = vmatpush2.xpose.msra.mxu0 0.0
      %2110 = vmatprep.subr.mxu0 0.0
      %2111 = vmatpush2.xpose.msra.mxu0 0.0
      %2112 = vmatprep.mubr.f32.mxu0 0.0
      %2113 = vmatmul.mubr.f32.gmra.mxu0 %v2001
      %v2114 = vpop.f32.mrf.mxu0
      %v2115 = vadd.f32 0.0, %v2114
      %v2116 = vpop.f32.mrf.mxu0
      %2117 = vmatprep.mubr.f32.mxu0 0.0
      %2118 = vmatmul.mubr.f32.gmra.mxu0 %v2004
      %v2119 = vpop.f32.mrf.mxu0
      %v2120 = vadd.f32 0.0, %v2119
      %v2121 = vpop.f32.mrf.mxu0
      %2122 = vmatprep.mubr.f32.mxu0 0.0
      %2123 = vmatmul.mubr.f32.gmra.mxu0 %v2007
      %v2124 = vpop.f32.mrf.mxu0
      %v2125 = vadd.f32 0.0, %v2124
      %v2126 = vpop.f32.mrf.mxu0
      %2127 = vmatprep.mubr.f32.mxu0 0.0
      %2128 = vmatmul.mubr.f32.gmra.mxu0 %v2010
      %v2129 = vpop.f32.mrf.mxu0
      %v2130 = vadd.f32 0.0, %v2129
      %v2131 = vpop.f32.mrf.mxu0
      %2132 = vmatprep.mubr.f32.mxu0 0.0
      %2133 = vmatmul.mubr.f32.gmra.mxu0 %v2013
      %v2134 = vpop.f32.mrf.mxu0
      %v2135 = vadd.f32 0.0, %v2134
      %v2136 = vpop.f32.mrf.mxu0
      %2137 = vmatprep.mubr.f32.mxu0 0.0
      %2138 = vmatmul.mubr.f32.gmra.mxu0 %v2016
      %v2139 = vpop.f32.mrf.mxu0
      %v2140 = vadd.f32 0.0, %v2139
      %v2141 = vpop.f32.mrf.mxu0
      %2142 = vmatprep.mubr.f32.mxu0 0.0
      %2143 = vmatmul.mubr.f32.gmra.mxu0 %v2019
      %v2144 = vpop.f32.mrf.mxu0
      %v2145 = vadd.f32 0.0, %v2144
      %v2146 = vpop.f32.mrf.mxu0
      %2147 = vmatprep.mubr.f32.mxu0 0.0
      %2148 = vmatmul.mubr.f32.gmra.mxu0 %v2022
      %v2149 = vpop.f32.mrf.mxu0
      %v2150 = vadd.f32 0.0, %v2149
      %v2151 = vpop.f32.mrf.mxu0
      %2152 = vdwg.mxu0
      %v2153 = vmul.f32 %v2115, 0.125
      %v2154 = vmul.f32 %v2120, 0.125
      %v2155 = vmul.f32 %v2125, 0.125
      %v2156 = vmul.f32 %v2130, 0.125
      %v2157 = vmul.f32 %v2135, 0.125
      %v2158 = vmul.f32 %v2140, 0.125
      %v2159 = vmul.f32 %v2145, 0.125
      %v2160 = vmul.f32 %v2150, 0.125
      %v2161 = vsel %vm334, %v2153, -inf
      %2162 = vmax.xlane.f32.xlu0 %v2161
      %v2163 = vpop.xlane.xlu0 %2162
      %v2164 = vsel %vm334, %v2154, -inf
      %2165 = vmax.xlane.f32.xlu0 %v2164
      %v2166 = vpop.xlane.xlu0 %2165
      %v2167 = vsel %vm334, %v2155, -inf
      %2168 = vmax.xlane.f32.xlu0 %v2167
      %v2169 = vpop.xlane.xlu0 %2168
      %v2170 = vsel %vm334, %v2156, -inf
      %2171 = vmax.xlane.f32.xlu0 %v2170
      %v2172 = vpop.xlane.xlu0 %2171
      %v2173 = vsel %vm334, %v2157, -inf
      %2174 = vmax.xlane.f32.xlu0 %v2173
      %v2175 = vpop.xlane.xlu0 %2174
      %v2176 = vsel %vm334, %v2158, -inf
      %2177 = vmax.xlane.f32.xlu0 %v2176
      %v2178 = vpop.xlane.xlu0 %2177
      %v2179 = vsel %vm334, %v2159, -inf
      %2180 = vmax.xlane.f32.xlu0 %v2179
      %v2181 = vpop.xlane.xlu0 %2180
      %v2182 = vsel %vm334, %v2160, -inf
      %2183 = vmax.xlane.f32.xlu0 %v2182
      %v2184 = vpop.xlane.xlu0 %2183
      %v2185 = vsub.f32 %v2153, %v2163
      %v2186 = vsub.f32 %v2154, %v2166
      %v2187 = vsub.f32 %v2155, %v2169
      %v2188 = vsub.f32 %v2156, %v2172
      %v2189 = vsub.f32 %v2157, %v2175
      %v2190 = vsub.f32 %v2158, %v2178
      %v2191 = vsub.f32 %v2159, %v2181
      %v2192 = vsub.f32 %v2160, %v2184
      %v2193 = vmul.f32 %v2185, 1.442695
      %v2194 = vpow.pop %v2193
      %v2195 = vmul.f32 %v2186, 1.442695
      %v2196 = vpow.pop %v2195
      %v2197 = vmul.f32 %v2187, 1.442695
      %v2198 = vpow.pop %v2197
      %v2199 = vmul.f32 %v2188, 1.442695
      %v2200 = vpow.pop %v2199
      %v2201 = vmul.f32 %v2189, 1.442695
      %v2202 = vpow.pop %v2201
      %v2203 = vmul.f32 %v2190, 1.442695
      %v2204 = vpow.pop %v2203
      %v2205 = vmul.f32 %v2191, 1.442695
      %v2206 = vpow.pop %v2205
      %v2207 = vmul.f32 %v2192, 1.442695
      %v2208 = vpow.pop %v2207
      %v2209 = vsel %vm334, %v2194, 0.0
      %2210 = vadd.xlane.f32.xlu0 %v2209
      %v2211 = vpop.xlane.xlu0 %2210
      %v2212 = vsel %vm334, %v2196, 0.0
      %2213 = vadd.xlane.f32.xlu0 %v2212
      %v2214 = vpop.xlane.xlu0 %2213
      %v2215 = vsel %vm334, %v2198, 0.0
      %2216 = vadd.xlane.f32.xlu0 %v2215
      %v2217 = vpop.xlane.xlu0 %2216
      %v2218 = vsel %vm334, %v2200, 0.0
      %2219 = vadd.xlane.f32.xlu0 %v2218
      %v2220 = vpop.xlane.xlu0 %2219
      %v2221 = vsel %vm334, %v2202, 0.0
      %2222 = vadd.xlane.f32.xlu0 %v2221
      %v2223 = vpop.xlane.xlu0 %2222
      %v2224 = vsel %vm334, %v2204, 0.0
      %2225 = vadd.xlane.f32.xlu0 %v2224
      %v2226 = vpop.xlane.xlu0 %2225
      %v2227 = vsel %vm334, %v2206, 0.0
      %2228 = vadd.xlane.f32.xlu0 %v2227
      %v2229 = vpop.xlane.xlu0 %2228
      %v2230 = vsel %vm334, %v2208, 0.0
      %2231 = vadd.xlane.f32.xlu0 %v2230
      %v2232 = vpop.xlane.xlu0 %2231
      %v2233 = vrcp.pop %v2211
      %v2234 = vmul.f32 %v2194, %v2233
      %v2235 = vrcp.pop %v2214
      %v2236 = vmul.f32 %v2196, %v2235
      %v2237 = vrcp.pop %v2217
      %v2238 = vmul.f32 %v2198, %v2237
      %v2239 = vrcp.pop %v2220
      %v2240 = vmul.f32 %v2200, %v2239
      %v2241 = vrcp.pop %v2223
      %v2242 = vmul.f32 %v2202, %v2241
      %v2243 = vrcp.pop %v2226
      %v2244 = vmul.f32 %v2204, %v2243
      %v2245 = vrcp.pop %v2229
      %v2246 = vmul.f32 %v2206, %v2245
      %v2247 = vrcp.pop %v2232
      %v2248 = vmul.f32 %v2208, %v2247
      %v2250 = vsel %vm334, %v2234, 0
      %v2253 = vsel %vm334, %v2236, 0
      %v2256 = vsel %vm334, %v2238, 0
      %v2259 = vsel %vm334, %v2240, 0
      %v2262 = vsel %vm334, %v2242, 0
      %v2265 = vsel %vm334, %v2244, 0
      %v2268 = vsel %vm334, %v2246, 0
      %v2271 = vsel %vm334, %v2248, 0
      %2273 = vmatprep.subr.mxu0 0.0
      %2274 = vmatpush1.msra.mxu0 0.0
      %2275 = vmatprep.subr.mxu0 0.0
      %2276 = vmatpush1.msra.mxu0 0.0
      %2277 = vmatprep.subr.mxu0 0.0
      %2278 = vmatpush1.msra.mxu0 0.0
      %2279 = vmatprep.subr.mxu0 0.0
      %2280 = vmatpush1.msra.mxu0 0.0
      %2281 = vmatprep.subr.mxu0 0.0
      %2282 = vmatpush1.msra.mxu0 0.0
      %2283 = vmatprep.subr.mxu0 0.0
      %2284 = vmatpush1.msra.mxu0 0.0
      %2285 = vmatprep.subr.mxu0 0.0
      %2286 = vmatpush1.msra.mxu0 0.0
      %2287 = vmatprep.subr.mxu0 0.0
      %2288 = vmatpush1.msra.mxu0 0.0
      %2289 = vmatprep.subr.mxu0 0.0
      %2290 = vmatpush1.msra.mxu0 %v1975
      %2291 = vmatprep.subr.mxu0 0.0
      %2292 = vmatpush1.msra.mxu0 %v1974
      %2293 = vmatprep.subr.mxu0 0.0
      %2294 = vmatpush1.msra.mxu0 %v1973
      %2295 = vmatprep.subr.mxu0 0.0
      %2296 = vmatpush1.msra.mxu0 %v1972
      %2297 = vmatprep.subr.mxu0 0.0
      %2298 = vmatpush1.msra.mxu0 %v1971
      %2299 = vmatprep.subr.mxu0 0.0
      %2300 = vmatpush1.msra.mxu0 %v1970
      %2301 = vmatprep.subr.mxu0 0.0
      %2302 = vmatpush1.msra.mxu0 %v1969
      %2303 = vmatprep.subr.mxu0 0.0
      %2304 = vmatpush1.msra.mxu0 %v1968
      %2305 = vmatprep.subr.mxu0 0.0
      %2306 = vmatpush2.msra.mxu0 0.0
      %2307 = vmatprep.subr.mxu0 0.0
      %2308 = vmatpush2.msra.mxu0 0.0
      %2309 = vmatprep.subr.mxu0 0.0
      %2310 = vmatpush2.msra.mxu0 0.0
      %2311 = vmatprep.subr.mxu0 0.0
      %2312 = vmatpush2.msra.mxu0 0.0
      %2313 = vmatprep.subr.mxu0 0.0
      %2314 = vmatpush2.msra.mxu0 0.0
      %2315 = vmatprep.subr.mxu0 0.0
      %2316 = vmatpush2.msra.mxu0 0.0
      %2317 = vmatprep.subr.mxu0 0.0
      %2318 = vmatpush2.msra.mxu0 0.0
      %2319 = vmatprep.subr.mxu0 0.0
      %2320 = vmatpush2.msra.mxu0 0.0
      %2321 = vmatprep.subr.mxu0 0.0
      %2322 = vmatpush2.msra.mxu0 0.0
      %2323 = vmatprep.subr.mxu0 0.0
      %2324 = vmatpush2.msra.mxu0 0.0
      %2325 = vmatprep.subr.mxu0 0.0
      %2326 = vmatpush2.msra.mxu0 0.0
      %2327 = vmatprep.subr.mxu0 0.0
      %2328 = vmatpush2.msra.mxu0 0.0
      %2329 = vmatprep.subr.mxu0 0.0
      %2330 = vmatpush2.msra.mxu0 0.0
      %2331 = vmatprep.subr.mxu0 0.0
      %2332 = vmatpush2.msra.mxu0 0.0
      %2333 = vmatprep.subr.mxu0 0.0
      %2334 = vmatpush2.msra.mxu0 0.0
      %2335 = vmatprep.subr.mxu0 0.0
      %2336 = vmatpush2.msra.mxu0 0.0
      %2337 = vmatprep.mubr.f32.mxu0 0.0
      %2338 = vmatmul.mubr.f32.gmra.mxu0 %v2250
      %v2339 = vpop.f32.mrf.mxu0
      %v2340 = vadd.f32 0.0, %v2339
      %v2341 = vpop.f32.mrf.mxu0
      %2342 = vmatprep.mubr.f32.mxu0 0.0
      %2343 = vmatmul.mubr.f32.gmra.mxu0 %v2253
      %v2344 = vpop.f32.mrf.mxu0
      %v2345 = vadd.f32 0.0, %v2344
      %v2346 = vpop.f32.mrf.mxu0
      %2347 = vmatprep.mubr.f32.mxu0 0.0
      %2348 = vmatmul.mubr.f32.gmra.mxu0 %v2256
      %v2349 = vpop.f32.mrf.mxu0
      %v2350 = vadd.f32 0.0, %v2349
      %v2351 = vpop.f32.mrf.mxu0
      %2352 = vmatprep.mubr.f32.mxu0 0.0
      %2353 = vmatmul.mubr.f32.gmra.mxu0 %v2259
      %v2354 = vpop.f32.mrf.mxu0
      %v2355 = vadd.f32 0.0, %v2354
      %v2356 = vpop.f32.mrf.mxu0
      %2357 = vmatprep.mubr.f32.mxu0 0.0
      %2358 = vmatmul.mubr.f32.gmra.mxu0 %v2262
      %v2359 = vpop.f32.mrf.mxu0
      %v2360 = vadd.f32 0.0, %v2359
      %v2361 = vpop.f32.mrf.mxu0
      %2362 = vmatprep.mubr.f32.mxu0 0.0
      %2363 = vmatmul.mubr.f32.gmra.mxu0 %v2265
      %v2364 = vpop.f32.mrf.mxu0
      %v2365 = vadd.f32 0.0, %v2364
      %v2366 = vpop.f32.mrf.mxu0
      %2367 = vmatprep.mubr.f32.mxu0 0.0
      %2368 = vmatmul.mubr.f32.gmra.mxu0 %v2268
      %v2369 = vpop.f32.mrf.mxu0
      %v2370 = vadd.f32 0.0, %v2369
      %v2371 = vpop.f32.mrf.mxu0
      %2372 = vmatprep.mubr.f32.mxu0 0.0
      %2373 = vmatmul.mubr.f32.gmra.mxu0 %v2271
      %v2374 = vpop.f32.mrf.mxu0
      %v2375 = vadd.f32 0.0, %v2374
      %v2376 = vpop.f32.mrf.mxu0
      %2377 = vdwg.mxu0
      %2378 = vst.msk [vmem:[%s285] sm:$0xff] %vm334, %v2340
      %2379 = vst.msk [vmem:[%s285 + $0x8] sm:$0xff] %vm334, %v2345
      %2380 = vst.msk [vmem:[%s285 + $0x10] sm:$0xff] %vm334, %v2350
      %2381 = vst.msk [vmem:[%s285 + $0x18] sm:$0xff] %vm334, %v2355
      %2382 = vst.msk [vmem:[%s285 + $0x20] sm:$0xff] %vm334, %v2360
      %2383 = vst.msk [vmem:[%s285 + $0x28] sm:$0xff] %vm334, %v2365
      %2384 = vst.msk [vmem:[%s285 + $0x30] sm:$0xff] %vm334, %v2370
      %2385 = vst.msk [vmem:[%s285 + $0x38] sm:$0xff] %vm334, %v2375
      %v2387 = vsel %vm334, %v920, 0
      %v2390 = vsel %vm334, %v921, 0
      %v2393 = vsel %vm334, %v922, 0
      %v2396 = vsel %vm334, %v923, 0
      %v2399 = vsel %vm334, %v924, 0
      %v2402 = vsel %vm334, %v925, 0
      %v2405 = vsel %vm334, %v926, 0
      %v2408 = vsel %vm334, %v927, 0
      %v2411 = vsel %vm334, %v1448, 0
      %v2414 = vsel %vm334, %v1449, 0
      %v2417 = vsel %vm334, %v1450, 0
      %v2420 = vsel %vm334, %v1451, 0
      %v2423 = vsel %vm334, %v1452, 0
      %v2426 = vsel %vm334, %v1453, 0
      %v2429 = vsel %vm334, %v1454, 0
      %v2432 = vsel %vm334, %v1455, 0
      %2434 = vmatprep.subr.mxu0 0.0
      %2435 = vmatpush1.xpose.msra.mxu0 0.0
      %2436 = vmatprep.subr.mxu0 0.0
      %2437 = vmatpush1.xpose.msra.mxu0 0.0
      %2438 = vmatprep.subr.mxu0 0.0
      %2439 = vmatpush1.xpose.msra.mxu0 0.0
      %2440 = vmatprep.subr.mxu0 0.0
      %2441 = vmatpush1.xpose.msra.mxu0 0.0
      %2442 = vmatprep.subr.mxu0 0.0
      %2443 = vmatpush1.xpose.msra.mxu0 0.0
      %2444 = vmatprep.subr.mxu0 0.0
      %2445 = vmatpush1.xpose.msra.mxu0 0.0
      %2446 = vmatprep.subr.mxu0 0.0
      %2447 = vmatpush1.xpose.msra.mxu0 0.0
      %2448 = vmatprep.subr.mxu0 0.0
      %2449 = vmatpush1.xpose.msra.mxu0 0.0
      %2450 = vmatprep.subr.mxu0 0.0
      %2451 = vmatpush1.xpose.msra.mxu0 %v2432
      %2452 = vmatprep.subr.mxu0 0.0
      %2453 = vmatpush1.xpose.msra.mxu0 %v2429
      %2454 = vmatprep.subr.mxu0 0.0
      %2455 = vmatpush1.xpose.msra.mxu0 %v2426
      %2456 = vmatprep.subr.mxu0 0.0
      %2457 = vmatpush1.xpose.msra.mxu0 %v2423
      %2458 = vmatprep.subr.mxu0 0.0
      %2459 = vmatpush1.xpose.msra.mxu0 %v2420
      %2460 = vmatprep.subr.mxu0 0.0
      %2461 = vmatpush1.xpose.msra.mxu0 %v2417
      %2462 = vmatprep.subr.mxu0 0.0
      %2463 = vmatpush1.xpose.msra.mxu0 %v2414
      %2464 = vmatprep.subr.mxu0 0.0
      %2465 = vmatpush1.xpose.msra.mxu0 %v2411
      %2466 = vmatprep.subr.mxu0 0.0
      %2467 = vmatpush2.xpose.msra.mxu0 0.0
      %2468 = vmatprep.subr.mxu0 0.0
      %2469 = vmatpush2.xpose.msra.mxu0 0.0
      %2470 = vmatprep.subr.mxu0 0.0
      %2471 = vmatpush2.xpose.msra.mxu0 0.0
      %2472 = vmatprep.subr.mxu0 0.0
      %2473 = vmatpush2.xpose.msra.mxu0 0.0
      %2474 = vmatprep.subr.mxu0 0.0
      %2475 = vmatpush2.xpose.msra.mxu0 0.0
      %2476 = vmatprep.subr.mxu0 0.0
      %2477 = vmatpush2.xpose.msra.mxu0 0.0
      %2478 = vmatprep.subr.mxu0 0.0
      %2479 = vmatpush2.xpose.msra.mxu0 0.0
      %2480 = vmatprep.subr.mxu0 0.0
      %2481 = vmatpush2.xpose.msra.mxu0 0.0
      %2482 = vmatprep.subr.mxu0 0.0
      %2483 = vmatpush2.xpose.msra.mxu0 0.0
      %2484 = vmatprep.subr.mxu0 0.0
      %2485 = vmatpush2.xpose.msra.mxu0 0.0
      %2486 = vmatprep.subr.mxu0 0.0
      %2487 = vmatpush2.xpose.msra.mxu0 0.0
      %2488 = vmatprep.subr.mxu0 0.0
      %2489 = vmatpush2.xpose.msra.mxu0 0.0
      %2490 = vmatprep.subr.mxu0 0.0
      %2491 = vmatpush2.xpose.msra.mxu0 0.0
      %2492 = vmatprep.subr.mxu0 0.0
      %2493 = vmatpush2.xpose.msra.mxu0 0.0
      %2494 = vmatprep.subr.mxu0 0.0
      %2495 = vmatpush2.xpose.msra.mxu0 0.0
      %2496 = vmatprep.subr.mxu0 0.0
      %2497 = vmatpush2.xpose.msra.mxu0 0.0
      %2498 = vmatprep.mubr.f32.mxu0 0.0
      %2499 = vmatmul.mubr.f32.gmra.mxu0 %v2387
      %v2500 = vpop.f32.mrf.mxu0
      %v2501 = vadd.f32 0.0, %v2500
      %v2502 = vpop.f32.mrf.mxu0
      %2503 = vmatprep.mubr.f32.mxu0 0.0
      %2504 = vmatmul.mubr.f32.gmra.mxu0 %v2390
      %v2505 = vpop.f32.mrf.mxu0
      %v2506 = vadd.f32 0.0, %v2505
      %v2507 = vpop.f32.mrf.mxu0
      %2508 = vmatprep.mubr.f32.mxu0 0.0
      %2509 = vmatmul.mubr.f32.gmra.mxu0 %v2393
      %v2510 = vpop.f32.mrf.mxu0
      %v2511 = vadd.f32 0.0, %v2510
      %v2512 = vpop.f32.mrf.mxu0
      %2513 = vmatprep.mubr.f32.mxu0 0.0
      %2514 = vmatmul.mubr.f32.gmra.mxu0 %v2396
      %v2515 = vpop.f32.mrf.mxu0
      %v2516 = vadd.f32 0.0, %v2515
      %v2517 = vpop.f32.mrf.mxu0
      %2518 = vmatprep.mubr.f32.mxu0 0.0
      %2519 = vmatmul.mubr.f32.gmra.mxu0 %v2399
      %v2520 = vpop.f32.mrf.mxu0
      %v2521 = vadd.f32 0.0, %v2520
      %v2522 = vpop.f32.mrf.mxu0
      %2523 = vmatprep.mubr.f32.mxu0 0.0
      %2524 = vmatmul.mubr.f32.gmra.mxu0 %v2402
      %v2525 = vpop.f32.mrf.mxu0
      %v2526 = vadd.f32 0.0, %v2525
      %v2527 = vpop.f32.mrf.mxu0
      %2528 = vmatprep.mubr.f32.mxu0 0.0
      %2529 = vmatmul.mubr.f32.gmra.mxu0 %v2405
      %v2530 = vpop.f32.mrf.mxu0
      %v2531 = vadd.f32 0.0, %v2530
      %v2532 = vpop.f32.mrf.mxu0
      %2533 = vmatprep.mubr.f32.mxu0 0.0
      %2534 = vmatmul.mubr.f32.gmra.mxu0 %v2408
      %v2535 = vpop.f32.mrf.mxu0
      %v2536 = vadd.f32 0.0, %v2535
      %v2537 = vpop.f32.mrf.mxu0
      %2538 = vdwg.mxu0
      %v2539 = vmul.f32 %v2501, 0.125
      %v2540 = vmul.f32 %v2506, 0.125
      %v2541 = vmul.f32 %v2511, 0.125
      %v2542 = vmul.f32 %v2516, 0.125
      %v2543 = vmul.f32 %v2521, 0.125
      %v2544 = vmul.f32 %v2526, 0.125
      %v2545 = vmul.f32 %v2531, 0.125
      %v2546 = vmul.f32 %v2536, 0.125
      %v2547 = vsel %vm334, %v2539, -inf
      %2548 = vmax.xlane.f32.xlu0 %v2547
      %v2549 = vpop.xlane.xlu0 %2548
      %v2550 = vsel %vm334, %v2540, -inf
      %2551 = vmax.xlane.f32.xlu0 %v2550
      %v2552 = vpop.xlane.xlu0 %2551
      %v2553 = vsel %vm334, %v2541, -inf
      %2554 = vmax.xlane.f32.xlu0 %v2553
      %v2555 = vpop.xlane.xlu0 %2554
      %v2556 = vsel %vm334, %v2542, -inf
      %2557 = vmax.xlane.f32.xlu0 %v2556
      %v2558 = vpop.xlane.xlu0 %2557
      %v2559 = vsel %vm334, %v2543, -inf
      %2560 = vmax.xlane.f32.xlu0 %v2559
      %v2561 = vpop.xlane.xlu0 %2560
      %v2562 = vsel %vm334, %v2544, -inf
      %2563 = vmax.xlane.f32.xlu0 %v2562
      %v2564 = vpop.xlane.xlu0 %2563
      %v2565 = vsel %vm334, %v2545, -inf
      %2566 = vmax.xlane.f32.xlu0 %v2565
      %v2567 = vpop.xlane.xlu0 %2566
      %v2568 = vsel %vm334, %v2546, -inf
      %2569 = vmax.xlane.f32.xlu0 %v2568
      %v2570 = vpop.xlane.xlu0 %2569
      %v2571 = vsub.f32 %v2539, %v2549
      %v2572 = vsub.f32 %v2540, %v2552
      %v2573 = vsub.f32 %v2541, %v2555
      %v2574 = vsub.f32 %v2542, %v2558
      %v2575 = vsub.f32 %v2543, %v2561
      %v2576 = vsub.f32 %v2544, %v2564
      %v2577 = vsub.f32 %v2545, %v2567
      %v2578 = vsub.f32 %v2546, %v2570
      %v2579 = vmul.f32 %v2571, 1.442695
      %v2580 = vpow.pop %v2579
      %v2581 = vmul.f32 %v2572, 1.442695
      %v2582 = vpow.pop %v2581
      %v2583 = vmul.f32 %v2573, 1.442695
      %v2584 = vpow.pop %v2583
      %v2585 = vmul.f32 %v2574, 1.442695
      %v2586 = vpow.pop %v2585
      %v2587 = vmul.f32 %v2575, 1.442695
      %v2588 = vpow.pop %v2587
      %v2589 = vmul.f32 %v2576, 1.442695
      %v2590 = vpow.pop %v2589
      %v2591 = vmul.f32 %v2577, 1.442695
      %v2592 = vpow.pop %v2591
      %v2593 = vmul.f32 %v2578, 1.442695
      %v2594 = vpow.pop %v2593
      %v2595 = vsel %vm334, %v2580, 0.0
      %2596 = vadd.xlane.f32.xlu0 %v2595
      %v2597 = vpop.xlane.xlu0 %2596
      %v2598 = vsel %vm334, %v2582, 0.0
      %2599 = vadd.xlane.f32.xlu0 %v2598
      %v2600 = vpop.xlane.xlu0 %2599
      %v2601 = vsel %vm334, %v2584, 0.0
      %2602 = vadd.xlane.f32.xlu0 %v2601
      %v2603 = vpop.xlane.xlu0 %2602
      %v2604 = vsel %vm334, %v2586, 0.0
      %2605 = vadd.xlane.f32.xlu0 %v2604
      %v2606 = vpop.xlane.xlu0 %2605
      %v2607 = vsel %vm334, %v2588, 0.0
      %2608 = vadd.xlane.f32.xlu0 %v2607
      %v2609 = vpop.xlane.xlu0 %2608
      %v2610 = vsel %vm334, %v2590, 0.0
      %2611 = vadd.xlane.f32.xlu0 %v2610
      %v2612 = vpop.xlane.xlu0 %2611
      %v2613 = vsel %vm334, %v2592, 0.0
      %2614 = vadd.xlane.f32.xlu0 %v2613
      %v2615 = vpop.xlane.xlu0 %2614
      %v2616 = vsel %vm334, %v2594, 0.0
      %2617 = vadd.xlane.f32.xlu0 %v2616
      %v2618 = vpop.xlane.xlu0 %2617
      %v2619 = vrcp.pop %v2597
      %v2620 = vmul.f32 %v2580, %v2619
      %v2621 = vrcp.pop %v2600
      %v2622 = vmul.f32 %v2582, %v2621
      %v2623 = vrcp.pop %v2603
      %v2624 = vmul.f32 %v2584, %v2623
      %v2625 = vrcp.pop %v2606
      %v2626 = vmul.f32 %v2586, %v2625
      %v2627 = vrcp.pop %v2609
      %v2628 = vmul.f32 %v2588, %v2627
      %v2629 = vrcp.pop %v2612
      %v2630 = vmul.f32 %v2590, %v2629
      %v2631 = vrcp.pop %v2615
      %v2632 = vmul.f32 %v2592, %v2631
      %v2633 = vrcp.pop %v2618
      %v2634 = vmul.f32 %v2594, %v2633
      %v2636 = vsel %vm334, %v2620, 0
      %v2639 = vsel %vm334, %v2622, 0
      %v2642 = vsel %vm334, %v2624, 0
      %v2645 = vsel %vm334, %v2626, 0
      %v2648 = vsel %vm334, %v2628, 0
      %v2651 = vsel %vm334, %v2630, 0
      %v2654 = vsel %vm334, %v2632, 0
      %v2657 = vsel %vm334, %v2634, 0
      %2659 = vmatprep.subr.mxu0 0.0
      %2660 = vmatpush1.msra.mxu0 0.0
      %2661 = vmatprep.subr.mxu0 0.0
      %2662 = vmatpush1.msra.mxu0 0.0
      %2663 = vmatprep.subr.mxu0 0.0
      %2664 = vmatpush1.msra.mxu0 0.0
      %2665 = vmatprep.subr.mxu0 0.0
      %2666 = vmatpush1.msra.mxu0 0.0
      %2667 = vmatprep.subr.mxu0 0.0
      %2668 = vmatpush1.msra.mxu0 0.0
      %2669 = vmatprep.subr.mxu0 0.0
      %2670 = vmatpush1.msra.mxu0 0.0
      %2671 = vmatprep.subr.mxu0 0.0
      %2672 = vmatpush1.msra.mxu0 0.0
      %2673 = vmatprep.subr.mxu0 0.0
      %2674 = vmatpush1.msra.mxu0 0.0
      %2675 = vmatprep.subr.mxu0 0.0
      %2676 = vmatpush1.msra.mxu0 %v1983
      %2677 = vmatprep.subr.mxu0 0.0
      %2678 = vmatpush1.msra.mxu0 %v1982
      %2679 = vmatprep.subr.mxu0 0.0
      %2680 = vmatpush1.msra.mxu0 %v1981
      %2681 = vmatprep.subr.mxu0 0.0
      %2682 = vmatpush1.msra.mxu0 %v1980
      %2683 = vmatprep.subr.mxu0 0.0
      %2684 = vmatpush1.msra.mxu0 %v1979
      %2685 = vmatprep.subr.mxu0 0.0
      %2686 = vmatpush1.msra.mxu0 %v1978
      %2687 = vmatprep.subr.mxu0 0.0
      %2688 = vmatpush1.msra.mxu0 %v1977
      %2689 = vmatprep.subr.mxu0 0.0
      %2690 = vmatpush1.msra.mxu0 %v1976
      %2691 = vmatprep.subr.mxu0 0.0
      %2692 = vmatpush2.msra.mxu0 0.0
      %2693 = vmatprep.subr.mxu0 0.0
      %2694 = vmatpush2.msra.mxu0 0.0
      %2695 = vmatprep.subr.mxu0 0.0
      %2696 = vmatpush2.msra.mxu0 0.0
      %2697 = vmatprep.subr.mxu0 0.0
      %2698 = vmatpush2.msra.mxu0 0.0
      %2699 = vmatprep.subr.mxu0 0.0
      %2700 = vmatpush2.msra.mxu0 0.0
      %2701 = vmatprep.subr.mxu0 0.0
      %2702 = vmatpush2.msra.mxu0 0.0
      %2703 = vmatprep.subr.mxu0 0.0
      %2704 = vmatpush2.msra.mxu0 0.0
      %2705 = vmatprep.subr.mxu0 0.0
      %2706 = vmatpush2.msra.mxu0 0.0
      %2707 = vmatprep.subr.mxu0 0.0
      %2708 = vmatpush2.msra.mxu0 0.0
      %2709 = vmatprep.subr.mxu0 0.0
      %2710 = vmatpush2.msra.mxu0 0.0
      %2711 = vmatprep.subr.mxu0 0.0
      %2712 = vmatpush2.msra.mxu0 0.0
      %2713 = vmatprep.subr.mxu0 0.0
      %2714 = vmatpush2.msra.mxu0 0.0
      %2715 = vmatprep.subr.mxu0 0.0
      %2716 = vmatpush2.msra.mxu0 0.0
      %2717 = vmatprep.subr.mxu0 0.0
      %2718 = vmatpush2.msra.mxu0 0.0
      %2719 = vmatprep.subr.mxu0 0.0
      %2720 = vmatpush2.msra.mxu0 0.0
      %2721 = vmatprep.subr.mxu0 0.0
      %2722 = vmatpush2.msra.mxu0 0.0
      %2723 = vmatprep.mubr.f32.mxu0 0.0
      %2724 = vmatmul.mubr.f32.gmra.mxu0 %v2636
      %v2725 = vpop.f32.mrf.mxu0
      %v2726 = vadd.f32 0.0, %v2725
      %v2727 = vpop.f32.mrf.mxu0
      %2728 = vmatprep.mubr.f32.mxu0 0.0
      %2729 = vmatmul.mubr.f32.gmra.mxu0 %v2639
      %v2730 = vpop.f32.mrf.mxu0
      %v2731 = vadd.f32 0.0, %v2730
      %v2732 = vpop.f32.mrf.mxu0
      %2733 = vmatprep.mubr.f32.mxu0 0.0
      %2734 = vmatmul.mubr.f32.gmra.mxu0 %v2642
      %v2735 = vpop.f32.mrf.mxu0
      %v2736 = vadd.f32 0.0, %v2735
      %v2737 = vpop.f32.mrf.mxu0
      %2738 = vmatprep.mubr.f32.mxu0 0.0
      %2739 = vmatmul.mubr.f32.gmra.mxu0 %v2645
      %v2740 = vpop.f32.mrf.mxu0
      %v2741 = vadd.f32 0.0, %v2740
      %v2742 = vpop.f32.mrf.mxu0
      %2743 = vmatprep.mubr.f32.mxu0 0.0
      %2744 = vmatmul.mubr.f32.gmra.mxu0 %v2648
      %v2745 = vpop.f32.mrf.mxu0
      %v2746 = vadd.f32 0.0, %v2745
      %v2747 = vpop.f32.mrf.mxu0
      %2748 = vmatprep.mubr.f32.mxu0 0.0
      %2749 = vmatmul.mubr.f32.gmra.mxu0 %v2651
      %v2750 = vpop.f32.mrf.mxu0
      %v2751 = vadd.f32 0.0, %v2750
      %v2752 = vpop.f32.mrf.mxu0
      %2753 = vmatprep.mubr.f32.mxu0 0.0
      %2754 = vmatmul.mubr.f32.gmra.mxu0 %v2654
      %v2755 = vpop.f32.mrf.mxu0
      %v2756 = vadd.f32 0.0, %v2755
      %v2757 = vpop.f32.mrf.mxu0
      %2758 = vmatprep.mubr.f32.mxu0 0.0
      %2759 = vmatmul.mubr.f32.gmra.mxu0 %v2657
      %v2760 = vpop.f32.mrf.mxu0
      %v2761 = vadd.f32 0.0, %v2760
      %v2762 = vpop.f32.mrf.mxu0
      %2763 = vdwg.mxu0
      %s2764 = scalar_lea.vmem %s285, 64
      %2765 = vst.msk [vmem:[%s2764] sm:$0xff] %vm334, %v2726
      %2766 = vst.msk [vmem:[%s2764 + $0x8] sm:$0xff] %vm334, %v2731
      %2767 = vst.msk [vmem:[%s2764 + $0x10] sm:$0xff] %vm334, %v2736
      %2768 = vst.msk [vmem:[%s2764 + $0x18] sm:$0xff] %vm334, %v2741
      %2769 = vst.msk [vmem:[%s2764 + $0x20] sm:$0xff] %vm334, %v2746
      %2770 = vst.msk [vmem:[%s2764 + $0x28] sm:$0xff] %vm334, %v2751
      %2771 = vst.msk [vmem:[%s2764 + $0x30] sm:$0xff] %vm334, %v2756
      %2772 = vst.msk [vmem:[%s2764 + $0x38] sm:$0xff] %vm334, %v2761
      %v2774 = vsel %vm334, %v928, 0
      %v2777 = vsel %vm334, %v929, 0
      %v2780 = vsel %vm334, %v930, 0
      %v2783 = vsel %vm334, %v931, 0
      %v2786 = vsel %vm334, %v932, 0
      %v2789 = vsel %vm334, %v933, 0
      %v2792 = vsel %vm334, %v934, 0
      %v2795 = vsel %vm334, %v935, 0
      %v2798 = vsel %vm334, %v1456, 0
      %v2801 = vsel %vm334, %v1457, 0
      %v2804 = vsel %vm334, %v1458, 0
      %v2807 = vsel %vm334, %v1459, 0
      %v2810 = vsel %vm334, %v1460, 0
      %v2813 = vsel %vm334, %v1461, 0
      %v2816 = vsel %vm334, %v1462, 0
      %v2819 = vsel %vm334, %v1463, 0
      %2821 = vmatprep.subr.mxu0 0.0
      %2822 = vmatpush1.xpose.msra.mxu0 0.0
      %2823 = vmatprep.subr.mxu0 0.0
      %2824 = vmatpush1.xpose.msra.mxu0 0.0
      %2825 = vmatprep.subr.mxu0 0.0
      %2826 = vmatpush1.xpose.msra.mxu0 0.0
      %2827 = vmatprep.subr.mxu0 0.0
      %2828 = vmatpush1.xpose.msra.mxu0 0.0
      %2829 = vmatprep.subr.mxu0 0.0
      %2830 = vmatpush1.xpose.msra.mxu0 0.0
      %2831 = vmatprep.subr.mxu0 0.0
      %2832 = vmatpush1.xpose.msra.mxu0 0.0
      %2833 = vmatprep.subr.mxu0 0.0
      %2834 = vmatpush1.xpose.msra.mxu0 0.0
      %2835 = vmatprep.subr.mxu0 0.0
      %2836 = vmatpush1.xpose.msra.mxu0 0.0
      %2837 = vmatprep.subr.mxu0 0.0
      %2838 = vmatpush1.xpose.msra.mxu0 %v2819
      %2839 = vmatprep.subr.mxu0 0.0
      %2840 = vmatpush1.xpose.msra.mxu0 %v2816
      %2841 = vmatprep.subr.mxu0 0.0
      %2842 = vmatpush1.xpose.msra.mxu0 %v2813
      %2843 = vmatprep.subr.mxu0 0.0
      %2844 = vmatpush1.xpose.msra.mxu0 %v2810
      %2845 = vmatprep.subr.mxu0 0.0
      %2846 = vmatpush1.xpose.msra.mxu0 %v2807
      %2847 = vmatprep.subr.mxu0 0.0
      %2848 = vmatpush1.xpose.msra.mxu0 %v2804
      %2849 = vmatprep.subr.mxu0 0.0
      %2850 = vmatpush1.xpose.msra.mxu0 %v2801
      %2851 = vmatprep.subr.mxu0 0.0
      %2852 = vmatpush1.xpose.msra.mxu0 %v2798
      %2853 = vmatprep.subr.mxu0 0.0
      %2854 = vmatpush2.xpose.msra.mxu0 0.0
      %2855 = vmatprep.subr.mxu0 0.0
      %2856 = vmatpush2.xpose.msra.mxu0 0.0
      %2857 = vmatprep.subr.mxu0 0.0
      %2858 = vmatpush2.xpose.msra.mxu0 0.0
      %2859 = vmatprep.subr.mxu0 0.0
      %2860 = vmatpush2.xpose.msra.mxu0 0.0
      %2861 = vmatprep.subr.mxu0 0.0
      %2862 = vmatpush2.xpose.msra.mxu0 0.0
      %2863 = vmatprep.subr.mxu0 0.0
      %2864 = vmatpush2.xpose.msra.mxu0 0.0
      %2865 = vmatprep.subr.mxu0 0.0
      %2866 = vmatpush2.xpose.msra.mxu0 0.0
      %2867 = vmatprep.subr.mxu0 0.0
      %2868 = vmatpush2.xpose.msra.mxu0 0.0
      %2869 = vmatprep.subr.mxu0 0.0
      %2870 = vmatpush2.xpose.msra.mxu0 0.0
      %2871 = vmatprep.subr.mxu0 0.0
      %2872 = vmatpush2.xpose.msra.mxu0 0.0
      %2873 = vmatprep.subr.mxu0 0.0
      %2874 = vmatpush2.xpose.msra.mxu0 0.0
      %2875 = vmatprep.subr.mxu0 0.0
      %2876 = vmatpush2.xpose.msra.mxu0 0.0
      %2877 = vmatprep.subr.mxu0 0.0
      %2878 = vmatpush2.xpose.msra.mxu0 0.0
      %2879 = vmatprep.subr.mxu0 0.0
      %2880 = vmatpush2.xpose.msra.mxu0 0.0
      %2881 = vmatprep.subr.mxu0 0.0
      %2882 = vmatpush2.xpose.msra.mxu0 0.0
      %2883 = vmatprep.subr.mxu0 0.0
      %2884 = vmatpush2.xpose.msra.mxu0 0.0
      %2885 = vmatprep.mubr.f32.mxu0 0.0
      %2886 = vmatmul.mubr.f32.gmra.mxu0 %v2774
      %v2887 = vpop.f32.mrf.mxu0
      %v2888 = vadd.f32 0.0, %v2887
      %v2889 = vpop.f32.mrf.mxu0
      %2890 = vmatprep.mubr.f32.mxu0 0.0
      %2891 = vmatmul.mubr.f32.gmra.mxu0 %v2777
      %v2892 = vpop.f32.mrf.mxu0
      %v2893 = vadd.f32 0.0, %v2892
      %v2894 = vpop.f32.mrf.mxu0
      %2895 = vmatprep.mubr.f32.mxu0 0.0
      %2896 = vmatmul.mubr.f32.gmra.mxu0 %v2780
      %v2897 = vpop.f32.mrf.mxu0
      %v2898 = vadd.f32 0.0, %v2897
      %v2899 = vpop.f32.mrf.mxu0
      %2900 = vmatprep.mubr.f32.mxu0 0.0
      %2901 = vmatmul.mubr.f32.gmra.mxu0 %v2783
      %v2902 = vpop.f32.mrf.mxu0
      %v2903 = vadd.f32 0.0, %v2902
      %v2904 = vpop.f32.mrf.mxu0
      %2905 = vmatprep.mubr.f32.mxu0 0.0
      %2906 = vmatmul.mubr.f32.gmra.mxu0 %v2786
      %v2907 = vpop.f32.mrf.mxu0
      %v2908 = vadd.f32 0.0, %v2907
      %v2909 = vpop.f32.mrf.mxu0
      %2910 = vmatprep.mubr.f32.mxu0 0.0
      %2911 = vmatmul.mubr.f32.gmra.mxu0 %v2789
      %v2912 = vpop.f32.mrf.mxu0
      %v2913 = vadd.f32 0.0, %v2912
      %v2914 = vpop.f32.mrf.mxu0
      %2915 = vmatprep.mubr.f32.mxu0 0.0
      %2916 = vmatmul.mubr.f32.gmra.mxu0 %v2792
      %v2917 = vpop.f32.mrf.mxu0
      %v2918 = vadd.f32 0.0, %v2917
      %v2919 = vpop.f32.mrf.mxu0
      %2920 = vmatprep.mubr.f32.mxu0 0.0
      %2921 = vmatmul.mubr.f32.gmra.mxu0 %v2795
      %v2922 = vpop.f32.mrf.mxu0
      %v2923 = vadd.f32 0.0, %v2922
      %v2924 = vpop.f32.mrf.mxu0
      %2925 = vdwg.mxu0
      %v2926 = vmul.f32 %v2888, 0.125
      %v2927 = vmul.f32 %v2893, 0.125
      %v2928 = vmul.f32 %v2898, 0.125
      %v2929 = vmul.f32 %v2903, 0.125
      %v2930 = vmul.f32 %v2908, 0.125
      %v2931 = vmul.f32 %v2913, 0.125
      %v2932 = vmul.f32 %v2918, 0.125
      %v2933 = vmul.f32 %v2923, 0.125
      %v2934 = vsel %vm334, %v2926, -inf
      %2935 = vmax.xlane.f32.xlu0 %v2934
      %v2936 = vpop.xlane.xlu0 %2935
      %v2937 = vsel %vm334, %v2927, -inf
      %2938 = vmax.xlane.f32.xlu0 %v2937
      %v2939 = vpop.xlane.xlu0 %2938
      %v2940 = vsel %vm334, %v2928, -inf
      %2941 = vmax.xlane.f32.xlu0 %v2940
      %v2942 = vpop.xlane.xlu0 %2941
      %v2943 = vsel %vm334, %v2929, -inf
      %2944 = vmax.xlane.f32.xlu0 %v2943
      %v2945 = vpop.xlane.xlu0 %2944
      %v2946 = vsel %vm334, %v2930, -inf
      %2947 = vmax.xlane.f32.xlu0 %v2946
      %v2948 = vpop.xlane.xlu0 %2947
      %v2949 = vsel %vm334, %v2931, -inf
      %2950 = vmax.xlane.f32.xlu0 %v2949
      %v2951 = vpop.xlane.xlu0 %2950
      %v2952 = vsel %vm334, %v2932, -inf
      %2953 = vmax.xlane.f32.xlu0 %v2952
      %v2954 = vpop.xlane.xlu0 %2953
      %v2955 = vsel %vm334, %v2933, -inf
      %2956 = vmax.xlane.f32.xlu0 %v2955
      %v2957 = vpop.xlane.xlu0 %2956
      %v2958 = vsub.f32 %v2926, %v2936
      %v2959 = vsub.f32 %v2927, %v2939
      %v2960 = vsub.f32 %v2928, %v2942
      %v2961 = vsub.f32 %v2929, %v2945
      %v2962 = vsub.f32 %v2930, %v2948
      %v2963 = vsub.f32 %v2931, %v2951
      %v2964 = vsub.f32 %v2932, %v2954
      %v2965 = vsub.f32 %v2933, %v2957
      %v2966 = vmul.f32 %v2958, 1.442695
      %v2967 = vpow.pop %v2966
      %v2968 = vmul.f32 %v2959, 1.442695
      %v2969 = vpow.pop %v2968
      %v2970 = vmul.f32 %v2960, 1.442695
      %v2971 = vpow.pop %v2970
      %v2972 = vmul.f32 %v2961, 1.442695
      %v2973 = vpow.pop %v2972
      %v2974 = vmul.f32 %v2962, 1.442695
      %v2975 = vpow.pop %v2974
      %v2976 = vmul.f32 %v2963, 1.442695
      %v2977 = vpow.pop %v2976
      %v2978 = vmul.f32 %v2964, 1.442695
      %v2979 = vpow.pop %v2978
      %v2980 = vmul.f32 %v2965, 1.442695
      %v2981 = vpow.pop %v2980
      %v2982 = vsel %vm334, %v2967, 0.0
      %2983 = vadd.xlane.f32.xlu0 %v2982
      %v2984 = vpop.xlane.xlu0 %2983
      %v2985 = vsel %vm334, %v2969, 0.0
      %2986 = vadd.xlane.f32.xlu0 %v2985
      %v2987 = vpop.xlane.xlu0 %2986
      %v2988 = vsel %vm334, %v2971, 0.0
      %2989 = vadd.xlane.f32.xlu0 %v2988
      %v2990 = vpop.xlane.xlu0 %2989
      %v2991 = vsel %vm334, %v2973, 0.0
      %2992 = vadd.xlane.f32.xlu0 %v2991
      %v2993 = vpop.xlane.xlu0 %2992
      %v2994 = vsel %vm334, %v2975, 0.0
      %2995 = vadd.xlane.f32.xlu0 %v2994
      %v2996 = vpop.xlane.xlu0 %2995
      %v2997 = vsel %vm334, %v2977, 0.0
      %2998 = vadd.xlane.f32.xlu0 %v2997
      %v2999 = vpop.xlane.xlu0 %2998
      %v3000 = vsel %vm334, %v2979, 0.0
      %3001 = vadd.xlane.f32.xlu0 %v3000
      %v3002 = vpop.xlane.xlu0 %3001
      %v3003 = vsel %vm334, %v2981, 0.0
      %3004 = vadd.xlane.f32.xlu0 %v3003
      %v3005 = vpop.xlane.xlu0 %3004
      %v3006 = vrcp.pop %v2984
      %v3007 = vmul.f32 %v2967, %v3006
      %v3008 = vrcp.pop %v2987
      %v3009 = vmul.f32 %v2969, %v3008
      %v3010 = vrcp.pop %v2990
      %v3011 = vmul.f32 %v2971, %v3010
      %v3012 = vrcp.pop %v2993
      %v3013 = vmul.f32 %v2973, %v3012
      %v3014 = vrcp.pop %v2996
      %v3015 = vmul.f32 %v2975, %v3014
      %v3016 = vrcp.pop %v2999
      %v3017 = vmul.f32 %v2977, %v3016
      %v3018 = vrcp.pop %v3002
      %v3019 = vmul.f32 %v2979, %v3018
      %v3020 = vrcp.pop %v3005
      %v3021 = vmul.f32 %v2981, %v3020
      %v3023 = vsel %vm334, %v3007, 0
      %v3026 = vsel %vm334, %v3009, 0
      %v3029 = vsel %vm334, %v3011, 0
      %v3032 = vsel %vm334, %v3013, 0
      %v3035 = vsel %vm334, %v3015, 0
      %v3038 = vsel %vm334, %v3017, 0
      %v3041 = vsel %vm334, %v3019, 0
      %v3044 = vsel %vm334, %v3021, 0
      %3046 = vmatprep.subr.mxu0 0.0
      %3047 = vmatpush1.msra.mxu0 0.0
      %3048 = vmatprep.subr.mxu0 0.0
      %3049 = vmatpush1.msra.mxu0 0.0
      %3050 = vmatprep.subr.mxu0 0.0
      %3051 = vmatpush1.msra.mxu0 0.0
      %3052 = vmatprep.subr.mxu0 0.0
      %3053 = vmatpush1.msra.mxu0 0.0
      %3054 = vmatprep.subr.mxu0 0.0
      %3055 = vmatpush1.msra.mxu0 0.0
      %3056 = vmatprep.subr.mxu0 0.0
      %3057 = vmatpush1.msra.mxu0 0.0
      %3058 = vmatprep.subr.mxu0 0.0
      %3059 = vmatpush1.msra.mxu0 0.0
      %3060 = vmatprep.subr.mxu0 0.0
      %3061 = vmatpush1.msra.mxu0 0.0
      %3062 = vmatprep.subr.mxu0 0.0
      %3063 = vmatpush1.msra.mxu0 %v1991
      %3064 = vmatprep.subr.mxu0 0.0
      %3065 = vmatpush1.msra.mxu0 %v1990
      %3066 = vmatprep.subr.mxu0 0.0
      %3067 = vmatpush1.msra.mxu0 %v1989
      %3068 = vmatprep.subr.mxu0 0.0
      %3069 = vmatpush1.msra.mxu0 %v1988
      %3070 = vmatprep.subr.mxu0 0.0
      %3071 = vmatpush1.msra.mxu0 %v1987
      %3072 = vmatprep.subr.mxu0 0.0
      %3073 = vmatpush1.msra.mxu0 %v1986
      %3074 = vmatprep.subr.mxu0 0.0
      %3075 = vmatpush1.msra.mxu0 %v1985
      %3076 = vmatprep.subr.mxu0 0.0
      %3077 = vmatpush1.msra.mxu0 %v1984
      %3078 = vmatprep.subr.mxu0 0.0
      %3079 = vmatpush2.msra.mxu0 0.0
      %3080 = vmatprep.subr.mxu0 0.0
      %3081 = vmatpush2.msra.mxu0 0.0
      %3082 = vmatprep.subr.mxu0 0.0
      %3083 = vmatpush2.msra.mxu0 0.0
      %3084 = vmatprep.subr.mxu0 0.0
      %3085 = vmatpush2.msra.mxu0 0.0
      %3086 = vmatprep.subr.mxu0 0.0
      %3087 = vmatpush2.msra.mxu0 0.0
      %3088 = vmatprep.subr.mxu0 0.0
      %3089 = vmatpush2.msra.mxu0 0.0
      %3090 = vmatprep.subr.mxu0 0.0
      %3091 = vmatpush2.msra.mxu0 0.0
      %3092 = vmatprep.subr.mxu0 0.0
      %3093 = vmatpush2.msra.mxu0 0.0
      %3094 = vmatprep.subr.mxu0 0.0
      %3095 = vmatpush2.msra.mxu0 0.0
      %3096 = vmatprep.subr.mxu0 0.0
      %3097 = vmatpush2.msra.mxu0 0.0
      %3098 = vmatprep.subr.mxu0 0.0
      %3099 = vmatpush2.msra.mxu0 0.0
      %3100 = vmatprep.subr.mxu0 0.0
      %3101 = vmatpush2.msra.mxu0 0.0
      %3102 = vmatprep.subr.mxu0 0.0
      %3103 = vmatpush2.msra.mxu0 0.0
      %3104 = vmatprep.subr.mxu0 0.0
      %3105 = vmatpush2.msra.mxu0 0.0
      %3106 = vmatprep.subr.mxu0 0.0
      %3107 = vmatpush2.msra.mxu0 0.0
      %3108 = vmatprep.subr.mxu0 0.0
      %3109 = vmatpush2.msra.mxu0 0.0
      %3110 = vmatprep.mubr.f32.mxu0 0.0
      %3111 = vmatmul.mubr.f32.gmra.mxu0 %v3023
      %v3112 = vpop.f32.mrf.mxu0
      %v3113 = vadd.f32 0.0, %v3112
      %v3114 = vpop.f32.mrf.mxu0
      %3115 = vmatprep.mubr.f32.mxu0 0.0
      %3116 = vmatmul.mubr.f32.gmra.mxu0 %v3026
      %v3117 = vpop.f32.mrf.mxu0
      %v3118 = vadd.f32 0.0, %v3117
      %v3119 = vpop.f32.mrf.mxu0
      %3120 = vmatprep.mubr.f32.mxu0 0.0
      %3121 = vmatmul.mubr.f32.gmra.mxu0 %v3029
      %v3122 = vpop.f32.mrf.mxu0
      %v3123 = vadd.f32 0.0, %v3122
      %v3124 = vpop.f32.mrf.mxu0
      %3125 = vmatprep.mubr.f32.mxu0 0.0
      %3126 = vmatmul.mubr.f32.gmra.mxu0 %v3032
      %v3127 = vpop.f32.mrf.mxu0
      %v3128 = vadd.f32 0.0, %v3127
      %v3129 = vpop.f32.mrf.mxu0
      %3130 = vmatprep.mubr.f32.mxu0 0.0
      %3131 = vmatmul.mubr.f32.gmra.mxu0 %v3035
      %v3132 = vpop.f32.mrf.mxu0
      %v3133 = vadd.f32 0.0, %v3132
      %v3134 = vpop.f32.mrf.mxu0
      %3135 = vmatprep.mubr.f32.mxu0 0.0
      %3136 = vmatmul.mubr.f32.gmra.mxu0 %v3038
      %v3137 = vpop.f32.mrf.mxu0
      %v3138 = vadd.f32 0.0, %v3137
      %v3139 = vpop.f32.mrf.mxu0
      %3140 = vmatprep.mubr.f32.mxu0 0.0
      %3141 = vmatmul.mubr.f32.gmra.mxu0 %v3041
      %v3142 = vpop.f32.mrf.mxu0
      %v3143 = vadd.f32 0.0, %v3142
      %v3144 = vpop.f32.mrf.mxu0
      %3145 = vmatprep.mubr.f32.mxu0 0.0
      %3146 = vmatmul.mubr.f32.gmra.mxu0 %v3044
      %v3147 = vpop.f32.mrf.mxu0
      %v3148 = vadd.f32 0.0, %v3147
      %v3149 = vpop.f32.mrf.mxu0
      %3150 = vdwg.mxu0
      %s3151 = scalar_lea.vmem %s285, 128
      %3152 = vst.msk [vmem:[%s3151] sm:$0xff] %vm334, %v3113
      %3153 = vst.msk [vmem:[%s3151 + $0x8] sm:$0xff] %vm334, %v3118
      %3154 = vst.msk [vmem:[%s3151 + $0x10] sm:$0xff] %vm334, %v3123
      %3155 = vst.msk [vmem:[%s3151 + $0x18] sm:$0xff] %vm334, %v3128
      %3156 = vst.msk [vmem:[%s3151 + $0x20] sm:$0xff] %vm334, %v3133
      %3157 = vst.msk [vmem:[%s3151 + $0x28] sm:$0xff] %vm334, %v3138
      %3158 = vst.msk [vmem:[%s3151 + $0x30] sm:$0xff] %vm334, %v3143
      %3159 = vst.msk [vmem:[%s3151 + $0x38] sm:$0xff] %vm334, %v3148
      %v3161 = vsel %vm334, %v936, 0
      %v3164 = vsel %vm334, %v937, 0
      %v3167 = vsel %vm334, %v938, 0
      %v3170 = vsel %vm334, %v939, 0
      %v3173 = vsel %vm334, %v940, 0
      %v3176 = vsel %vm334, %v941, 0
      %v3179 = vsel %vm334, %v942, 0
      %v3182 = vsel %vm334, %v943, 0
      %v3185 = vsel %vm334, %v1464, 0
      %v3188 = vsel %vm334, %v1465, 0
      %v3191 = vsel %vm334, %v1466, 0
      %v3194 = vsel %vm334, %v1467, 0
      %v3197 = vsel %vm334, %v1468, 0
      %v3200 = vsel %vm334, %v1469, 0
      %v3203 = vsel %vm334, %v1470, 0
      %v3206 = vsel %vm334, %v1471, 0
      %3208 = vmatprep.subr.mxu0 0.0
      %3209 = vmatpush1.xpose.msra.mxu0 0.0
      %3210 = vmatprep.subr.mxu0 0.0
      %3211 = vmatpush1.xpose.msra.mxu0 0.0
      %3212 = vmatprep.subr.mxu0 0.0
      %3213 = vmatpush1.xpose.msra.mxu0 0.0
      %3214 = vmatprep.subr.mxu0 0.0
      %3215 = vmatpush1.xpose.msra.mxu0 0.0
      %3216 = vmatprep.subr.mxu0 0.0
      %3217 = vmatpush1.xpose.msra.mxu0 0.0
      %3218 = vmatprep.subr.mxu0 0.0
      %3219 = vmatpush1.xpose.msra.mxu0 0.0
      %3220 = vmatprep.subr.mxu0 0.0
      %3221 = vmatpush1.xpose.msra.mxu0 0.0
      %3222 = vmatprep.subr.mxu0 0.0
      %3223 = vmatpush1.xpose.msra.mxu0 0.0
      %3224 = vmatprep.subr.mxu0 0.0
      %3225 = vmatpush1.xpose.msra.mxu0 %v3206
      %3226 = vmatprep.subr.mxu0 0.0
      %3227 = vmatpush1.xpose.msra.mxu0 %v3203
      %3228 = vmatprep.subr.mxu0 0.0
      %3229 = vmatpush1.xpose.msra.mxu0 %v3200
      %3230 = vmatprep.subr.mxu0 0.0
      %3231 = vmatpush1.xpose.msra.mxu0 %v3197
      %3232 = vmatprep.subr.mxu0 0.0
      %3233 = vmatpush1.xpose.msra.mxu0 %v3194
      %3234 = vmatprep.subr.mxu0 0.0
      %3235 = vmatpush1.xpose.msra.mxu0 %v3191
      %3236 = vmatprep.subr.mxu0 0.0
      %3237 = vmatpush1.xpose.msra.mxu0 %v3188
      %3238 = vmatprep.subr.mxu0 0.0
      %3239 = vmatpush1.xpose.msra.mxu0 %v3185
      %3240 = vmatprep.subr.mxu0 0.0
      %3241 = vmatpush2.xpose.msra.mxu0 0.0
      %3242 = vmatprep.subr.mxu0 0.0
      %3243 = vmatpush2.xpose.msra.mxu0 0.0
      %3244 = vmatprep.subr.mxu0 0.0
      %3245 = vmatpush2.xpose.msra.mxu0 0.0
      %3246 = vmatprep.subr.mxu0 0.0
      %3247 = vmatpush2.xpose.msra.mxu0 0.0
      %3248 = vmatprep.subr.mxu0 0.0
      %3249 = vmatpush2.xpose.msra.mxu0 0.0
      %3250 = vmatprep.subr.mxu0 0.0
      %3251 = vmatpush2.xpose.msra.mxu0 0.0
      %3252 = vmatprep.subr.mxu0 0.0
      %3253 = vmatpush2.xpose.msra.mxu0 0.0
      %3254 = vmatprep.subr.mxu0 0.0
      %3255 = vmatpush2.xpose.msra.mxu0 0.0
      %3256 = vmatprep.subr.mxu0 0.0
      %3257 = vmatpush2.xpose.msra.mxu0 0.0
      %3258 = vmatprep.subr.mxu0 0.0
      %3259 = vmatpush2.xpose.msra.mxu0 0.0
      %3260 = vmatprep.subr.mxu0 0.0
      %3261 = vmatpush2.xpose.msra.mxu0 0.0
      %3262 = vmatprep.subr.mxu0 0.0
      %3263 = vmatpush2.xpose.msra.mxu0 0.0
      %3264 = vmatprep.subr.mxu0 0.0
      %3265 = vmatpush2.xpose.msra.mxu0 0.0
      %3266 = vmatprep.subr.mxu0 0.0
      %3267 = vmatpush2.xpose.msra.mxu0 0.0
      %3268 = vmatprep.subr.mxu0 0.0
      %3269 = vmatpush2.xpose.msra.mxu0 0.0
      %3270 = vmatprep.subr.mxu0 0.0
      %3271 = vmatpush2.xpose.msra.mxu0 0.0
      %3272 = vmatprep.mubr.f32.mxu0 0.0
      %3273 = vmatmul.mubr.f32.gmra.mxu0 %v3161
      %v3274 = vpop.f32.mrf.mxu0
      %v3275 = vadd.f32 0.0, %v3274
      %v3276 = vpop.f32.mrf.mxu0
      %3277 = vmatprep.mubr.f32.mxu0 0.0
      %3278 = vmatmul.mubr.f32.gmra.mxu0 %v3164
      %v3279 = vpop.f32.mrf.mxu0
      %v3280 = vadd.f32 0.0, %v3279
      %v3281 = vpop.f32.mrf.mxu0
      %3282 = vmatprep.mubr.f32.mxu0 0.0
      %3283 = vmatmul.mubr.f32.gmra.mxu0 %v3167
      %v3284 = vpop.f32.mrf.mxu0
      %v3285 = vadd.f32 0.0, %v3284
      %v3286 = vpop.f32.mrf.mxu0
      %3287 = vmatprep.mubr.f32.mxu0 0.0
      %3288 = vmatmul.mubr.f32.gmra.mxu0 %v3170
      %v3289 = vpop.f32.mrf.mxu0
      %v3290 = vadd.f32 0.0, %v3289
      %v3291 = vpop.f32.mrf.mxu0
      %3292 = vmatprep.mubr.f32.mxu0 0.0
      %3293 = vmatmul.mubr.f32.gmra.mxu0 %v3173
      %v3294 = vpop.f32.mrf.mxu0
      %v3295 = vadd.f32 0.0, %v3294
      %v3296 = vpop.f32.mrf.mxu0
      %3297 = vmatprep.mubr.f32.mxu0 0.0
      %3298 = vmatmul.mubr.f32.gmra.mxu0 %v3176
      %v3299 = vpop.f32.mrf.mxu0
      %v3300 = vadd.f32 0.0, %v3299
      %v3301 = vpop.f32.mrf.mxu0
      %3302 = vmatprep.mubr.f32.mxu0 0.0
      %3303 = vmatmul.mubr.f32.gmra.mxu0 %v3179
      %v3304 = vpop.f32.mrf.mxu0
      %v3305 = vadd.f32 0.0, %v3304
      %v3306 = vpop.f32.mrf.mxu0
      %3307 = vmatprep.mubr.f32.mxu0 0.0
      %3308 = vmatmul.mubr.f32.gmra.mxu0 %v3182
      %v3309 = vpop.f32.mrf.mxu0
      %v3310 = vadd.f32 0.0, %v3309
      %v3311 = vpop.f32.mrf.mxu0
      %3312 = vdwg.mxu0
      %v3313 = vmul.f32 %v3275, 0.125
      %v3314 = vmul.f32 %v3280, 0.125
      %v3315 = vmul.f32 %v3285, 0.125
      %v3316 = vmul.f32 %v3290, 0.125
      %v3317 = vmul.f32 %v3295, 0.125
      %v3318 = vmul.f32 %v3300, 0.125
      %v3319 = vmul.f32 %v3305, 0.125
      %v3320 = vmul.f32 %v3310, 0.125
      %v3321 = vsel %vm334, %v3313, -inf
      %3322 = vmax.xlane.f32.xlu0 %v3321
      %v3323 = vpop.xlane.xlu0 %3322
      %v3324 = vsel %vm334, %v3314, -inf
      %3325 = vmax.xlane.f32.xlu0 %v3324
      %v3326 = vpop.xlane.xlu0 %3325
      %v3327 = vsel %vm334, %v3315, -inf
      %3328 = vmax.xlane.f32.xlu0 %v3327
      %v3329 = vpop.xlane.xlu0 %3328
      %v3330 = vsel %vm334, %v3316, -inf
      %3331 = vmax.xlane.f32.xlu0 %v3330
      %v3332 = vpop.xlane.xlu0 %3331
      %v3333 = vsel %vm334, %v3317, -inf
      %3334 = vmax.xlane.f32.xlu0 %v3333
      %v3335 = vpop.xlane.xlu0 %3334
      %v3336 = vsel %vm334, %v3318, -inf
      %3337 = vmax.xlane.f32.xlu0 %v3336
      %v3338 = vpop.xlane.xlu0 %3337
      %v3339 = vsel %vm334, %v3319, -inf
      %3340 = vmax.xlane.f32.xlu0 %v3339
      %v3341 = vpop.xlane.xlu0 %3340
      %v3342 = vsel %vm334, %v3320, -inf
      %3343 = vmax.xlane.f32.xlu0 %v3342
      %v3344 = vpop.xlane.xlu0 %3343
      %v3345 = vsub.f32 %v3313, %v3323
      %v3346 = vsub.f32 %v3314, %v3326
      %v3347 = vsub.f32 %v3315, %v3329
      %v3348 = vsub.f32 %v3316, %v3332
      %v3349 = vsub.f32 %v3317, %v3335
      %v3350 = vsub.f32 %v3318, %v3338
      %v3351 = vsub.f32 %v3319, %v3341
      %v3352 = vsub.f32 %v3320, %v3344
      %v3353 = vmul.f32 %v3345, 1.442695
      %v3354 = vpow.pop %v3353
      %v3355 = vmul.f32 %v3346, 1.442695
      %v3356 = vpow.pop %v3355
      %v3357 = vmul.f32 %v3347, 1.442695
      %v3358 = vpow.pop %v3357
      %v3359 = vmul.f32 %v3348, 1.442695
      %v3360 = vpow.pop %v3359
      %v3361 = vmul.f32 %v3349, 1.442695
      %v3362 = vpow.pop %v3361
      %v3363 = vmul.f32 %v3350, 1.442695
      %v3364 = vpow.pop %v3363
      %v3365 = vmul.f32 %v3351, 1.442695
      %v3366 = vpow.pop %v3365
      %v3367 = vmul.f32 %v3352, 1.442695
      %v3368 = vpow.pop %v3367
      %v3369 = vsel %vm334, %v3354, 0.0
      %3370 = vadd.xlane.f32.xlu0 %v3369
      %v3371 = vpop.xlane.xlu0 %3370
      %v3372 = vsel %vm334, %v3356, 0.0
      %3373 = vadd.xlane.f32.xlu0 %v3372
      %v3374 = vpop.xlane.xlu0 %3373
      %v3375 = vsel %vm334, %v3358, 0.0
      %3376 = vadd.xlane.f32.xlu0 %v3375
      %v3377 = vpop.xlane.xlu0 %3376
      %v3378 = vsel %vm334, %v3360, 0.0
      %3379 = vadd.xlane.f32.xlu0 %v3378
      %v3380 = vpop.xlane.xlu0 %3379
      %v3381 = vsel %vm334, %v3362, 0.0
      %3382 = vadd.xlane.f32.xlu0 %v3381
      %v3383 = vpop.xlane.xlu0 %3382
      %v3384 = vsel %vm334, %v3364, 0.0
      %3385 = vadd.xlane.f32.xlu0 %v3384
      %v3386 = vpop.xlane.xlu0 %3385
      %v3387 = vsel %vm334, %v3366, 0.0
      %3388 = vadd.xlane.f32.xlu0 %v3387
      %v3389 = vpop.xlane.xlu0 %3388
      %v3390 = vsel %vm334, %v3368, 0.0
      %3391 = vadd.xlane.f32.xlu0 %v3390
      %v3392 = vpop.xlane.xlu0 %3391
      %v3393 = vrcp.pop %v3371
      %v3394 = vmul.f32 %v3354, %v3393
      %v3395 = vrcp.pop %v3374
      %v3396 = vmul.f32 %v3356, %v3395
      %v3397 = vrcp.pop %v3377
      %v3398 = vmul.f32 %v3358, %v3397
      %v3399 = vrcp.pop %v3380
      %v3400 = vmul.f32 %v3360, %v3399
      %v3401 = vrcp.pop %v3383
      %v3402 = vmul.f32 %v3362, %v3401
      %v3403 = vrcp.pop %v3386
      %v3404 = vmul.f32 %v3364, %v3403
      %v3405 = vrcp.pop %v3389
      %v3406 = vmul.f32 %v3366, %v3405
      %v3407 = vrcp.pop %v3392
      %v3408 = vmul.f32 %v3368, %v3407
      %v3410 = vsel %vm334, %v3394, 0
      %v3413 = vsel %vm334, %v3396, 0
      %v3416 = vsel %vm334, %v3398, 0
      %v3419 = vsel %vm334, %v3400, 0
      %v3422 = vsel %vm334, %v3402, 0
      %v3425 = vsel %vm334, %v3404, 0
      %v3428 = vsel %vm334, %v3406, 0
      %v3431 = vsel %vm334, %v3408, 0
      %3433 = vmatprep.subr.mxu0 0.0
      %3434 = vmatpush1.msra.mxu0 0.0
      %3435 = vmatprep.subr.mxu0 0.0
      %3436 = vmatpush1.msra.mxu0 0.0
      %3437 = vmatprep.subr.mxu0 0.0
      %3438 = vmatpush1.msra.mxu0 0.0
      %3439 = vmatprep.subr.mxu0 0.0
      %3440 = vmatpush1.msra.mxu0 0.0
      %3441 = vmatprep.subr.mxu0 0.0
      %3442 = vmatpush1.msra.mxu0 0.0
      %3443 = vmatprep.subr.mxu0 0.0
      %3444 = vmatpush1.msra.mxu0 0.0
      %3445 = vmatprep.subr.mxu0 0.0
      %3446 = vmatpush1.msra.mxu0 0.0
      %3447 = vmatprep.subr.mxu0 0.0
      %3448 = vmatpush1.msra.mxu0 0.0
      %3449 = vmatprep.subr.mxu0 0.0
      %3450 = vmatpush1.msra.mxu0 %v1999
      %3451 = vmatprep.subr.mxu0 0.0
      %3452 = vmatpush1.msra.mxu0 %v1998
      %3453 = vmatprep.subr.mxu0 0.0
      %3454 = vmatpush1.msra.mxu0 %v1997
      %3455 = vmatprep.subr.mxu0 0.0
      %3456 = vmatpush1.msra.mxu0 %v1996
      %3457 = vmatprep.subr.mxu0 0.0
      %3458 = vmatpush1.msra.mxu0 %v1995
      %3459 = vmatprep.subr.mxu0 0.0
      %3460 = vmatpush1.msra.mxu0 %v1994
      %3461 = vmatprep.subr.mxu0 0.0
      %3462 = vmatpush1.msra.mxu0 %v1993
      %3463 = vmatprep.subr.mxu0 0.0
      %3464 = vmatpush1.msra.mxu0 %v1992
      %3465 = vmatprep.subr.mxu0 0.0
      %3466 = vmatpush2.msra.mxu0 0.0
      %3467 = vmatprep.subr.mxu0 0.0
      %3468 = vmatpush2.msra.mxu0 0.0
      %3469 = vmatprep.subr.mxu0 0.0
      %3470 = vmatpush2.msra.mxu0 0.0
      %3471 = vmatprep.subr.mxu0 0.0
      %3472 = vmatpush2.msra.mxu0 0.0
      %3473 = vmatprep.subr.mxu0 0.0
      %3474 = vmatpush2.msra.mxu0 0.0
      %3475 = vmatprep.subr.mxu0 0.0
      %3476 = vmatpush2.msra.mxu0 0.0
      %3477 = vmatprep.subr.mxu0 0.0
      %3478 = vmatpush2.msra.mxu0 0.0
      %3479 = vmatprep.subr.mxu0 0.0
      %3480 = vmatpush2.msra.mxu0 0.0
      %3481 = vmatprep.subr.mxu0 0.0
      %3482 = vmatpush2.msra.mxu0 0.0
      %3483 = vmatprep.subr.mxu0 0.0
      %3484 = vmatpush2.msra.mxu0 0.0
      %3485 = vmatprep.subr.mxu0 0.0
      %3486 = vmatpush2.msra.mxu0 0.0
      %3487 = vmatprep.subr.mxu0 0.0
      %3488 = vmatpush2.msra.mxu0 0.0
      %3489 = vmatprep.subr.mxu0 0.0
      %3490 = vmatpush2.msra.mxu0 0.0
      %3491 = vmatprep.subr.mxu0 0.0
      %3492 = vmatpush2.msra.mxu0 0.0
      %3493 = vmatprep.subr.mxu0 0.0
      %3494 = vmatpush2.msra.mxu0 0.0
      %3495 = vmatprep.subr.mxu0 0.0
      %3496 = vmatpush2.msra.mxu0 0.0
      %3497 = vmatprep.mubr.f32.mxu0 0.0
      %3498 = vmatmul.mubr.f32.gmra.mxu0 %v3410
      %v3499 = vpop.f32.mrf.mxu0
      %v3500 = vadd.f32 0.0, %v3499
      %v3501 = vpop.f32.mrf.mxu0
      %3502 = vmatprep.mubr.f32.mxu0 0.0
      %3503 = vmatmul.mubr.f32.gmra.mxu0 %v3413
      %v3504 = vpop.f32.mrf.mxu0
      %v3505 = vadd.f32 0.0, %v3504
      %v3506 = vpop.f32.mrf.mxu0
      %3507 = vmatprep.mubr.f32.mxu0 0.0
      %3508 = vmatmul.mubr.f32.gmra.mxu0 %v3416
      %v3509 = vpop.f32.mrf.mxu0
      %v3510 = vadd.f32 0.0, %v3509
      %v3511 = vpop.f32.mrf.mxu0
      %3512 = vmatprep.mubr.f32.mxu0 0.0
      %3513 = vmatmul.mubr.f32.gmra.mxu0 %v3419
      %v3514 = vpop.f32.mrf.mxu0
      %v3515 = vadd.f32 0.0, %v3514
      %v3516 = vpop.f32.mrf.mxu0
      %3517 = vmatprep.mubr.f32.mxu0 0.0
      %3518 = vmatmul.mubr.f32.gmra.mxu0 %v3422
      %v3519 = vpop.f32.mrf.mxu0
      %v3520 = vadd.f32 0.0, %v3519
      %v3521 = vpop.f32.mrf.mxu0
      %3522 = vmatprep.mubr.f32.mxu0 0.0
      %3523 = vmatmul.mubr.f32.gmra.mxu0 %v3425
      %v3524 = vpop.f32.mrf.mxu0
      %v3525 = vadd.f32 0.0, %v3524
      %v3526 = vpop.f32.mrf.mxu0
      %3527 = vmatprep.mubr.f32.mxu0 0.0
      %3528 = vmatmul.mubr.f32.gmra.mxu0 %v3428
      %v3529 = vpop.f32.mrf.mxu0
      %v3530 = vadd.f32 0.0, %v3529
      %v3531 = vpop.f32.mrf.mxu0
      %3532 = vmatprep.mubr.f32.mxu0 0.0
      %3533 = vmatmul.mubr.f32.gmra.mxu0 %v3431
      %v3534 = vpop.f32.mrf.mxu0
      %v3535 = vadd.f32 0.0, %v3534
      %v3536 = vpop.f32.mrf.mxu0
      %3537 = vdwg.mxu0
      %s3538 = scalar_lea.vmem %s285, 192
      %3539 = vst.msk [vmem:[%s3538] sm:$0xff] %vm334, %v3500
      %3540 = vst.msk [vmem:[%s3538 + $0x8] sm:$0xff] %vm334, %v3505
      %3541 = vst.msk [vmem:[%s3538 + $0x10] sm:$0xff] %vm334, %v3510
      %3542 = vst.msk [vmem:[%s3538 + $0x18] sm:$0xff] %vm334, %v3515
      %3543 = vst.msk [vmem:[%s3538 + $0x20] sm:$0xff] %vm334, %v3520
      %3544 = vst.msk [vmem:[%s3538 + $0x28] sm:$0xff] %vm334, %v3525
      %3545 = vst.msk [vmem:[%s3538 + $0x30] sm:$0xff] %vm334, %v3530
      %3546 = vst.msk [vmem:[%s3538 + $0x38] sm:$0xff] %vm334, %v3535
      %s3547 = smul.u32 4, %s18
      %p3548 = scmp.lt.s32.totalorder %s3547, 7
      %s3549 = scalar_select %p3548, %s3547, 7
      %s3550 = smul.addr %s3549, 8
      %s3551 = smul.addr %s3550, 8
      %s3552 = scalar_lea.vmem %s7, %s3551
      // Predicated region
      $region49: #{irmb_forward.2} parent=47 // pred_check
        %p3553 = pneg %p188
      $region50: #{irmb_forward.2} parent=47 // pred_check_branch
        %3555 = sbr.rel (%p3553) target = $region52
      $region51: #{irmb_forward.2} parent=47 // pred_region
        %s3556 = smul.u32 4, %s18
      $region52: #{irmb_forward.2} parent=47 // pred_fallthru
        _
    $region48: #{irmb_forward.2} parent=5 // pred_fallthru
      _
    %p3557 = scmp.le.s32.totalorder 2, %s13
    // Predicated region
    $region53: #{irmb_forward.2} parent=5 // pred_check
      %p3558 = pneg %p3557
    $region54: #{irmb_forward.2} parent=5 // pred_check_branch
      %3560 = sbr.rel (%p3558) target = $region56
    $region55: #{irmb_forward.2} parent=5 // pred_region
      %s3561 = ssub.s32 %s13, 2
      // Predicated region
      $region57: #{irmb_forward.2} parent=55 // pred_check
        %p3562 = pneg %p194
      $region58: #{irmb_forward.2} parent=55 // pred_check_branch
        %3564 = sbr.rel (%p3562) target = $region60
      $region59: #{irmb_forward.2} parent=55 // pred_region
        %s3565 = smul.u32 4, %s19
        %p3566 = scmp.lt.s32.totalorder %s3565, 7
        %s3567 = scalar_select %p3566, %s3565, 7
        %s3568 = smul.addr %s3567, 8
        %s3569 = smul.addr %s3568, 8
        %s3570 = scalar_lea.vmem %s7, %s3569
      $region60: #{irmb_forward.2} parent=55 // pred_fallthru
        _
    $region56: #{irmb_forward.2} parent=5 // pred_fallthru
      _
  $region6: #{irmb_forward.2} parent=0 // loop_footer
    %s17 = sadd.s32 1, %s13
  $region7: #{irmb_forward.2} parent=0 // loop_footer_branch
    %12 = sbr.rel target = $region3
  $region8: #{irmb_forward.2} parent=0 // loop_exit
    _

// kernel: irmb_forward.3
$region0: #{irmb_forward.3}
  #allocation0 [shape = 'u32[]', space=smem, size = 0x4, offset = 0x4, fixed_abs, tag = 'smem constant byte address 0x4 - core index']
  #allocation1 [shape = 'u32[144,128]{1,0:T(1,128)}', space=vmem, size = 0x12000, scoped, tag = 'internal scratch']
  %s0 = inlined_call_operand.vmem [shape: f32[2,18,18,64], index: 0, kind: input, shape index: {}]
  %s1 = inlined_call_operand.vmem [shape: f32[2,16,16,64], index: 1, kind: input, shape index: {}]
  %s2 = inlined_call_operand.vmem [shape: f32[9,64], index: 2, kind: input, shape index: {}]
  %s3 = inlined_call_operand.vmem [shape: f32[1,64], index: 3, kind: input, shape index: {}]
  %s4 = inlined_call_operand.vmem [shape: f32[4,64,64], index: 4, kind: input, shape index: {}]
  %s5 = inlined_call_operand.vmem [shape: f32[4,64,64], index: 5, kind: input, shape index: {}]
  %s6 = inlined_call_operand.vmem [shape: f32[64,64], index: 6, kind: input, shape index: {}]
  %s7 = inlined_call_operand.hbm [shape: f32[2,16,16,64], index: 7, kind: output, shape index: {}]
  %s8 = sld [smem:[#allocation0]]
  $region61: #{irmb_forward.3} parent=0
    _
  %s10 = ssub.s32 1, %s8
  %s11 = scalar_select 0, %s10, %s8
  $region1: #{irmb_forward.3} parent=0
    #allocation2 [shape = 'u8[262144]{0}', space=vmem, size = 0x40000, scoped, tag = 'output window, operand 0']
    #allocation3 [shape = 's32[2]{0}', space=sflag, size = 0x8, scoped, tag = 'scoped memory for irmb_forward.3']
    %12 = vsyncpa [#allocation3], 0
    %s13 = scalar_lea.sflag [#allocation3], 1
    %14 = vsyncpa %s13, 0
    loop: start=0, step=1, limit=4
    $region2: #{irmb_forward.3} parent=1 // loop_pre_header
      _
    $region3: #{irmb_forward.3} parent=1 // loop_header
      %s16 = sphi 0, %s20
      %p17 = scmp.ge.s32.totalorder %s16, 4
      %s26 = sphi 0, %s28
      %s29 = sphi 0, %s26
      %s30 = sphi 0, %s29
      %s46 = sphi 0, %s30
      %s52 = sphi 0, %s54
      %s55 = sphi 0, %s52
      %s56 = sphi 0, %s55
      %s72 = sphi 0, %s56
      %s76 = sphi 0, %s76
      %s78 = sphi 0, %s76
      %s79 = sphi 0, %s78
      %s93 = sphi 0, %s79
      %s97 = sphi 0, %s97
      %s99 = sphi 0, %s97
      %s100 = sphi 0, %s99
      %s114 = sphi 0, %s100
      %s118 = sphi 0, %s118
      %s120 = sphi 0, %s118
      %s121 = sphi 0, %s120
      %s135 = sphi 0, %s121
      %s139 = sphi 0, %s139
      %s141 = sphi 0, %s139
      %s142 = sphi 0, %s141
      %s156 = sphi 0, %s142
      %s160 = sphi 0, %s160
      %s162 = sphi 0, %s160
      %s163 = sphi 0, %s162
      %s177 = sphi 0, %s163
      %s183 = sphi 0, %s185
      %s186 = sphi 0, %s183
      %s187 = sphi 0, %s186
      %s203 = sphi 0, %s187
    $region4: #{irmb_forward.3} parent=1 // loop_header_branch
      %19 = sbr.rel (%p17) target = $region8
    $region5: #{irmb_forward.3} parent=1 // loop_body
      %s21 = ssub.s32 %s16, 1
      %s22 = ssub.s32 %s16, 2
      %s23 = sadd.s32 %s16, 1
      %s24 = ssub.s32 %s16, %s23
      %p25 = scmp.eq.s32.totalorder %s24, 0
      %s27 = sadd.s32 %s26, 1
      %s28 = scalar_select %p25, %s26, %s27
      %p31 = pneg %p25
      %p32 = scmp.eq.s32.totalorder %s16, 1
      %p33 = por %p31, %p32
      %p34 = scmp.ne.s32.totalorder %s26, %s29
      %p35 = scmp.eq.s32.totalorder %s16, 0
      %p36 = por %p34, %p35
      %p37 = scmp.ne.s32.totalorder %s26, %s29
      %p38 = scmp.eq.s32.totalorder %s21, 1
      %p39 = por %p37, %p38
      %p40 = scmp.ne.s32.totalorder %s29, %s30
      %p41 = scmp.eq.s32.totalorder %s21, 0
      %p42 = por %p40, %p41
      %p43 = scmp.ne.s32.totalorder %s29, %s30
      %p44 = scmp.eq.s32.totalorder %s22, 1
      %p45 = por %p43, %p44
      %p47 = scmp.ne.s32.totalorder %s30, %s46
      %p48 = scmp.eq.s32.totalorder %s22, 0
      %p49 = por %p47, %p48
      %s50 = ssub.s32 %s16, %s23
      %p51 = scmp.eq.s32.totalorder %s50, 0
      %s53 = sadd.s32 %s52, 1
      %s54 = scalar_select %p51, %s52, %s53
      %p57 = pneg %p51
      %p58 = scmp.eq.s32.totalorder %s16, 1
      %p59 = por %p57, %p58
      %p60 = scmp.ne.s32.totalorder %s52, %s55
      %p61 = scmp.eq.s32.totalorder %s16, 0
      %p62 = por %p60, %p61
      %p63 = scmp.ne.s32.totalorder %s52, %s55
      %p64 = scmp.eq.s32.totalorder %s21, 1
      %p65 = por %p63, %p64
      %p66 = scmp.ne.s32.totalorder %s55, %s56
      %p67 = scmp.eq.s32.totalorder %s21, 0
      %p68 = por %p66, %p67
      %p69 = scmp.ne.s32.totalorder %s55, %s56
      %p70 = scmp.eq.s32.totalorder %s22, 1
      %p71 = por %p69, %p70
      %p73 = scmp.ne.s32.totalorder %s56, %s72
      %p74 = scmp.eq.s32.totalorder %s22, 0
      %p75 = por %p73, %p74
      %s77 = sadd.s32 %s76, 1
      %p80 = scmp.eq.s32.totalorder %s16, 1
      %p81 = scmp.ne.s32.totalorder %s76, %s78
      %p82 = scmp.eq.s32.totalorder %s16, 0
      %p83 = por %p81, %p82
      %p84 = scmp.ne.s32.totalorder %s76, %s78
      %p85 = scmp.eq.s32.totalorder %s21, 1
      %p86 = por %p84, %p85
      %p87 = scmp.ne.s32.totalorder %s78, %s79
      %p88 = scmp.eq.s32.totalorder %s21, 0
      %p89 = por %p87, %p88
      %p90 = scmp.ne.s32.totalorder %s78, %s79
      %p91 = scmp.eq.s32.totalorder %s22, 1
      %p92 = por %p90, %p91
      %p94 = scmp.ne.s32.totalorder %s79, %s93
      %p95 = scmp.eq.s32.totalorder %s22, 0
      %p96 = por %p94, %p95
      %s98 = sadd.s32 %s97, 1
      %p101 = scmp.eq.s32.totalorder %s16, 1
      %p102 = scmp.ne.s32.totalorder %s97, %s99
      %p103 = scmp.eq.s32.totalorder %s16, 0
      %p104 = por %p102, %p103
      %p105 = scmp.ne.s32.totalorder %s97, %s99
      %p106 = scmp.eq.s32.totalorder %s21, 1
      %p107 = por %p105, %p106
      %p108 = scmp.ne.s32.totalorder %s99, %s100
      %p109 = scmp.eq.s32.totalorder %s21, 0
      %p110 = por %p108, %p109
      %p111 = scmp.ne.s32.totalorder %s99, %s100
      %p112 = scmp.eq.s32.totalorder %s22, 1
      %p113 = por %p111, %p112
      %p115 = scmp.ne.s32.totalorder %s100, %s114
      %p116 = scmp.eq.s32.totalorder %s22, 0
      %p117 = por %p115, %p116
      %s119 = sadd.s32 %s118, 1
      %p122 = scmp.eq.s32.totalorder %s16, 1
      %p123 = scmp.ne.s32.totalorder %s118, %s120
      %p124 = scmp.eq.s32.totalorder %s16, 0
      %p125 = por %p123, %p124
      %p126 = scmp.ne.s32.totalorder %s118, %s120
      %p127 = scmp.eq.s32.totalorder %s21, 1
      %p128 = por %p126, %p127
      %p129 = scmp.ne.s32.totalorder %s120, %s121
      %p130 = scmp.eq.s32.totalorder %s21, 0
      %p131 = por %p129, %p130
      %p132 = scmp.ne.s32.totalorder %s120, %s121
      %p133 = scmp.eq.s32.totalorder %s22, 1
      %p134 = por %p132, %p133
      %p136 = scmp.ne.s32.totalorder %s121, %s135
      %p137 = scmp.eq.s32.totalorder %s22, 0
      %p138 = por %p136, %p137
      %s140 = sadd.s32 %s139, 1
      %p143 = scmp.eq.s32.totalorder %s16, 1
      %p144 = scmp.ne.s32.totalorder %s139, %s141
      %p145 = scmp.eq.s32.totalorder %s16, 0
      %p146 = por %p144, %p145
      %p147 = scmp.ne.s32.totalorder %s139, %s141
      %p148 = scmp.eq.s32.totalorder %s21, 1
      %p149 = por %p147, %p148
      %p150 = scmp.ne.s32.totalorder %s141, %s142
      %p151 = scmp.eq.s32.totalorder %s21, 0
      %p152 = por %p150, %p151
      %p153 = scmp.ne.s32.totalorder %s141, %s142
      %p154 = scmp.eq.s32.totalorder %s22, 1
      %p155 = por %p153, %p154
      %p157 = scmp.ne.s32.totalorder %s142, %s156
      %p158 = scmp.eq.s32.totalorder %s22, 0
      %p159 = por %p157, %p158
      %s161 = sadd.s32 %s160, 1
      %p164 = scmp.eq.s32.totalorder %s16, 1
      %p165 = scmp.ne.s32.totalorder %s160, %s162
      %p166 = scmp.eq.s32.totalorder %s16, 0
      %p167 = por %p165, %p166
      %p168 = scmp.ne.s32.totalorder %s160, %s162
      %p169 = scmp.eq.s32.totalorder %s21, 1
      %p170 = por %p168, %p169
      %p171 = scmp.ne.s32.totalorder %s162, %s163
      %p172 = scmp.eq.s32.totalorder %s21, 0
      %p173 = por %p171, %p172
      %p174 = scmp.ne.s32.totalorder %s162, %s163
      %p175 = scmp.eq.s32.totalorder %s22, 1
      %p176 = por %p174, %p175
      %p178 = scmp.ne.s32.totalorder %s163, %s177
      %p179 = scmp.eq.s32.totalorder %s22, 0
      %p180 = por %p178, %p179
      %s181 = ssub.s32 %s16, %s23
      %p182 = scmp.eq.s32.totalorder %s181, 0
      %s184 = sadd.s32 %s183, 1
      %s185 = scalar_select %p182, %s183, %s184
      %p188 = pneg %p182
      %p189 = scmp.eq.s32.totalorder %s16, 1
      %p190 = por %p188, %p189
      %p191 = scmp.ne.s32.totalorder %s183, %s186
      %p192 = scmp.eq.s32.totalorder %s16, 0
      %p193 = por %p191, %p192
      %p194 = scmp.ne.s32.totalorder %s183, %s186
      %p195 = scmp.eq.s32.totalorder %s21, 1
      %p196 = por %p194, %p195
      %p197 = scmp.ne.s32.totalorder %s186, %s187
      %p198 = scmp.eq.s32.totalorder %s21, 0
      %p199 = por %p197, %p198
      %p200 = scmp.ne.s32.totalorder %s186, %s187
      %p201 = scmp.eq.s32.totalorder %s22, 1
      %p202 = por %p200, %p201
      %p204 = scmp.ne.s32.totalorder %s187, %s203
      %p205 = scmp.eq.s32.totalorder %s22, 0
      %p206 = por %p204, %p205
      %p207 = scmp.le.s32.totalorder 1, %s16
      %p208 = scmp.lt.s32.totalorder %s16, 3
      %p209 = pnand %p207, %p208
      %p210 = pneg %p209
      // Predicated region
      $region9: #{irmb_forward.3} parent=5 // pred_check
        _
      $region10: #{irmb_forward.3} parent=5 // pred_check_branch
        %212 = sbr.rel (%p209) target = $region12
      $region11: #{irmb_forward.3} parent=5 // pred_region
        %s213 = ssub.s32 %s16, 1
        // Predicated region
        $region13: #{irmb_forward.3} parent=11 // pred_check
          %p214 = pneg %p89
        $region14: #{irmb_forward.3} parent=11 // pred_check_branch
          %216 = sbr.rel (%p214) target = $region16
        $region15: #{irmb_forward.3} parent=11 // pred_region
          _
        $region16: #{irmb_forward.3} parent=11 // pred_fallthru
          _
        // Predicated region
        $region17: #{irmb_forward.3} parent=11 // pred_check
          %p217 = pneg %p110
        $region18: #{irmb_forward.3} parent=11 // pred_check_branch
          %219 = sbr.rel (%p217) target = $region20
        $region19: #{irmb_forward.3} parent=11 // pred_region
          _
        $region20: #{irmb_forward.3} parent=11 // pred_fallthru
          _
        // Predicated region
        $region21: #{irmb_forward.3} parent=11 // pred_check
          %p220 = pneg %p131
        $region22: #{irmb_forward.3} parent=11 // pred_check_branch
          %222 = sbr.rel (%p220) target = $region24
        $region23: #{irmb_forward.3} parent=11 // pred_region
          _
        $region24: #{irmb_forward.3} parent=11 // pred_fallthru
          _
        // Predicated region
        $region25: #{irmb_forward.3} parent=11 // pred_check
          %p223 = pneg %p152
        $region26: #{irmb_forward.3} parent=11 // pred_check_branch
          %225 = sbr.rel (%p223) target = $region28
        $region27: #{irmb_forward.3} parent=11 // pred_region
          _
        $region28: #{irmb_forward.3} parent=11 // pred_fallthru
          _
        // Predicated region
        $region29: #{irmb_forward.3} parent=11 // pred_check
          %p226 = pneg %p173
        $region30: #{irmb_forward.3} parent=11 // pred_check_branch
          %228 = sbr.rel (%p226) target = $region32
        $region31: #{irmb_forward.3} parent=11 // pred_region
          _
        $region32: #{irmb_forward.3} parent=11 // pred_fallthru
          _
      $region12: #{irmb_forward.3} parent=5 // pred_fallthru
        _
      %p229 = scmp.lt.s32.totalorder %s16, 2
      // Predicated region
      $region33: #{irmb_forward.3} parent=5 // pred_check
        %p230 = pneg %p229
      $region34: #{irmb_forward.3} parent=5 // pred_check_branch
        %232 = sbr.rel (%p230) target = $region36
      $region35: #{irmb_forward.3} parent=5 // pred_region
        // Predicated region
        $region37: #{irmb_forward.3} parent=35 // pred_check
          %p233 = pneg %p36
        $region38: #{irmb_forward.3} parent=35 // pred_check_branch
          %235 = sbr.rel (%p233) target = $region40
        $region39: #{irmb_forward.3} parent=35 // pred_region
          %p236 = scmp.lt.s32.totalorder %s16, 1
          %s237 = scalar_select %p236, %s16, 1
          %s238 = smul.addr %s237, 54
          %s239 = smul.addr %s238, 8
          %s240 = scalar_lea.vmem %s0, %s239
        $region40: #{irmb_forward.3} parent=35 // pred_fallthru
          _
        // Predicated region
        $region41: #{irmb_forward.3} parent=35 // pred_check
          %p241 = pneg %p62
        $region42: #{irmb_forward.3} parent=35 // pred_check_branch
          %243 = sbr.rel (%p241) target = $region44
        $region43: #{irmb_forward.3} parent=35 // pred_region
          %p244 = scmp.lt.s32.totalorder %s16, 1
          %s245 = scalar_select %p244, %s16, 1
          %s246 = smul.addr %s245, 32
          %s247 = smul.addr %s246, 8
          %s248 = scalar_lea.vmem %s1, %s247
        $region44: #{irmb_forward.3} parent=35 // pred_fallthru
          _
      $region36: #{irmb_forward.3} parent=5 // pred_fallthru
        _
      %p249 = scmp.le.s32.totalorder 1, %s16
      %p250 = scmp.lt.s32.totalorder %s16, 3
      %p251 = pnand %p249, %p250
      %p252 = pneg %p251
      // Predicated region
      $region45: #{irmb_forward.3} parent=5 // pred_check
        _
      $region46: #{irmb_forward.3} parent=5 // pred_check_branch
        %254 = sbr.rel (%p251) target = $region48
      $region47: #{irmb_forward.3} parent=5 // pred_region
        %s255 = ssub.s32 %s16, 1
        %p256 = scmp.lt.s32.totalorder %s21, 1
        %s257 = scalar_select %p256, %s21, 1
        %s258 = smul.addr %s257, 54
        %s259 = smul.addr %s258, 8
        %s260 = scalar_lea.vmem %s0, %s259
        %p261 = pneg %p42
        %p262 = pneg %p39
        %p263 = scmp.lt.s32.totalorder %s21, 1
        %s264 = scalar_select %p263, %s21, 1
        %s265 = smul.addr %s264, 32
        %s266 = smul.addr %s265, 8
        %s267 = scalar_lea.vmem %s1, %s266
        %p268 = pneg %p68
        %p269 = pneg %p65
        %p270 = pneg %p89
        %p271 = pneg %p86
        %p272 = pneg %p110
        %p273 = pneg %p107
        %p274 = pneg %p131
        %p275 = pneg %p128
        %p276 = pneg %p152
        %p277 = pneg %p149
        %p278 = pneg %p173
        %p279 = pneg %p170
        %p280 = pneg %p199
        %p281 = pneg %p196
        %s282 = sand.u32 %s186, 1
        %s283 = scalar_lea.sflag [#allocation3], %s282
        %s284 = sand.u32 %s186, 1
        %s285 = smul.addr %s284, 256
        %s286 = scalar_lea.vmem [#allocation2], %s285
        %p287 = scmp.lt.s32.totalorder %s21, 1
        %s288 = scalar_select %p287, %s21, 1
        %s289 = smul.addr %s288, 54
        %s290 = smul.addr %s289, 8
        %s291 = scalar_lea.vmem %s0, %s290
        %p292 = scmp.lt.s32.totalorder %s21, 1
        %s293 = scalar_select %p292, %s21, 1
        %s294 = smul.addr %s293, 32
        %s295 = smul.addr %s294, 8
        %s296 = scalar_lea.vmem %s1, %s295
        %v297 = vld [vmem:[%s291] sm:$0xff]
        %v298 = vld [vmem:[%s291 + $0x8] sm:$0xff]
        %v299 = vld [vmem:[%s291 + $0x18] sm:$0xff]
        %v300 = vld [vmem:[%s291 + $0x20] sm:$0xff]
        %v301 = vld [vmem:[%s291 + $0x30] sm:$0xff]
        %v302 = vld [vmem:[%s291 + $0x38] sm:$0xff]
        %v303 = vld [vmem:[%s291 + $0x48] sm:$0xff]
        %v304 = vld [vmem:[%s291 + $0x50] sm:$0xff]
        %v305 = vld [vmem:[%s291 + $0x60] sm:$0xff]
        %v306 = vld [vmem:[%s291 + $0x68] sm:$0xff]
        %v307 = vld [vmem:[%s291 + $0x78] sm:$0xff]
        %v308 = vld [vmem:[%s291 + $0x80] sm:$0xff]
        %v309 = vld [vmem:[%s291 + $0x90] sm:$0xff]
        %v310 = vld [vmem:[%s291 + $0x98] sm:$0xff]
        %v311 = vld [vmem:[%s291 + $0xa8] sm:$0xff]
        %v312 = vld [vmem:[%s291 + $0xb0] sm:$0xff]
        %v313 = vld [vmem:[%s291 + $0xc0] sm:$0xff]
        %v314 = vld [vmem:[%s291 + $0xc8] sm:$0xff]
        %v315 = vld [vmem:[%s291 + $0xd8] sm:$0xff]
        %v316 = vld [vmem:[%s291 + $0xe0] sm:$0xff]
        %v317 = vld [vmem:[%s291 + $0xf0] sm:$0xff]
        %v318 = vld [vmem:[%s291 + $0xf8] sm:$0xff]
        %v319 = vld [vmem:[%s291 + $0x108] sm:$0xff]
        %v320 = vld [vmem:[%s291 + $0x110] sm:$0xff]
        %v321 = vld [vmem:[%s291 + $0x120] sm:$0xff]
        %v322 = vld [vmem:[%s291 + $0x128] sm:$0xff]
        %v323 = vld [vmem:[%s291 + $0x138] sm:$0xff]
        %v324 = vld [vmem:[%s291 + $0x140] sm:$0xff]
        %v325 = vld [vmem:[%s291 + $0x150] sm:$0xff]
        %v326 = vld [vmem:[%s291 + $0x158] sm:$0xff]
        %v327 = vld [vmem:[%s291 + $0x168] sm:$0xff]
        %v328 = vld [vmem:[%s291 + $0x170] sm:$0xff]
        %v329 = vld [vmem:[%s2] sm:$0x1]
        %v330 = vlaneseq
        %v331 = vshrl.u32 %v330, 7
        %v332 = vsub.s32 0, %v331
        %v333 = vrot.slane %v329, %v332
        %v334 = vmul.f32 %v297, %v333
        %v335 = vmul.f32 %v298, %v333
        %v336 = vmul.f32 %v299, %v333
        %v337 = vmul.f32 %v300, %v333
        %v338 = vmul.f32 %v301, %v333
        %v339 = vmul.f32 %v302, %v333
        %v340 = vmul.f32 %v303, %v333
        %v341 = vmul.f32 %v304, %v333
        %v342 = vmul.f32 %v305, %v333
        %v343 = vmul.f32 %v306, %v333
        %v344 = vmul.f32 %v307, %v333
        %v345 = vmul.f32 %v308, %v333
        %v346 = vmul.f32 %v309, %v333
        %v347 = vmul.f32 %v310, %v333
        %v348 = vmul.f32 %v311, %v333
        %v349 = vmul.f32 %v312, %v333
        %v350 = vmul.f32 %v313, %v333
        %v351 = vmul.f32 %v314, %v333
        %v352 = vmul.f32 %v315, %v333
        %v353 = vmul.f32 %v316, %v333
        %v354 = vmul.f32 %v317, %v333
        %v355 = vmul.f32 %v318, %v333
        %v356 = vmul.f32 %v319, %v333
        %v357 = vmul.f32 %v320, %v333
        %v358 = vmul.f32 %v321, %v333
        %v359 = vmul.f32 %v322, %v333
        %v360 = vmul.f32 %v323, %v333
        %v361 = vmul.f32 %v324, %v333
        %v362 = vmul.f32 %v325, %v333
        %v363 = vmul.f32 %v326, %v333
        %v364 = vmul.f32 %v327, %v333
        %v365 = vmul.f32 %v328, %v333
        %v366 = vadd.f32 %v334, 0.0
        %v367 = vadd.f32 %v335, 0.0
        %v368 = vadd.f32 %v336, 0.0
        %v369 = vadd.f32 %v337, 0.0
        %v370 = vadd.f32 %v338, 0.0
        %v371 = vadd.f32 %v339, 0.0
        %v372 = vadd.f32 %v340, 0.0
        %v373 = vadd.f32 %v341, 0.0
        %v374 = vadd.f32 %v342, 0.0
        %v375 = vadd.f32 %v343, 0.0
        %v376 = vadd.f32 %v344, 0.0
        %v377 = vadd.f32 %v345, 0.0
        %v378 = vadd.f32 %v346, 0.0
        %v379 = vadd.f32 %v347, 0.0
        %v380 = vadd.f32 %v348, 0.0
        %v381 = vadd.f32 %v349, 0.0
        %v382 = vadd.f32 %v350, 0.0
        %v383 = vadd.f32 %v351, 0.0
        %v384 = vadd.f32 %v352, 0.0
        %v385 = vadd.f32 %v353, 0.0
        %v386 = vadd.f32 %v354, 0.0
        %v387 = vadd.f32 %v355, 0.0
        %v388 = vadd.f32 %v356, 0.0
        %v389 = vadd.f32 %v357, 0.0
        %v390 = vadd.f32 %v358, 0.0
        %v391 = vadd.f32 %v359, 0.0
        %v392 = vadd.f32 %v360, 0.0
        %v393 = vadd.f32 %v361, 0.0
        %v394 = vadd.f32 %v362, 0.0
        %v395 = vadd.f32 %v363, 0.0
        %v396 = vadd.f32 %v364, 0.0
        %v397 = vadd.f32 %v365, 0.0
        %v398 = vld [vmem:[%s291 + $0x1] sm:$0xff]
        %v399 = vld [vmem:[%s291 + $0x9] sm:$0xff]
        %v400 = vld [vmem:[%s291 + $0x19] sm:$0xff]
        %v401 = vld [vmem:[%s291 + $0x21] sm:$0xff]
        %v402 = vld [vmem:[%s291 + $0x31] sm:$0xff]
        %v403 = vld [vmem:[%s291 + $0x39] sm:$0xff]
        %v404 = vld [vmem:[%s291 + $0x49] sm:$0xff]
        %v405 = vld [vmem:[%s291 + $0x51] sm:$0xff]
        %v406 = vld [vmem:[%s291 + $0x61] sm:$0xff]
        %v407 = vld [vmem:[%s291 + $0x69] sm:$0xff]
        %v408 = vld [vmem:[%s291 + $0x79] sm:$0xff]
        %v409 = vld [vmem:[%s291 + $0x81] sm:$0xff]
        %v410 = vld [vmem:[%s291 + $0x91] sm:$0xff]
        %v411 = vld [vmem:[%s291 + $0x99] sm:$0xff]
        %v412 = vld [vmem:[%s291 + $0xa9] sm:$0xff]
        %v413 = vld [vmem:[%s291 + $0xb1] sm:$0xff]
        %v414 = vld [vmem:[%s291 + $0xc1] sm:$0xff]
        %v415 = vld [vmem:[%s291 + $0xc9] sm:$0xff]
        %v416 = vld [vmem:[%s291 + $0xd9] sm:$0xff]
        %v417 = vld [vmem:[%s291 + $0xe1] sm:$0xff]
        %v418 = vld [vmem:[%s291 + $0xf1] sm:$0xff]
        %v419 = vld [vmem:[%s291 + $0xf9] sm:$0xff]
        %v420 = vld [vmem:[%s291 + $0x109] sm:$0xff]
        %v421 = vld [vmem:[%s291 + $0x111] sm:$0xff]
        %v422 = vld [vmem:[%s291 + $0x121] sm:$0xff]
        %v423 = vld [vmem:[%s291 + $0x129] sm:$0xff]
        %v424 = vld [vmem:[%s291 + $0x139] sm:$0xff]
        %v425 = vld [vmem:[%s291 + $0x141] sm:$0xff]
        %v426 = vld [vmem:[%s291 + $0x151] sm:$0xff]
        %v427 = vld [vmem:[%s291 + $0x159] sm:$0xff]
        %v428 = vld [vmem:[%s291 + $0x169] sm:$0xff]
        %v429 = vld [vmem:[%s291 + $0x171] sm:$0xff]
        %v430 = vld [vmem:[%s2 + $0x1] sm:$0x1]
        %v431 = vlaneseq
        %v432 = vshrl.u32 %v431, 7
        %v433 = vsub.s32 0, %v432
        %v434 = vrot.slane %v430, %v433
        %v435 = vmul.f32 %v398, %v434
        %v436 = vmul.f32 %v399, %v434
        %v437 = vmul.f32 %v400, %v434
        %v438 = vmul.f32 %v401, %v434
        %v439 = vmul.f32 %v402, %v434
        %v440 = vmul.f32 %v403, %v434
        %v441 = vmul.f32 %v404, %v434
        %v442 = vmul.f32 %v405, %v434
        %v443 = vmul.f32 %v406, %v434
        %v444 = vmul.f32 %v407, %v434
        %v445 = vmul.f32 %v408, %v434
        %v446 = vmul.f32 %v409, %v434
        %v447 = vmul.f32 %v410, %v434
        %v448 = vmul.f32 %v411, %v434
        %v449 = vmul.f32 %v412, %v434
        %v450 = vmul.f32 %v413, %v434
        %v451 = vmul.f32 %v414, %v434
        %v452 = vmul.f32 %v415, %v434
        %v453 = vmul.f32 %v416, %v434
        %v454 = vmul.f32 %v417, %v434
        %v455 = vmul.f32 %v418, %v434
        %v456 = vmul.f32 %v419, %v434
        %v457 = vmul.f32 %v420, %v434
        %v458 = vmul.f32 %v421, %v434
        %v459 = vmul.f32 %v422, %v434
        %v460 = vmul.f32 %v423, %v434
        %v461 = vmul.f32 %v424, %v434
        %v462 = vmul.f32 %v425, %v434
        %v463 = vmul.f32 %v426, %v434
        %v464 = vmul.f32 %v427, %v434
        %v465 = vmul.f32 %v428, %v434
        %v466 = vmul.f32 %v429, %v434
        %v467 = vadd.f32 %v366, %v435
        %v468 = vadd.f32 %v367, %v436
        %v469 = vadd.f32 %v368, %v437
        %v470 = vadd.f32 %v369, %v438
        %v471 = vadd.f32 %v370, %v439
        %v472 = vadd.f32 %v371, %v440
        %v473 = vadd.f32 %v372, %v441
        %v474 = vadd.f32 %v373, %v442
        %v475 = vadd.f32 %v374, %v443
        %v476 = vadd.f32 %v375, %v444
        %v477 = vadd.f32 %v376, %v445
        %v478 = vadd.f32 %v377, %v446
        %v479 = vadd.f32 %v378, %v447
        %v480 = vadd.f32 %v379, %v448
        %v481 = vadd.f32 %v380, %v449
        %v482 = vadd.f32 %v381, %v450
        %v483 = vadd.f32 %v382, %v451
        %v484 = vadd.f32 %v383, %v452
        %v485 = vadd.f32 %v384, %v453
        %v486 = vadd.f32 %v385, %v454
        %v487 = vadd.f32 %v386, %v455
        %v488 = vadd.f32 %v387, %v456
        %v489 = vadd.f32 %v388, %v457
        %v490 = vadd.f32 %v389, %v458
        %v491 = vadd.f32 %v390, %v459
        %v492 = vadd.f32 %v391, %v460
        %v493 = vadd.f32 %v392, %v461
        %v494 = vadd.f32 %v393, %v462
        %v495 = vadd.f32 %v394, %v463
        %v496 = vadd.f32 %v395, %v464
        %v497 = vadd.f32 %v396, %v465
        %v498 = vadd.f32 %v397, %v466
        %v499 = vld [vmem:[%s291 + $0x2] sm:$0xff]
        %v500 = vld [vmem:[%s291 + $0xa] sm:$0xff]
        %v501 = vld [vmem:[%s291 + $0x1a] sm:$0xff]
        %v502 = vld [vmem:[%s291 + $0x22] sm:$0xff]
        %v503 = vld [vmem:[%s291 + $0x32] sm:$0xff]
        %v504 = vld [vmem:[%s291 + $0x3a] sm:$0xff]
        %v505 = vld [vmem:[%s291 + $0x4a] sm:$0xff]
        %v506 = vld [vmem:[%s291 + $0x52] sm:$0xff]
        %v507 = vld [vmem:[%s291 + $0x62] sm:$0xff]
        %v508 = vld [vmem:[%s291 + $0x6a] sm:$0xff]
        %v509 = vld [vmem:[%s291 + $0x7a] sm:$0xff]
        %v510 = vld [vmem:[%s291 + $0x82] sm:$0xff]
        %v511 = vld [vmem:[%s291 + $0x92] sm:$0xff]
        %v512 = vld [vmem:[%s291 + $0x9a] sm:$0xff]
        %v513 = vld [vmem:[%s291 + $0xaa] sm:$0xff]
        %v514 = vld [vmem:[%s291 + $0xb2] sm:$0xff]
        %v515 = vld [vmem:[%s291 + $0xc2] sm:$0xff]
        %v516 = vld [vmem:[%s291 + $0xca] sm:$0xff]
        %v517 = vld [vmem:[%s291 + $0xda] sm:$0xff]
        %v518 = vld [vmem:[%s291 + $0xe2] sm:$0xff]
        %v519 = vld [vmem:[%s291 + $0xf2] sm:$0xff]
        %v520 = vld [vmem:[%s291 + $0xfa] sm:$0xff]
        %v521 = vld [vmem:[%s291 + $0x10a] sm:$0xff]
        %v522 = vld [vmem:[%s291 + $0x112] sm:$0xff]
        %v523 = vld [vmem:[%s291 + $0x122] sm:$0xff]
        %v524 = vld [vmem:[%s291 + $0x12a] sm:$0xff]
        %v525 = vld [vmem:[%s291 + $0x13a] sm:$0xff]
        %v526 = vld [vmem:[%s291 + $0x142] sm:$0xff]
        %v527 = vld [vmem:[%s291 + $0x152] sm:$0xff]
        %v528 = vld [vmem:[%s291 + $0x15a] sm:$0xff]
        %v529 = vld [vmem:[%s291 + $0x16a] sm:$0xff]
        %v530 = vld [vmem:[%s291 + $0x172] sm:$0xff]
        %v531 = vld [vmem:[%s2 + $0x2] sm:$0x1]
        %v532 = vlaneseq
        %v533 = vshrl.u32 %v532, 7
        %v534 = vsub.s32 0, %v533
        %v535 = vrot.slane %v531, %v534
        %v536 = vmul.f32 %v499, %v535
        %v537 = vmul.f32 %v500, %v535
        %v538 = vmul.f32 %v501, %v535
        %v539 = vmul.f32 %v502, %v535
        %v540 = vmul.f32 %v503, %v535
        %v541 = vmul.f32 %v504, %v535
        %v542 = vmul.f32 %v505, %v535
        %v543 = vmul.f32 %v506, %v535
        %v544 = vmul.f32 %v507, %v535
        %v545 = vmul.f32 %v508, %v535
        %v546 = vmul.f32 %v509, %v535
        %v547 = vmul.f32 %v510, %v535
        %v548 = vmul.f32 %v511, %v535
        %v549 = vmul.f32 %v512, %v535
        %v550 = vmul.f32 %v513, %v535
        %v551 = vmul.f32 %v514, %v535
        %v552 = vmul.f32 %v515, %v535
        %v553 = vmul.f32 %v516, %v535
        %v554 = vmul.f32 %v517, %v535
        %v555 = vmul.f32 %v518, %v535
        %v556 = vmul.f32 %v519, %v535
        %v557 = vmul.f32 %v520, %v535
        %v558 = vmul.f32 %v521, %v535
        %v559 = vmul.f32 %v522, %v535
        %v560 = vmul.f32 %v523, %v535
        %v561 = vmul.f32 %v524, %v535
        %v562 = vmul.f32 %v525, %v535
        %v563 = vmul.f32 %v526, %v535
        %v564 = vmul.f32 %v527, %v535
        %v565 = vmul.f32 %v528, %v535
        %v566 = vmul.f32 %v529, %v535
        %v567 = vmul.f32 %v530, %v535
        %v568 = vadd.f32 %v467, %v536
        %v569 = vadd.f32 %v468, %v537
        %v570 = vadd.f32 %v469, %v538
        %v571 = vadd.f32 %v470, %v539
        %v572 = vadd.f32 %v471, %v540
        %v573 = vadd.f32 %v472, %v541
        %v574 = vadd.f32 %v473, %v542
        %v575 = vadd.f32 %v474, %v543
        %v576 = vadd.f32 %v475, %v544
        %v577 = vadd.f32 %v476, %v545
        %v578 = vadd.f32 %v477, %v546
        %v579 = vadd.f32 %v478, %v547
        %v580 = vadd.f32 %v479, %v548
        %v581 = vadd.f32 %v480, %v549
        %v582 = vadd.f32 %v481, %v550
        %v583 = vadd.f32 %v482, %v551
        %v584 = vadd.f32 %v483, %v552
        %v585 = vadd.f32 %v484, %v553
        %v586 = vadd.f32 %v485, %v554
        %v587 = vadd.f32 %v486, %v555
        %v588 = vadd.f32 %v487, %v556
        %v589 = vadd.f32 %v488, %v557
        %v590 = vadd.f32 %v489, %v558
        %v591 = vadd.f32 %v490, %v559
        %v592 = vadd.f32 %v491, %v560
        %v593 = vadd.f32 %v492, %v561
        %v594 = vadd.f32 %v493, %v562
        %v595 = vadd.f32 %v494, %v563
        %v596 = vadd.f32 %v495, %v564
        %v597 = vadd.f32 %v496, %v565
        %v598 = vadd.f32 %v497, %v566
        %v599 = vadd.f32 %v498, %v567
        %s600 = scalar_lea.vmem %s291, 24
        %v601 = vld [vmem:[%s600] sm:$0xff]
        %v602 = vld [vmem:[%s600 + $0x8] sm:$0xff]
        %v603 = vld [vmem:[%s600 + $0x18] sm:$0xff]
        %v604 = vld [vmem:[%s600 + $0x20] sm:$0xff]
        %v605 = vld [vmem:[%s600 + $0x30] sm:$0xff]
        %v606 = vld [vmem:[%s600 + $0x38] sm:$0xff]
        %v607 = vld [vmem:[%s600 + $0x48] sm:$0xff]
        %v608 = vld [vmem:[%s600 + $0x50] sm:$0xff]
        %v609 = vld [vmem:[%s600 + $0x60] sm:$0xff]
        %v610 = vld [vmem:[%s600 + $0x68] sm:$0xff]
        %v611 = vld [vmem:[%s600 + $0x78] sm:$0xff]
        %v612 = vld [vmem:[%s600 + $0x80] sm:$0xff]
        %v613 = vld [vmem:[%s600 + $0x90] sm:$0xff]
        %v614 = vld [vmem:[%s600 + $0x98] sm:$0xff]
        %v615 = vld [vmem:[%s600 + $0xa8] sm:$0xff]
        %v616 = vld [vmem:[%s600 + $0xb0] sm:$0xff]
        %v617 = vld [vmem:[%s600 + $0xc0] sm:$0xff]
        %v618 = vld [vmem:[%s600 + $0xc8] sm:$0xff]
        %v619 = vld [vmem:[%s600 + $0xd8] sm:$0xff]
        %v620 = vld [vmem:[%s600 + $0xe0] sm:$0xff]
        %v621 = vld [vmem:[%s600 + $0xf0] sm:$0xff]
        %v622 = vld [vmem:[%s600 + $0xf8] sm:$0xff]
        %v623 = vld [vmem:[%s600 + $0x108] sm:$0xff]
        %v624 = vld [vmem:[%s600 + $0x110] sm:$0xff]
        %v625 = vld [vmem:[%s600 + $0x120] sm:$0xff]
        %v626 = vld [vmem:[%s600 + $0x128] sm:$0xff]
        %v627 = vld [vmem:[%s600 + $0x138] sm:$0xff]
        %v628 = vld [vmem:[%s600 + $0x140] sm:$0xff]
        %v629 = vld [vmem:[%s600 + $0x150] sm:$0xff]
        %v630 = vld [vmem:[%s600 + $0x158] sm:$0xff]
        %v631 = vld [vmem:[%s600 + $0x168] sm:$0xff]
        %v632 = vld [vmem:[%s600 + $0x170] sm:$0xff]
        %v633 = vld [vmem:[%s2 + $0x3] sm:$0x1]
        %v634 = vlaneseq
        %v635 = vshrl.u32 %v634, 7
        %v636 = vsub.s32 0, %v635
        %v637 = vrot.slane %v633, %v636
        %v638 = vmul.f32 %v601, %v637
        %v639 = vmul.f32 %v602, %v637
        %v640 = vmul.f32 %v603, %v637
        %v641 = vmul.f32 %v604, %v637
        %v642 = vmul.f32 %v605, %v637
        %v643 = vmul.f32 %v606, %v637
        %v644 = vmul.f32 %v607, %v637
        %v645 = vmul.f32 %v608, %v637
        %v646 = vmul.f32 %v609, %v637
        %v647 = vmul.f32 %v610, %v637
        %v648 = vmul.f32 %v611, %v637
        %v649 = vmul.f32 %v612, %v637
        %v650 = vmul.f32 %v613, %v637
        %v651 = vmul.f32 %v614, %v637
        %v652 = vmul.f32 %v615, %v637
        %v653 = vmul.f32 %v616, %v637
        %v654 = vmul.f32 %v617, %v637
        %v655 = vmul.f32 %v618, %v637
        %v656 = vmul.f32 %v619, %v637
        %v657 = vmul.f32 %v620, %v637
        %v658 = vmul.f32 %v621, %v637
        %v659 = vmul.f32 %v622, %v637
        %v660 = vmul.f32 %v623, %v637
        %v661 = vmul.f32 %v624, %v637
        %v662 = vmul.f32 %v625, %v637
        %v663 = vmul.f32 %v626, %v637
        %v664 = vmul.f32 %v627, %v637
        %v665 = vmul.f32 %v628, %v637
        %v666 = vmul.f32 %v629, %v637
        %v667 = vmul.f32 %v630, %v637
        %v668 = vmul.f32 %v631, %v637
        %v669 = vmul.f32 %v632, %v637
        %v670 = vadd.f32 %v568, %v638
        %v671 = vadd.f32 %v569, %v639
        %v672 = vadd.f32 %v570, %v640
        %v673 = vadd.f32 %v571, %v641
        %v674 = vadd.f32 %v572, %v642
        %v675 = vadd.f32 %v573, %v643
        %v676 = vadd.f32 %v574, %v644
        %v677 = vadd.f32 %v575, %v645
        %v678 = vadd.f32 %v576, %v646
        %v679 = vadd.f32 %v577, %v647
        %v680 = vadd.f32 %v578, %v648
        %v681 = vadd.f32 %v579, %v649
        %v682 = vadd.f32 %v580, %v650
        %v683 = vadd.f32 %v581, %v651
        %v684 = vadd.f32 %v582, %v652
        %v685 = vadd.f32 %v583, %v653
        %v686 = vadd.f32 %v584, %v654
        %v687 = vadd.f32 %v585, %v655
        %v688 = vadd.f32 %v586, %v656
        %v689 = vadd.f32 %v587, %v657
        %v690 = vadd.f32 %v588, %v658
        %v691 = vadd.f32 %v589, %v659
        %v692 = vadd.f32 %v590, %v660
        %v693 = vadd.f32 %v591, %v661
        %v694 = vadd.f32 %v592, %v662
        %v695 = vadd.f32 %v593, %v663
        %v696 = vadd.f32 %v594, %v664
        %v697 = vadd.f32 %v595, %v665
        %v698 = vadd.f32 %v596, %v666
        %v699 = vadd.f32 %v597, %v667
        %v700 = vadd.f32 %v598, %v668
        %v701 = vadd.f32 %v599, %v669
        %v702 = vld [vmem:[%s600 + $0x1] sm:$0xff]
        %v703 = vld [vmem:[%s600 + $0x9] sm:$0xff]
        %v704 = vld [vmem:[%s600 + $0x19] sm:$0xff]
        %v705 = vld [vmem:[%s600 + $0x21] sm:$0xff]
        %v706 = vld [vmem:[%s600 + $0x31] sm:$0xff]
        %v707 = vld [vmem:[%s600 + $0x39] sm:$0xff]
        %v708 = vld [vmem:[%s600 + $0x49] sm:$0xff]
        %v709 = vld [vmem:[%s600 + $0x51] sm:$0xff]
        %v710 = vld [vmem:[%s600 + $0x61] sm:$0xff]
        %v711 = vld [vmem:[%s600 + $0x69] sm:$0xff]
        %v712 = vld [vmem:[%s600 + $0x79] sm:$0xff]
        %v713 = vld [vmem:[%s600 + $0x81] sm:$0xff]
        %v714 = vld [vmem:[%s600 + $0x91] sm:$0xff]
        %v715 = vld [vmem:[%s600 + $0x99] sm:$0xff]
        %v716 = vld [vmem:[%s600 + $0xa9] sm:$0xff]
        %v717 = vld [vmem:[%s600 + $0xb1] sm:$0xff]
        %v718 = vld [vmem:[%s600 + $0xc1] sm:$0xff]
        %v719 = vld [vmem:[%s600 + $0xc9] sm:$0xff]
        %v720 = vld [vmem:[%s600 + $0xd9] sm:$0xff]
        %v721 = vld [vmem:[%s600 + $0xe1] sm:$0xff]
        %v722 = vld [vmem:[%s600 + $0xf1] sm:$0xff]
        %v723 = vld [vmem:[%s600 + $0xf9] sm:$0xff]
        %v724 = vld [vmem:[%s600 + $0x109] sm:$0xff]
        %v725 = vld [vmem:[%s600 + $0x111] sm:$0xff]
        %v726 = vld [vmem:[%s600 + $0x121] sm:$0xff]
        %v727 = vld [vmem:[%s600 + $0x129] sm:$0xff]
        %v728 = vld [vmem:[%s600 + $0x139] sm:$0xff]
        %v729 = vld [vmem:[%s600 + $0x141] sm:$0xff]
        %v730 = vld [vmem:[%s600 + $0x151] sm:$0xff]
        %v731 = vld [vmem:[%s600 + $0x159] sm:$0xff]
        %v732 = vld [vmem:[%s600 + $0x169] sm:$0xff]
        %v733 = vld [vmem:[%s600 + $0x171] sm:$0xff]
        %v734 = vld [vmem:[%s2 + $0x4] sm:$0x1]
        %v735 = vlaneseq
        %v736 = vshrl.u32 %v735, 7
        %v737 = vsub.s32 0, %v736
        %v738 = vrot.slane %v734, %v737
        %v739 = vmul.f32 %v702, %v738
        %v740 = vmul.f32 %v703, %v738
        %v741 = vmul.f32 %v704, %v738
        %v742 = vmul.f32 %v705, %v738
        %v743 = vmul.f32 %v706, %v738
        %v744 = vmul.f32 %v707, %v738
        %v745 = vmul.f32 %v708, %v738
        %v746 = vmul.f32 %v709, %v738
        %v747 = vmul.f32 %v710, %v738
        %v748 = vmul.f32 %v711, %v738
        %v749 = vmul.f32 %v712, %v738
        %v750 = vmul.f32 %v713, %v738
        %v751 = vmul.f32 %v714, %v738
        %v752 = vmul.f32 %v715, %v738
        %v753 = vmul.f32 %v716, %v738
        %v754 = vmul.f32 %v717, %v738
        %v755 = vmul.f32 %v718, %v738
        %v756 = vmul.f32 %v719, %v738
        %v757 = vmul.f32 %v720, %v738
        %v758 = vmul.f32 %v721, %v738
        %v759 = vmul.f32 %v722, %v738
        %v760 = vmul.f32 %v723, %v738
        %v761 = vmul.f32 %v724, %v738
        %v762 = vmul.f32 %v725, %v738
        %v763 = vmul.f32 %v726, %v738
        %v764 = vmul.f32 %v727, %v738
        %v765 = vmul.f32 %v728, %v738
        %v766 = vmul.f32 %v729, %v738
        %v767 = vmul.f32 %v730, %v738
        %v768 = vmul.f32 %v731, %v738
        %v769 = vmul.f32 %v732, %v738
        %v770 = vmul.f32 %v733, %v738
        %v771 = vadd.f32 %v670, %v739
        %v772 = vadd.f32 %v671, %v740
        %v773 = vadd.f32 %v672, %v741
        %v774 = vadd.f32 %v673, %v742
        %v775 = vadd.f32 %v674, %v743
        %v776 = vadd.f32 %v675, %v744
        %v777 = vadd.f32 %v676, %v745
        %v778 = vadd.f32 %v677, %v746
        %v779 = vadd.f32 %v678, %v747
        %v780 = vadd.f32 %v679, %v748
        %v781 = vadd.f32 %v680, %v749
        %v782 = vadd.f32 %v681, %v750
        %v783 = vadd.f32 %v682, %v751
        %v784 = vadd.f32 %v683, %v752
        %v785 = vadd.f32 %v684, %v753
        %v786 = vadd.f32 %v685, %v754
        %v787 = vadd.f32 %v686, %v755
        %v788 = vadd.f32 %v687, %v756
        %v789 = vadd.f32 %v688, %v757
        %v790 = vadd.f32 %v689, %v758
        %v791 = vadd.f32 %v690, %v759
        %v792 = vadd.f32 %v691, %v760
        %v793 = vadd.f32 %v692, %v761
        %v794 = vadd.f32 %v693, %v762
        %v795 = vadd.f32 %v694, %v763
        %v796 = vadd.f32 %v695, %v764
        %v797 = vadd.f32 %v696, %v765
        %v798 = vadd.f32 %v697, %v766
        %v799 = vadd.f32 %v698, %v767
        %v800 = vadd.f32 %v699, %v768
        %v801 = vadd.f32 %v700, %v769
        %v802 = vadd.f32 %v701, %v770
        %v803 = vld [vmem:[%s600 + $0x2] sm:$0xff]
        %v804 = vld [vmem:[%s600 + $0xa] sm:$0xff]
        %v805 = vld [vmem:[%s600 + $0x1a] sm:$0xff]
        %v806 = vld [vmem:[%s600 + $0x22] sm:$0xff]
        %v807 = vld [vmem:[%s600 + $0x32] sm:$0xff]
        %v808 = vld [vmem:[%s600 + $0x3a] sm:$0xff]
        %v809 = vld [vmem:[%s600 + $0x4a] sm:$0xff]
        %v810 = vld [vmem:[%s600 + $0x52] sm:$0xff]
        %v811 = vld [vmem:[%s600 + $0x62] sm:$0xff]
        %v812 = vld [vmem:[%s600 + $0x6a] sm:$0xff]
        %v813 = vld [vmem:[%s600 + $0x7a] sm:$0xff]
        %v814 = vld [vmem:[%s600 + $0x82] sm:$0xff]
        %v815 = vld [vmem:[%s600 + $0x92] sm:$0xff]
        %v816 = vld [vmem:[%s600 + $0x9a] sm:$0xff]
        %v817 = vld [vmem:[%s600 + $0xaa] sm:$0xff]
        %v818 = vld [vmem:[%s600 + $0xb2] sm:$0xff]
        %v819 = vld [vmem:[%s600 + $0xc2] sm:$0xff]
        %v820 = vld [vmem:[%s600 + $0xca] sm:$0xff]
        %v821 = vld [vmem:[%s600 + $0xda] sm:$0xff]
        %v822 = vld [vmem:[%s600 + $0xe2] sm:$0xff]
        %v823 = vld [vmem:[%s600 + $0xf2] sm:$0xff]
        %v824 = vld [vmem:[%s600 + $0xfa] sm:$0xff]
        %v825 = vld [vmem:[%s600 + $0x10a] sm:$0xff]
        %v826 = vld [vmem:[%s600 + $0x112] sm:$0xff]
        %v827 = vld [vmem:[%s600 + $0x122] sm:$0xff]
        %v828 = vld [vmem:[%s600 + $0x12a] sm:$0xff]
        %v829 = vld [vmem:[%s600 + $0x13a] sm:$0xff]
        %v830 = vld [vmem:[%s600 + $0x142] sm:$0xff]
        %v831 = vld [vmem:[%s600 + $0x152] sm:$0xff]
        %v832 = vld [vmem:[%s600 + $0x15a] sm:$0xff]
        %v833 = vld [vmem:[%s600 + $0x16a] sm:$0xff]
        %v834 = vld [vmem:[%s600 + $0x172] sm:$0xff]
        %v835 = vld [vmem:[%s2 + $0x5] sm:$0x1]
        %v836 = vlaneseq
        %v837 = vshrl.u32 %v836, 7
        %v838 = vsub.s32 0, %v837
        %v839 = vrot.slane %v835, %v838
        %v840 = vmul.f32 %v803, %v839
        %v841 = vmul.f32 %v804, %v839
        %v842 = vmul.f32 %v805, %v839
        %v843 = vmul.f32 %v806, %v839
        %v844 = vmul.f32 %v807, %v839
        %v845 = vmul.f32 %v808, %v839
        %v846 = vmul.f32 %v809, %v839
        %v847 = vmul.f32 %v810, %v839
        %v848 = vmul.f32 %v811, %v839
        %v849 = vmul.f32 %v812, %v839
        %v850 = vmul.f32 %v813, %v839
        %v851 = vmul.f32 %v814, %v839
        %v852 = vmul.f32 %v815, %v839
        %v853 = vmul.f32 %v816, %v839
        %v854 = vmul.f32 %v817, %v839
        %v855 = vmul.f32 %v818, %v839
        %v856 = vmul.f32 %v819, %v839
        %v857 = vmul.f32 %v820, %v839
        %v858 = vmul.f32 %v821, %v839
        %v859 = vmul.f32 %v822, %v839
        %v860 = vmul.f32 %v823, %v839
        %v861 = vmul.f32 %v824, %v839
        %v862 = vmul.f32 %v825, %v839
        %v863 = vmul.f32 %v826, %v839
        %v864 = vmul.f32 %v827, %v839
        %v865 = vmul.f32 %v828, %v839
        %v866 = vmul.f32 %v829, %v839
        %v867 = vmul.f32 %v830, %v839
        %v868 = vmul.f32 %v831, %v839
        %v869 = vmul.f32 %v832, %v839
        %v870 = vmul.f32 %v833, %v839
        %v871 = vmul.f32 %v834, %v839
        %v872 = vadd.f32 %v771, %v840
        %v873 = vadd.f32 %v772, %v841
        %v874 = vadd.f32 %v773, %v842
        %v875 = vadd.f32 %v774, %v843
        %v876 = vadd.f32 %v775, %v844
        %v877 = vadd.f32 %v776, %v845
        %v878 = vadd.f32 %v777, %v846
        %v879 = vadd.f32 %v778, %v847
        %v880 = vadd.f32 %v779, %v848
        %v881 = vadd.f32 %v780, %v849
        %v882 = vadd.f32 %v781, %v850
        %v883 = vadd.f32 %v782, %v851
        %v884 = vadd.f32 %v783, %v852
        %v885 = vadd.f32 %v784, %v853
        %v886 = vadd.f32 %v785, %v854
        %v887 = vadd.f32 %v786, %v855
        %v888 = vadd.f32 %v787, %v856
        %v889 = vadd.f32 %v788, %v857
        %v890 = vadd.f32 %v789, %v858
        %v891 = vadd.f32 %v790, %v859
        %v892 = vadd.f32 %v791, %v860
        %v893 = vadd.f32 %v792, %v861
        %v894 = vadd.f32 %v793, %v862
        %v895 = vadd.f32 %v794, %v863
        %v896 = vadd.f32 %v795, %v864
        %v897 = vadd.f32 %v796, %v865
        %v898 = vadd.f32 %v797, %v866
        %v899 = vadd.f32 %v798, %v867
        %v900 = vadd.f32 %v799, %v868
        %v901 = vadd.f32 %v800, %v869
        %v902 = vadd.f32 %v801, %v870
        %v903 = vadd.f32 %v802, %v871
        %s904 = scalar_lea.vmem %s291, 48
        %v905 = vld [vmem:[%s904] sm:$0xff]
        %v906 = vld [vmem:[%s904 + $0x8] sm:$0xff]
        %v907 = vld [vmem:[%s904 + $0x18] sm:$0xff]
        %v908 = vld [vmem:[%s904 + $0x20] sm:$0xff]
        %v909 = vld [vmem:[%s904 + $0x30] sm:$0xff]
        %v910 = vld [vmem:[%s904 + $0x38] sm:$0xff]
        %v911 = vld [vmem:[%s904 + $0x48] sm:$0xff]
        %v912 = vld [vmem:[%s904 + $0x50] sm:$0xff]
        %v913 = vld [vmem:[%s904 + $0x60] sm:$0xff]
        %v914 = vld [vmem:[%s904 + $0x68] sm:$0xff]
        %v915 = vld [vmem:[%s904 + $0x78] sm:$0xff]
        %v916 = vld [vmem:[%s904 + $0x80] sm:$0xff]
        %v917 = vld [vmem:[%s904 + $0x90] sm:$0xff]
        %v918 = vld [vmem:[%s904 + $0x98] sm:$0xff]
        %v919 = vld [vmem:[%s904 + $0xa8] sm:$0xff]
        %v920 = vld [vmem:[%s904 + $0xb0] sm:$0xff]
        %v921 = vld [vmem:[%s904 + $0xc0] sm:$0xff]
        %v922 = vld [vmem:[%s904 + $0xc8] sm:$0xff]
        %v923 = vld [vmem:[%s904 + $0xd8] sm:$0xff]
        %v924 = vld [vmem:[%s904 + $0xe0] sm:$0xff]
        %v925 = vld [vmem:[%s904 + $0xf0] sm:$0xff]
        %v926 = vld [vmem:[%s904 + $0xf8] sm:$0xff]
        %v927 = vld [vmem:[%s904 + $0x108] sm:$0xff]
        %v928 = vld [vmem:[%s904 + $0x110] sm:$0xff]
        %v929 = vld [vmem:[%s904 + $0x120] sm:$0xff]
        %v930 = vld [vmem:[%s904 + $0x128] sm:$0xff]
        %v931 = vld [vmem:[%s904 + $0x138] sm:$0xff]
        %v932 = vld [vmem:[%s904 + $0x140] sm:$0xff]
        %v933 = vld [vmem:[%s904 + $0x150] sm:$0xff]
        %v934 = vld [vmem:[%s904 + $0x158] sm:$0xff]
        %v935 = vld [vmem:[%s904 + $0x168] sm:$0xff]
        %v936 = vld [vmem:[%s904 + $0x170] sm:$0xff]
        %v937 = vld [vmem:[%s2 + $0x6] sm:$0x1]
        %v938 = vlaneseq
        %v939 = vshrl.u32 %v938, 7
        %v940 = vsub.s32 0, %v939
        %v941 = vrot.slane %v937, %v940
        %v942 = vmul.f32 %v905, %v941
        %v943 = vmul.f32 %v906, %v941
        %v944 = vmul.f32 %v907, %v941
        %v945 = vmul.f32 %v908, %v941
        %v946 = vmul.f32 %v909, %v941
        %v947 = vmul.f32 %v910, %v941
        %v948 = vmul.f32 %v911, %v941
        %v949 = vmul.f32 %v912, %v941
        %v950 = vmul.f32 %v913, %v941
        %v951 = vmul.f32 %v914, %v941
        %v952 = vmul.f32 %v915, %v941
        %v953 = vmul.f32 %v916, %v941
        %v954 = vmul.f32 %v917, %v941
        %v955 = vmul.f32 %v918, %v941
        %v956 = vmul.f32 %v919, %v941
        %v957 = vmul.f32 %v920, %v941
        %v958 = vmul.f32 %v921, %v941
        %v959 = vmul.f32 %v922, %v941
        %v960 = vmul.f32 %v923, %v941
        %v961 = vmul.f32 %v924, %v941
        %v962 = vmul.f32 %v925, %v941
        %v963 = vmul.f32 %v926, %v941
        %v964 = vmul.f32 %v927, %v941
        %v965 = vmul.f32 %v928, %v941
        %v966 = vmul.f32 %v929, %v941
        %v967 = vmul.f32 %v930, %v941
        %v968 = vmul.f32 %v931, %v941
        %v969 = vmul.f32 %v932, %v941
        %v970 = vmul.f32 %v933, %v941
        %v971 = vmul.f32 %v934, %v941
        %v972 = vmul.f32 %v935, %v941
        %v973 = vmul.f32 %v936, %v941
        %v974 = vadd.f32 %v872, %v942
        %v975 = vadd.f32 %v873, %v943
        %v976 = vadd.f32 %v874, %v944
        %v977 = vadd.f32 %v875, %v945
        %v978 = vadd.f32 %v876, %v946
        %v979 = vadd.f32 %v877, %v947
        %v980 = vadd.f32 %v878, %v948
        %v981 = vadd.f32 %v879, %v949
        %v982 = vadd.f32 %v880, %v950
        %v983 = vadd.f32 %v881, %v951
        %v984 = vadd.f32 %v882, %v952
        %v985 = vadd.f32 %v883, %v953
        %v986 = vadd.f32 %v884, %v954
        %v987 = vadd.f32 %v885, %v955
        %v988 = vadd.f32 %v886, %v956
        %v989 = vadd.f32 %v887, %v957
        %v990 = vadd.f32 %v888, %v958
        %v991 = vadd.f32 %v889, %v959
        %v992 = vadd.f32 %v890, %v960
        %v993 = vadd.f32 %v891, %v961
        %v994 = vadd.f32 %v892, %v962
        %v995 = vadd.f32 %v893, %v963
        %v996 = vadd.f32 %v894, %v964
        %v997 = vadd.f32 %v895, %v965
        %v998 = vadd.f32 %v896, %v966
        %v999 = vadd.f32 %v897, %v967
        %v1000 = vadd.f32 %v898, %v968
        %v1001 = vadd.f32 %v899, %v969
        %v1002 = vadd.f32 %v900, %v970
        %v1003 = vadd.f32 %v901, %v971
        %v1004 = vadd.f32 %v902, %v972
        %v1005 = vadd.f32 %v903, %v973
        %v1006 = vld [vmem:[%s904 + $0x1] sm:$0xff]
        %v1007 = vld [vmem:[%s904 + $0x9] sm:$0xff]
        %v1008 = vld [vmem:[%s904 + $0x19] sm:$0xff]
        %v1009 = vld [vmem:[%s904 + $0x21] sm:$0xff]
        %v1010 = vld [vmem:[%s904 + $0x31] sm:$0xff]
        %v1011 = vld [vmem:[%s904 + $0x39] sm:$0xff]
        %v1012 = vld [vmem:[%s904 + $0x49] sm:$0xff]
        %v1013 = vld [vmem:[%s904 + $0x51] sm:$0xff]
        %v1014 = vld [vmem:[%s904 + $0x61] sm:$0xff]
        %v1015 = vld [vmem:[%s904 + $0x69] sm:$0xff]
        %v1016 = vld [vmem:[%s904 + $0x79] sm:$0xff]
        %v1017 = vld [vmem:[%s904 + $0x81] sm:$0xff]
        %v1018 = vld [vmem:[%s904 + $0x91] sm:$0xff]
        %v1019 = vld [vmem:[%s904 + $0x99] sm:$0xff]
        %v1020 = vld [vmem:[%s904 + $0xa9] sm:$0xff]
        %v1021 = vld [vmem:[%s904 + $0xb1] sm:$0xff]
        %v1022 = vld [vmem:[%s904 + $0xc1] sm:$0xff]
        %v1023 = vld [vmem:[%s904 + $0xc9] sm:$0xff]
        %v1024 = vld [vmem:[%s904 + $0xd9] sm:$0xff]
        %v1025 = vld [vmem:[%s904 + $0xe1] sm:$0xff]
        %v1026 = vld [vmem:[%s904 + $0xf1] sm:$0xff]
        %v1027 = vld [vmem:[%s904 + $0xf9] sm:$0xff]
        %v1028 = vld [vmem:[%s904 + $0x109] sm:$0xff]
        %v1029 = vld [vmem:[%s904 + $0x111] sm:$0xff]
        %v1030 = vld [vmem:[%s904 + $0x121] sm:$0xff]
        %v1031 = vld [vmem:[%s904 + $0x129] sm:$0xff]
        %v1032 = vld [vmem:[%s904 + $0x139] sm:$0xff]
        %v1033 = vld [vmem:[%s904 + $0x141] sm:$0xff]
        %v1034 = vld [vmem:[%s904 + $0x151] sm:$0xff]
        %v1035 = vld [vmem:[%s904 + $0x159] sm:$0xff]
        %v1036 = vld [vmem:[%s904 + $0x169] sm:$0xff]
        %v1037 = vld [vmem:[%s904 + $0x171] sm:$0xff]
        %v1038 = vld [vmem:[%s2 + $0x7] sm:$0x1]
        %v1039 = vlaneseq
        %v1040 = vshrl.u32 %v1039, 7
        %v1041 = vsub.s32 0, %v1040
        %v1042 = vrot.slane %v1038, %v1041
        %v1043 = vmul.f32 %v1006, %v1042
        %v1044 = vmul.f32 %v1007, %v1042
        %v1045 = vmul.f32 %v1008, %v1042
        %v1046 = vmul.f32 %v1009, %v1042
        %v1047 = vmul.f32 %v1010, %v1042
        %v1048 = vmul.f32 %v1011, %v1042
        %v1049 = vmul.f32 %v1012, %v1042
        %v1050 = vmul.f32 %v1013, %v1042
        %v1051 = vmul.f32 %v1014, %v1042
        %v1052 = vmul.f32 %v1015, %v1042
        %v1053 = vmul.f32 %v1016, %v1042
        %v1054 = vmul.f32 %v1017, %v1042
        %v1055 = vmul.f32 %v1018, %v1042
        %v1056 = vmul.f32 %v1019, %v1042
        %v1057 = vmul.f32 %v1020, %v1042
        %v1058 = vmul.f32 %v1021, %v1042
        %v1059 = vmul.f32 %v1022, %v1042
        %v1060 = vmul.f32 %v1023, %v1042
        %v1061 = vmul.f32 %v1024, %v1042
        %v1062 = vmul.f32 %v1025, %v1042
        %v1063 = vmul.f32 %v1026, %v1042
        %v1064 = vmul.f32 %v1027, %v1042
        %v1065 = vmul.f32 %v1028, %v1042
        %v1066 = vmul.f32 %v1029, %v1042
        %v1067 = vmul.f32 %v1030, %v1042
        %v1068 = vmul.f32 %v1031, %v1042
        %v1069 = vmul.f32 %v1032, %v1042
        %v1070 = vmul.f32 %v1033, %v1042
        %v1071 = vmul.f32 %v1034, %v1042
        %v1072 = vmul.f32 %v1035, %v1042
        %v1073 = vmul.f32 %v1036, %v1042
        %v1074 = vmul.f32 %v1037, %v1042
        %v1075 = vadd.f32 %v974, %v1043
        %v1076 = vadd.f32 %v975, %v1044
        %v1077 = vadd.f32 %v976, %v1045
        %v1078 = vadd.f32 %v977, %v1046
        %v1079 = vadd.f32 %v978, %v1047
        %v1080 = vadd.f32 %v979, %v1048
        %v1081 = vadd.f32 %v980, %v1049
        %v1082 = vadd.f32 %v981, %v1050
        %v1083 = vadd.f32 %v982, %v1051
        %v1084 = vadd.f32 %v983, %v1052
        %v1085 = vadd.f32 %v984, %v1053
        %v1086 = vadd.f32 %v985, %v1054
        %v1087 = vadd.f32 %v986, %v1055
        %v1088 = vadd.f32 %v987, %v1056
        %v1089 = vadd.f32 %v988, %v1057
        %v1090 = vadd.f32 %v989, %v1058
        %v1091 = vadd.f32 %v990, %v1059
        %v1092 = vadd.f32 %v991, %v1060
        %v1093 = vadd.f32 %v992, %v1061
        %v1094 = vadd.f32 %v993, %v1062
        %v1095 = vadd.f32 %v994, %v1063
        %v1096 = vadd.f32 %v995, %v1064
        %v1097 = vadd.f32 %v996, %v1065
        %v1098 = vadd.f32 %v997, %v1066
        %v1099 = vadd.f32 %v998, %v1067
        %v1100 = vadd.f32 %v999, %v1068
        %v1101 = vadd.f32 %v1000, %v1069
        %v1102 = vadd.f32 %v1001, %v1070
        %v1103 = vadd.f32 %v1002, %v1071
        %v1104 = vadd.f32 %v1003, %v1072
        %v1105 = vadd.f32 %v1004, %v1073
        %v1106 = vadd.f32 %v1005, %v1074
        %v1107 = vld [vmem:[%s904 + $0x2] sm:$0xff]
        %v1108 = vld [vmem:[%s904 + $0xa] sm:$0xff]
        %v1109 = vld [vmem:[%s904 + $0x1a] sm:$0xff]
        %v1110 = vld [vmem:[%s904 + $0x22] sm:$0xff]
        %v1111 = vld [vmem:[%s904 + $0x32] sm:$0xff]
        %v1112 = vld [vmem:[%s904 + $0x3a] sm:$0xff]
        %v1113 = vld [vmem:[%s904 + $0x4a] sm:$0xff]
        %v1114 = vld [vmem:[%s904 + $0x52] sm:$0xff]
        %v1115 = vld [vmem:[%s904 + $0x62] sm:$0xff]
        %v1116 = vld [vmem:[%s904 + $0x6a] sm:$0xff]
        %v1117 = vld [vmem:[%s904 + $0x7a] sm:$0xff]
        %v1118 = vld [vmem:[%s904 + $0x82] sm:$0xff]
        %v1119 = vld [vmem:[%s904 + $0x92] sm:$0xff]
        %v1120 = vld [vmem:[%s904 + $0x9a] sm:$0xff]
        %v1121 = vld [vmem:[%s904 + $0xaa] sm:$0xff]
        %v1122 = vld [vmem:[%s904 + $0xb2] sm:$0xff]
        %v1123 = vld [vmem:[%s904 + $0xc2] sm:$0xff]
        %v1124 = vld [vmem:[%s904 + $0xca] sm:$0xff]
        %v1125 = vld [vmem:[%s904 + $0xda] sm:$0xff]
        %v1126 = vld [vmem:[%s904 + $0xe2] sm:$0xff]
        %v1127 = vld [vmem:[%s904 + $0xf2] sm:$0xff]
        %v1128 = vld [vmem:[%s904 + $0xfa] sm:$0xff]
        %v1129 = vld [vmem:[%s904 + $0x10a] sm:$0xff]
        %v1130 = vld [vmem:[%s904 + $0x112] sm:$0xff]
        %v1131 = vld [vmem:[%s904 + $0x122] sm:$0xff]
        %v1132 = vld [vmem:[%s904 + $0x12a] sm:$0xff]
        %v1133 = vld [vmem:[%s904 + $0x13a] sm:$0xff]
        %v1134 = vld [vmem:[%s904 + $0x142] sm:$0xff]
        %v1135 = vld [vmem:[%s904 + $0x152] sm:$0xff]
        %v1136 = vld [vmem:[%s904 + $0x15a] sm:$0xff]
        %v1137 = vld [vmem:[%s904 + $0x16a] sm:$0xff]
        %v1138 = vld [vmem:[%s904 + $0x172] sm:$0xff]
        %v1139 = vld [vmem:[%s2 + $0x8] sm:$0x1]
        %v1140 = vlaneseq
        %v1141 = vshrl.u32 %v1140, 7
        %v1142 = vsub.s32 0, %v1141
        %v1143 = vrot.slane %v1139, %v1142
        %v1144 = vmul.f32 %v1107, %v1143
        %v1145 = vmul.f32 %v1108, %v1143
        %v1146 = vmul.f32 %v1109, %v1143
        %v1147 = vmul.f32 %v1110, %v1143
        %v1148 = vmul.f32 %v1111, %v1143
        %v1149 = vmul.f32 %v1112, %v1143
        %v1150 = vmul.f32 %v1113, %v1143
        %v1151 = vmul.f32 %v1114, %v1143
        %v1152 = vmul.f32 %v1115, %v1143
        %v1153 = vmul.f32 %v1116, %v1143
        %v1154 = vmul.f32 %v1117, %v1143
        %v1155 = vmul.f32 %v1118, %v1143
        %v1156 = vmul.f32 %v1119, %v1143
        %v1157 = vmul.f32 %v1120, %v1143
        %v1158 = vmul.f32 %v1121, %v1143
        %v1159 = vmul.f32 %v1122, %v1143
        %v1160 = vmul.f32 %v1123, %v1143
        %v1161 = vmul.f32 %v1124, %v1143
        %v1162 = vmul.f32 %v1125, %v1143
        %v1163 = vmul.f32 %v1126, %v1143
        %v1164 = vmul.f32 %v1127, %v1143
        %v1165 = vmul.f32 %v1128, %v1143
        %v1166 = vmul.f32 %v1129, %v1143
        %v1167 = vmul.f32 %v1130, %v1143
        %v1168 = vmul.f32 %v1131, %v1143
        %v1169 = vmul.f32 %v1132, %v1143
        %v1170 = vmul.f32 %v1133, %v1143
        %v1171 = vmul.f32 %v1134, %v1143
        %v1172 = vmul.f32 %v1135, %v1143
        %v1173 = vmul.f32 %v1136, %v1143
        %v1174 = vmul.f32 %v1137, %v1143
        %v1175 = vmul.f32 %v1138, %v1143
        %v1176 = vadd.f32 %v1075, %v1144
        %v1177 = vadd.f32 %v1076, %v1145
        %v1178 = vadd.f32 %v1077, %v1146
        %v1179 = vadd.f32 %v1078, %v1147
        %v1180 = vadd.f32 %v1079, %v1148
        %v1181 = vadd.f32 %v1080, %v1149
        %v1182 = vadd.f32 %v1081, %v1150
        %v1183 = vadd.f32 %v1082, %v1151
        %v1184 = vadd.f32 %v1083, %v1152
        %v1185 = vadd.f32 %v1084, %v1153
        %v1186 = vadd.f32 %v1085, %v1154
        %v1187 = vadd.f32 %v1086, %v1155
        %v1188 = vadd.f32 %v1087, %v1156
        %v1189 = vadd.f32 %v1088, %v1157
        %v1190 = vadd.f32 %v1089, %v1158
        %v1191 = vadd.f32 %v1090, %v1159
        %v1192 = vadd.f32 %v1091, %v1160
        %v1193 = vadd.f32 %v1092, %v1161
        %v1194 = vadd.f32 %v1093, %v1162
        %v1195 = vadd.f32 %v1094, %v1163
        %v1196 = vadd.f32 %v1095, %v1164
        %v1197 = vadd.f32 %v1096, %v1165
        %v1198 = vadd.f32 %v1097, %v1166
        %v1199 = vadd.f32 %v1098, %v1167
        %v1200 = vadd.f32 %v1099, %v1168
        %v1201 = vadd.f32 %v1100, %v1169
        %v1202 = vadd.f32 %v1101, %v1170
        %v1203 = vadd.f32 %v1102, %v1171
        %v1204 = vadd.f32 %v1103, %v1172
        %v1205 = vadd.f32 %v1104, %v1173
        %v1206 = vadd.f32 %v1105, %v1174
        %v1207 = vadd.f32 %v1106, %v1175
        %v1208 = vld [vmem:[%s3] sm:$0x1]
        %v1210 = vlaneseq
        %v1211 = vshrl.u32 %v1210, 7
        %v1212 = vsub.s32 0, %v1211
        %v1213 = vrot.slane %v1208, %v1212
        %v1215 = vadd.f32 %v1176, %v1213
        %v1216 = vadd.f32 %v1177, %v1213
        %v1217 = vadd.f32 %v1178, %v1213
        %v1218 = vadd.f32 %v1179, %v1213
        %v1219 = vadd.f32 %v1180, %v1213
        %v1220 = vadd.f32 %v1181, %v1213
        %v1221 = vadd.f32 %v1182, %v1213
        %v1222 = vadd.f32 %v1183, %v1213
        %v1223 = vadd.f32 %v1184, %v1213
        %v1224 = vadd.f32 %v1185, %v1213
        %v1225 = vadd.f32 %v1186, %v1213
        %v1226 = vadd.f32 %v1187, %v1213
        %v1227 = vadd.f32 %v1188, %v1213
        %v1228 = vadd.f32 %v1189, %v1213
        %v1229 = vadd.f32 %v1190, %v1213
        %v1230 = vadd.f32 %v1191, %v1213
        %v1231 = vadd.f32 %v1192, %v1213
        %v1232 = vadd.f32 %v1193, %v1213
        %v1233 = vadd.f32 %v1194, %v1213
        %v1234 = vadd.f32 %v1195, %v1213
        %v1235 = vadd.f32 %v1196, %v1213
        %v1236 = vadd.f32 %v1197, %v1213
        %v1237 = vadd.f32 %v1198, %v1213
        %v1238 = vadd.f32 %v1199, %v1213
        %v1239 = vadd.f32 %v1200, %v1213
        %v1240 = vadd.f32 %v1201, %v1213
        %v1241 = vadd.f32 %v1202, %v1213
        %v1242 = vadd.f32 %v1203, %v1213
        %v1243 = vadd.f32 %v1204, %v1213
        %v1244 = vadd.f32 %v1205, %v1213
        %v1245 = vadd.f32 %v1206, %v1213
        %v1246 = vadd.f32 %v1207, %v1213
        %v1247 = vmul.f32 %v1215, 0.5
        %v1248 = vmul.f32 %v1216, 0.5
        %v1249 = vmul.f32 %v1217, 0.5
        %v1250 = vmul.f32 %v1218, 0.5
        %v1251 = vmul.f32 %v1219, 0.5
        %v1252 = vmul.f32 %v1220, 0.5
        %v1253 = vmul.f32 %v1221, 0.5
        %v1254 = vmul.f32 %v1222, 0.5
        %v1255 = vmul.f32 %v1223, 0.5
        %v1256 = vmul.f32 %v1224, 0.5
        %v1257 = vmul.f32 %v1225, 0.5
        %v1258 = vmul.f32 %v1226, 0.5
        %v1259 = vmul.f32 %v1227, 0.5
        %v1260 = vmul.f32 %v1228, 0.5
        %v1261 = vmul.f32 %v1229, 0.5
        %v1262 = vmul.f32 %v1230, 0.5
        %v1263 = vmul.f32 %v1231, 0.5
        %v1264 = vmul.f32 %v1232, 0.5
        %v1265 = vmul.f32 %v1233, 0.5
        %v1266 = vmul.f32 %v1234, 0.5
        %v1267 = vmul.f32 %v1235, 0.5
        %v1268 = vmul.f32 %v1236, 0.5
        %v1269 = vmul.f32 %v1237, 0.5
        %v1270 = vmul.f32 %v1238, 0.5
        %v1271 = vmul.f32 %v1239, 0.5
        %v1272 = vmul.f32 %v1240, 0.5
        %v1273 = vmul.f32 %v1241, 0.5
        %v1274 = vmul.f32 %v1242, 0.5
        %v1275 = vmul.f32 %v1243, 0.5
        %v1276 = vmul.f32 %v1244, 0.5
        %v1277 = vmul.f32 %v1245, 0.5
        %v1278 = vmul.f32 %v1246, 0.5
        %v1279 = vmul.f32 %v1215, 0.044715
        %v1280 = vmul.f32 %v1216, 0.044715
        %v1281 = vmul.f32 %v1217, 0.044715
        %v1282 = vmul.f32 %v1218, 0.044715
        %v1283 = vmul.f32 %v1219, 0.044715
        %v1284 = vmul.f32 %v1220, 0.044715
        %v1285 = vmul.f32 %v1221, 0.044715
        %v1286 = vmul.f32 %v1222, 0.044715
        %v1287 = vmul.f32 %v1223, 0.044715
        %v1288 = vmul.f32 %v1224, 0.044715
        %v1289 = vmul.f32 %v1225, 0.044715
        %v1290 = vmul.f32 %v1226, 0.044715
        %v1291 = vmul.f32 %v1227, 0.044715
        %v1292 = vmul.f32 %v1228, 0.044715
        %v1293 = vmul.f32 %v1229, 0.044715
        %v1294 = vmul.f32 %v1230, 0.044715
        %v1295 = vmul.f32 %v1231, 0.044715
        %v1296 = vmul.f32 %v1232, 0.044715
        %v1297 = vmul.f32 %v1233, 0.044715
        %v1298 = vmul.f32 %v1234, 0.044715
        %v1299 = vmul.f32 %v1235, 0.044715
        %v1300 = vmul.f32 %v1236, 0.044715
        %v1301 = vmul.f32 %v1237, 0.044715
        %v1302 = vmul.f32 %v1238, 0.044715
        %v1303 = vmul.f32 %v1239, 0.044715
        %v1304 = vmul.f32 %v1240, 0.044715
        %v1305 = vmul.f32 %v1241, 0.044715
        %v1306 = vmul.f32 %v1242, 0.044715
        %v1307 = vmul.f32 %v1243, 0.044715
        %v1308 = vmul.f32 %v1244, 0.044715
        %v1309 = vmul.f32 %v1245, 0.044715
        %v1310 = vmul.f32 %v1246, 0.044715
        %v1311 = vmul.f32 %v1279, %v1215
        %v1312 = vmul.f32 %v1280, %v1216
        %v1313 = vmul.f32 %v1281, %v1217
        %v1314 = vmul.f32 %v1282, %v1218
        %v1315 = vmul.f32 %v1283, %v1219
        %v1316 = vmul.f32 %v1284, %v1220
        %v1317 = vmul.f32 %v1285, %v1221
        %v1318 = vmul.f32 %v1286, %v1222
        %v1319 = vmul.f32 %v1287, %v1223
        %v1320 = vmul.f32 %v1288, %v1224
        %v1321 = vmul.f32 %v1289, %v1225
        %v1322 = vmul.f32 %v1290, %v1226
        %v1323 = vmul.f32 %v1291, %v1227
        %v1324 = vmul.f32 %v1292, %v1228
        %v1325 = vmul.f32 %v1293, %v1229
        %v1326 = vmul.f32 %v1294, %v1230
        %v1327 = vmul.f32 %v1295, %v1231
        %v1328 = vmul.f32 %v1296, %v1232
        %v1329 = vmul.f32 %v1297, %v1233
        %v1330 = vmul.f32 %v1298, %v1234
        %v1331 = vmul.f32 %v1299, %v1235
        %v1332 = vmul.f32 %v1300, %v1236
        %v1333 = vmul.f32 %v1301, %v1237
        %v1334 = vmul.f32 %v1302, %v1238
        %v1335 = vmul.f32 %v1303, %v1239
        %v1336 = vmul.f32 %v1304, %v1240
        %v1337 = vmul.f32 %v1305, %v1241
        %v1338 = vmul.f32 %v1306, %v1242
        %v1339 = vmul.f32 %v1307, %v1243
        %v1340 = vmul.f32 %v1308, %v1244
        %v1341 = vmul.f32 %v1309, %v1245
        %v1342 = vmul.f32 %v1310, %v1246
        %v1343 = vmul.f32 %v1311, %v1215
        %v1344 = vmul.f32 %v1312, %v1216
        %v1345 = vmul.f32 %v1313, %v1217
        %v1346 = vmul.f32 %v1314, %v1218
        %v1347 = vmul.f32 %v1315, %v1219
        %v1348 = vmul.f32 %v1316, %v1220
        %v1349 = vmul.f32 %v1317, %v1221
        %v1350 = vmul.f32 %v1318, %v1222
        %v1351 = vmul.f32 %v1319, %v1223
        %v1352 = vmul.f32 %v1320, %v1224
        %v1353 = vmul.f32 %v1321, %v1225
        %v1354 = vmul.f32 %v1322, %v1226
        %v1355 = vmul.f32 %v1323, %v1227
        %v1356 = vmul.f32 %v1324, %v1228
        %v1357 = vmul.f32 %v1325, %v1229
        %v1358 = vmul.f32 %v1326, %v1230
        %v1359 = vmul.f32 %v1327, %v1231
        %v1360 = vmul.f32 %v1328, %v1232
        %v1361 = vmul.f32 %v1329, %v1233
        %v1362 = vmul.f32 %v1330, %v1234
        %v1363 = vmul.f32 %v1331, %v1235
        %v1364 = vmul.f32 %v1332, %v1236
        %v1365 = vmul.f32 %v1333, %v1237
        %v1366 = vmul.f32 %v1334, %v1238
        %v1367 = vmul.f32 %v1335, %v1239
        %v1368 = vmul.f32 %v1336, %v1240
        %v1369 = vmul.f32 %v1337, %v1241
        %v1370 = vmul.f32 %v1338, %v1242
        %v1371 = vmul.f32 %v1339, %v1243
        %v1372 = vmul.f32 %v1340, %v1244
        %v1373 = vmul.f32 %v1341, %v1245
        %v1374 = vmul.f32 %v1342, %v1246
        %v1375 = vadd.f32 %v1215, %v1343
        %v1376 = vadd.f32 %v1216, %v1344
        %v1377 = vadd.f32 %v1217, %v1345
        %v1378 = vadd.f32 %v1218, %v1346
        %v1379 = vadd.f32 %v1219, %v1347
        %v1380 = vadd.f32 %v1220, %v1348
        %v1381 = vadd.f32 %v1221, %v1349
        %v1382 = vadd.f32 %v1222, %v1350
        %v1383 = vadd.f32 %v1223, %v1351
        %v1384 = vadd.f32 %v1224, %v1352
        %v1385 = vadd.f32 %v1225, %v1353
        %v1386 = vadd.f32 %v1226, %v1354
        %v1387 = vadd.f32 %v1227, %v1355
        %v1388 = vadd.f32 %v1228, %v1356
        %v1389 = vadd.f32 %v1229, %v1357
        %v1390 = vadd.f32 %v1230, %v1358
        %v1391 = vadd.f32 %v1231, %v1359
        %v1392 = vadd.f32 %v1232, %v1360
        %v1393 = vadd.f32 %v1233, %v1361
        %v1394 = vadd.f32 %v1234, %v1362
        %v1395 = vadd.f32 %v1235, %v1363
        %v1396 = vadd.f32 %v1236, %v1364
        %v1397 = vadd.f32 %v1237, %v1365
        %v1398 = vadd.f32 %v1238, %v1366
        %v1399 = vadd.f32 %v1239, %v1367
        %v1400 = vadd.f32 %v1240, %v1368
        %v1401 = vadd.f32 %v1241, %v1369
        %v1402 = vadd.f32 %v1242, %v1370
        %v1403 = vadd.f32 %v1243, %v1371
        %v1404 = vadd.f32 %v1244, %v1372
        %v1405 = vadd.f32 %v1245, %v1373
        %v1406 = vadd.f32 %v1246, %v1374
        %v1407 = vmul.f32 %v1375, 0.7978846
        %v1408 = vmul.f32 %v1376, 0.7978846
        %v1409 = vmul.f32 %v1377, 0.7978846
        %v1410 = vmul.f32 %v1378, 0.7978846
        %v1411 = vmul.f32 %v1379, 0.7978846
        %v1412 = vmul.f32 %v1380, 0.7978846
        %v1413 = vmul.f32 %v1381, 0.7978846
        %v1414 = vmul.f32 %v1382, 0.7978846
        %v1415 = vmul.f32 %v1383, 0.7978846
        %v1416 = vmul.f32 %v1384, 0.7978846
        %v1417 = vmul.f32 %v1385, 0.7978846
        %v1418 = vmul.f32 %v1386, 0.7978846
        %v1419 = vmul.f32 %v1387, 0.7978846
        %v1420 = vmul.f32 %v1388, 0.7978846
        %v1421 = vmul.f32 %v1389, 0.7978846
        %v1422 = vmul.f32 %v1390, 0.7978846
        %v1423 = vmul.f32 %v1391, 0.7978846
        %v1424 = vmul.f32 %v1392, 0.7978846
        %v1425 = vmul.f32 %v1393, 0.7978846
        %v1426 = vmul.f32 %v1394, 0.7978846
        %v1427 = vmul.f32 %v1395, 0.7978846
        %v1428 = vmul.f32 %v1396, 0.7978846
        %v1429 = vmul.f32 %v1397, 0.7978846
        %v1430 = vmul.f32 %v1398, 0.7978846
        %v1431 = vmul.f32 %v1399, 0.7978846
        %v1432 = vmul.f32 %v1400, 0.7978846
        %v1433 = vmul.f32 %v1401, 0.7978846
        %v1434 = vmul.f32 %v1402, 0.7978846
        %v1435 = vmul.f32 %v1403, 0.7978846
        %v1436 = vmul.f32 %v1404, 0.7978846
        %v1437 = vmul.f32 %v1405, 0.7978846
        %v1438 = vmul.f32 %v1406, 0.7978846
        %v1439 = vtanh.pop %v1407
        %v1440 = vtanh.pop %v1408
        %v1441 = vtanh.pop %v1409
        %v1442 = vtanh.pop %v1410
        %v1443 = vtanh.pop %v1411
        %v1444 = vtanh.pop %v1412
        %v1445 = vtanh.pop %v1413
        %v1446 = vtanh.pop %v1414
        %v1447 = vtanh.pop %v1415
        %v1448 = vtanh.pop %v1416
        %v1449 = vtanh.pop %v1417
        %v1450 = vtanh.pop %v1418
        %v1451 = vtanh.pop %v1419
        %v1452 = vtanh.pop %v1420
        %v1453 = vtanh.pop %v1421
        %v1454 = vtanh.pop %v1422
        %v1455 = vtanh.pop %v1423
        %v1456 = vtanh.pop %v1424
        %v1457 = vtanh.pop %v1425
        %v1458 = vtanh.pop %v1426
        %v1459 = vtanh.pop %v1427
        %v1460 = vtanh.pop %v1428
        %v1461 = vtanh.pop %v1429
        %v1462 = vtanh.pop %v1430
        %v1463 = vtanh.pop %v1431
        %v1464 = vtanh.pop %v1432
        %v1465 = vtanh.pop %v1433
        %v1466 = vtanh.pop %v1434
        %v1467 = vtanh.pop %v1435
        %v1468 = vtanh.pop %v1436
        %v1469 = vtanh.pop %v1437
        %v1470 = vtanh.pop %v1438
        %v1471 = vadd.f32 %v1439, 1.0
        %v1472 = vadd.f32 %v1440, 1.0
        %v1473 = vadd.f32 %v1441, 1.0
        %v1474 = vadd.f32 %v1442, 1.0
        %v1475 = vadd.f32 %v1443, 1.0
        %v1476 = vadd.f32 %v1444, 1.0
        %v1477 = vadd.f32 %v1445, 1.0
        %v1478 = vadd.f32 %v1446, 1.0
        %v1479 = vadd.f32 %v1447, 1.0
        %v1480 = vadd.f32 %v1448, 1.0
        %v1481 = vadd.f32 %v1449, 1.0
        %v1482 = vadd.f32 %v1450, 1.0
        %v1483 = vadd.f32 %v1451, 1.0
        %v1484 = vadd.f32 %v1452, 1.0
        %v1485 = vadd.f32 %v1453, 1.0
        %v1486 = vadd.f32 %v1454, 1.0
        %v1487 = vadd.f32 %v1455, 1.0
        %v1488 = vadd.f32 %v1456, 1.0
        %v1489 = vadd.f32 %v1457, 1.0
        %v1490 = vadd.f32 %v1458, 1.0
        %v1491 = vadd.f32 %v1459, 1.0
        %v1492 = vadd.f32 %v1460, 1.0
        %v1493 = vadd.f32 %v1461, 1.0
        %v1494 = vadd.f32 %v1462, 1.0
        %v1495 = vadd.f32 %v1463, 1.0
        %v1496 = vadd.f32 %v1464, 1.0
        %v1497 = vadd.f32 %v1465, 1.0
        %v1498 = vadd.f32 %v1466, 1.0
        %v1499 = vadd.f32 %v1467, 1.0
        %v1500 = vadd.f32 %v1468, 1.0
        %v1501 = vadd.f32 %v1469, 1.0
        %v1502 = vadd.f32 %v1470, 1.0
        %v1503 = vmul.f32 %v1247, %v1471
        %v1504 = vmul.f32 %v1248, %v1472
        %v1505 = vmul.f32 %v1249, %v1473
        %v1506 = vmul.f32 %v1250, %v1474
        %v1507 = vmul.f32 %v1251, %v1475
        %v1508 = vmul.f32 %v1252, %v1476
        %v1509 = vmul.f32 %v1253, %v1477
        %v1510 = vmul.f32 %v1254, %v1478
        %v1511 = vmul.f32 %v1255, %v1479
        %v1512 = vmul.f32 %v1256, %v1480
        %v1513 = vmul.f32 %v1257, %v1481
        %v1514 = vmul.f32 %v1258, %v1482
        %v1515 = vmul.f32 %v1259, %v1483
        %v1516 = vmul.f32 %v1260, %v1484
        %v1517 = vmul.f32 %v1261, %v1485
        %v1518 = vmul.f32 %v1262, %v1486
        %v1519 = vmul.f32 %v1263, %v1487
        %v1520 = vmul.f32 %v1264, %v1488
        %v1521 = vmul.f32 %v1265, %v1489
        %v1522 = vmul.f32 %v1266, %v1490
        %v1523 = vmul.f32 %v1267, %v1491
        %v1524 = vmul.f32 %v1268, %v1492
        %v1525 = vmul.f32 %v1269, %v1493
        %v1526 = vmul.f32 %v1270, %v1494
        %v1527 = vmul.f32 %v1271, %v1495
        %v1528 = vmul.f32 %v1272, %v1496
        %v1529 = vmul.f32 %v1273, %v1497
        %v1530 = vmul.f32 %v1274, %v1498
        %v1531 = vmul.f32 %v1275, %v1499
        %v1532 = vmul.f32 %v1276, %v1500
        %v1533 = vmul.f32 %v1277, %v1501
        %v1534 = vmul.f32 %v1278, %v1502
        %vm1535 = vcmask 523264
        %v1536 = vsel %vm1535, %v1503, 0.0
        %v1537 = vsel %vm1535, %v1505, 0.0
        %v1538 = vadd.f32 %v1536, %v1537
        %v1539 = vsel %vm1535, %v1507, 0.0
        %v1540 = vadd.f32 %v1538, %v1539
        %v1541 = vsel %vm1535, %v1509, 0.0
        %v1542 = vadd.f32 %v1540, %v1541
        %v1543 = vsel %vm1535, %v1511, 0.0
        %v1544 = vadd.f32 %v1542, %v1543
        %v1545 = vsel %vm1535, %v1513, 0.0
        %v1546 = vadd.f32 %v1544, %v1545
        %v1547 = vsel %vm1535, %v1515, 0.0
        %v1548 = vadd.f32 %v1546, %v1547
        %v1549 = vsel %vm1535, %v1517, 0.0
        %v1550 = vadd.f32 %v1548, %v1549
        %v1551 = vsel %vm1535, %v1519, 0.0
        %v1552 = vadd.f32 %v1550, %v1551
        %v1553 = vsel %vm1535, %v1521, 0.0
        %v1554 = vadd.f32 %v1552, %v1553
        %v1555 = vsel %vm1535, %v1523, 0.0
        %v1556 = vadd.f32 %v1554, %v1555
        %v1557 = vsel %vm1535, %v1525, 0.0
        %v1558 = vadd.f32 %v1556, %v1557
        %v1559 = vsel %vm1535, %v1527, 0.0
        %v1560 = vadd.f32 %v1558, %v1559
        %v1561 = vsel %vm1535, %v1529, 0.0
        %v1562 = vadd.f32 %v1560, %v1561
        %v1563 = vsel %vm1535, %v1531, 0.0
        %v1564 = vadd.f32 %v1562, %v1563
        %v1565 = vsel %vm1535, %v1533, 0.0
        %v1566 = vadd.f32 %v1564, %v1565
        %v1567 = vsel %vm1535, %v1504, 0.0
        %v1568 = vsel %vm1535, %v1506, 0.0
        %v1569 = vadd.f32 %v1567, %v1568
        %v1570 = vsel %vm1535, %v1508, 0.0
        %v1571 = vadd.f32 %v1569, %v1570
        %v1572 = vsel %vm1535, %v1510, 0.0
        %v1573 = vadd.f32 %v1571, %v1572
        %v1574 = vsel %vm1535, %v1512, 0.0
        %v1575 = vadd.f32 %v1573, %v1574
        %v1576 = vsel %vm1535, %v1514, 0.0
        %v1577 = vadd.f32 %v1575, %v1576
        %v1578 = vsel %vm1535, %v1516, 0.0
        %v1579 = vadd.f32 %v1577, %v1578
        %v1580 = vsel %vm1535, %v1518, 0.0
        %v1581 = vadd.f32 %v1579, %v1580
        %v1582 = vsel %vm1535, %v1520, 0.0
        %v1583 = vadd.f32 %v1581, %v1582
        %v1584 = vsel %vm1535, %v1522, 0.0
        %v1585 = vadd.f32 %v1583, %v1584
        %v1586 = vsel %vm1535, %v1524, 0.0
        %v1587 = vadd.f32 %v1585, %v1586
        %v1588 = vsel %vm1535, %v1526, 0.0
        %v1589 = vadd.f32 %v1587, %v1588
        %v1590 = vsel %vm1535, %v1528, 0.0
        %v1591 = vadd.f32 %v1589, %v1590
        %v1592 = vsel %vm1535, %v1530, 0.0
        %v1593 = vadd.f32 %v1591, %v1592
        %v1594 = vsel %vm1535, %v1532, 0.0
        %v1595 = vadd.f32 %v1593, %v1594
        %v1596 = vsel %vm1535, %v1534, 0.0
        %v1597 = vadd.f32 %v1595, %v1596
        %v1598 = vsel %vm1535, %v1566, 0.0
        %v1599 = vsel %vm1535, %v1597, 0.0
        %v1600 = vadd.f32 %v1598, %v1599
        %v1601 = vrot.slane %v1600, 4
        %v1602 = vadd.f32 %v1600, %v1601
        %v1603 = vrot.slane %v1602, 2
        %v1604 = vadd.f32 %v1602, %v1603
        %v1605 = vrot.slane %v1604, 1
        %v1606 = vadd.f32 %v1604, %v1605
        %v1607 = vmul.f32 %v1606, 0.00390625
        %v1608 = vld [vmem:[%s4] sm:$0xff]
        %v1609 = vld [vmem:[%s4 + $0x8] sm:$0xff]
        %v1610 = vld [vmem:[%s4 + $0x10] sm:$0xff]
        %v1611 = vld [vmem:[%s4 + $0x18] sm:$0xff]
        %v1612 = vld [vmem:[%s4 + $0x20] sm:$0xff]
        %v1613 = vld [vmem:[%s4 + $0x28] sm:$0xff]
        %v1614 = vld [vmem:[%s4 + $0x30] sm:$0xff]
        %v1615 = vld [vmem:[%s4 + $0x38] sm:$0xff]
        %v1617 = vsel %vm1535, %v1607, 0
        %1619 = vmatprep.subr.mxu0 0.0
        %1620 = vmatpush1.msra.mxu0 0.0
        %1621 = vmatprep.subr.mxu0 0.0
        %1622 = vmatpush1.msra.mxu0 0.0
        %1623 = vmatprep.subr.mxu0 0.0
        %1624 = vmatpush1.msra.mxu0 0.0
        %1625 = vmatprep.subr.mxu0 0.0
        %1626 = vmatpush1.msra.mxu0 0.0
        %1627 = vmatprep.subr.mxu0 0.0
        %1628 = vmatpush1.msra.mxu0 0.0
        %1629 = vmatprep.subr.mxu0 0.0
        %1630 = vmatpush1.msra.mxu0 0.0
        %1631 = vmatprep.subr.mxu0 0.0
        %1632 = vmatpush1.msra.mxu0 0.0
        %1633 = vmatprep.subr.mxu0 0.0
        %1634 = vmatpush1.msra.mxu0 0.0
        %1635 = vmatprep.subr.mxu0 0.0
        %1636 = vmatpush1.msra.mxu0 %v1615
        %1637 = vmatprep.subr.mxu0 0.0
        %1638 = vmatpush1.msra.mxu0 %v1614
        %1639 = vmatprep.subr.mxu0 0.0
        %1640 = vmatpush1.msra.mxu0 %v1613
        %1641 = vmatprep.subr.mxu0 0.0
        %1642 = vmatpush1.msra.mxu0 %v1612
        %1643 = vmatprep.subr.mxu0 0.0
        %1644 = vmatpush1.msra.mxu0 %v1611
        %1645 = vmatprep.subr.mxu0 0.0
        %1646 = vmatpush1.msra.mxu0 %v1610
        %1647 = vmatprep.subr.mxu0 0.0
        %1648 = vmatpush1.msra.mxu0 %v1609
        %1649 = vmatprep.subr.mxu0 0.0
        %1650 = vmatpush1.msra.mxu0 %v1608
        %1651 = vmatprep.subr.mxu0 0.0
        %1652 = vmatpush2.msra.mxu0 0.0
        %1653 = vmatprep.subr.mxu0 0.0
        %1654 = vmatpush2.msra.mxu0 0.0
        %1655 = vmatprep.subr.mxu0 0.0
        %1656 = vmatpush2.msra.mxu0 0.0
        %1657 = vmatprep.subr.mxu0 0.0
        %1658 = vmatpush2.msra.mxu0 0.0
        %1659 = vmatprep.subr.mxu0 0.0
        %1660 = vmatpush2.msra.mxu0 0.0
        %1661 = vmatprep.subr.mxu0 0.0
        %1662 = vmatpush2.msra.mxu0 0.0
        %1663 = vmatprep.subr.mxu0 0.0
        %1664 = vmatpush2.msra.mxu0 0.0
        %1665 = vmatprep.subr.mxu0 0.0
        %1666 = vmatpush2.msra.mxu0 0.0
        %1667 = vmatprep.subr.mxu0 0.0
        %1668 = vmatpush2.msra.mxu0 0.0
        %1669 = vmatprep.subr.mxu0 0.0
        %1670 = vmatpush2.msra.mxu0 0.0
        %1671 = vmatprep.subr.mxu0 0.0
        %1672 = vmatpush2.msra.mxu0 0.0
        %1673 = vmatprep.subr.mxu0 0.0
        %1674 = vmatpush2.msra.mxu0 0.0
        %1675 = vmatprep.subr.mxu0 0.0
        %1676 = vmatpush2.msra.mxu0 0.0
        %1677 = vmatprep.subr.mxu0 0.0
        %1678 = vmatpush2.msra.mxu0 0.0
        %1679 = vmatprep.subr.mxu0 0.0
        %1680 = vmatpush2.msra.mxu0 0.0
        %1681 = vmatprep.subr.mxu0 0.0
        %1682 = vmatpush2.msra.mxu0 0.0
        %1683 = vmatprep.mubr.f32.mxu0 0.0
        %1684 = vmatmul.mubr.f32.gmra.mxu0 %v1617
        %v1685 = vpop.f32.mrf.mxu0
        %v1686 = vadd.f32 0.0, %v1685
        %v1687 = vpop.f32.mrf.mxu0
        %1688 = vdwg.mxu0
        %v1689 = vmax.f32 %v1686, 0.0
        %v1690 = vld [vmem:[%s5] sm:$0xff]
        %v1691 = vld [vmem:[%s5 + $0x8] sm:$0xff]
        %v1692 = vld [vmem:[%s5 + $0x10] sm:$0xff]
        %v1693 = vld [vmem:[%s5 + $0x18] sm:$0xff]
        %v1694 = vld [vmem:[%s5 + $0x20] sm:$0xff]
        %v1695 = vld [vmem:[%s5 + $0x28] sm:$0xff]
        %v1696 = vld [vmem:[%s5 + $0x30] sm:$0xff]
        %v1697 = vld [vmem:[%s5 + $0x38] sm:$0xff]
        %s1698 = scalar_lea.vmem %s4, 64
        %v1699 = vld [vmem:[%s1698] sm:$0xff]
        %v1700 = vld [vmem:[%s1698 + $0x8] sm:$0xff]
        %v1701 = vld [vmem:[%s1698 + $0x10] sm:$0xff]
        %v1702 = vld [vmem:[%s1698 + $0x18] sm:$0xff]
        %v1703 = vld [vmem:[%s1698 + $0x20] sm:$0xff]
        %v1704 = vld [vmem:[%s1698 + $0x28] sm:$0xff]
        %v1705 = vld [vmem:[%s1698 + $0x30] sm:$0xff]
        %v1706 = vld [vmem:[%s1698 + $0x38] sm:$0xff]
        %1707 = vmatprep.subr.mxu0 0.0
        %1708 = vmatpush1.msra.mxu0 0.0
        %1709 = vmatprep.subr.mxu0 0.0
        %1710 = vmatpush1.msra.mxu0 0.0
        %1711 = vmatprep.subr.mxu0 0.0
        %1712 = vmatpush1.msra.mxu0 0.0
        %1713 = vmatprep.subr.mxu0 0.0
        %1714 = vmatpush1.msra.mxu0 0.0
        %1715 = vmatprep.subr.mxu0 0.0
        %1716 = vmatpush1.msra.mxu0 0.0
        %1717 = vmatprep.subr.mxu0 0.0
        %1718 = vmatpush1.msra.mxu0 0.0
        %1719 = vmatprep.subr.mxu0 0.0
        %1720 = vmatpush1.msra.mxu0 0.0
        %1721 = vmatprep.subr.mxu0 0.0
        %1722 = vmatpush1.msra.mxu0 0.0
        %1723 = vmatprep.subr.mxu0 0.0
        %1724 = vmatpush1.msra.mxu0 %v1706
        %1725 = vmatprep.subr.mxu0 0.0
        %1726 = vmatpush1.msra.mxu0 %v1705
        %1727 = vmatprep.subr.mxu0 0.0
        %1728 = vmatpush1.msra.mxu0 %v1704
        %1729 = vmatprep.subr.mxu0 0.0
        %1730 = vmatpush1.msra.mxu0 %v1703
        %1731 = vmatprep.subr.mxu0 0.0
        %1732 = vmatpush1.msra.mxu0 %v1702
        %1733 = vmatprep.subr.mxu0 0.0
        %1734 = vmatpush1.msra.mxu0 %v1701
        %1735 = vmatprep.subr.mxu0 0.0
        %1736 = vmatpush1.msra.mxu0 %v1700
        %1737 = vmatprep.subr.mxu0 0.0
        %1738 = vmatpush1.msra.mxu0 %v1699
        %1739 = vmatprep.subr.mxu0 0.0
        %1740 = vmatpush2.msra.mxu0 0.0
        %1741 = vmatprep.subr.mxu0 0.0
        %1742 = vmatpush2.msra.mxu0 0.0
        %1743 = vmatprep.subr.mxu0 0.0
        %1744 = vmatpush2.msra.mxu0 0.0
        %1745 = vmatprep.subr.mxu0 0.0
        %1746 = vmatpush2.msra.mxu0 0.0
        %1747 = vmatprep.subr.mxu0 0.0
        %1748 = vmatpush2.msra.mxu0 0.0
        %1749 = vmatprep.subr.mxu0 0.0
        %1750 = vmatpush2.msra.mxu0 0.0
        %1751 = vmatprep.subr.mxu0 0.0
        %1752 = vmatpush2.msra.mxu0 0.0
        %1753 = vmatprep.subr.mxu0 0.0
        %1754 = vmatpush2.msra.mxu0 0.0
        %1755 = vmatprep.subr.mxu0 0.0
        %1756 = vmatpush2.msra.mxu0 0.0
        %1757 = vmatprep.subr.mxu0 0.0
        %1758 = vmatpush2.msra.mxu0 0.0
        %1759 = vmatprep.subr.mxu0 0.0
        %1760 = vmatpush2.msra.mxu0 0.0
        %1761 = vmatprep.subr.mxu0 0.0
        %1762 = vmatpush2.msra.mxu0 0.0
        %1763 = vmatprep.subr.mxu0 0.0
        %1764 = vmatpush2.msra.mxu0 0.0
        %1765 = vmatprep.subr.mxu0 0.0
        %1766 = vmatpush2.msra.mxu0 0.0
        %1767 = vmatprep.subr.mxu0 0.0
        %1768 = vmatpush2.msra.mxu0 0.0
        %1769 = vmatprep.subr.mxu0 0.0
        %1770 = vmatpush2.msra.mxu0 0.0
        %1771 = vmatprep.mubr.f32.mxu0 0.0
        %1772 = vmatmul.mubr.f32.gmra.mxu0 %v1617
        %v1773 = vpop.f32.mrf.mxu0
        %v1774 = vadd.f32 0.0, %v1773
        %v1775 = vpop.f32.mrf.mxu0
        %1776 = vdwg.mxu0
        %v1777 = vmax.f32 %v1774, 0.0
        %s1778 = scalar_lea.vmem %s5, 64
        %v1779 = vld [vmem:[%s1778] sm:$0xff]
        %v1780 = vld [vmem:[%s1778 + $0x8] sm:$0xff]
        %v1781 = vld [vmem:[%s1778 + $0x10] sm:$0xff]
        %v1782 = vld [vmem:[%s1778 + $0x18] sm:$0xff]
        %v1783 = vld [vmem:[%s1778 + $0x20] sm:$0xff]
        %v1784 = vld [vmem:[%s1778 + $0x28] sm:$0xff]
        %v1785 = vld [vmem:[%s1778 + $0x30] sm:$0xff]
        %v1786 = vld [vmem:[%s1778 + $0x38] sm:$0xff]
        %v1788 = vsel %vm1535, %v1777, 0
        %1790 = vmatprep.subr.mxu0 0.0
        %1791 = vmatpush1.msra.mxu0 0.0
        %1792 = vmatprep.subr.mxu0 0.0
        %1793 = vmatpush1.msra.mxu0 0.0
        %1794 = vmatprep.subr.mxu0 0.0
        %1795 = vmatpush1.msra.mxu0 0.0
        %1796 = vmatprep.subr.mxu0 0.0
        %1797 = vmatpush1.msra.mxu0 0.0
        %1798 = vmatprep.subr.mxu0 0.0
        %1799 = vmatpush1.msra.mxu0 0.0
        %1800 = vmatprep.subr.mxu0 0.0
        %1801 = vmatpush1.msra.mxu0 0.0
        %1802 = vmatprep.subr.mxu0 0.0
        %1803 = vmatpush1.msra.mxu0 0.0
        %1804 = vmatprep.subr.mxu0 0.0
        %1805 = vmatpush1.msra.mxu0 0.0
        %1806 = vmatprep.subr.mxu0 0.0
        %1807 = vmatpush1.msra.mxu0 %v1786
        %1808 = vmatprep.subr.mxu0 0.0
        %1809 = vmatpush1.msra.mxu0 %v1785
        %1810 = vmatprep.subr.mxu0 0.0
        %1811 = vmatpush1.msra.mxu0 %v1784
        %1812 = vmatprep.subr.mxu0 0.0
        %1813 = vmatpush1.msra.mxu0 %v1783
        %1814 = vmatprep.subr.mxu0 0.0
        %1815 = vmatpush1.msra.mxu0 %v1782
        %1816 = vmatprep.subr.mxu0 0.0
        %1817 = vmatpush1.msra.mxu0 %v1781
        %1818 = vmatprep.subr.mxu0 0.0
        %1819 = vmatpush1.msra.mxu0 %v1780
        %1820 = vmatprep.subr.mxu0 0.0
        %1821 = vmatpush1.msra.mxu0 %v1779
        %1822 = vmatprep.subr.mxu0 0.0
        %1823 = vmatpush2.msra.mxu0 0.0
        %1824 = vmatprep.subr.mxu0 0.0
        %1825 = vmatpush2.msra.mxu0 0.0
        %1826 = vmatprep.subr.mxu0 0.0
        %1827 = vmatpush2.msra.mxu0 0.0
        %1828 = vmatprep.subr.mxu0 0.0
        %1829 = vmatpush2.msra.mxu0 0.0
        %1830 = vmatprep.subr.mxu0 0.0
        %1831 = vmatpush2.msra.mxu0 0.0
        %1832 = vmatprep.subr.mxu0 0.0
        %1833 = vmatpush2.msra.mxu0 0.0
        %1834 = vmatprep.subr.mxu0 0.0
        %1835 = vmatpush2.msra.mxu0 0.0
        %1836 = vmatprep.subr.mxu0 0.0
        %1837 = vmatpush2.msra.mxu0 0.0
        %1838 = vmatprep.subr.mxu0 0.0
        %1839 = vmatpush2.msra.mxu0 0.0
        %1840 = vmatprep.subr.mxu0 0.0
        %1841 = vmatpush2.msra.mxu0 0.0
        %1842 = vmatprep.subr.mxu0 0.0
        %1843 = vmatpush2.msra.mxu0 0.0
        %1844 = vmatprep.subr.mxu0 0.0
        %1845 = vmatpush2.msra.mxu0 0.0
        %1846 = vmatprep.subr.mxu0 0.0
        %1847 = vmatpush2.msra.mxu0 0.0
        %1848 = vmatprep.subr.mxu0 0.0
        %1849 = vmatpush2.msra.mxu0 0.0
        %1850 = vmatprep.subr.mxu0 0.0
        %1851 = vmatpush2.msra.mxu0 0.0
        %1852 = vmatprep.subr.mxu0 0.0
        %1853 = vmatpush2.msra.mxu0 0.0
        %1854 = vmatprep.mubr.f32.mxu0 0.0
        %1855 = vmatmul.mubr.f32.gmra.mxu0 %v1788
        %v1856 = vpop.f32.mrf.mxu0
        %v1857 = vadd.f32 0.0, %v1856
        %v1858 = vpop.f32.mrf.mxu0
        %1859 = vdwg.mxu0
        %v1861 = vsel %vm1535, %v1689, 0
        %1863 = vmatprep.subr.mxu0 0.0
        %1864 = vmatpush1.msra.mxu0 0.0
        %1865 = vmatprep.subr.mxu0 0.0
        %1866 = vmatpush1.msra.mxu0 0.0
        %1867 = vmatprep.subr.mxu0 0.0
        %1868 = vmatpush1.msra.mxu0 0.0
        %1869 = vmatprep.subr.mxu0 0.0
        %1870 = vmatpush1.msra.mxu0 0.0
        %1871 = vmatprep.subr.mxu0 0.0
        %1872 = vmatpush1.msra.mxu0 0.0
        %1873 = vmatprep.subr.mxu0 0.0
        %1874 = vmatpush1.msra.mxu0 0.0
        %1875 = vmatprep.subr.mxu0 0.0
        %1876 = vmatpush1.msra.mxu0 0.0
        %1877 = vmatprep.subr.mxu0 0.0
        %1878 = vmatpush1.msra.mxu0 0.0
        %1879 = vmatprep.subr.mxu0 0.0
        %1880 = vmatpush1.msra.mxu0 %v1697
        %1881 = vmatprep.subr.mxu0 0.0
        %1882 = vmatpush1.msra.mxu0 %v1696
        %1883 = vmatprep.subr.mxu0 0.0
        %1884 = vmatpush1.msra.mxu0 %v1695
        %1885 = vmatprep.subr.mxu0 0.0
        %1886 = vmatpush1.msra.mxu0 %v1694
        %1887 = vmatprep.subr.mxu0 0.0
        %1888 = vmatpush1.msra.mxu0 %v1693
        %1889 = vmatprep.subr.mxu0 0.0
        %1890 = vmatpush1.msra.mxu0 %v1692
        %1891 = vmatprep.subr.mxu0 0.0
        %1892 = vmatpush1.msra.mxu0 %v1691
        %1893 = vmatprep.subr.mxu0 0.0
        %1894 = vmatpush1.msra.mxu0 %v1690
        %1895 = vmatprep.subr.mxu0 0.0
        %1896 = vmatpush2.msra.mxu0 0.0
        %1897 = vmatprep.subr.mxu0 0.0
        %1898 = vmatpush2.msra.mxu0 0.0
        %1899 = vmatprep.subr.mxu0 0.0
        %1900 = vmatpush2.msra.mxu0 0.0
        %1901 = vmatprep.subr.mxu0 0.0
        %1902 = vmatpush2.msra.mxu0 0.0
        %1903 = vmatprep.subr.mxu0 0.0
        %1904 = vmatpush2.msra.mxu0 0.0
        %1905 = vmatprep.subr.mxu0 0.0
        %1906 = vmatpush2.msra.mxu0 0.0
        %1907 = vmatprep.subr.mxu0 0.0
        %1908 = vmatpush2.msra.mxu0 0.0
        %1909 = vmatprep.subr.mxu0 0.0
        %1910 = vmatpush2.msra.mxu0 0.0
        %1911 = vmatprep.subr.mxu0 0.0
        %1912 = vmatpush2.msra.mxu0 0.0
        %1913 = vmatprep.subr.mxu0 0.0
        %1914 = vmatpush2.msra.mxu0 0.0
        %1915 = vmatprep.subr.mxu0 0.0
        %1916 = vmatpush2.msra.mxu0 0.0
        %1917 = vmatprep.subr.mxu0 0.0
        %1918 = vmatpush2.msra.mxu0 0.0
        %1919 = vmatprep.subr.mxu0 0.0
        %1920 = vmatpush2.msra.mxu0 0.0
        %1921 = vmatprep.subr.mxu0 0.0
        %1922 = vmatpush2.msra.mxu0 0.0
        %1923 = vmatprep.subr.mxu0 0.0
        %1924 = vmatpush2.msra.mxu0 0.0
        %1925 = vmatprep.subr.mxu0 0.0
        %1926 = vmatpush2.msra.mxu0 0.0
        %1927 = vmatprep.mubr.f32.mxu0 0.0
        %1928 = vmatmul.mubr.f32.gmra.mxu0 %v1861
        %v1929 = vpop.f32.mrf.mxu0
        %v1930 = vadd.f32 %v1857, %v1929
        %v1931 = vpop.f32.mrf.mxu0
        %1932 = vdwg.mxu0
        %s1933 = scalar_lea.vmem %s4, 128
        %v1934 = vld [vmem:[%s1933] sm:$0xff]
        %v1935 = vld [vmem:[%s1933 + $0x8] sm:$0xff]
        %v1936 = vld [vmem:[%s1933 + $0x10] sm:$0xff]
        %v1937 = vld [vmem:[%s1933 + $0x18] sm:$0xff]
        %v1938 = vld [vmem:[%s1933 + $0x20] sm:$0xff]
        %v1939 = vld [vmem:[%s1933 + $0x28] sm:$0xff]
        %v1940 = vld [vmem:[%s1933 + $0x30] sm:$0xff]
        %v1941 = vld [vmem:[%s1933 + $0x38] sm:$0xff]
        %1942 = vmatprep.subr.mxu0 0.0
        %1943 = vmatpush1.msra.mxu0 0.0
        %1944 = vmatprep.subr.mxu0 0.0
        %1945 = vmatpush1.msra.mxu0 0.0
        %1946 = vmatprep.subr.mxu0 0.0
        %1947 = vmatpush1.msra.mxu0 0.0
        %1948 = vmatprep.subr.mxu0 0.0
        %1949 = vmatpush1.msra.mxu0 0.0
        %1950 = vmatprep.subr.mxu0 0.0
        %1951 = vmatpush1.msra.mxu0 0.0
        %1952 = vmatprep.subr.mxu0 0.0
        %1953 = vmatpush1.msra.mxu0 0.0
        %1954 = vmatprep.subr.mxu0 0.0
        %1955 = vmatpush1.msra.mxu0 0.0
        %1956 = vmatprep.subr.mxu0 0.0
        %1957 = vmatpush1.msra.mxu0 0.0
        %1958 = vmatprep.subr.mxu0 0.0
        %1959 = vmatpush1.msra.mxu0 %v1941
        %1960 = vmatprep.subr.mxu0 0.0
        %1961 = vmatpush1.msra.mxu0 %v1940
        %1962 = vmatprep.subr.mxu0 0.0
        %1963 = vmatpush1.msra.mxu0 %v1939
        %1964 = vmatprep.subr.mxu0 0.0
        %1965 = vmatpush1.msra.mxu0 %v1938
        %1966 = vmatprep.subr.mxu0 0.0
        %1967 = vmatpush1.msra.mxu0 %v1937
        %1968 = vmatprep.subr.mxu0 0.0
        %1969 = vmatpush1.msra.mxu0 %v1936
        %1970 = vmatprep.subr.mxu0 0.0
        %1971 = vmatpush1.msra.mxu0 %v1935
        %1972 = vmatprep.subr.mxu0 0.0
        %1973 = vmatpush1.msra.mxu0 %v1934
        %1974 = vmatprep.subr.mxu0 0.0
        %1975 = vmatpush2.msra.mxu0 0.0
        %1976 = vmatprep.subr.mxu0 0.0
        %1977 = vmatpush2.msra.mxu0 0.0
        %1978 = vmatprep.subr.mxu0 0.0
        %1979 = vmatpush2.msra.mxu0 0.0
        %1980 = vmatprep.subr.mxu0 0.0
        %1981 = vmatpush2.msra.mxu0 0.0
        %1982 = vmatprep.subr.mxu0 0.0
        %1983 = vmatpush2.msra.mxu0 0.0
        %1984 = vmatprep.subr.mxu0 0.0
        %1985 = vmatpush2.msra.mxu0 0.0
        %1986 = vmatprep.subr.mxu0 0.0
        %1987 = vmatpush2.msra.mxu0 0.0
        %1988 = vmatprep.subr.mxu0 0.0
        %1989 = vmatpush2.msra.mxu0 0.0
        %1990 = vmatprep.subr.mxu0 0.0
        %1991 = vmatpush2.msra.mxu0 0.0
        %1992 = vmatprep.subr.mxu0 0.0
        %1993 = vmatpush2.msra.mxu0 0.0
        %1994 = vmatprep.subr.mxu0 0.0
        %1995 = vmatpush2.msra.mxu0 0.0
        %1996 = vmatprep.subr.mxu0 0.0
        %1997 = vmatpush2.msra.mxu0 0.0
        %1998 = vmatprep.subr.mxu0 0.0
        %1999 = vmatpush2.msra.mxu0 0.0
        %2000 = vmatprep.subr.mxu0 0.0
        %2001 = vmatpush2.msra.mxu0 0.0
        %2002 = vmatprep.subr.mxu0 0.0
        %2003 = vmatpush2.msra.mxu0 0.0
        %2004 = vmatprep.subr.mxu0 0.0
        %2005 = vmatpush2.msra.mxu0 0.0
        %2006 = vmatprep.mubr.f32.mxu0 0.0
        %2007 = vmatmul.mubr.f32.gmra.mxu0 %v1617
        %v2008 = vpop.f32.mrf.mxu0
        %v2009 = vadd.f32 0.0, %v2008
        %v2010 = vpop.f32.mrf.mxu0
        %2011 = vdwg.mxu0
        %v2012 = vmax.f32 %v2009, 0.0
        %s2013 = scalar_lea.vmem %s5, 128
        %v2014 = vld [vmem:[%s2013] sm:$0xff]
        %v2015 = vld [vmem:[%s2013 + $0x8] sm:$0xff]
        %v2016 = vld [vmem:[%s2013 + $0x10] sm:$0xff]
        %v2017 = vld [vmem:[%s2013 + $0x18] sm:$0xff]
        %v2018 = vld [vmem:[%s2013 + $0x20] sm:$0xff]
        %v2019 = vld [vmem:[%s2013 + $0x28] sm:$0xff]
        %v2020 = vld [vmem:[%s2013 + $0x30] sm:$0xff]
        %v2021 = vld [vmem:[%s2013 + $0x38] sm:$0xff]
        %v2023 = vsel %vm1535, %v2012, 0
        %2025 = vmatprep.subr.mxu0 0.0
        %2026 = vmatpush1.msra.mxu0 0.0
        %2027 = vmatprep.subr.mxu0 0.0
        %2028 = vmatpush1.msra.mxu0 0.0
        %2029 = vmatprep.subr.mxu0 0.0
        %2030 = vmatpush1.msra.mxu0 0.0
        %2031 = vmatprep.subr.mxu0 0.0
        %2032 = vmatpush1.msra.mxu0 0.0
        %2033 = vmatprep.subr.mxu0 0.0
        %2034 = vmatpush1.msra.mxu0 0.0
        %2035 = vmatprep.subr.mxu0 0.0
        %2036 = vmatpush1.msra.mxu0 0.0
        %2037 = vmatprep.subr.mxu0 0.0
        %2038 = vmatpush1.msra.mxu0 0.0
        %2039 = vmatprep.subr.mxu0 0.0
        %2040 = vmatpush1.msra.mxu0 0.0
        %2041 = vmatprep.subr.mxu0 0.0
        %2042 = vmatpush1.msra.mxu0 %v2021
        %2043 = vmatprep.subr.mxu0 0.0
        %2044 = vmatpush1.msra.mxu0 %v2020
        %2045 = vmatprep.subr.mxu0 0.0
        %2046 = vmatpush1.msra.mxu0 %v2019
        %2047 = vmatprep.subr.mxu0 0.0
        %2048 = vmatpush1.msra.mxu0 %v2018
        %2049 = vmatprep.subr.mxu0 0.0
        %2050 = vmatpush1.msra.mxu0 %v2017
        %2051 = vmatprep.subr.mxu0 0.0
        %2052 = vmatpush1.msra.mxu0 %v2016
        %2053 = vmatprep.subr.mxu0 0.0
        %2054 = vmatpush1.msra.mxu0 %v2015
        %2055 = vmatprep.subr.mxu0 0.0
        %2056 = vmatpush1.msra.mxu0 %v2014
        %2057 = vmatprep.subr.mxu0 0.0
        %2058 = vmatpush2.msra.mxu0 0.0
        %2059 = vmatprep.subr.mxu0 0.0
        %2060 = vmatpush2.msra.mxu0 0.0
        %2061 = vmatprep.subr.mxu0 0.0
        %2062 = vmatpush2.msra.mxu0 0.0
        %2063 = vmatprep.subr.mxu0 0.0
        %2064 = vmatpush2.msra.mxu0 0.0
        %2065 = vmatprep.subr.mxu0 0.0
        %2066 = vmatpush2.msra.mxu0 0.0
        %2067 = vmatprep.subr.mxu0 0.0
        %2068 = vmatpush2.msra.mxu0 0.0
        %2069 = vmatprep.subr.mxu0 0.0
        %2070 = vmatpush2.msra.mxu0 0.0
        %2071 = vmatprep.subr.mxu0 0.0
        %2072 = vmatpush2.msra.mxu0 0.0
        %2073 = vmatprep.subr.mxu0 0.0
        %2074 = vmatpush2.msra.mxu0 0.0
        %2075 = vmatprep.subr.mxu0 0.0
        %2076 = vmatpush2.msra.mxu0 0.0
        %2077 = vmatprep.subr.mxu0 0.0
        %2078 = vmatpush2.msra.mxu0 0.0
        %2079 = vmatprep.subr.mxu0 0.0
        %2080 = vmatpush2.msra.mxu0 0.0
        %2081 = vmatprep.subr.mxu0 0.0
        %2082 = vmatpush2.msra.mxu0 0.0
        %2083 = vmatprep.subr.mxu0 0.0
        %2084 = vmatpush2.msra.mxu0 0.0
        %2085 = vmatprep.subr.mxu0 0.0
        %2086 = vmatpush2.msra.mxu0 0.0
        %2087 = vmatprep.subr.mxu0 0.0
        %2088 = vmatpush2.msra.mxu0 0.0
        %2089 = vmatprep.mubr.f32.mxu0 0.0
        %2090 = vmatmul.mubr.f32.gmra.mxu0 %v2023
        %v2091 = vpop.f32.mrf.mxu0
        %v2092 = vadd.f32 0.0, %v2091
        %v2093 = vpop.f32.mrf.mxu0
        %2094 = vdwg.mxu0
        %v2095 = vadd.f32 %v1930, %v2092
        %s2096 = scalar_lea.vmem %s4, 192
        %v2097 = vld [vmem:[%s2096] sm:$0xff]
        %v2098 = vld [vmem:[%s2096 + $0x8] sm:$0xff]
        %v2099 = vld [vmem:[%s2096 + $0x10] sm:$0xff]
        %v2100 = vld [vmem:[%s2096 + $0x18] sm:$0xff]
        %v2101 = vld [vmem:[%s2096 + $0x20] sm:$0xff]
        %v2102 = vld [vmem:[%s2096 + $0x28] sm:$0xff]
        %v2103 = vld [vmem:[%s2096 + $0x30] sm:$0xff]
        %v2104 = vld [vmem:[%s2096 + $0x38] sm:$0xff]
        %2105 = vmatprep.subr.mxu0 0.0
        %2106 = vmatpush1.msra.mxu0 0.0
        %2107 = vmatprep.subr.mxu0 0.0
        %2108 = vmatpush1.msra.mxu0 0.0
        %2109 = vmatprep.subr.mxu0 0.0
        %2110 = vmatpush1.msra.mxu0 0.0
        %2111 = vmatprep.subr.mxu0 0.0
        %2112 = vmatpush1.msra.mxu0 0.0
        %2113 = vmatprep.subr.mxu0 0.0
        %2114 = vmatpush1.msra.mxu0 0.0
        %2115 = vmatprep.subr.mxu0 0.0
        %2116 = vmatpush1.msra.mxu0 0.0
        %2117 = vmatprep.subr.mxu0 0.0
        %2118 = vmatpush1.msra.mxu0 0.0
        %2119 = vmatprep.subr.mxu0 0.0
        %2120 = vmatpush1.msra.mxu0 0.0
        %2121 = vmatprep.subr.mxu0 0.0
        %2122 = vmatpush1.msra.mxu0 %v2104
        %2123 = vmatprep.subr.mxu0 0.0
        %2124 = vmatpush1.msra.mxu0 %v2103
        %2125 = vmatprep.subr.mxu0 0.0
        %2126 = vmatpush1.msra.mxu0 %v2102
        %2127 = vmatprep.subr.mxu0 0.0
        %2128 = vmatpush1.msra.mxu0 %v2101
        %2129 = vmatprep.subr.mxu0 0.0
        %2130 = vmatpush1.msra.mxu0 %v2100
        %2131 = vmatprep.subr.mxu0 0.0
        %2132 = vmatpush1.msra.mxu0 %v2099
        %2133 = vmatprep.subr.mxu0 0.0
        %2134 = vmatpush1.msra.mxu0 %v2098
        %2135 = vmatprep.subr.mxu0 0.0
        %2136 = vmatpush1.msra.mxu0 %v2097
        %2137 = vmatprep.subr.mxu0 0.0
        %2138 = vmatpush2.msra.mxu0 0.0
        %2139 = vmatprep.subr.mxu0 0.0
        %2140 = vmatpush2.msra.mxu0 0.0
        %2141 = vmatprep.subr.mxu0 0.0
        %2142 = vmatpush2.msra.mxu0 0.0
        %2143 = vmatprep.subr.mxu0 0.0
        %2144 = vmatpush2.msra.mxu0 0.0
        %2145 = vmatprep.subr.mxu0 0.0
        %2146 = vmatpush2.msra.mxu0 0.0
        %2147 = vmatprep.subr.mxu0 0.0
        %2148 = vmatpush2.msra.mxu0 0.0
        %2149 = vmatprep.subr.mxu0 0.0
        %2150 = vmatpush2.msra.mxu0 0.0
        %2151 = vmatprep.subr.mxu0 0.0
        %2152 = vmatpush2.msra.mxu0 0.0
        %2153 = vmatprep.subr.mxu0 0.0
        %2154 = vmatpush2.msra.mxu0 0.0
        %2155 = vmatprep.subr.mxu0 0.0
        %2156 = vmatpush2.msra.mxu0 0.0
        %2157 = vmatprep.subr.mxu0 0.0
        %2158 = vmatpush2.msra.mxu0 0.0
        %2159 = vmatprep.subr.mxu0 0.0
        %2160 = vmatpush2.msra.mxu0 0.0
        %2161 = vmatprep.subr.mxu0 0.0
        %2162 = vmatpush2.msra.mxu0 0.0
        %2163 = vmatprep.subr.mxu0 0.0
        %2164 = vmatpush2.msra.mxu0 0.0
        %2165 = vmatprep.subr.mxu0 0.0
        %2166 = vmatpush2.msra.mxu0 0.0
        %2167 = vmatprep.subr.mxu0 0.0
        %2168 = vmatpush2.msra.mxu0 0.0
        %2169 = vmatprep.mubr.f32.mxu0 0.0
        %2170 = vmatmul.mubr.f32.gmra.mxu0 %v1617
        %v2171 = vpop.f32.mrf.mxu0
        %v2172 = vadd.f32 0.0, %v2171
        %v2173 = vpop.f32.mrf.mxu0
        %2174 = vdwg.mxu0
        %v2175 = vmax.f32 %v2172, 0.0
        %s2176 = scalar_lea.vmem %s5, 192
        %v2177 = vld [vmem:[%s2176] sm:$0xff]
        %v2178 = vld [vmem:[%s2176 + $0x8] sm:$0xff]
        %v2179 = vld [vmem:[%s2176 + $0x10] sm:$0xff]
        %v2180 = vld [vmem:[%s2176 + $0x18] sm:$0xff]
        %v2181 = vld [vmem:[%s2176 + $0x20] sm:$0xff]
        %v2182 = vld [vmem:[%s2176 + $0x28] sm:$0xff]
        %v2183 = vld [vmem:[%s2176 + $0x30] sm:$0xff]
        %v2184 = vld [vmem:[%s2176 + $0x38] sm:$0xff]
        %v2186 = vsel %vm1535, %v2175, 0
        %2188 = vmatprep.subr.mxu0 0.0
        %2189 = vmatpush1.msra.mxu0 0.0
        %2190 = vmatprep.subr.mxu0 0.0
        %2191 = vmatpush1.msra.mxu0 0.0
        %2192 = vmatprep.subr.mxu0 0.0
        %2193 = vmatpush1.msra.mxu0 0.0
        %2194 = vmatprep.subr.mxu0 0.0
        %2195 = vmatpush1.msra.mxu0 0.0
        %2196 = vmatprep.subr.mxu0 0.0
        %2197 = vmatpush1.msra.mxu0 0.0
        %2198 = vmatprep.subr.mxu0 0.0
        %2199 = vmatpush1.msra.mxu0 0.0
        %2200 = vmatprep.subr.mxu0 0.0
        %2201 = vmatpush1.msra.mxu0 0.0
        %2202 = vmatprep.subr.mxu0 0.0
        %2203 = vmatpush1.msra.mxu0 0.0
        %2204 = vmatprep.subr.mxu0 0.0
        %2205 = vmatpush1.msra.mxu0 %v2184
        %2206 = vmatprep.subr.mxu0 0.0
        %2207 = vmatpush1.msra.mxu0 %v2183
        %2208 = vmatprep.subr.mxu0 0.0
        %2209 = vmatpush1.msra.mxu0 %v2182
        %2210 = vmatprep.subr.mxu0 0.0
        %2211 = vmatpush1.msra.mxu0 %v2181
        %2212 = vmatprep.subr.mxu0 0.0
        %2213 = vmatpush1.msra.mxu0 %v2180
        %2214 = vmatprep.subr.mxu0 0.0
        %2215 = vmatpush1.msra.mxu0 %v2179
        %2216 = vmatprep.subr.mxu0 0.0
        %2217 = vmatpush1.msra.mxu0 %v2178
        %2218 = vmatprep.subr.mxu0 0.0
        %2219 = vmatpush1.msra.mxu0 %v2177
        %2220 = vmatprep.subr.mxu0 0.0
        %2221 = vmatpush2.msra.mxu0 0.0
        %2222 = vmatprep.subr.mxu0 0.0
        %2223 = vmatpush2.msra.mxu0 0.0
        %2224 = vmatprep.subr.mxu0 0.0
        %2225 = vmatpush2.msra.mxu0 0.0
        %2226 = vmatprep.subr.mxu0 0.0
        %2227 = vmatpush2.msra.mxu0 0.0
        %2228 = vmatprep.subr.mxu0 0.0
        %2229 = vmatpush2.msra.mxu0 0.0
        %2230 = vmatprep.subr.mxu0 0.0
        %2231 = vmatpush2.msra.mxu0 0.0
        %2232 = vmatprep.subr.mxu0 0.0
        %2233 = vmatpush2.msra.mxu0 0.0
        %2234 = vmatprep.subr.mxu0 0.0
        %2235 = vmatpush2.msra.mxu0 0.0
        %2236 = vmatprep.subr.mxu0 0.0
        %2237 = vmatpush2.msra.mxu0 0.0
        %2238 = vmatprep.subr.mxu0 0.0
        %2239 = vmatpush2.msra.mxu0 0.0
        %2240 = vmatprep.subr.mxu0 0.0
        %2241 = vmatpush2.msra.mxu0 0.0
        %2242 = vmatprep.subr.mxu0 0.0
        %2243 = vmatpush2.msra.mxu0 0.0
        %2244 = vmatprep.subr.mxu0 0.0
        %2245 = vmatpush2.msra.mxu0 0.0
        %2246 = vmatprep.subr.mxu0 0.0
        %2247 = vmatpush2.msra.mxu0 0.0
        %2248 = vmatprep.subr.mxu0 0.0
        %2249 = vmatpush2.msra.mxu0 0.0
        %2250 = vmatprep.subr.mxu0 0.0
        %2251 = vmatpush2.msra.mxu0 0.0
        %2252 = vmatprep.mubr.f32.mxu0 0.0
        %2253 = vmatmul.mubr.f32.gmra.mxu0 %v2186
        %v2254 = vpop.f32.mrf.mxu0
        %v2255 = vadd.f32 0.0, %v2254
        %v2256 = vpop.f32.mrf.mxu0
        %2257 = vdwg.mxu0
        %v2258 = vadd.f32 %v2095, %v2255
        %v2259 = vxor.u32 %v2258, 2147483648
        %v2260 = vmul.f32 %v2259, 1.442695
        %v2261 = vpow.pop %v2260
        %v2262 = vadd.f32 %v2261, 1.0
        %v2263 = vrcp.pop %v2262
        %v2264 = vmul.f32 1.0, %v2263
        %v2265 = vlaneseq
        %v2266 = vshrl.u32 %v2265, 7
        %v2267 = vsub.s32 0, %v2266
        %v2268 = vrot.slane %v2264, %v2267
        %v2269 = vmul.f32 %v1503, %v2268
        %v2270 = vmul.f32 %v1504, %v2268
        %v2271 = vmul.f32 %v1505, %v2268
        %v2272 = vmul.f32 %v1506, %v2268
        %v2273 = vmul.f32 %v1507, %v2268
        %v2274 = vmul.f32 %v1508, %v2268
        %v2275 = vmul.f32 %v1509, %v2268
        %v2276 = vmul.f32 %v1510, %v2268
        %v2277 = vmul.f32 %v1511, %v2268
        %v2278 = vmul.f32 %v1512, %v2268
        %v2279 = vmul.f32 %v1513, %v2268
        %v2280 = vmul.f32 %v1514, %v2268
        %v2281 = vmul.f32 %v1515, %v2268
        %v2282 = vmul.f32 %v1516, %v2268
        %v2283 = vmul.f32 %v1517, %v2268
        %v2284 = vmul.f32 %v1518, %v2268
        %v2285 = vmul.f32 %v1519, %v2268
        %v2286 = vmul.f32 %v1520, %v2268
        %v2287 = vmul.f32 %v1521, %v2268
        %v2288 = vmul.f32 %v1522, %v2268
        %v2289 = vmul.f32 %v1523, %v2268
        %v2290 = vmul.f32 %v1524, %v2268
        %v2291 = vmul.f32 %v1525, %v2268
        %v2292 = vmul.f32 %v1526, %v2268
        %v2293 = vmul.f32 %v1527, %v2268
        %v2294 = vmul.f32 %v1528, %v2268
        %v2295 = vmul.f32 %v1529, %v2268
        %v2296 = vmul.f32 %v1530, %v2268
        %v2297 = vmul.f32 %v1531, %v2268
        %v2298 = vmul.f32 %v1532, %v2268
        %v2299 = vmul.f32 %v1533, %v2268
        %v2300 = vmul.f32 %v1534, %v2268
        %v2301 = vadd.f32 %v702, %v2269
        %v2302 = vadd.f32 %v703, %v2270
        %v2303 = vadd.f32 %v704, %v2271
        %v2304 = vadd.f32 %v705, %v2272
        %v2305 = vadd.f32 %v706, %v2273
        %v2306 = vadd.f32 %v707, %v2274
        %v2307 = vadd.f32 %v708, %v2275
        %v2308 = vadd.f32 %v709, %v2276
        %v2309 = vadd.f32 %v710, %v2277
        %v2310 = vadd.f32 %v711, %v2278
        %v2311 = vadd.f32 %v712, %v2279
        %v2312 = vadd.f32 %v713, %v2280
        %v2313 = vadd.f32 %v714, %v2281
        %v2314 = vadd.f32 %v715, %v2282
        %v2315 = vadd.f32 %v716, %v2283
        %v2316 = vadd.f32 %v717, %v2284
        %v2317 = vadd.f32 %v718, %v2285
        %v2318 = vadd.f32 %v719, %v2286
        %v2319 = vadd.f32 %v720, %v2287
        %v2320 = vadd.f32 %v721, %v2288
        %v2321 = vadd.f32 %v722, %v2289
        %v2322 = vadd.f32 %v723, %v2290
        %v2323 = vadd.f32 %v724, %v2291
        %v2324 = vadd.f32 %v725, %v2292
        %v2325 = vadd.f32 %v726, %v2293
        %v2326 = vadd.f32 %v727, %v2294
        %v2327 = vadd.f32 %v728, %v2295
        %v2328 = vadd.f32 %v729, %v2296
        %v2329 = vadd.f32 %v730, %v2297
        %v2330 = vadd.f32 %v731, %v2298
        %v2331 = vadd.f32 %v732, %v2299
        %v2332 = vadd.f32 %v733, %v2300
        %v2333 = vld [vmem:[%s6] sm:$0xff]
        %v2334 = vld [vmem:[%s6 + $0x8] sm:$0xff]
        %v2335 = vld [vmem:[%s6 + $0x10] sm:$0xff]
        %v2336 = vld [vmem:[%s6 + $0x18] sm:$0xff]
        %v2337 = vld [vmem:[%s6 + $0x20] sm:$0xff]
        %v2338 = vld [vmem:[%s6 + $0x28] sm:$0xff]
        %v2339 = vld [vmem:[%s6 + $0x30] sm:$0xff]
        %v2340 = vld [vmem:[%s6 + $0x38] sm:$0xff]
        %v2342 = vsel %vm1535, %v2301, 0
        %v2345 = vsel %vm1535, %v2302, 0
        %v2348 = vsel %vm1535, %v2303, 0
        %v2351 = vsel %vm1535, %v2304, 0
        %v2354 = vsel %vm1535, %v2305, 0
        %v2357 = vsel %vm1535, %v2306, 0
        %v2360 = vsel %vm1535, %v2307, 0
        %v2363 = vsel %vm1535, %v2308, 0
        %v2366 = vsel %vm1535, %v2309, 0
        %v2369 = vsel %vm1535, %v2310, 0
        %v2372 = vsel %vm1535, %v2311, 0
        %v2375 = vsel %vm1535, %v2312, 0
        %v2378 = vsel %vm1535, %v2313, 0
        %v2381 = vsel %vm1535, %v2314, 0
        %v2384 = vsel %vm1535, %v2315, 0
        %v2387 = vsel %vm1535, %v2316, 0
        %v2390 = vsel %vm1535, %v2317, 0
        %v2393 = vsel %vm1535, %v2318, 0
        %v2396 = vsel %vm1535, %v2319, 0
        %v2399 = vsel %vm1535, %v2320, 0
        %v2402 = vsel %vm1535, %v2321, 0
        %v2405 = vsel %vm1535, %v2322, 0
        %v2408 = vsel %vm1535, %v2323, 0
        %v2411 = vsel %vm1535, %v2324, 0
        %v2414 = vsel %vm1535, %v2325, 0
        %v2417 = vsel %vm1535, %v2326, 0
        %v2420 = vsel %vm1535, %v2327, 0
        %v2423 = vsel %vm1535, %v2328, 0
        %v2426 = vsel %vm1535, %v2329, 0
        %v2429 = vsel %vm1535, %v2330, 0
        %v2432 = vsel %vm1535, %v2331, 0
        %v2435 = vsel %vm1535, %v2332, 0
        %2437 = vmatprep.subr.mxu0 0.0
        %2438 = vmatpush1.msra.mxu0 0.0
        %2439 = vmatprep.subr.mxu0 0.0
        %2440 = vmatpush1.msra.mxu0 0.0
        %2441 = vmatprep.subr.mxu0 0.0
        %2442 = vmatpush1.msra.mxu0 0.0
        %2443 = vmatprep.subr.mxu0 0.0
        %2444 = vmatpush1.msra.mxu0 0.0
        %2445 = vmatprep.subr.mxu0 0.0
        %2446 = vmatpush1.msra.mxu0 0.0
        %2447 = vmatprep.subr.mxu0 0.0
        %2448 = vmatpush1.msra.mxu0 0.0
        %2449 = vmatprep.subr.mxu0 0.0
        %2450 = vmatpush1.msra.mxu0 0.0
        %2451 = vmatprep.subr.mxu0 0.0
        %2452 = vmatpush1.msra.mxu0 0.0
        %2453 = vmatprep.subr.mxu0 0.0
        %2454 = vmatpush1.msra.mxu0 %v2340
        %2455 = vmatprep.subr.mxu0 0.0
        %2456 = vmatpush1.msra.mxu0 %v2339
        %2457 = vmatprep.subr.mxu0 0.0
        %2458 = vmatpush1.msra.mxu0 %v2338
        %2459 = vmatprep.subr.mxu0 0.0
        %2460 = vmatpush1.msra.mxu0 %v2337
        %2461 = vmatprep.subr.mxu0 0.0
        %2462 = vmatpush1.msra.mxu0 %v2336
        %2463 = vmatprep.subr.mxu0 0.0
        %2464 = vmatpush1.msra.mxu0 %v2335
        %2465 = vmatprep.subr.mxu0 0.0
        %2466 = vmatpush1.msra.mxu0 %v2334
        %2467 = vmatprep.subr.mxu0 0.0
        %2468 = vmatpush1.msra.mxu0 %v2333
        %2469 = vmatprep.subr.mxu0 0.0
        %2470 = vmatpush2.msra.mxu0 0.0
        %2471 = vmatprep.subr.mxu0 0.0
        %2472 = vmatpush2.msra.mxu0 0.0
        %2473 = vmatprep.subr.mxu0 0.0
        %2474 = vmatpush2.msra.mxu0 0.0
        %2475 = vmatprep.subr.mxu0 0.0
        %2476 = vmatpush2.msra.mxu0 0.0
        %2477 = vmatprep.subr.mxu0 0.0
        %2478 = vmatpush2.msra.mxu0 0.0
        %2479 = vmatprep.subr.mxu0 0.0
        %2480 = vmatpush2.msra.mxu0 0.0
        %2481 = vmatprep.subr.mxu0 0.0
        %2482 = vmatpush2.msra.mxu0 0.0
        %2483 = vmatprep.subr.mxu0 0.0
        %2484 = vmatpush2.msra.mxu0 0.0
        %2485 = vmatprep.subr.mxu0 0.0
        %2486 = vmatpush2.msra.mxu0 0.0
        %2487 = vmatprep.subr.mxu0 0.0
        %2488 = vmatpush2.msra.mxu0 0.0
        %2489 = vmatprep.subr.mxu0 0.0
        %2490 = vmatpush2.msra.mxu0 0.0
        %2491 = vmatprep.subr.mxu0 0.0
        %2492 = vmatpush2.msra.mxu0 0.0
        %2493 = vmatprep.subr.mxu0 0.0
        %2494 = vmatpush2.msra.mxu0 0.0
        %2495 = vmatprep.subr.mxu0 0.0
        %2496 = vmatpush2.msra.mxu0 0.0
        %2497 = vmatprep.subr.mxu0 0.0
        %2498 = vmatpush2.msra.mxu0 0.0
        %2499 = vmatprep.subr.mxu0 0.0
        %2500 = vmatpush2.msra.mxu0 0.0
        %2501 = vmatprep.mubr.f32.mxu0 0.0
        %2502 = vmatmul.mubr.f32.gmra.mxu0 %v2342
        %v2503 = vpop.f32.mrf.mxu0
        %v2504 = vadd.f32 0.0, %v2503
        %v2505 = vpop.f32.mrf.mxu0
        %2506 = vmatprep.mubr.f32.mxu0 0.0
        %2507 = vmatmul.mubr.f32.gmra.mxu0 %v2345
        %v2508 = vpop.f32.mrf.mxu0
        %v2509 = vadd.f32 0.0, %v2508
        %v2510 = vpop.f32.mrf.mxu0
        %2511 = vmatprep.mubr.f32.mxu0 0.0
        %2512 = vmatmul.mubr.f32.gmra.mxu0 %v2348
        %v2513 = vpop.f32.mrf.mxu0
        %v2514 = vadd.f32 0.0, %v2513
        %v2515 = vpop.f32.mrf.mxu0
        %2516 = vmatprep.mubr.f32.mxu0 0.0
        %2517 = vmatmul.mubr.f32.gmra.mxu0 %v2351
        %v2518 = vpop.f32.mrf.mxu0
        %v2519 = vadd.f32 0.0, %v2518
        %v2520 = vpop.f32.mrf.mxu0
        %2521 = vmatprep.mubr.f32.mxu0 0.0
        %2522 = vmatmul.mubr.f32.gmra.mxu0 %v2354
        %v2523 = vpop.f32.mrf.mxu0
        %v2524 = vadd.f32 0.0, %v2523
        %v2525 = vpop.f32.mrf.mxu0
        %2526 = vmatprep.mubr.f32.mxu0 0.0
        %2527 = vmatmul.mubr.f32.gmra.mxu0 %v2357
        %v2528 = vpop.f32.mrf.mxu0
        %v2529 = vadd.f32 0.0, %v2528
        %v2530 = vpop.f32.mrf.mxu0
        %2531 = vmatprep.mubr.f32.mxu0 0.0
        %2532 = vmatmul.mubr.f32.gmra.mxu0 %v2360
        %v2533 = vpop.f32.mrf.mxu0
        %v2534 = vadd.f32 0.0, %v2533
        %v2535 = vpop.f32.mrf.mxu0
        %2536 = vmatprep.mubr.f32.mxu0 0.0
        %2537 = vmatmul.mubr.f32.gmra.mxu0 %v2363
        %v2538 = vpop.f32.mrf.mxu0
        %v2539 = vadd.f32 0.0, %v2538
        %v2540 = vpop.f32.mrf.mxu0
        %2541 = vmatprep.mubr.f32.mxu0 0.0
        %2542 = vmatmul.mubr.f32.gmra.mxu0 %v2366
        %v2543 = vpop.f32.mrf.mxu0
        %v2544 = vadd.f32 0.0, %v2543
        %v2545 = vpop.f32.mrf.mxu0
        %2546 = vmatprep.mubr.f32.mxu0 0.0
        %2547 = vmatmul.mubr.f32.gmra.mxu0 %v2369
        %v2548 = vpop.f32.mrf.mxu0
        %v2549 = vadd.f32 0.0, %v2548
        %v2550 = vpop.f32.mrf.mxu0
        %2551 = vmatprep.mubr.f32.mxu0 0.0
        %2552 = vmatmul.mubr.f32.gmra.mxu0 %v2372
        %v2553 = vpop.f32.mrf.mxu0
        %v2554 = vadd.f32 0.0, %v2553
        %v2555 = vpop.f32.mrf.mxu0
        %2556 = vmatprep.mubr.f32.mxu0 0.0
        %2557 = vmatmul.mubr.f32.gmra.mxu0 %v2375
        %v2558 = vpop.f32.mrf.mxu0
        %v2559 = vadd.f32 0.0, %v2558
        %v2560 = vpop.f32.mrf.mxu0
        %2561 = vmatprep.mubr.f32.mxu0 0.0
        %2562 = vmatmul.mubr.f32.gmra.mxu0 %v2378
        %v2563 = vpop.f32.mrf.mxu0
        %v2564 = vadd.f32 0.0, %v2563
        %v2565 = vpop.f32.mrf.mxu0
        %2566 = vmatprep.mubr.f32.mxu0 0.0
        %2567 = vmatmul.mubr.f32.gmra.mxu0 %v2381
        %v2568 = vpop.f32.mrf.mxu0
        %v2569 = vadd.f32 0.0, %v2568
        %v2570 = vpop.f32.mrf.mxu0
        %2571 = vmatprep.mubr.f32.mxu0 0.0
        %2572 = vmatmul.mubr.f32.gmra.mxu0 %v2384
        %v2573 = vpop.f32.mrf.mxu0
        %v2574 = vadd.f32 0.0, %v2573
        %v2575 = vpop.f32.mrf.mxu0
        %2576 = vmatprep.mubr.f32.mxu0 0.0
        %2577 = vmatmul.mubr.f32.gmra.mxu0 %v2387
        %v2578 = vpop.f32.mrf.mxu0
        %v2579 = vadd.f32 0.0, %v2578
        %v2580 = vpop.f32.mrf.mxu0
        %2581 = vmatprep.mubr.f32.mxu0 0.0
        %2582 = vmatmul.mubr.f32.gmra.mxu0 %v2390
        %v2583 = vpop.f32.mrf.mxu0
        %v2584 = vadd.f32 0.0, %v2583
        %v2585 = vpop.f32.mrf.mxu0
        %2586 = vmatprep.mubr.f32.mxu0 0.0
        %2587 = vmatmul.mubr.f32.gmra.mxu0 %v2393
        %v2588 = vpop.f32.mrf.mxu0
        %v2589 = vadd.f32 0.0, %v2588
        %v2590 = vpop.f32.mrf.mxu0
        %2591 = vmatprep.mubr.f32.mxu0 0.0
        %2592 = vmatmul.mubr.f32.gmra.mxu0 %v2396
        %v2593 = vpop.f32.mrf.mxu0
        %v2594 = vadd.f32 0.0, %v2593
        %v2595 = vpop.f32.mrf.mxu0
        %2596 = vmatprep.mubr.f32.mxu0 0.0
        %2597 = vmatmul.mubr.f32.gmra.mxu0 %v2399
        %v2598 = vpop.f32.mrf.mxu0
        %v2599 = vadd.f32 0.0, %v2598
        %v2600 = vpop.f32.mrf.mxu0
        %2601 = vmatprep.mubr.f32.mxu0 0.0
        %2602 = vmatmul.mubr.f32.gmra.mxu0 %v2402
        %v2603 = vpop.f32.mrf.mxu0
        %v2604 = vadd.f32 0.0, %v2603
        %v2605 = vpop.f32.mrf.mxu0
        %2606 = vmatprep.mubr.f32.mxu0 0.0
        %2607 = vmatmul.mubr.f32.gmra.mxu0 %v2405
        %v2608 = vpop.f32.mrf.mxu0
        %v2609 = vadd.f32 0.0, %v2608
        %v2610 = vpop.f32.mrf.mxu0
        %2611 = vmatprep.mubr.f32.mxu0 0.0
        %2612 = vmatmul.mubr.f32.gmra.mxu0 %v2408
        %v2613 = vpop.f32.mrf.mxu0
        %v2614 = vadd.f32 0.0, %v2613
        %v2615 = vpop.f32.mrf.mxu0
        %2616 = vmatprep.mubr.f32.mxu0 0.0
        %2617 = vmatmul.mubr.f32.gmra.mxu0 %v2411
        %v2618 = vpop.f32.mrf.mxu0
        %v2619 = vadd.f32 0.0, %v2618
        %v2620 = vpop.f32.mrf.mxu0
        %2621 = vmatprep.mubr.f32.mxu0 0.0
        %2622 = vmatmul.mubr.f32.gmra.mxu0 %v2414
        %v2623 = vpop.f32.mrf.mxu0
        %v2624 = vadd.f32 0.0, %v2623
        %v2625 = vpop.f32.mrf.mxu0
        %2626 = vmatprep.mubr.f32.mxu0 0.0
        %2627 = vmatmul.mubr.f32.gmra.mxu0 %v2417
        %v2628 = vpop.f32.mrf.mxu0
        %v2629 = vadd.f32 0.0, %v2628
        %v2630 = vpop.f32.mrf.mxu0
        %2631 = vmatprep.mubr.f32.mxu0 0.0
        %2632 = vmatmul.mubr.f32.gmra.mxu0 %v2420
        %v2633 = vpop.f32.mrf.mxu0
        %v2634 = vadd.f32 0.0, %v2633
        %v2635 = vpop.f32.mrf.mxu0
        %2636 = vmatprep.mubr.f32.mxu0 0.0
        %2637 = vmatmul.mubr.f32.gmra.mxu0 %v2423
        %v2638 = vpop.f32.mrf.mxu0
        %v2639 = vadd.f32 0.0, %v2638
        %v2640 = vpop.f32.mrf.mxu0
        %2641 = vmatprep.mubr.f32.mxu0 0.0
        %2642 = vmatmul.mubr.f32.gmra.mxu0 %v2426
        %v2643 = vpop.f32.mrf.mxu0
        %v2644 = vadd.f32 0.0, %v2643
        %v2645 = vpop.f32.mrf.mxu0
        %2646 = vmatprep.mubr.f32.mxu0 0.0
        %2647 = vmatmul.mubr.f32.gmra.mxu0 %v2429
        %v2648 = vpop.f32.mrf.mxu0
        %v2649 = vadd.f32 0.0, %v2648
        %v2650 = vpop.f32.mrf.mxu0
        %2651 = vmatprep.mubr.f32.mxu0 0.0
        %2652 = vmatmul.mubr.f32.gmra.mxu0 %v2432
        %v2653 = vpop.f32.mrf.mxu0
        %v2654 = vadd.f32 0.0, %v2653
        %v2655 = vpop.f32.mrf.mxu0
        %2656 = vmatprep.mubr.f32.mxu0 0.0
        %2657 = vmatmul.mubr.f32.gmra.mxu0 %v2435
        %v2658 = vpop.f32.mrf.mxu0
        %v2659 = vadd.f32 0.0, %v2658
        %v2660 = vpop.f32.mrf.mxu0
        %2661 = vdwg.mxu0
        %v2662 = vmul.f32 %v2504, 0.5
        %v2663 = vmul.f32 %v2509, 0.5
        %v2664 = vmul.f32 %v2514, 0.5
        %v2665 = vmul.f32 %v2519, 0.5
        %v2666 = vmul.f32 %v2524, 0.5
        %v2667 = vmul.f32 %v2529, 0.5
        %v2668 = vmul.f32 %v2534, 0.5
        %v2669 = vmul.f32 %v2539, 0.5
        %v2670 = vmul.f32 %v2544, 0.5
        %v2671 = vmul.f32 %v2549, 0.5
        %v2672 = vmul.f32 %v2554, 0.5
        %v2673 = vmul.f32 %v2559, 0.5
        %v2674 = vmul.f32 %v2564, 0.5
        %v2675 = vmul.f32 %v2569, 0.5
        %v2676 = vmul.f32 %v2574, 0.5
        %v2677 = vmul.f32 %v2579, 0.5
        %v2678 = vmul.f32 %v2584, 0.5
        %v2679 = vmul.f32 %v2589, 0.5
        %v2680 = vmul.f32 %v2594, 0.5
        %v2681 = vmul.f32 %v2599, 0.5
        %v2682 = vmul.f32 %v2604, 0.5
        %v2683 = vmul.f32 %v2609, 0.5
        %v2684 = vmul.f32 %v2614, 0.5
        %v2685 = vmul.f32 %v2619, 0.5
        %v2686 = vmul.f32 %v2624, 0.5
        %v2687 = vmul.f32 %v2629, 0.5
        %v2688 = vmul.f32 %v2634, 0.5
        %v2689 = vmul.f32 %v2639, 0.5
        %v2690 = vmul.f32 %v2644, 0.5
        %v2691 = vmul.f32 %v2649, 0.5
        %v2692 = vmul.f32 %v2654, 0.5
        %v2693 = vmul.f32 %v2659, 0.5
        %v2694 = vmul.f32 %v2504, 0.044715
        %v2695 = vmul.f32 %v2509, 0.044715
        %v2696 = vmul.f32 %v2514, 0.044715
        %v2697 = vmul.f32 %v2519, 0.044715
        %v2698 = vmul.f32 %v2524, 0.044715
        %v2699 = vmul.f32 %v2529, 0.044715
        %v2700 = vmul.f32 %v2534, 0.044715
        %v2701 = vmul.f32 %v2539, 0.044715
        %v2702 = vmul.f32 %v2544, 0.044715
        %v2703 = vmul.f32 %v2549, 0.044715
        %v2704 = vmul.f32 %v2554, 0.044715
        %v2705 = vmul.f32 %v2559, 0.044715
        %v2706 = vmul.f32 %v2564, 0.044715
        %v2707 = vmul.f32 %v2569, 0.044715
        %v2708 = vmul.f32 %v2574, 0.044715
        %v2709 = vmul.f32 %v2579, 0.044715
        %v2710 = vmul.f32 %v2584, 0.044715
        %v2711 = vmul.f32 %v2589, 0.044715
        %v2712 = vmul.f32 %v2594, 0.044715
        %v2713 = vmul.f32 %v2599, 0.044715
        %v2714 = vmul.f32 %v2604, 0.044715
        %v2715 = vmul.f32 %v2609, 0.044715
        %v2716 = vmul.f32 %v2614, 0.044715
        %v2717 = vmul.f32 %v2619, 0.044715
        %v2718 = vmul.f32 %v2624, 0.044715
        %v2719 = vmul.f32 %v2629, 0.044715
        %v2720 = vmul.f32 %v2634, 0.044715
        %v2721 = vmul.f32 %v2639, 0.044715
        %v2722 = vmul.f32 %v2644, 0.044715
        %v2723 = vmul.f32 %v2649, 0.044715
        %v2724 = vmul.f32 %v2654, 0.044715
        %v2725 = vmul.f32 %v2659, 0.044715
        %v2726 = vmul.f32 %v2694, %v2504
        %v2727 = vmul.f32 %v2695, %v2509
        %v2728 = vmul.f32 %v2696, %v2514
        %v2729 = vmul.f32 %v2697, %v2519
        %v2730 = vmul.f32 %v2698, %v2524
        %v2731 = vmul.f32 %v2699, %v2529
        %v2732 = vmul.f32 %v2700, %v2534
        %v2733 = vmul.f32 %v2701, %v2539
        %v2734 = vmul.f32 %v2702, %v2544
        %v2735 = vmul.f32 %v2703, %v2549
        %v2736 = vmul.f32 %v2704, %v2554
        %v2737 = vmul.f32 %v2705, %v2559
        %v2738 = vmul.f32 %v2706, %v2564
        %v2739 = vmul.f32 %v2707, %v2569
        %v2740 = vmul.f32 %v2708, %v2574
        %v2741 = vmul.f32 %v2709, %v2579
        %v2742 = vmul.f32 %v2710, %v2584
        %v2743 = vmul.f32 %v2711, %v2589
        %v2744 = vmul.f32 %v2712, %v2594
        %v2745 = vmul.f32 %v2713, %v2599
        %v2746 = vmul.f32 %v2714, %v2604
        %v2747 = vmul.f32 %v2715, %v2609
        %v2748 = vmul.f32 %v2716, %v2614
        %v2749 = vmul.f32 %v2717, %v2619
        %v2750 = vmul.f32 %v2718, %v2624
        %v2751 = vmul.f32 %v2719, %v2629
        %v2752 = vmul.f32 %v2720, %v2634
        %v2753 = vmul.f32 %v2721, %v2639
        %v2754 = vmul.f32 %v2722, %v2644
        %v2755 = vmul.f32 %v2723, %v2649
        %v2756 = vmul.f32 %v2724, %v2654
        %v2757 = vmul.f32 %v2725, %v2659
        %v2758 = vmul.f32 %v2726, %v2504
        %v2759 = vmul.f32 %v2727, %v2509
        %v2760 = vmul.f32 %v2728, %v2514
        %v2761 = vmul.f32 %v2729, %v2519
        %v2762 = vmul.f32 %v2730, %v2524
        %v2763 = vmul.f32 %v2731, %v2529
        %v2764 = vmul.f32 %v2732, %v2534
        %v2765 = vmul.f32 %v2733, %v2539
        %v2766 = vmul.f32 %v2734, %v2544
        %v2767 = vmul.f32 %v2735, %v2549
        %v2768 = vmul.f32 %v2736, %v2554
        %v2769 = vmul.f32 %v2737, %v2559
        %v2770 = vmul.f32 %v2738, %v2564
        %v2771 = vmul.f32 %v2739, %v2569
        %v2772 = vmul.f32 %v2740, %v2574
        %v2773 = vmul.f32 %v2741, %v2579
        %v2774 = vmul.f32 %v2742, %v2584
        %v2775 = vmul.f32 %v2743, %v2589
        %v2776 = vmul.f32 %v2744, %v2594
        %v2777 = vmul.f32 %v2745, %v2599
        %v2778 = vmul.f32 %v2746, %v2604
        %v2779 = vmul.f32 %v2747, %v2609
        %v2780 = vmul.f32 %v2748, %v2614
        %v2781 = vmul.f32 %v2749, %v2619
        %v2782 = vmul.f32 %v2750, %v2624
        %v2783 = vmul.f32 %v2751, %v2629
        %v2784 = vmul.f32 %v2752, %v2634
        %v2785 = vmul.f32 %v2753, %v2639
        %v2786 = vmul.f32 %v2754, %v2644
        %v2787 = vmul.f32 %v2755, %v2649
        %v2788 = vmul.f32 %v2756, %v2654
        %v2789 = vmul.f32 %v2757, %v2659
        %v2790 = vadd.f32 %v2504, %v2758
        %v2791 = vadd.f32 %v2509, %v2759
        %v2792 = vadd.f32 %v2514, %v2760
        %v2793 = vadd.f32 %v2519, %v2761
        %v2794 = vadd.f32 %v2524, %v2762
        %v2795 = vadd.f32 %v2529, %v2763
        %v2796 = vadd.f32 %v2534, %v2764
        %v2797 = vadd.f32 %v2539, %v2765
        %v2798 = vadd.f32 %v2544, %v2766
        %v2799 = vadd.f32 %v2549, %v2767
        %v2800 = vadd.f32 %v2554, %v2768
        %v2801 = vadd.f32 %v2559, %v2769
        %v2802 = vadd.f32 %v2564, %v2770
        %v2803 = vadd.f32 %v2569, %v2771
        %v2804 = vadd.f32 %v2574, %v2772
        %v2805 = vadd.f32 %v2579, %v2773
        %v2806 = vadd.f32 %v2584, %v2774
        %v2807 = vadd.f32 %v2589, %v2775
        %v2808 = vadd.f32 %v2594, %v2776
        %v2809 = vadd.f32 %v2599, %v2777
        %v2810 = vadd.f32 %v2604, %v2778
        %v2811 = vadd.f32 %v2609, %v2779
        %v2812 = vadd.f32 %v2614, %v2780
        %v2813 = vadd.f32 %v2619, %v2781
        %v2814 = vadd.f32 %v2624, %v2782
        %v2815 = vadd.f32 %v2629, %v2783
        %v2816 = vadd.f32 %v2634, %v2784
        %v2817 = vadd.f32 %v2639, %v2785
        %v2818 = vadd.f32 %v2644, %v2786
        %v2819 = vadd.f32 %v2649, %v2787
        %v2820 = vadd.f32 %v2654, %v2788
        %v2821 = vadd.f32 %v2659, %v2789
        %v2822 = vmul.f32 %v2790, 0.7978846
        %v2823 = vmul.f32 %v2791, 0.7978846
        %v2824 = vmul.f32 %v2792, 0.7978846
        %v2825 = vmul.f32 %v2793, 0.7978846
        %v2826 = vmul.f32 %v2794, 0.7978846
        %v2827 = vmul.f32 %v2795, 0.7978846
        %v2828 = vmul.f32 %v2796, 0.7978846
        %v2829 = vmul.f32 %v2797, 0.7978846
        %v2830 = vmul.f32 %v2798, 0.7978846
        %v2831 = vmul.f32 %v2799, 0.7978846
        %v2832 = vmul.f32 %v2800, 0.7978846
        %v2833 = vmul.f32 %v2801, 0.7978846
        %v2834 = vmul.f32 %v2802, 0.7978846
        %v2835 = vmul.f32 %v2803, 0.7978846
        %v2836 = vmul.f32 %v2804, 0.7978846
        %v2837 = vmul.f32 %v2805, 0.7978846
        %v2838 = vmul.f32 %v2806, 0.7978846
        %v2839 = vmul.f32 %v2807, 0.7978846
        %v2840 = vmul.f32 %v2808, 0.7978846
        %v2841 = vmul.f32 %v2809, 0.7978846
        %v2842 = vmul.f32 %v2810, 0.7978846
        %v2843 = vmul.f32 %v2811, 0.7978846
        %v2844 = vmul.f32 %v2812, 0.7978846
        %v2845 = vmul.f32 %v2813, 0.7978846
        %v2846 = vmul.f32 %v2814, 0.7978846
        %v2847 = vmul.f32 %v2815, 0.7978846
        %v2848 = vmul.f32 %v2816, 0.7978846
        %v2849 = vmul.f32 %v2817, 0.7978846
        %v2850 = vmul.f32 %v2818, 0.7978846
        %v2851 = vmul.f32 %v2819, 0.7978846
        %v2852 = vmul.f32 %v2820, 0.7978846
        %v2853 = vmul.f32 %v2821, 0.7978846
        %v2854 = vtanh.pop %v2822
        %v2855 = vtanh.pop %v2823
        %v2856 = vtanh.pop %v2824
        %v2857 = vtanh.pop %v2825
        %v2858 = vtanh.pop %v2826
        %v2859 = vtanh.pop %v2827
        %v2860 = vtanh.pop %v2828
        %v2861 = vtanh.pop %v2829
        %v2862 = vtanh.pop %v2830
        %v2863 = vtanh.pop %v2831
        %v2864 = vtanh.pop %v2832
        %v2865 = vtanh.pop %v2833
        %v2866 = vtanh.pop %v2834
        %v2867 = vtanh.pop %v2835
        %v2868 = vtanh.pop %v2836
        %v2869 = vtanh.pop %v2837
        %v2870 = vtanh.pop %v2838
        %v2871 = vtanh.pop %v2839
        %v2872 = vtanh.pop %v2840
        %v2873 = vtanh.pop %v2841
        %v2874 = vtanh.pop %v2842
        %v2875 = vtanh.pop %v2843
        %v2876 = vtanh.pop %v2844
        %v2877 = vtanh.pop %v2845
        %v2878 = vtanh.pop %v2846
        %v2879 = vtanh.pop %v2847
        %v2880 = vtanh.pop %v2848
        %v2881 = vtanh.pop %v2849
        %v2882 = vtanh.pop %v2850
        %v2883 = vtanh.pop %v2851
        %v2884 = vtanh.pop %v2852
        %v2885 = vtanh.pop %v2853
        %v2886 = vadd.f32 %v2854, 1.0
        %v2887 = vadd.f32 %v2855, 1.0
        %v2888 = vadd.f32 %v2856, 1.0
        %v2889 = vadd.f32 %v2857, 1.0
        %v2890 = vadd.f32 %v2858, 1.0
        %v2891 = vadd.f32 %v2859, 1.0
        %v2892 = vadd.f32 %v2860, 1.0
        %v2893 = vadd.f32 %v2861, 1.0
        %v2894 = vadd.f32 %v2862, 1.0
        %v2895 = vadd.f32 %v2863, 1.0
        %v2896 = vadd.f32 %v2864, 1.0
        %v2897 = vadd.f32 %v2865, 1.0
        %v2898 = vadd.f32 %v2866, 1.0
        %v2899 = vadd.f32 %v2867, 1.0
        %v2900 = vadd.f32 %v2868, 1.0
        %v2901 = vadd.f32 %v2869, 1.0
        %v2902 = vadd.f32 %v2870, 1.0
        %v2903 = vadd.f32 %v2871, 1.0
        %v2904 = vadd.f32 %v2872, 1.0
        %v2905 = vadd.f32 %v2873, 1.0
        %v2906 = vadd.f32 %v2874, 1.0
        %v2907 = vadd.f32 %v2875, 1.0
        %v2908 = vadd.f32 %v2876, 1.0
        %v2909 = vadd.f32 %v2877, 1.0
        %v2910 = vadd.f32 %v2878, 1.0
        %v2911 = vadd.f32 %v2879, 1.0
        %v2912 = vadd.f32 %v2880, 1.0
        %v2913 = vadd.f32 %v2881, 1.0
        %v2914 = vadd.f32 %v2882, 1.0
        %v2915 = vadd.f32 %v2883, 1.0
        %v2916 = vadd.f32 %v2884, 1.0
        %v2917 = vadd.f32 %v2885, 1.0
        %v2918 = vmul.f32 %v2662, %v2886
        %v2919 = vmul.f32 %v2663, %v2887
        %v2920 = vmul.f32 %v2664, %v2888
        %v2921 = vmul.f32 %v2665, %v2889
        %v2922 = vmul.f32 %v2666, %v2890
        %v2923 = vmul.f32 %v2667, %v2891
        %v2924 = vmul.f32 %v2668, %v2892
        %v2925 = vmul.f32 %v2669, %v2893
        %v2926 = vmul.f32 %v2670, %v2894
        %v2927 = vmul.f32 %v2671, %v2895
        %v2928 = vmul.f32 %v2672, %v2896
        %v2929 = vmul.f32 %v2673, %v2897
        %v2930 = vmul.f32 %v2674, %v2898
        %v2931 = vmul.f32 %v2675, %v2899
        %v2932 = vmul.f32 %v2676, %v2900
        %v2933 = vmul.f32 %v2677, %v2901
        %v2934 = vmul.f32 %v2678, %v2902
        %v2935 = vmul.f32 %v2679, %v2903
        %v2936 = vmul.f32 %v2680, %v2904
        %v2937 = vmul.f32 %v2681, %v2905
        %v2938 = vmul.f32 %v2682, %v2906
        %v2939 = vmul.f32 %v2683, %v2907
        %v2940 = vmul.f32 %v2684, %v2908
        %v2941 = vmul.f32 %v2685, %v2909
        %v2942 = vmul.f32 %v2686, %v2910
        %v2943 = vmul.f32 %v2687, %v2911
        %v2944 = vmul.f32 %v2688, %v2912
        %v2945 = vmul.f32 %v2689, %v2913
        %v2946 = vmul.f32 %v2690, %v2914
        %v2947 = vmul.f32 %v2691, %v2915
        %v2948 = vmul.f32 %v2692, %v2916
        %v2949 = vmul.f32 %v2693, %v2917
        %v2950 = vld [vmem:[%s296] sm:$0xff]
        %v2951 = vld [vmem:[%s296 + $0x8] sm:$0xff]
        %v2952 = vld [vmem:[%s296 + $0x10] sm:$0xff]
        %v2953 = vld [vmem:[%s296 + $0x18] sm:$0xff]
        %v2954 = vld [vmem:[%s296 + $0x20] sm:$0xff]
        %v2955 = vld [vmem:[%s296 + $0x28] sm:$0xff]
        %v2956 = vld [vmem:[%s296 + $0x30] sm:$0xff]
        %v2957 = vld [vmem:[%s296 + $0x38] sm:$0xff]
        %v2958 = vld [vmem:[%s296 + $0x40] sm:$0xff]
        %v2959 = vld [vmem:[%s296 + $0x48] sm:$0xff]
        %v2960 = vld [vmem:[%s296 + $0x50] sm:$0xff]
        %v2961 = vld [vmem:[%s296 + $0x58] sm:$0xff]
        %v2962 = vld [vmem:[%s296 + $0x60] sm:$0xff]
        %v2963 = vld [vmem:[%s296 + $0x68] sm:$0xff]
        %v2964 = vld [vmem:[%s296 + $0x70] sm:$0xff]
        %v2965 = vld [vmem:[%s296 + $0x78] sm:$0xff]
        %v2966 = vld [vmem:[%s296 + $0x80] sm:$0xff]
        %v2967 = vld [vmem:[%s296 + $0x88] sm:$0xff]
        %v2968 = vld [vmem:[%s296 + $0x90] sm:$0xff]
        %v2969 = vld [vmem:[%s296 + $0x98] sm:$0xff]
        %v2970 = vld [vmem:[%s296 + $0xa0] sm:$0xff]
        %v2971 = vld [vmem:[%s296 + $0xa8] sm:$0xff]
        %v2972 = vld [vmem:[%s296 + $0xb0] sm:$0xff]
        %v2973 = vld [vmem:[%s296 + $0xb8] sm:$0xff]
        %v2974 = vld [vmem:[%s296 + $0xc0] sm:$0xff]
        %v2975 = vld [vmem:[%s296 + $0xc8] sm:$0xff]
        %v2976 = vld [vmem:[%s296 + $0xd0] sm:$0xff]
        %v2977 = vld [vmem:[%s296 + $0xd8] sm:$0xff]
        %v2978 = vld [vmem:[%s296 + $0xe0] sm:$0xff]
        %v2979 = vld [vmem:[%s296 + $0xe8] sm:$0xff]
        %v2980 = vld [vmem:[%s296 + $0xf0] sm:$0xff]
        %v2981 = vld [vmem:[%s296 + $0xf8] sm:$0xff]
        %v2982 = vadd.f32 %v2918, %v2950
        %v2983 = vadd.f32 %v2919, %v2951
        %v2984 = vadd.f32 %v2920, %v2952
        %v2985 = vadd.f32 %v2921, %v2953
        %v2986 = vadd.f32 %v2922, %v2954
        %v2987 = vadd.f32 %v2923, %v2955
        %v2988 = vadd.f32 %v2924, %v2956
        %v2989 = vadd.f32 %v2925, %v2957
        %v2990 = vadd.f32 %v2926, %v2958
        %v2991 = vadd.f32 %v2927, %v2959
        %v2992 = vadd.f32 %v2928, %v2960
        %v2993 = vadd.f32 %v2929, %v2961
        %v2994 = vadd.f32 %v2930, %v2962
        %v2995 = vadd.f32 %v2931, %v2963
        %v2996 = vadd.f32 %v2932, %v2964
        %v2997 = vadd.f32 %v2933, %v2965
        %v2998 = vadd.f32 %v2934, %v2966
        %v2999 = vadd.f32 %v2935, %v2967
        %v3000 = vadd.f32 %v2936, %v2968
        %v3001 = vadd.f32 %v2937, %v2969
        %v3002 = vadd.f32 %v2938, %v2970
        %v3003 = vadd.f32 %v2939, %v2971
        %v3004 = vadd.f32 %v2940, %v2972
        %v3005 = vadd.f32 %v2941, %v2973
        %v3006 = vadd.f32 %v2942, %v2974
        %v3007 = vadd.f32 %v2943, %v2975
        %v3008 = vadd.f32 %v2944, %v2976
        %v3009 = vadd.f32 %v2945, %v2977
        %v3010 = vadd.f32 %v2946, %v2978
        %v3011 = vadd.f32 %v2947, %v2979
        %v3012 = vadd.f32 %v2948, %v2980
        %v3013 = vadd.f32 %v2949, %v2981
        %3014 = vst.msk [vmem:[%s286] sm:$0xff] %vm1535, %v2982
        %3015 = vst.msk [vmem:[%s286 + $0x8] sm:$0xff] %vm1535, %v2983
        %3016 = vst.msk [vmem:[%s286 + $0x10] sm:$0xff] %vm1535, %v2984
        %3017 = vst.msk [vmem:[%s286 + $0x18] sm:$0xff] %vm1535, %v2985
        %3018 = vst.msk [vmem:[%s286 + $0x20] sm:$0xff] %vm1535, %v2986
        %3019 = vst.msk [vmem:[%s286 + $0x28] sm:$0xff] %vm1535, %v2987
        %3020 = vst.msk [vmem:[%s286 + $0x30] sm:$0xff] %vm1535, %v2988
        %3021 = vst.msk [vmem:[%s286 + $0x38] sm:$0xff] %vm1535, %v2989
        %3022 = vst.msk [vmem:[%s286 + $0x40] sm:$0xff] %vm1535, %v2990
        %3023 = vst.msk [vmem:[%s286 + $0x48] sm:$0xff] %vm1535, %v2991
        %3024 = vst.msk [vmem:[%s286 + $0x50] sm:$0xff] %vm1535, %v2992
        %3025 = vst.msk [vmem:[%s286 + $0x58] sm:$0xff] %vm1535, %v2993
        %3026 = vst.msk [vmem:[%s286 + $0x60] sm:$0xff] %vm1535, %v2994
        %3027 = vst.msk [vmem:[%s286 + $0x68] sm:$0xff] %vm1535, %v2995
        %3028 = vst.msk [vmem:[%s286 + $0x70] sm:$0xff] %vm1535, %v2996
        %3029 = vst.msk [vmem:[%s286 + $0x78] sm:$0xff] %vm1535, %v2997
        %3030 = vst.msk [vmem:[%s286 + $0x80] sm:$0xff] %vm1535, %v2998
        %3031 = vst.msk [vmem:[%s286 + $0x88] sm:$0xff] %vm1535, %v2999
        %3032 = vst.msk [vmem:[%s286 + $0x90] sm:$0xff] %vm1535, %v3000
        %3033 = vst.msk [vmem:[%s286 + $0x98] sm:$0xff] %vm1535, %v3001
        %3034 = vst.msk [vmem:[%s286 + $0xa0] sm:$0xff] %vm1535, %v3002
        %3035 = vst.msk [vmem:[%s286 + $0xa8] sm:$0xff] %vm1535, %v3003
        %3036 = vst.msk [vmem:[%s286 + $0xb0] sm:$0xff] %vm1535, %v3004
        %3037 = vst.msk [vmem:[%s286 + $0xb8] sm:$0xff] %vm1535, %v3005
        %3038 = vst.msk [vmem:[%s286 + $0xc0] sm:$0xff] %vm1535, %v3006
        %3039 = vst.msk [vmem:[%s286 + $0xc8] sm:$0xff] %vm1535, %v3007
        %3040 = vst.msk [vmem:[%s286 + $0xd0] sm:$0xff] %vm1535, %v3008
        %3041 = vst.msk [vmem:[%s286 + $0xd8] sm:$0xff] %vm1535, %v3009
        %3042 = vst.msk [vmem:[%s286 + $0xe0] sm:$0xff] %vm1535, %v3010
        %3043 = vst.msk [vmem:[%s286 + $0xe8] sm:$0xff] %vm1535, %v3011
        %3044 = vst.msk [vmem:[%s286 + $0xf0] sm:$0xff] %vm1535, %v3012
        %3045 = vst.msk [vmem:[%s286 + $0xf8] sm:$0xff] %vm1535, %v3013
        %s3046 = sand.u32 %s186, 1
        %s3047 = scalar_lea.sflag [#allocation3], %s3046
        %s3048 = sand.u32 %s186, 1
        %s3049 = smul.addr %s3048, 256
        %s3050 = scalar_lea.vmem [#allocation2], %s3049
        // Predicated region
        $region49: #{irmb_forward.3} parent=47 // pred_check
          %p3051 = pneg %p196
        $region50: #{irmb_forward.3} parent=47 // pred_check_branch
          %3053 = sbr.rel (%p3051) target = $region52
        $region51: #{irmb_forward.3} parent=47 // pred_region
          %s3055 = ssub.s32 4096, 4096
          %3056 = vsyncadd %s3047, %s3055
          %s3057 = smul.addr %s21, 32
          %s3058 = smul.addr %s3057, 128
          %s3059 = scalar_lea.hbm %s7, %s3058
          %s3060 = sshll.u32 %s3050, 4
          %s3061 = int_to_ptr.vmem [resolvable:$true] %s3060
          %3066 = dma.vmem_to_hbm [thread:$0]  %s3061, 4096, %s3059, %s3047, 128, 128, 8
        $region52: #{irmb_forward.3} parent=47 // pred_fallthru
          _
      $region48: #{irmb_forward.3} parent=5 // pred_fallthru
        _
      %p3067 = scmp.le.s32.totalorder 2, %s16
      // Predicated region
      $region53: #{irmb_forward.3} parent=5 // pred_check
        %p3068 = pneg %p3067
      $region54: #{irmb_forward.3} parent=5 // pred_check_branch
        %3070 = sbr.rel (%p3068) target = $region56
      $region55: #{irmb_forward.3} parent=5 // pred_region
        %s3071 = ssub.s32 %s16, 2
        // Predicated region
        $region57: #{irmb_forward.3} parent=55 // pred_check
          %p3072 = pneg %p202
        $region58: #{irmb_forward.3} parent=55 // pred_check_branch
          %3074 = sbr.rel (%p3072) target = $region60
        $region59: #{irmb_forward.3} parent=55 // pred_region
          %s3075 = sand.u32 %s187, 1
          %s3076 = scalar_lea.sflag [#allocation3], %s3075
          %s3077 = sand.u32 %s187, 1
          %s3078 = smul.addr %s3077, 256
          %s3079 = scalar_lea.vmem [#allocation2], %s3078
          %3080 = dma.done %s3076, 4096
        $region60: #{irmb_forward.3} parent=55 // pred_fallthru
          _
      $region56: #{irmb_forward.3} parent=5 // pred_fallthru
        _
    $region6: #{irmb_forward.3} parent=1 // loop_footer
      %s20 = sadd.s32 1, %s16
    $region7: #{irmb_forward.3} parent=1 // loop_footer_branch
      %15 = sbr.rel target = $region3
    $region8: #{irmb_forward.3} parent=1 // loop_exit
      _
    %3081 = vsyncpa [#allocation3], 1
    %s3082 = scalar_lea.sflag [#allocation3], 1
    %3083 = vsyncpa %s3082, 1

</llo_original>
